<compile_context>
chip_gen: v5e
topology: v5e:2x2
jax: 0.10.0
libtpu: 0.0.40
codegen_flags: <defaults>
</compile_context>

<pallas_src>
import functools

import jax
import jax.numpy as jnp
import numpy as np
from jax import lax
from jax.experimental import pallas as pl
from jax.experimental.pallas import tpu as pltpu


def _round_up(x, m):
    return (x + m - 1) // m * m


# ----------------------------------------------------------------------------
# Per-generation tiling / VMEM knobs
# ----------------------------------------------------------------------------
@functools.lru_cache(maxsize=None)
def _chip_config():
    """v5e/v6e: 128 MiB VMEM per core.  v7x: 64 MiB, 2 TensorCores per chip."""
    vmem_cap = 64 * 1024 * 1024                     # conservative default (v7x)
    try:
        info = pltpu.get_tpu_info()
        cap = getattr(info, "vmem_capacity_bytes", None)
        if cap:
            vmem_cap = int(cap)
    except Exception:
        pass
    if vmem_cap >= 100 * 1024 * 1024:               # v5e / v6e
        return {"tm_max": 2048, "budget": 80 * 1024 * 1024,
                "limit_cap": 100 * 1024 * 1024, "two_tiles": False}
    return {"tm_max": 512, "budget": 28 * 1024 * 1024,   # v7x
            "limit_cap": 40 * 1024 * 1024, "two_tiles": True}


# ----------------------------------------------------------------------------
# Pallas kernel: fused (patches @ weights) + bias (+ ReLU), f32 accumulation
# ----------------------------------------------------------------------------
def _gemm_bias_act_kernel(p_ref, w_ref, b_ref, o_ref, *, relu):
    acc = jnp.dot(p_ref[...], w_ref[...], preferred_element_type=jnp.float32)
    acc = acc + b_ref[...]
    if relu:
        acc = jnp.maximum(acc, 0.0)
    o_ref[...] = acc.astype(o_ref.dtype)


def pallas_matmul_bias(patches, w_mat, bias, *, relu, out_dtype):
    """patches (M,K) x w_mat (K,N) + bias (N,) -> (M,N) in `out_dtype`.

    Operands are bf16 (MXU); accumulation / bias / ReLU run in f32 inside the
    kernel; the result is cast on store.  M is tiled over a cdiv grid on the
    unpadded M (partial last tile is masked by Pallas); K and N use full-dim
    blocks so nothing is padded / copied in HBM.
    """
    M, K = patches.shape
    K2, N = w_mat.shape
    assert K == K2 and bias.shape == (N,)

    patches = patches.astype(jnp.bfloat16)
    w_mat = w_mat.astype(jnp.bfloat16)
    bias2 = bias.astype(jnp.float32).reshape(1, N)

    out_bytes = jnp.dtype(out_dtype).itemsize
    cfg = _chip_config()

    def tile_bytes(tm_):
        # double-buffered streaming patches + output tiles, resident weights/bias
        return (2 * (tm_ * K * 2 + tm_ * N * out_bytes)
                + 2 * (K * N * 2 + N * 4))

    if M < 512:
        tm = M                                   # single full-dim tile
    else:
        tm = min(cfg["tm_max"], _round_up(M, 256))
        if cfg["two_tiles"]:                     # keep both v7x TCs busy
            tm = min(tm, _round_up((M + 1) // 2, 256))
        while tm > 256 and tile_bytes(tm) > cfg["budget"]:
            tm -= 256
        tm = max(tm, 256)

    vmem_limit = int(min(cfg["limit_cap"],
                         max(16 * 1024 * 1024, tile_bytes(tm) + 8 * 1024 * 1024)))

    kernel = functools.partial(_gemm_bias_act_kernel, relu=relu)
    out = pl.pallas_call(
        kernel,
        out_shape=jax.ShapeDtypeStruct((M, N), out_dtype),
        grid=(pl.cdiv(M, tm),),
        in_specs=[
            pl.BlockSpec((tm, K), lambda i: (i, 0)),    # streaming patch rows
            pl.BlockSpec((K, N), lambda i: (0, 0)),     # resident weights
            pl.BlockSpec((1, N), lambda i: (0, 0)),     # resident bias
        ],
        out_specs=pl.BlockSpec((tm, N), lambda i: (i, 0)),
        compiler_params=pltpu.CompilerParams(
            dimension_semantics=("parallel",),          # shard M tiles across TCs
            vmem_limit_bytes=vmem_limit,
        ),
        cost_estimate=pl.CostEstimate(
            flops=2 * M * K * N,
            transcendentals=0,
            bytes_accessed=(M * K * 2 + K * N * 2 + M * N * out_bytes + N * 4),
        ),
    )(patches, w_mat, bias2)
    return out


# ----------------------------------------------------------------------------
# Glue: im2col patch extraction for the strided encoder convs (bf16)
# ----------------------------------------------------------------------------
def _extract_patches(x_padded, k, stride):
    """(N,Hp,Wp,C) -> ((N*Ho*Wo, k*k*C), Ho, Wo); tap order (kh, kw, ci)."""
    n, hp, wp, c = x_padded.shape
    ho = (hp - k) // stride + 1
    wo = (wp - k) // stride + 1
    cols = []
    for kh in range(k):
        for kw in range(k):
            cols.append(x_padded[:, kh:kh + stride * (ho - 1) + 1:stride,
                                 kw:kw + stride * (wo - 1) + 1:stride, :])
    patches = jnp.concatenate(cols, axis=-1)
    return patches.reshape(n * ho * wo, k * k * c), ho, wo


# ----------------------------------------------------------------------------
# Conv2d (k3, stride 2, pad 1) built on the Pallas GEMM
# ----------------------------------------------------------------------------
def conv2d(x, w_mat, bias, *, relu, out_dtype, stride=2, pad=1, k=3):
    """x: (N,H,W,Cin) NHWC.  w_mat: (k*k*Cin, Cout) GEMM-ready bf16."""
    n, _, _, cin = x.shape
    cout = w_mat.shape[1]
    assert w_mat.shape[0] == k * k * cin
    xp = jnp.pad(x.astype(jnp.bfloat16), ((0, 0), (pad, pad), (pad, pad), (0, 0)))
    patches, ho, wo = _extract_patches(xp, k, stride)
    out = pallas_matmul_bias(patches, w_mat, bias, relu=relu, out_dtype=out_dtype)
    return out.reshape(n, ho, wo, cout)


# ----------------------------------------------------------------------------
# ConvTranspose2d (k3, stride 2, pad 1, out_pad 1) via sub-pixel decomposition
# ----------------------------------------------------------------------------
# (output phase a, patch tap dh) -> transposed-conv kernel row kh.  Derivation:
# oh = 2*ih - 1 + kh, so oh = 2m+a uses (kh=1, ih=m) for a=0 and
# (kh=2, ih=m) / (kh=0, ih=m+1) for a=1.  Missing pairs contribute zero.
_PHASE_TAP = {(0, 0): 1, (1, 0): 2, (1, 1): 0}


def conv_transpose2d(x, w_mat, bias4, *, relu, out_dtype):
    """Exact PyTorch ConvTranspose2d(k=3, stride=2, padding=1, output_padding=1)
    as one GEMM over 2x2 patches of the *undilated* input.
    x: (N,H,W,Cin) NHWC.  w_mat: (4*Cin, 4*Cout) phase matrix (GEMM-ready)."""
    n, h, wd, cin = x.shape
    assert w_mat.shape[0] == 4 * cin
    cout = w_mat.shape[1] // 4
    xp = jnp.pad(x.astype(jnp.bfloat16), ((0, 0), (0, 1), (0, 1), (0, 0)))
    # 2x2 patches, tap order (dh, dw, ci): K = 4*Cin, no zero-dilated input.
    cols = [xp[:, dh:dh + h, dw:dw + wd, :] for dh in (0, 1) for dw in (0, 1)]
    patches = jnp.concatenate(cols, axis=-1).reshape(n * h * wd, 4 * cin)
    out = pallas_matmul_bias(patches, w_mat, bias4, relu=relu, out_dtype=out_dtype)
    # Interleave phases: out[n, 2m+a, 2p+b, co] = gemm[(n,m,p), (a,b,co)].
    # Reshape is free; only the minor-dim swap moves bytes (bf16 for
    # intermediate layers).
    out = out.reshape(n, h, wd, 2, 2, cout)
    out = jnp.transpose(out, (0, 1, 3, 2, 4, 5)).reshape(n, 2 * h, 2 * wd, cout)
    return out


# ----------------------------------------------------------------------------
# Parameter init (deterministic, PyTorch-like uniform(-1/sqrt(fan_in), ...))
# ----------------------------------------------------------------------------
def _init_pair(key, shape_w, fan_in, nbias):
    k1, k2 = jax.random.split(key)
    bound = 1.0 / np.sqrt(fan_in)
    w = jax.random.uniform(k1, shape_w, jnp.float32, -bound, bound)
    b = jax.random.uniform(k2, (nbias,), jnp.float32, -bound, bound)
    return w, b


def init_params(img_channels, key):
    params = {}
    enc_io = [(img_channels, 256), (256, 128), (128, 64), (64, 8)]
    dec_io = [(8, 64), (64, 128), (128, 256), (256, img_channels)]
    keys = jax.random.split(key, 8)
    for i, (cin, cout) in enumerate(enc_io):
        params[f"enc{i}"] = _init_pair(keys[i], (cout, cin, 3, 3), cin * 9, cout)
    for i, (cin, cout) in enumerate(dec_io):
        params[f"dec{i}"] = _init_pair(keys[4 + i], (cin, cout, 3, 3), cout * 9, cout)
    return params


def prepare_params(params):
    """One-time conversion of PyTorch-layout weights into GEMM-ready matrices.

    Done once outside the per-step forward so no transposes / scatters are
    re-traced or re-executed every call.
    """
    gp = {}
    for i in range(4):
        w, b = params[f"enc{i}"]
        cout, cin, k, _ = w.shape
        w_mat = jnp.transpose(w, (2, 3, 1, 0)).reshape(k * k * cin, cout)
        gp[f"enc{i}"] = (w_mat.astype(jnp.bfloat16), b.astype(jnp.float32))
    for i in range(4):
        w, b = params[f"dec{i}"]
        cin, cout, k, _ = w.shape
        assert k == 3
        # Phase weight matrix: rows (dh,dw,ci), cols (a,b,co); zero where a
        # given output phase does not use a tap.
        wfull = jnp.zeros((2, 2, 2, 2, cin, cout), w.dtype)
        for (a, dh), kh in _PHASE_TAP.items():
            for (bb, dw), kw in _PHASE_TAP.items():
                wfull = wfull.at[a, bb, dh, dw].set(w[:, :, kh, kw])
        w_mat = jnp.transpose(wfull, (2, 3, 4, 0, 1, 5)).reshape(4 * cin, 4 * cout)
        bias4 = jnp.tile(b, 4).astype(jnp.float32)      # bias per (a,b,co) slot
        gp[f"dec{i}"] = (w_mat.astype(jnp.bfloat16), bias4)
    return gp


# ----------------------------------------------------------------------------
# AutoEncoder forward (NCHW in / NCHW out, matching the PyTorch module)
# ----------------------------------------------------------------------------
def autoencoder_forward(gemm_params, x_nchw):
    x = jnp.transpose(x_nchw, (0, 2, 3, 1)).astype(jnp.float32)  # NCHW -> NHWC

    # Encoder: conv(s2,p1)+ReLU x3 (bf16 intermediates), final conv -> f32.
    h = conv2d(x, *gemm_params["enc0"], relu=True, out_dtype=jnp.bfloat16)
    h = conv2d(h, *gemm_params["enc1"], relu=True, out_dtype=jnp.bfloat16)
    h = conv2d(h, *gemm_params["enc2"], relu=True, out_dtype=jnp.bfloat16)
    encoded = conv2d(h, *gemm_params["enc3"], relu=False, out_dtype=jnp.float32)

    # Decoder: convT(s2,p1,op1)+ReLU x3 (bf16 intermediates), final -> f32.
    d = conv_transpose2d(encoded, *gemm_params["dec0"], relu=True, out_dtype=jnp.bfloat16)
    d = conv_transpose2d(d, *gemm_params["dec1"], relu=True, out_dtype=jnp.bfloat16)
    d = conv_transpose2d(d, *gemm_params["dec2"], relu=True, out_dtype=jnp.bfloat16)
    decoded = conv_transpose2d(d, *gemm_params["dec3"], relu=False, out_dtype=jnp.float32)

    return jnp.transpose(encoded, (0, 3, 1, 2)), jnp.transpose(decoded, (0, 3, 1, 2))


# ----------------------------------------------------------------------------
# Reference (XLA lax conv) with the SAME mixed precision (bf16 operands, f32
# accumulation/bias/ReLU), so the check isolates the Pallas lowering.
# ----------------------------------------------------------------------------
def _ref_conv(x, w, b, relu):
    w_hwio = jnp.transpose(w, (2, 3, 1, 0)).astype(jnp.bfloat16)
    out = lax.conv_general_dilated(x.astype(jnp.bfloat16), w_hwio, (2, 2),
                                   ((1, 1), (1, 1)),
                                   dimension_numbers=("NHWC", "HWIO", "NHWC"),
                                   preferred_element_type=jnp.float32)
    out = out + b
    return jnp.maximum(out, 0.0) if relu else out


def _ref_convT(x, w, b, relu):
    w_hwio = jnp.transpose(w[:, :, ::-1, ::-1], (2, 3, 0, 1)).astype(jnp.bfloat16)
    out = lax.conv_general_dilated(x.astype(jnp.bfloat16), w_hwio, (1, 1),
                                   ((1, 2), (1, 2)), lhs_dilation=(2, 2),
                                   dimension_numbers=("NHWC", "HWIO", "NHWC"),
                                   preferred_element_type=jnp.float32)
    out = out + b
    return jnp.maximum(out, 0.0) if relu else out


def autoencoder_reference(params, x_nchw):
    x = jnp.transpose(x_nchw, (0, 2, 3, 1)).astype(jnp.float32)
    h = _ref_conv(x, *params["enc0"], True)
    h = _ref_conv(h, *params["enc1"], True)
    h = _ref_conv(h, *params["enc2"], True)
    enc = _ref_conv(h, *params["enc3"], False)
    d = _ref_convT(enc, *params["dec0"], True)
    d = _ref_convT(d, *params["dec1"], True)
    d = _ref_convT(d, *params["dec2"], True)
    dec = _ref_convT(d, *params["dec3"], False)
    return jnp.transpose(enc, (0, 3, 1, 2)), jnp.transpose(dec, (0, 3, 1, 2))


if __name__ == "__main__":
    img_channels = 4
    batch, spatial = 2, 16

    key = jax.random.PRNGKey(0)
    k_param, k_input = jax.random.split(key)
    params = init_params(img_channels, k_param)
    gemm_params = prepare_params(params)           # weight prep ONCE, outside jit
    x = jax.random.normal(k_input, (batch, img_channels, spatial, spatial), jnp.float32)

    encoded, decoded = jax.jit(autoencoder_forward)(gemm_params, x)
    jax.block_until_ready((encoded, decoded))

    assert encoded.shape == (batch, 8, spatial // 16, spatial // 16)
    assert decoded.shape == (batch, img_channels, spatial, spatial)
    assert bool(jnp.all(jnp.isfinite(encoded))) and bool(jnp.all(jnp.isfinite(decoded)))

    enc_ref, dec_ref = jax.jit(autoencoder_reference)(params, x)
    np.testing.assert_allclose(np.asarray(encoded), np.asarray(enc_ref), rtol=1e-2, atol=1e-2)
    np.testing.assert_allclose(np.asarray(decoded), np.asarray(dec_ref), rtol=1e-2, atol=1e-2)

    print("KERNEL_OK")
</pallas_src>

<mosaic_0001>
module attributes {stable_mosaic.version = 11 : i64} {
  func.func @_gemm_bias_act_kernel(%arg0: i32, %arg1: memref<128x36xbf16, #tpu.memory_space<vmem>>, %arg2: memref<36x256xbf16, #tpu.memory_space<vmem>>, %arg3: memref<1x256xf32, #tpu.memory_space<vmem>>, %arg4: memref<128x256xbf16, #tpu.memory_space<vmem>>) attributes {dimension_semantics = [#tpu.dimension_semantics<parallel>], iteration_bounds = array<i64: 1>, scalar_prefetch = 0 : i64, scratch_operands = 0 : i64, tpu.core_type = #tpu.core_type<tc>, window_params = [{transform_indices = @transform_0, window_bounds = array<i64: 128, 36>}, {pipeline_mode = #tpu.pipeline_mode<synchronous>, transform_indices = @transform_1, window_bounds = array<i64: 36, 256>}, {pipeline_mode = #tpu.pipeline_mode<synchronous>, transform_indices = @transform_2, window_bounds = array<i64: 1, 256>}, {transform_indices = @transform_3, window_bounds = array<i64: 128, 256>}]} {
    %c0 = arith.constant 0 : index
    %c0_0 = arith.constant 0 : index
    %0 = vector.load %arg1[%c0, %c0_0] : memref<128x36xbf16, #tpu.memory_space<vmem>>, vector<128x36xbf16>
    %c0_1 = arith.constant 0 : index
    %c0_2 = arith.constant 0 : index
    %1 = vector.load %arg2[%c0_1, %c0_2] : memref<36x256xbf16, #tpu.memory_space<vmem>>, vector<36x256xbf16>
    %cst = arith.constant dense<0.000000e+00> : vector<128x256xf32>
    %2 = tpu.matmul %0, %1, %cst {dimension_numbers = #tpu.dot_dimension_numbers<[1], [0], [0], [1], [0, 0, 1, 1], [], []>} : vector<128x36xbf16>, vector<36x256xbf16>, vector<128x256xf32> -> vector<128x256xf32>
    %c0_3 = arith.constant 0 : index
    %c0_4 = arith.constant 0 : index
    %3 = vector.load %arg3[%c0_3, %c0_4] : memref<1x256xf32, #tpu.memory_space<vmem>>, vector<1x256xf32>
    %4 = vector.broadcast %3 : vector<1x256xf32> to vector<128x256xf32>
    %5 = arith.addf %2, %4 : vector<128x256xf32>
    %cst_5 = arith.constant 0.000000e+00 : f32
    %6 = vector.broadcast %cst_5 : f32 to vector<128x256xf32>
    %7 = arith.maximumf %5, %6 : vector<128x256xf32>
    %8 = arith.truncf %7 : vector<128x256xf32> to vector<128x256xbf16>
    %c0_6 = arith.constant 0 : index
    %c0_7 = arith.constant 0 : index
    %9 = vector.load %arg4[%c0_6, %c0_7] : memref<128x256xbf16, #tpu.memory_space<vmem>>, vector<128x256xbf16>
    tpu.vector_store %arg4[%c0_6, %c0_7], %8 {strides = array<i32>} : memref<128x256xbf16, #tpu.memory_space<vmem>>, vector<128x256xbf16>,
    return
  }
  func.func @transform_0(%arg0: i32) -> (i32, i32) {
    %c0_i32 = arith.constant 0 : i32
    %c0_i32_0 = arith.constant 0 : i32
    return %arg0, %c0_i32 : i32, i32
  }
  func.func @transform_1(%arg0: i32) -> (i32, i32) {
    %c0_i32 = arith.constant 0 : i32
    %c0_i32_0 = arith.constant 0 : i32
    %c0_i32_1 = arith.constant 0 : i32
    return %c0_i32, %c0_i32_0 : i32, i32
  }
  func.func @transform_2(%arg0: i32) -> (i32, i32) {
    %c0_i32 = arith.constant 0 : i32
    %c0_i32_0 = arith.constant 0 : i32
    %c0_i32_1 = arith.constant 0 : i32
    return %c0_i32, %c0_i32_0 : i32, i32
  }
  func.func @transform_3(%arg0: i32) -> (i32, i32) {
    %c0_i32 = arith.constant 0 : i32
    %c0_i32_0 = arith.constant 0 : i32
    return %arg0, %c0_i32 : i32, i32
  }
}

module attributes {stable_mosaic.version = 11 : i64} {
  func.func @_gemm_bias_act_kernel(%arg0: i32, %arg1: memref<32x2304xbf16, #tpu.memory_space<vmem>>, %arg2: memref<2304x128xbf16, #tpu.memory_space<vmem>>, %arg3: memref<1x128xf32, #tpu.memory_space<vmem>>, %arg4: memref<32x128xbf16, #tpu.memory_space<vmem>>) attributes {dimension_semantics = [#tpu.dimension_semantics<parallel>], iteration_bounds = array<i64: 1>, scalar_prefetch = 0 : i64, scratch_operands = 0 : i64, tpu.core_type = #tpu.core_type<tc>, window_params = [{transform_indices = @transform_0, window_bounds = array<i64: 32, 2304>}, {pipeline_mode = #tpu.pipeline_mode<synchronous>, transform_indices = @transform_1, window_bounds = array<i64: 2304, 128>}, {pipeline_mode = #tpu.pipeline_mode<synchronous>, transform_indices = @transform_2, window_bounds = array<i64: 1, 128>}, {transform_indices = @transform_3, window_bounds = array<i64: 32, 128>}]} {
    %c0 = arith.constant 0 : index
    %c0_0 = arith.constant 0 : index
    %0 = vector.load %arg1[%c0, %c0_0] : memref<32x2304xbf16, #tpu.memory_space<vmem>>, vector<32x2304xbf16>
    %c0_1 = arith.constant 0 : index
    %c0_2 = arith.constant 0 : index
    %1 = vector.load %arg2[%c0_1, %c0_2] : memref<2304x128xbf16, #tpu.memory_space<vmem>>, vector<2304x128xbf16>
    %cst = arith.constant dense<0.000000e+00> : vector<32x128xf32>
    %2 = tpu.matmul %0, %1, %cst {dimension_numbers = #tpu.dot_dimension_numbers<[1], [0], [0], [1], [0, 0, 1, 1], [], []>} : vector<32x2304xbf16>, vector<2304x128xbf16>, vector<32x128xf32> -> vector<32x128xf32>
    %c0_3 = arith.constant 0 : index
    %c0_4 = arith.constant 0 : index
    %3 = vector.load %arg3[%c0_3, %c0_4] : memref<1x128xf32, #tpu.memory_space<vmem>>, vector<1x128xf32>
    %4 = vector.broadcast %3 : vector<1x128xf32> to vector<32x128xf32>
    %5 = arith.addf %2, %4 : vector<32x128xf32>
    %cst_5 = arith.constant 0.000000e+00 : f32
    %6 = vector.broadcast %cst_5 : f32 to vector<32x128xf32>
    %7 = arith.maximumf %5, %6 : vector<32x128xf32>
    %8 = arith.truncf %7 : vector<32x128xf32> to vector<32x128xbf16>
    %c0_6 = arith.constant 0 : index
    %c0_7 = arith.constant 0 : index
    %9 = vector.load %arg4[%c0_6, %c0_7] : memref<32x128xbf16, #tpu.memory_space<vmem>>, vector<32x128xbf16>
    tpu.vector_store %arg4[%c0_6, %c0_7], %8 {strides = array<i32>} : memref<32x128xbf16, #tpu.memory_space<vmem>>, vector<32x128xbf16>,
    return
  }
  func.func @transform_0(%arg0: i32) -> (i32, i32) {
    %c0_i32 = arith.constant 0 : i32
    %c0_i32_0 = arith.constant 0 : i32
    return %arg0, %c0_i32 : i32, i32
  }
  func.func @transform_1(%arg0: i32) -> (i32, i32) {
    %c0_i32 = arith.constant 0 : i32
    %c0_i32_0 = arith.constant 0 : i32
    %c0_i32_1 = arith.constant 0 : i32
    return %c0_i32, %c0_i32_0 : i32, i32
  }
  func.func @transform_2(%arg0: i32) -> (i32, i32) {
    %c0_i32 = arith.constant 0 : i32
    %c0_i32_0 = arith.constant 0 : i32
    %c0_i32_1 = arith.constant 0 : i32
    return %c0_i32, %c0_i32_0 : i32, i32
  }
  func.func @transform_3(%arg0: i32) -> (i32, i32) {
    %c0_i32 = arith.constant 0 : i32
    %c0_i32_0 = arith.constant 0 : i32
    return %arg0, %c0_i32 : i32, i32
  }
}

module attributes {stable_mosaic.version = 11 : i64} {
  func.func @_gemm_bias_act_kernel(%arg0: i32, %arg1: memref<8x1152xbf16, #tpu.memory_space<vmem>>, %arg2: memref<1152x64xbf16, #tpu.memory_space<vmem>>, %arg3: memref<1x64xf32, #tpu.memory_space<vmem>>, %arg4: memref<8x64xbf16, #tpu.memory_space<vmem>>) attributes {dimension_semantics = [#tpu.dimension_semantics<parallel>], iteration_bounds = array<i64: 1>, scalar_prefetch = 0 : i64, scratch_operands = 0 : i64, tpu.core_type = #tpu.core_type<tc>, window_params = [{transform_indices = @transform_0, window_bounds = array<i64: 8, 1152>}, {pipeline_mode = #tpu.pipeline_mode<synchronous>, transform_indices = @transform_1, window_bounds = array<i64: 1152, 64>}, {pipeline_mode = #tpu.pipeline_mode<synchronous>, transform_indices = @transform_2, window_bounds = array<i64: 1, 64>}, {transform_indices = @transform_3, window_bounds = array<i64: 8, 64>}]} {
    %c0 = arith.constant 0 : index
    %c0_0 = arith.constant 0 : index
    %0 = vector.load %arg1[%c0, %c0_0] : memref<8x1152xbf16, #tpu.memory_space<vmem>>, vector<8x1152xbf16>
    %c0_1 = arith.constant 0 : index
    %c0_2 = arith.constant 0 : index
    %1 = vector.load %arg2[%c0_1, %c0_2] : memref<1152x64xbf16, #tpu.memory_space<vmem>>, vector<1152x64xbf16>
    %cst = arith.constant dense<0.000000e+00> : vector<8x64xf32>
    %2 = tpu.matmul %0, %1, %cst {dimension_numbers = #tpu.dot_dimension_numbers<[1], [0], [0], [1], [0, 0, 1, 1], [], []>} : vector<8x1152xbf16>, vector<1152x64xbf16>, vector<8x64xf32> -> vector<8x64xf32>
    %c0_3 = arith.constant 0 : index
    %c0_4 = arith.constant 0 : index
    %3 = vector.load %arg3[%c0_3, %c0_4] : memref<1x64xf32, #tpu.memory_space<vmem>>, vector<1x64xf32>
    %4 = vector.broadcast %3 : vector<1x64xf32> to vector<8x64xf32>
    %5 = arith.addf %2, %4 : vector<8x64xf32>
    %cst_5 = arith.constant 0.000000e+00 : f32
    %6 = vector.broadcast %cst_5 : f32 to vector<8x64xf32>
    %7 = arith.maximumf %5, %6 : vector<8x64xf32>
    %8 = arith.truncf %7 : vector<8x64xf32> to vector<8x64xbf16>
    %c0_6 = arith.constant 0 : index
    %c0_7 = arith.constant 0 : index
    %9 = vector.load %arg4[%c0_6, %c0_7] : memref<8x64xbf16, #tpu.memory_space<vmem>>, vector<8x64xbf16>
    tpu.vector_store %arg4[%c0_6, %c0_7], %8 {strides = array<i32>} : memref<8x64xbf16, #tpu.memory_space<vmem>>, vector<8x64xbf16>,
    return
  }
  func.func @transform_0(%arg0: i32) -> (i32, i32) {
    %c0_i32 = arith.constant 0 : i32
    %c0_i32_0 = arith.constant 0 : i32
    return %arg0, %c0_i32 : i32, i32
  }
  func.func @transform_1(%arg0: i32) -> (i32, i32) {
    %c0_i32 = arith.constant 0 : i32
    %c0_i32_0 = arith.constant 0 : i32
    %c0_i32_1 = arith.constant 0 : i32
    return %c0_i32, %c0_i32_0 : i32, i32
  }
  func.func @transform_2(%arg0: i32) -> (i32, i32) {
    %c0_i32 = arith.constant 0 : i32
    %c0_i32_0 = arith.constant 0 : i32
    %c0_i32_1 = arith.constant 0 : i32
    return %c0_i32, %c0_i32_0 : i32, i32
  }
  func.func @transform_3(%arg0: i32) -> (i32, i32) {
    %c0_i32 = arith.constant 0 : i32
    %c0_i32_0 = arith.constant 0 : i32
    return %arg0, %c0_i32 : i32, i32
  }
}

module attributes {stable_mosaic.version = 11 : i64} {
  func.func @_gemm_bias_act_kernel(%arg0: i32, %arg1: memref<2x576xbf16, #tpu.memory_space<vmem>>, %arg2: memref<576x8xbf16, #tpu.memory_space<vmem>>, %arg3: memref<1x8xf32, #tpu.memory_space<vmem>>, %arg4: memref<2x8xf32, #tpu.memory_space<vmem>>) attributes {dimension_semantics = [#tpu.dimension_semantics<parallel>], iteration_bounds = array<i64: 1>, scalar_prefetch = 0 : i64, scratch_operands = 0 : i64, tpu.core_type = #tpu.core_type<tc>, window_params = [{transform_indices = @transform_0, window_bounds = array<i64: 2, 576>}, {pipeline_mode = #tpu.pipeline_mode<synchronous>, transform_indices = @transform_1, window_bounds = array<i64: 576, 8>}, {pipeline_mode = #tpu.pipeline_mode<synchronous>, transform_indices = @transform_2, window_bounds = array<i64: 1, 8>}, {transform_indices = @transform_3, window_bounds = array<i64: 2, 8>}]} {
    %c0 = arith.constant 0 : index
    %c0_0 = arith.constant 0 : index
    %0 = vector.load %arg1[%c0, %c0_0] : memref<2x576xbf16, #tpu.memory_space<vmem>>, vector<2x576xbf16>
    %c0_1 = arith.constant 0 : index
    %c0_2 = arith.constant 0 : index
    %1 = vector.load %arg2[%c0_1, %c0_2] : memref<576x8xbf16, #tpu.memory_space<vmem>>, vector<576x8xbf16>
    %cst = arith.constant dense<0.000000e+00> : vector<2x8xf32>
    %2 = tpu.matmul %0, %1, %cst {dimension_numbers = #tpu.dot_dimension_numbers<[1], [0], [0], [1], [0, 0, 1, 1], [], []>} : vector<2x576xbf16>, vector<576x8xbf16>, vector<2x8xf32> -> vector<2x8xf32>
    %c0_3 = arith.constant 0 : index
    %c0_4 = arith.constant 0 : index
    %3 = vector.load %arg3[%c0_3, %c0_4] : memref<1x8xf32, #tpu.memory_space<vmem>>, vector<1x8xf32>
    %4 = vector.broadcast %3 : vector<1x8xf32> to vector<2x8xf32>
    %5 = arith.addf %2, %4 : vector<2x8xf32>
    %c0_5 = arith.constant 0 : index
    %c0_6 = arith.constant 0 : index
    %6 = vector.load %arg4[%c0_5, %c0_6] : memref<2x8xf32, #tpu.memory_space<vmem>>, vector<2x8xf32>
    tpu.vector_store %arg4[%c0_5, %c0_6], %5 {strides = array<i32>} : memref<2x8xf32, #tpu.memory_space<vmem>>, vector<2x8xf32>,
    return
  }
  func.func @transform_0(%arg0: i32) -> (i32, i32) {
    %c0_i32 = arith.constant 0 : i32
    %c0_i32_0 = arith.constant 0 : i32
    return %arg0, %c0_i32 : i32, i32
  }
  func.func @transform_1(%arg0: i32) -> (i32, i32) {
    %c0_i32 = arith.constant 0 : i32
    %c0_i32_0 = arith.constant 0 : i32
    %c0_i32_1 = arith.constant 0 : i32
    return %c0_i32, %c0_i32_0 : i32, i32
  }
  func.func @transform_2(%arg0: i32) -> (i32, i32) {
    %c0_i32 = arith.constant 0 : i32
    %c0_i32_0 = arith.constant 0 : i32
    %c0_i32_1 = arith.constant 0 : i32
    return %c0_i32, %c0_i32_0 : i32, i32
  }
  func.func @transform_3(%arg0: i32) -> (i32, i32) {
    %c0_i32 = arith.constant 0 : i32
    %c0_i32_0 = arith.constant 0 : i32
    return %arg0, %c0_i32 : i32, i32
  }
}

module attributes {stable_mosaic.version = 11 : i64} {
  func.func @_gemm_bias_act_kernel(%arg0: i32, %arg1: memref<2x32xbf16, #tpu.memory_space<vmem>>, %arg2: memref<32x256xbf16, #tpu.memory_space<vmem>>, %arg3: memref<1x256xf32, #tpu.memory_space<vmem>>, %arg4: memref<2x256xbf16, #tpu.memory_space<vmem>>) attributes {dimension_semantics = [#tpu.dimension_semantics<parallel>], iteration_bounds = array<i64: 1>, scalar_prefetch = 0 : i64, scratch_operands = 0 : i64, tpu.core_type = #tpu.core_type<tc>, window_params = [{transform_indices = @transform_0, window_bounds = array<i64: 2, 32>}, {pipeline_mode = #tpu.pipeline_mode<synchronous>, transform_indices = @transform_1, window_bounds = array<i64: 32, 256>}, {pipeline_mode = #tpu.pipeline_mode<synchronous>, transform_indices = @transform_2, window_bounds = array<i64: 1, 256>}, {transform_indices = @transform_3, window_bounds = array<i64: 2, 256>}]} {
    %c0 = arith.constant 0 : index
    %c0_0 = arith.constant 0 : index
    %0 = vector.load %arg1[%c0, %c0_0] : memref<2x32xbf16, #tpu.memory_space<vmem>>, vector<2x32xbf16>
    %c0_1 = arith.constant 0 : index
    %c0_2 = arith.constant 0 : index
    %1 = vector.load %arg2[%c0_1, %c0_2] : memref<32x256xbf16, #tpu.memory_space<vmem>>, vector<32x256xbf16>
    %cst = arith.constant dense<0.000000e+00> : vector<2x256xf32>
    %2 = tpu.matmul %0, %1, %cst {dimension_numbers = #tpu.dot_dimension_numbers<[1], [0], [0], [1], [0, 0, 1, 1], [], []>} : vector<2x32xbf16>, vector<32x256xbf16>, vector<2x256xf32> -> vector<2x256xf32>
    %c0_3 = arith.constant 0 : index
    %c0_4 = arith.constant 0 : index
    %3 = vector.load %arg3[%c0_3, %c0_4] : memref<1x256xf32, #tpu.memory_space<vmem>>, vector<1x256xf32>
    %4 = vector.broadcast %3 : vector<1x256xf32> to vector<2x256xf32>
    %5 = arith.addf %2, %4 : vector<2x256xf32>
    %cst_5 = arith.constant 0.000000e+00 : f32
    %6 = vector.broadcast %cst_5 : f32 to vector<2x256xf32>
    %7 = arith.maximumf %5, %6 : vector<2x256xf32>
    %8 = arith.truncf %7 : vector<2x256xf32> to vector<2x256xbf16>
    %c0_6 = arith.constant 0 : index
    %c0_7 = arith.constant 0 : index
    %9 = vector.load %arg4[%c0_6, %c0_7] : memref<2x256xbf16, #tpu.memory_space<vmem>>, vector<2x256xbf16>
    tpu.vector_store %arg4[%c0_6, %c0_7], %8 {strides = array<i32>} : memref<2x256xbf16, #tpu.memory_space<vmem>>, vector<2x256xbf16>,
    return
  }
  func.func @transform_0(%arg0: i32) -> (i32, i32) {
    %c0_i32 = arith.constant 0 : i32
    %c0_i32_0 = arith.constant 0 : i32
    return %arg0, %c0_i32 : i32, i32
  }
  func.func @transform_1(%arg0: i32) -> (i32, i32) {
    %c0_i32 = arith.constant 0 : i32
    %c0_i32_0 = arith.constant 0 : i32
    %c0_i32_1 = arith.constant 0 : i32
    return %c0_i32, %c0_i32_0 : i32, i32
  }
  func.func @transform_2(%arg0: i32) -> (i32, i32) {
    %c0_i32 = arith.constant 0 : i32
    %c0_i32_0 = arith.constant 0 : i32
    %c0_i32_1 = arith.constant 0 : i32
    return %c0_i32, %c0_i32_0 : i32, i32
  }
  func.func @transform_3(%arg0: i32) -> (i32, i32) {
    %c0_i32 = arith.constant 0 : i32
    %c0_i32_0 = arith.constant 0 : i32
    return %arg0, %c0_i32 : i32, i32
  }
}

module attributes {stable_mosaic.version = 11 : i64} {
  func.func @_gemm_bias_act_kernel(%arg0: i32, %arg1: memref<32x512xbf16, #tpu.memory_space<vmem>>, %arg2: memref<512x1024xbf16, #tpu.memory_space<vmem>>, %arg3: memref<1x1024xf32, #tpu.memory_space<vmem>>, %arg4: memref<32x1024xbf16, #tpu.memory_space<vmem>>) attributes {dimension_semantics = [#tpu.dimension_semantics<parallel>], iteration_bounds = array<i64: 1>, scalar_prefetch = 0 : i64, scratch_operands = 0 : i64, tpu.core_type = #tpu.core_type<tc>, window_params = [{transform_indices = @transform_0, window_bounds = array<i64: 32, 512>}, {pipeline_mode = #tpu.pipeline_mode<synchronous>, transform_indices = @transform_1, window_bounds = array<i64: 512, 1024>}, {pipeline_mode = #tpu.pipeline_mode<synchronous>, transform_indices = @transform_2, window_bounds = array<i64: 1, 1024>}, {transform_indices = @transform_3, window_bounds = array<i64: 32, 1024>}]} {
    %c0 = arith.constant 0 : index
    %c0_0 = arith.constant 0 : index
    %0 = vector.load %arg1[%c0, %c0_0] : memref<32x512xbf16, #tpu.memory_space<vmem>>, vector<32x512xbf16>
    %c0_1 = arith.constant 0 : index
    %c0_2 = arith.constant 0 : index
    %1 = vector.load %arg2[%c0_1, %c0_2] : memref<512x1024xbf16, #tpu.memory_space<vmem>>, vector<512x1024xbf16>
    %cst = arith.constant dense<0.000000e+00> : vector<32x1024xf32>
    %2 = tpu.matmul %0, %1, %cst {dimension_numbers = #tpu.dot_dimension_numbers<[1], [0], [0], [1], [0, 0, 1, 1], [], []>} : vector<32x512xbf16>, vector<512x1024xbf16>, vector<32x1024xf32> -> vector<32x1024xf32>
    %c0_3 = arith.constant 0 : index
    %c0_4 = arith.constant 0 : index
    %3 = vector.load %arg3[%c0_3, %c0_4] : memref<1x1024xf32, #tpu.memory_space<vmem>>, vector<1x1024xf32>
    %4 = vector.broadcast %3 : vector<1x1024xf32> to vector<32x1024xf32>
    %5 = arith.addf %2, %4 : vector<32x1024xf32>
    %cst_5 = arith.constant 0.000000e+00 : f32
    %6 = vector.broadcast %cst_5 : f32 to vector<32x1024xf32>
    %7 = arith.maximumf %5, %6 : vector<32x1024xf32>
    %8 = arith.truncf %7 : vector<32x1024xf32> to vector<32x1024xbf16>
    %c0_6 = arith.constant 0 : index
    %c0_7 = arith.constant 0 : index
    %9 = vector.load %arg4[%c0_6, %c0_7] : memref<32x1024xbf16, #tpu.memory_space<vmem>>, vector<32x1024xbf16>
    tpu.vector_store %arg4[%c0_6, %c0_7], %8 {strides = array<i32>} : memref<32x1024xbf16, #tpu.memory_space<vmem>>, vector<32x1024xbf16>,
    return
  }
  func.func @transform_0(%arg0: i32) -> (i32, i32) {
    %c0_i32 = arith.constant 0 : i32
    %c0_i32_0 = arith.constant 0 : i32
    return %arg0, %c0_i32 : i32, i32
  }
  func.func @transform_1(%arg0: i32) -> (i32, i32) {
    %c0_i32 = arith.constant 0 : i32
    %c0_i32_0 = arith.constant 0 : i32
    %c0_i32_1 = arith.constant 0 : i32
    return %c0_i32, %c0_i32_0 : i32, i32
  }
  func.func @transform_2(%arg0: i32) -> (i32, i32) {
    %c0_i32 = arith.constant 0 : i32
    %c0_i32_0 = arith.constant 0 : i32
    %c0_i32_1 = arith.constant 0 : i32
    return %c0_i32, %c0_i32_0 : i32, i32
  }
  func.func @transform_3(%arg0: i32) -> (i32, i32) {
    %c0_i32 = arith.constant 0 : i32
    %c0_i32_0 = arith.constant 0 : i32
    return %arg0, %c0_i32 : i32, i32
  }
}

module attributes {stable_mosaic.version = 11 : i64} {
  func.func @_gemm_bias_act_kernel(%arg0: i32, %arg1: memref<8x256xbf16, #tpu.memory_space<vmem>>, %arg2: memref<256x512xbf16, #tpu.memory_space<vmem>>, %arg3: memref<1x512xf32, #tpu.memory_space<vmem>>, %arg4: memref<8x512xbf16, #tpu.memory_space<vmem>>) attributes {dimension_semantics = [#tpu.dimension_semantics<parallel>], iteration_bounds = array<i64: 1>, scalar_prefetch = 0 : i64, scratch_operands = 0 : i64, tpu.core_type = #tpu.core_type<tc>, window_params = [{transform_indices = @transform_0, window_bounds = array<i64: 8, 256>}, {pipeline_mode = #tpu.pipeline_mode<synchronous>, transform_indices = @transform_1, window_bounds = array<i64: 256, 512>}, {pipeline_mode = #tpu.pipeline_mode<synchronous>, transform_indices = @transform_2, window_bounds = array<i64: 1, 512>}, {transform_indices = @transform_3, window_bounds = array<i64: 8, 512>}]} {
    %c0 = arith.constant 0 : index
    %c0_0 = arith.constant 0 : index
    %0 = vector.load %arg1[%c0, %c0_0] : memref<8x256xbf16, #tpu.memory_space<vmem>>, vector<8x256xbf16>
    %c0_1 = arith.constant 0 : index
    %c0_2 = arith.constant 0 : index
    %1 = vector.load %arg2[%c0_1, %c0_2] : memref<256x512xbf16, #tpu.memory_space<vmem>>, vector<256x512xbf16>
    %cst = arith.constant dense<0.000000e+00> : vector<8x512xf32>
    %2 = tpu.matmul %0, %1, %cst {dimension_numbers = #tpu.dot_dimension_numbers<[1], [0], [0], [1], [0, 0, 1, 1], [], []>} : vector<8x256xbf16>, vector<256x512xbf16>, vector<8x512xf32> -> vector<8x512xf32>
    %c0_3 = arith.constant 0 : index
    %c0_4 = arith.constant 0 : index
    %3 = vector.load %arg3[%c0_3, %c0_4] : memref<1x512xf32, #tpu.memory_space<vmem>>, vector<1x512xf32>
    %4 = vector.broadcast %3 : vector<1x512xf32> to vector<8x512xf32>
    %5 = arith.addf %2, %4 : vector<8x512xf32>
    %cst_5 = arith.constant 0.000000e+00 : f32
    %6 = vector.broadcast %cst_5 : f32 to vector<8x512xf32>
    %7 = arith.maximumf %5, %6 : vector<8x512xf32>
    %8 = arith.truncf %7 : vector<8x512xf32> to vector<8x512xbf16>
    %c0_6 = arith.constant 0 : index
    %c0_7 = arith.constant 0 : index
    %9 = vector.load %arg4[%c0_6, %c0_7] : memref<8x512xbf16, #tpu.memory_space<vmem>>, vector<8x512xbf16>
    tpu.vector_store %arg4[%c0_6, %c0_7], %8 {strides = array<i32>} : memref<8x512xbf16, #tpu.memory_space<vmem>>, vector<8x512xbf16>,
    return
  }
  func.func @transform_0(%arg0: i32) -> (i32, i32) {
    %c0_i32 = arith.constant 0 : i32
    %c0_i32_0 = arith.constant 0 : i32
    return %arg0, %c0_i32 : i32, i32
  }
  func.func @transform_1(%arg0: i32) -> (i32, i32) {
    %c0_i32 = arith.constant 0 : i32
    %c0_i32_0 = arith.constant 0 : i32
    %c0_i32_1 = arith.constant 0 : i32
    return %c0_i32, %c0_i32_0 : i32, i32
  }
  func.func @transform_2(%arg0: i32) -> (i32, i32) {
    %c0_i32 = arith.constant 0 : i32
    %c0_i32_0 = arith.constant 0 : i32
    %c0_i32_1 = arith.constant 0 : i32
    return %c0_i32, %c0_i32_0 : i32, i32
  }
  func.func @transform_3(%arg0: i32) -> (i32, i32) {
    %c0_i32 = arith.constant 0 : i32
    %c0_i32_0 = arith.constant 0 : i32
    return %arg0, %c0_i32 : i32, i32
  }
}

module attributes {stable_mosaic.version = 11 : i64} {
  func.func @_gemm_bias_act_kernel(%arg0: i32, %arg1: memref<128x1024xbf16, #tpu.memory_space<vmem>>, %arg2: memref<1024x16xbf16, #tpu.memory_space<vmem>>, %arg3: memref<1x16xf32, #tpu.memory_space<vmem>>, %arg4: memref<128x16xf32, #tpu.memory_space<vmem>>) attributes {dimension_semantics = [#tpu.dimension_semantics<parallel>], iteration_bounds = array<i64: 1>, scalar_prefetch = 0 : i64, scratch_operands = 0 : i64, tpu.core_type = #tpu.core_type<tc>, window_params = [{transform_indices = @transform_0, window_bounds = array<i64: 128, 1024>}, {pipeline_mode = #tpu.pipeline_mode<synchronous>, transform_indices = @transform_1, window_bounds = array<i64: 1024, 16>}, {pipeline_mode = #tpu.pipeline_mode<synchronous>, transform_indices = @transform_2, window_bounds = array<i64: 1, 16>}, {transform_indices = @transform_3, window_bounds = array<i64: 128, 16>}]} {
    %c0 = arith.constant 0 : index
    %c0_0 = arith.constant 0 : index
    %0 = vector.load %arg1[%c0, %c0_0] : memref<128x1024xbf16, #tpu.memory_space<vmem>>, vector<128x1024xbf16>
    %c0_1 = arith.constant 0 : index
    %c0_2 = arith.constant 0 : index
    %1 = vector.load %arg2[%c0_1, %c0_2] : memref<1024x16xbf16, #tpu.memory_space<vmem>>, vector<1024x16xbf16>
    %cst = arith.constant dense<0.000000e+00> : vector<128x16xf32>
    %2 = tpu.matmul %0, %1, %cst {dimension_numbers = #tpu.dot_dimension_numbers<[1], [0], [0], [1], [0, 0, 1, 1], [], []>} : vector<128x1024xbf16>, vector<1024x16xbf16>, vector<128x16xf32> -> vector<128x16xf32>
    %c0_3 = arith.constant 0 : index
    %c0_4 = arith.constant 0 : index
    %3 = vector.load %arg3[%c0_3, %c0_4] : memref<1x16xf32, #tpu.memory_space<vmem>>, vector<1x16xf32>
    %4 = vector.broadcast %3 : vector<1x16xf32> to vector<128x16xf32>
    %5 = arith.addf %2, %4 : vector<128x16xf32>
    %c0_5 = arith.constant 0 : index
    %c0_6 = arith.constant 0 : index
    %6 = vector.load %arg4[%c0_5, %c0_6] : memref<128x16xf32, #tpu.memory_space<vmem>>, vector<128x16xf32>
    tpu.vector_store %arg4[%c0_5, %c0_6], %5 {strides = array<i32>} : memref<128x16xf32, #tpu.memory_space<vmem>>, vector<128x16xf32>,
    return
  }
  func.func @transform_0(%arg0: i32) -> (i32, i32) {
    %c0_i32 = arith.constant 0 : i32
    %c0_i32_0 = arith.constant 0 : i32
    return %arg0, %c0_i32 : i32, i32
  }
  func.func @transform_1(%arg0: i32) -> (i32, i32) {
    %c0_i32 = arith.constant 0 : i32
    %c0_i32_0 = arith.constant 0 : i32
    %c0_i32_1 = arith.constant 0 : i32
    return %c0_i32, %c0_i32_0 : i32, i32
  }
  func.func @transform_2(%arg0: i32) -> (i32, i32) {
    %c0_i32 = arith.constant 0 : i32
    %c0_i32_0 = arith.constant 0 : i32
    %c0_i32_1 = arith.constant 0 : i32
    return %c0_i32, %c0_i32_0 : i32, i32
  }
  func.func @transform_3(%arg0: i32) -> (i32, i32) {
    %c0_i32 = arith.constant 0 : i32
    %c0_i32_0 = arith.constant 0 : i32
    return %arg0, %c0_i32 : i32, i32
  }
}

</mosaic_0001>

<llo_original>
// kernel: autoencoder_forward.8
$region0: #{autoencoder_forward.8}
  #allocation0 [shape = 'u32[]', space=smem, size = 0x4, offset = 0x4, fixed_abs, tag = 'smem constant byte address 0x4 - core index']
  #allocation1 [shape = 'u32[72,128]{1,0:T(1,128)}', space=vmem, size = 0x9000, scoped, tag = 'internal scratch']
  %s0 = inlined_call_operand.vmem [shape: bf16[128,36], index: 0, kind: input, shape index: {}]
  %s1 = inlined_call_operand.vmem [shape: bf16[36,256], index: 1, kind: input, shape index: {}]
  %s2 = inlined_call_operand.vmem [shape: f32[1,256], index: 2, kind: input, shape index: {}]
  %s3 = inlined_call_operand.vmem [shape: bf16[128,256], index: 3, kind: output, shape index: {}]
  %s4 = sld [smem:[#allocation0]]
  $region22: #{autoencoder_forward.8} parent=0
    _
  %s6 = ssub.s32 1, %s4
  %s7 = scalar_select 0, %s6, %s4
  // Predicated region
  $region2: #{autoencoder_forward.8} parent=0 // pred_check
    _
  $region3: #{autoencoder_forward.8} parent=0 // pred_check_branch
    %9 = sbr.rel (0) target = $region5
  $region4: #{autoencoder_forward.8} parent=0 // pred_region
    _
  $region5: #{autoencoder_forward.8} parent=0 // pred_fallthru
    _
  // Predicated region
  $region6: #{autoencoder_forward.8} parent=0 // pred_check
    _
  $region7: #{autoencoder_forward.8} parent=0 // pred_check_branch
    %11 = sbr.rel (0) target = $region9
  $region8: #{autoencoder_forward.8} parent=0 // pred_region
    _
  $region9: #{autoencoder_forward.8} parent=0 // pred_fallthru
    _
  // Predicated region
  $region10: #{autoencoder_forward.8} parent=0 // pred_check
    _
  $region11: #{autoencoder_forward.8} parent=0 // pred_check_branch
    %13 = sbr.rel (0) target = $region13
  $region12: #{autoencoder_forward.8} parent=0 // pred_region
    _
  $region13: #{autoencoder_forward.8} parent=0 // pred_fallthru
    _
  %v15 = vld [vmem:[%s0] sm:$0xf]
  %v16 = vld [vmem:[%s0 + $0x4] sm:$0xf]
  %v17 = vld [vmem:[%s0 + $0x8] sm:$0xf]
  %v18 = vld [vmem:[%s0 + $0xc] sm:$0xf]
  %v19 = vld [vmem:[%s0 + $0x10] sm:$0xf]
  %v20 = vld [vmem:[%s0 + $0x14] sm:$0xf]
  %v21 = vld [vmem:[%s0 + $0x18] sm:$0xf]
  %v22 = vld [vmem:[%s0 + $0x1c] sm:$0xf]
  %v23 = vld [vmem:[%s0 + $0x20] sm:$0xf]
  %v24 = vld [vmem:[%s0 + $0x24] sm:$0xf]
  %v25 = vld [vmem:[%s0 + $0x28] sm:$0xf]
  %v26 = vld [vmem:[%s0 + $0x2c] sm:$0xf]
  %v27 = vld [vmem:[%s0 + $0x30] sm:$0xf]
  %v28 = vld [vmem:[%s0 + $0x34] sm:$0xf]
  %v29 = vld [vmem:[%s0 + $0x38] sm:$0xf]
  %v30 = vld [vmem:[%s0 + $0x3c] sm:$0xf]
  %v31 = vld [vmem:[%s1] sm:$0xff]
  %v32 = vld [vmem:[%s1 + $0x8] sm:$0xff]
  %v33 = vld [vmem:[%s1 + $0x10] sm:$0xff]
  %v34 = vld [vmem:[%s1 + $0x18] sm:$0xff]
  %v35 = vld [vmem:[%s1 + $0x20] sm:$0x33]
  %v36 = vld [vmem:[%s2] sm:$0x3]
  %v38 = vperm.slane %v36, 0
  %v39 = vperm.slane %v36, 1
  %v58 = vunpack.c.l.b16 %v15
  %v59 = vunpack.c.l.b16 %v16
  %v60 = vunpack.c.l.b16 %v17
  %v61 = vunpack.c.l.b16 %v18
  %v62 = vunpack.c.l.b16 %v19
  %v63 = vunpack.c.l.b16 %v20
  %v64 = vunpack.c.l.b16 %v21
  %v65 = vunpack.c.l.b16 %v22
  %v66 = vunpack.c.l.b16 %v23
  %v67 = vunpack.c.l.b16 %v24
  %v68 = vunpack.c.l.b16 %v25
  %v69 = vunpack.c.l.b16 %v26
  %v70 = vunpack.c.l.b16 %v27
  %v71 = vunpack.c.l.b16 %v28
  %v72 = vunpack.c.l.b16 %v29
  %v73 = vunpack.c.l.b16 %v30
  %v74 = vpack.c.b16 %v59, %v58
  %v75 = vpack.c.b16 %v61, %v60
  %v76 = vpack.c.b16 %v63, %v62
  %v77 = vpack.c.b16 %v65, %v64
  %v78 = vpack.c.b16 %v67, %v66
  %v79 = vpack.c.b16 %v69, %v68
  %v80 = vpack.c.b16 %v71, %v70
  %v81 = vpack.c.b16 %v73, %v72
  %v87 = vunpack.c.l.b16 %v31
  %v88 = vunpack.c.h.b16 %v31
  %v89 = vunpack.c.l.b16 %v32
  %v90 = vunpack.c.h.b16 %v32
  %v91 = vunpack.c.l.b16 %v33
  %v92 = vunpack.c.h.b16 %v33
  %v93 = vunpack.c.l.b16 %v34
  %v94 = vunpack.c.h.b16 %v34
  %v95 = vunpack.c.l.b16 %v35
  %v96 = vunpack.c.h.b16 %v35
  %v97 = vpack.c.b16 %v89, %v87
  %v98 = vpack.c.b16 %v90, %v88
  %v99 = vpack.c.b16 %v93, %v91
  %v100 = vpack.c.b16 %v94, %v92
  %v101 = vpack.c.b16 %v95, %v95
  %v102 = vpack.c.b16 %v96, %v96
  %vm107 = vcmask 293888
  %v109 = vsel %vm107, %v74, 0
  %v112 = vsel %vm107, %v75, 0
  %v115 = vsel %vm107, %v76, 0
  %v118 = vsel %vm107, %v77, 0
  %v121 = vsel %vm107, %v78, 0
  %v124 = vsel %vm107, %v79, 0
  %v127 = vsel %vm107, %v80, 0
  %v130 = vsel %vm107, %v81, 0
  %vm132 = vcmask 1041408
  %v134 = vsel %vm132, %v101, 0
  %v137 = vsel %vm132, %v102, 0
  %139 = vmatpush.bf16.msra.mxu0 0
  %140 = vmatpush.bf16.msra.mxu0 0
  %141 = vmatpush.bf16.msra.mxu0 0
  %142 = vmatpush.bf16.msra.mxu0 0
  %143 = vmatpush.bf16.msra.mxu0 0
  %144 = vmatpush.bf16.msra.mxu0 %v134
  %145 = vmatpush.bf16.msra.mxu0 %v99
  %146 = vmatpush.bf16.msra.mxu0 %v97
  %147 = vmatmul.bf16.gmra.mxu0 %v109
  %v148 = vpop.f32.mrf.mxu0
  %v149 = vadd.f32 %v38, %v148
  %v150 = vpop.f32.mrf.mxu0
  %v151 = vadd.f32 %v38, %v150
  %152 = vmatmul.bf16.gmra.mxu0 %v112
  %v153 = vpop.f32.mrf.mxu0
  %v154 = vadd.f32 %v38, %v153
  %v155 = vpop.f32.mrf.mxu0
  %v156 = vadd.f32 %v38, %v155
  %157 = vmatmul.bf16.gmra.mxu0 %v115
  %v158 = vpop.f32.mrf.mxu0
  %v159 = vadd.f32 %v38, %v158
  %v160 = vpop.f32.mrf.mxu0
  %v161 = vadd.f32 %v38, %v160
  %162 = vmatmul.bf16.gmra.mxu0 %v118
  %v163 = vpop.f32.mrf.mxu0
  %v164 = vadd.f32 %v38, %v163
  %v165 = vpop.f32.mrf.mxu0
  %v166 = vadd.f32 %v38, %v165
  %167 = vmatmul.bf16.gmra.mxu0 %v121
  %v168 = vpop.f32.mrf.mxu0
  %v169 = vadd.f32 %v38, %v168
  %v170 = vpop.f32.mrf.mxu0
  %v171 = vadd.f32 %v38, %v170
  %172 = vmatmul.bf16.gmra.mxu0 %v124
  %v173 = vpop.f32.mrf.mxu0
  %v174 = vadd.f32 %v38, %v173
  %v175 = vpop.f32.mrf.mxu0
  %v176 = vadd.f32 %v38, %v175
  %177 = vmatmul.bf16.gmra.mxu0 %v127
  %v178 = vpop.f32.mrf.mxu0
  %v179 = vadd.f32 %v38, %v178
  %v180 = vpop.f32.mrf.mxu0
  %v181 = vadd.f32 %v38, %v180
  %182 = vmatmul.bf16.gmra.mxu0 %v130
  %v183 = vpop.f32.mrf.mxu0
  %v184 = vadd.f32 %v38, %v183
  %v185 = vpop.f32.mrf.mxu0
  %v186 = vadd.f32 %v38, %v185
  %187 = vdwg.mxu0
  %188 = vmatpush.bf16.msra.mxu0 0
  %189 = vmatpush.bf16.msra.mxu0 0
  %190 = vmatpush.bf16.msra.mxu0 0
  %191 = vmatpush.bf16.msra.mxu0 0
  %192 = vmatpush.bf16.msra.mxu0 0
  %193 = vmatpush.bf16.msra.mxu0 %v137
  %194 = vmatpush.bf16.msra.mxu0 %v100
  %195 = vmatpush.bf16.msra.mxu0 %v98
  %196 = vmatmul.bf16.gmra.mxu0 %v109
  %v197 = vpop.f32.mrf.mxu0
  %v198 = vadd.f32 %v39, %v197
  %v199 = vpop.f32.mrf.mxu0
  %v200 = vadd.f32 %v39, %v199
  %201 = vmatmul.bf16.gmra.mxu0 %v112
  %v202 = vpop.f32.mrf.mxu0
  %v203 = vadd.f32 %v39, %v202
  %v204 = vpop.f32.mrf.mxu0
  %v205 = vadd.f32 %v39, %v204
  %206 = vmatmul.bf16.gmra.mxu0 %v115
  %v207 = vpop.f32.mrf.mxu0
  %v208 = vadd.f32 %v39, %v207
  %v209 = vpop.f32.mrf.mxu0
  %v210 = vadd.f32 %v39, %v209
  %211 = vmatmul.bf16.gmra.mxu0 %v118
  %v212 = vpop.f32.mrf.mxu0
  %v213 = vadd.f32 %v39, %v212
  %v214 = vpop.f32.mrf.mxu0
  %v215 = vadd.f32 %v39, %v214
  %216 = vmatmul.bf16.gmra.mxu0 %v121
  %v217 = vpop.f32.mrf.mxu0
  %v218 = vadd.f32 %v39, %v217
  %v219 = vpop.f32.mrf.mxu0
  %v220 = vadd.f32 %v39, %v219
  %221 = vmatmul.bf16.gmra.mxu0 %v124
  %v222 = vpop.f32.mrf.mxu0
  %v223 = vadd.f32 %v39, %v222
  %v224 = vpop.f32.mrf.mxu0
  %v225 = vadd.f32 %v39, %v224
  %226 = vmatmul.bf16.gmra.mxu0 %v127
  %v227 = vpop.f32.mrf.mxu0
  %v228 = vadd.f32 %v39, %v227
  %v229 = vpop.f32.mrf.mxu0
  %v230 = vadd.f32 %v39, %v229
  %231 = vmatmul.bf16.gmra.mxu0 %v130
  %v232 = vpop.f32.mrf.mxu0
  %v233 = vadd.f32 %v39, %v232
  %v234 = vpop.f32.mrf.mxu0
  %v235 = vadd.f32 %v39, %v234
  %236 = vdwg.mxu0
  %v237 = vmax.f32 %v149, 0.0
  %v238 = vmax.f32 %v198, 0.0
  %v239 = vmax.f32 %v151, 0.0
  %v240 = vmax.f32 %v200, 0.0
  %v241 = vmax.f32 %v154, 0.0
  %v242 = vmax.f32 %v203, 0.0
  %v243 = vmax.f32 %v156, 0.0
  %v244 = vmax.f32 %v205, 0.0
  %v245 = vmax.f32 %v159, 0.0
  %v246 = vmax.f32 %v208, 0.0
  %v247 = vmax.f32 %v161, 0.0
  %v248 = vmax.f32 %v210, 0.0
  %v249 = vmax.f32 %v164, 0.0
  %v250 = vmax.f32 %v213, 0.0
  %v251 = vmax.f32 %v166, 0.0
  %v252 = vmax.f32 %v215, 0.0
  %v253 = vmax.f32 %v169, 0.0
  %v254 = vmax.f32 %v218, 0.0
  %v255 = vmax.f32 %v171, 0.0
  %v256 = vmax.f32 %v220, 0.0
  %v257 = vmax.f32 %v174, 0.0
  %v258 = vmax.f32 %v223, 0.0
  %v259 = vmax.f32 %v176, 0.0
  %v260 = vmax.f32 %v225, 0.0
  %v261 = vmax.f32 %v179, 0.0
  %v262 = vmax.f32 %v228, 0.0
  %v263 = vmax.f32 %v181, 0.0
  %v264 = vmax.f32 %v230, 0.0
  %v265 = vmax.f32 %v184, 0.0
  %v266 = vmax.f32 %v233, 0.0
  %v267 = vmax.f32 %v186, 0.0
  %v268 = vmax.f32 %v235, 0.0
  %v269 = vpack.c.bf16 %v238, %v237
  %v270 = vpack.c.bf16 %v240, %v239
  %v271 = vpack.c.bf16 %v242, %v241
  %v272 = vpack.c.bf16 %v244, %v243
  %v273 = vpack.c.bf16 %v246, %v245
  %v274 = vpack.c.bf16 %v248, %v247
  %v275 = vpack.c.bf16 %v250, %v249
  %v276 = vpack.c.bf16 %v252, %v251
  %v277 = vpack.c.bf16 %v254, %v253
  %v278 = vpack.c.bf16 %v256, %v255
  %v279 = vpack.c.bf16 %v258, %v257
  %v280 = vpack.c.bf16 %v260, %v259
  %v281 = vpack.c.bf16 %v262, %v261
  %v282 = vpack.c.bf16 %v264, %v263
  %v283 = vpack.c.bf16 %v266, %v265
  %v284 = vpack.c.bf16 %v268, %v267
  %285 = vst [vmem:[%s3] sm:$0xff] %v269
  %286 = vst [vmem:[%s3 + $0x8] sm:$0xff] %v270
  %287 = vst [vmem:[%s3 + $0x10] sm:$0xff] %v271
  %288 = vst [vmem:[%s3 + $0x18] sm:$0xff] %v272
  %289 = vst [vmem:[%s3 + $0x20] sm:$0xff] %v273
  %290 = vst [vmem:[%s3 + $0x28] sm:$0xff] %v274
  %291 = vst [vmem:[%s3 + $0x30] sm:$0xff] %v275
  %292 = vst [vmem:[%s3 + $0x38] sm:$0xff] %v276
  %293 = vst [vmem:[%s3 + $0x40] sm:$0xff] %v277
  %294 = vst [vmem:[%s3 + $0x48] sm:$0xff] %v278
  %295 = vst [vmem:[%s3 + $0x50] sm:$0xff] %v279
  %296 = vst [vmem:[%s3 + $0x58] sm:$0xff] %v280
  %297 = vst [vmem:[%s3 + $0x60] sm:$0xff] %v281
  %298 = vst [vmem:[%s3 + $0x68] sm:$0xff] %v282
  %299 = vst [vmem:[%s3 + $0x70] sm:$0xff] %v283
  %300 = vst [vmem:[%s3 + $0x78] sm:$0xff] %v284
  // Predicated region
  $region14: #{autoencoder_forward.8} parent=0 // pred_check
    _
  $region15: #{autoencoder_forward.8} parent=0 // pred_check_branch
    %302 = sbr.rel (0) target = $region17
  $region16: #{autoencoder_forward.8} parent=0 // pred_region
    _
  $region17: #{autoencoder_forward.8} parent=0 // pred_fallthru
    _
  // Predicated region
  $region18: #{autoencoder_forward.8} parent=0 // pred_check
    _
  $region19: #{autoencoder_forward.8} parent=0 // pred_check_branch
    %304 = sbr.rel (0) target = $region21
  $region20: #{autoencoder_forward.8} parent=0 // pred_region
    _
  $region21: #{autoencoder_forward.8} parent=0 // pred_fallthru
    _

// kernel: autoencoder_forward.10
$region0: #{autoencoder_forward.10}
  #allocation0 [shape = 'u32[]', space=smem, size = 0x4, offset = 0x4, fixed_abs, tag = 'smem constant byte address 0x4 - core index']
  #allocation1 [shape = 'u32[72,128]{1,0:T(1,128)}', space=vmem, size = 0x9000, scoped, tag = 'internal scratch']
  %s0 = inlined_call_operand.vmem [shape: bf16[8,1152], index: 0, kind: input, shape index: {}]
  %s1 = inlined_call_operand.vmem [shape: bf16[1152,64], index: 1, kind: input, shape index: {}]
  %s2 = inlined_call_operand.vmem [shape: f32[1,64], index: 2, kind: input, shape index: {}]
  %s3 = inlined_call_operand.vmem [shape: bf16[8,64], index: 3, kind: output, shape index: {}]
  %s4 = sld [smem:[#allocation0]]
  $region22: #{autoencoder_forward.10} parent=0
    _
  %s6 = ssub.s32 1, %s4
  %s7 = scalar_select 0, %s6, %s4
  // Predicated region
  $region2: #{autoencoder_forward.10} parent=0 // pred_check
    _
  $region3: #{autoencoder_forward.10} parent=0 // pred_check_branch
    %9 = sbr.rel (0) target = $region5
  $region4: #{autoencoder_forward.10} parent=0 // pred_region
    _
  $region5: #{autoencoder_forward.10} parent=0 // pred_fallthru
    _
  // Predicated region
  $region6: #{autoencoder_forward.10} parent=0 // pred_check
    _
  $region7: #{autoencoder_forward.10} parent=0 // pred_check_branch
    %11 = sbr.rel (0) target = $region9
  $region8: #{autoencoder_forward.10} parent=0 // pred_region
    _
  $region9: #{autoencoder_forward.10} parent=0 // pred_fallthru
    _
  // Predicated region
  $region10: #{autoencoder_forward.10} parent=0 // pred_check
    _
  $region11: #{autoencoder_forward.10} parent=0 // pred_check_branch
    %13 = sbr.rel (0) target = $region13
  $region12: #{autoencoder_forward.10} parent=0 // pred_region
    _
  $region13: #{autoencoder_forward.10} parent=0 // pred_fallthru
    _
  %v14 = vld [vmem:[%s0] sm:$0xff]
  %v15 = vld [vmem:[%s0 + $0x8] sm:$0xff]
  %v16 = vld [vmem:[%s0 + $0x10] sm:$0xff]
  %v17 = vld [vmem:[%s0 + $0x18] sm:$0xff]
  %v18 = vld [vmem:[%s0 + $0x20] sm:$0xf]
  %v19 = vld [vmem:[%s1] sm:$0xf]
  %v20 = vld [vmem:[%s1 + $0x4] sm:$0xf]
  %v21 = vld [vmem:[%s1 + $0x8] sm:$0xf]
  %v22 = vld [vmem:[%s1 + $0xc] sm:$0xf]
  %v23 = vld [vmem:[%s1 + $0x10] sm:$0xf]
  %v24 = vld [vmem:[%s1 + $0x14] sm:$0xf]
  %v25 = vld [vmem:[%s1 + $0x18] sm:$0xf]
  %v26 = vld [vmem:[%s1 + $0x1c] sm:$0xf]
  %v27 = vld [vmem:[%s1 + $0x20] sm:$0xf]
  %v28 = vld [vmem:[%s1 + $0x24] sm:$0xf]
  %v29 = vld [vmem:[%s1 + $0x28] sm:$0xf]
  %v30 = vld [vmem:[%s1 + $0x2c] sm:$0xf]
  %v31 = vld [vmem:[%s1 + $0x30] sm:$0xf]
  %v32 = vld [vmem:[%s1 + $0x34] sm:$0xf]
  %v33 = vld [vmem:[%s1 + $0x38] sm:$0xf]
  %v34 = vld [vmem:[%s1 + $0x3c] sm:$0xf]
  %v35 = vld [vmem:[%s1 + $0x40] sm:$0xf]
  %v36 = vld [vmem:[%s1 + $0x44] sm:$0xf]
  %v37 = vld [vmem:[%s1 + $0x48] sm:$0xf]
  %v38 = vld [vmem:[%s1 + $0x4c] sm:$0xf]
  %v39 = vld [vmem:[%s1 + $0x50] sm:$0xf]
  %v40 = vld [vmem:[%s1 + $0x54] sm:$0xf]
  %v41 = vld [vmem:[%s1 + $0x58] sm:$0xf]
  %v42 = vld [vmem:[%s1 + $0x5c] sm:$0xf]
  %v43 = vld [vmem:[%s1 + $0x60] sm:$0xf]
  %v44 = vld [vmem:[%s1 + $0x64] sm:$0xf]
  %v45 = vld [vmem:[%s1 + $0x68] sm:$0xf]
  %v46 = vld [vmem:[%s1 + $0x6c] sm:$0xf]
  %v47 = vld [vmem:[%s1 + $0x70] sm:$0xf]
  %v48 = vld [vmem:[%s1 + $0x74] sm:$0xf]
  %v49 = vld [vmem:[%s1 + $0x78] sm:$0xf]
  %v50 = vld [vmem:[%s1 + $0x7c] sm:$0xf]
  %v51 = vld [vmem:[%s1 + $0x80] sm:$0xf]
  %v52 = vld [vmem:[%s1 + $0x84] sm:$0xf]
  %v53 = vld [vmem:[%s1 + $0x88] sm:$0xf]
  %v54 = vld [vmem:[%s1 + $0x8c] sm:$0xf]
  %v55 = vld [vmem:[%s1 + $0x90] sm:$0xf]
  %v56 = vld [vmem:[%s1 + $0x94] sm:$0xf]
  %v57 = vld [vmem:[%s1 + $0x98] sm:$0xf]
  %v58 = vld [vmem:[%s1 + $0x9c] sm:$0xf]
  %v59 = vld [vmem:[%s1 + $0xa0] sm:$0xf]
  %v60 = vld [vmem:[%s1 + $0xa4] sm:$0xf]
  %v61 = vld [vmem:[%s1 + $0xa8] sm:$0xf]
  %v62 = vld [vmem:[%s1 + $0xac] sm:$0xf]
  %v63 = vld [vmem:[%s1 + $0xb0] sm:$0xf]
  %v64 = vld [vmem:[%s1 + $0xb4] sm:$0xf]
  %v65 = vld [vmem:[%s1 + $0xb8] sm:$0xf]
  %v66 = vld [vmem:[%s1 + $0xbc] sm:$0xf]
  %v67 = vld [vmem:[%s1 + $0xc0] sm:$0xf]
  %v68 = vld [vmem:[%s1 + $0xc4] sm:$0xf]
  %v69 = vld [vmem:[%s1 + $0xc8] sm:$0xf]
  %v70 = vld [vmem:[%s1 + $0xcc] sm:$0xf]
  %v71 = vld [vmem:[%s1 + $0xd0] sm:$0xf]
  %v72 = vld [vmem:[%s1 + $0xd4] sm:$0xf]
  %v73 = vld [vmem:[%s1 + $0xd8] sm:$0xf]
  %v74 = vld [vmem:[%s1 + $0xdc] sm:$0xf]
  %v75 = vld [vmem:[%s1 + $0xe0] sm:$0xf]
  %v76 = vld [vmem:[%s1 + $0xe4] sm:$0xf]
  %v77 = vld [vmem:[%s1 + $0xe8] sm:$0xf]
  %v78 = vld [vmem:[%s1 + $0xec] sm:$0xf]
  %v79 = vld [vmem:[%s1 + $0xf0] sm:$0xf]
  %v80 = vld [vmem:[%s1 + $0xf4] sm:$0xf]
  %v81 = vld [vmem:[%s1 + $0xf8] sm:$0xf]
  %v82 = vld [vmem:[%s1 + $0xfc] sm:$0xf]
  %v83 = vld [vmem:[%s1 + $0x100] sm:$0xf]
  %v84 = vld [vmem:[%s1 + $0x104] sm:$0xf]
  %v85 = vld [vmem:[%s1 + $0x108] sm:$0xf]
  %v86 = vld [vmem:[%s1 + $0x10c] sm:$0xf]
  %v87 = vld [vmem:[%s1 + $0x110] sm:$0xf]
  %v88 = vld [vmem:[%s1 + $0x114] sm:$0xf]
  %v89 = vld [vmem:[%s1 + $0x118] sm:$0xf]
  %v90 = vld [vmem:[%s1 + $0x11c] sm:$0xf]
  %v91 = vld [vmem:[%s1 + $0x120] sm:$0xf]
  %v92 = vld [vmem:[%s1 + $0x124] sm:$0xf]
  %v93 = vld [vmem:[%s1 + $0x128] sm:$0xf]
  %v94 = vld [vmem:[%s1 + $0x12c] sm:$0xf]
  %v95 = vld [vmem:[%s1 + $0x130] sm:$0xf]
  %v96 = vld [vmem:[%s1 + $0x134] sm:$0xf]
  %v97 = vld [vmem:[%s1 + $0x138] sm:$0xf]
  %v98 = vld [vmem:[%s1 + $0x13c] sm:$0xf]
  %v99 = vld [vmem:[%s1 + $0x140] sm:$0xf]
  %v100 = vld [vmem:[%s1 + $0x144] sm:$0xf]
  %v101 = vld [vmem:[%s1 + $0x148] sm:$0xf]
  %v102 = vld [vmem:[%s1 + $0x14c] sm:$0xf]
  %v103 = vld [vmem:[%s1 + $0x150] sm:$0xf]
  %v104 = vld [vmem:[%s1 + $0x154] sm:$0xf]
  %v105 = vld [vmem:[%s1 + $0x158] sm:$0xf]
  %v106 = vld [vmem:[%s1 + $0x15c] sm:$0xf]
  %v107 = vld [vmem:[%s1 + $0x160] sm:$0xf]
  %v108 = vld [vmem:[%s1 + $0x164] sm:$0xf]
  %v109 = vld [vmem:[%s1 + $0x168] sm:$0xf]
  %v110 = vld [vmem:[%s1 + $0x16c] sm:$0xf]
  %v111 = vld [vmem:[%s1 + $0x170] sm:$0xf]
  %v112 = vld [vmem:[%s1 + $0x174] sm:$0xf]
  %v113 = vld [vmem:[%s1 + $0x178] sm:$0xf]
  %v114 = vld [vmem:[%s1 + $0x17c] sm:$0xf]
  %v115 = vld [vmem:[%s1 + $0x180] sm:$0xf]
  %v116 = vld [vmem:[%s1 + $0x184] sm:$0xf]
  %v117 = vld [vmem:[%s1 + $0x188] sm:$0xf]
  %v118 = vld [vmem:[%s1 + $0x18c] sm:$0xf]
  %v119 = vld [vmem:[%s1 + $0x190] sm:$0xf]
  %v120 = vld [vmem:[%s1 + $0x194] sm:$0xf]
  %v121 = vld [vmem:[%s1 + $0x198] sm:$0xf]
  %v122 = vld [vmem:[%s1 + $0x19c] sm:$0xf]
  %v123 = vld [vmem:[%s1 + $0x1a0] sm:$0xf]
  %v124 = vld [vmem:[%s1 + $0x1a4] sm:$0xf]
  %v125 = vld [vmem:[%s1 + $0x1a8] sm:$0xf]
  %v126 = vld [vmem:[%s1 + $0x1ac] sm:$0xf]
  %v127 = vld [vmem:[%s1 + $0x1b0] sm:$0xf]
  %v128 = vld [vmem:[%s1 + $0x1b4] sm:$0xf]
  %v129 = vld [vmem:[%s1 + $0x1b8] sm:$0xf]
  %v130 = vld [vmem:[%s1 + $0x1bc] sm:$0xf]
  %v131 = vld [vmem:[%s1 + $0x1c0] sm:$0xf]
  %v132 = vld [vmem:[%s1 + $0x1c4] sm:$0xf]
  %v133 = vld [vmem:[%s1 + $0x1c8] sm:$0xf]
  %v134 = vld [vmem:[%s1 + $0x1cc] sm:$0xf]
  %v135 = vld [vmem:[%s1 + $0x1d0] sm:$0xf]
  %v136 = vld [vmem:[%s1 + $0x1d4] sm:$0xf]
  %v137 = vld [vmem:[%s1 + $0x1d8] sm:$0xf]
  %v138 = vld [vmem:[%s1 + $0x1dc] sm:$0xf]
  %v139 = vld [vmem:[%s1 + $0x1e0] sm:$0xf]
  %v140 = vld [vmem:[%s1 + $0x1e4] sm:$0xf]
  %v141 = vld [vmem:[%s1 + $0x1e8] sm:$0xf]
  %v142 = vld [vmem:[%s1 + $0x1ec] sm:$0xf]
  %v143 = vld [vmem:[%s1 + $0x1f0] sm:$0xf]
  %v144 = vld [vmem:[%s1 + $0x1f4] sm:$0xf]
  %v145 = vld [vmem:[%s1 + $0x1f8] sm:$0xf]
  %v146 = vld [vmem:[%s1 + $0x1fc] sm:$0xf]
  %v147 = vld [vmem:[%s1 + $0x200] sm:$0xf]
  %v148 = vld [vmem:[%s1 + $0x204] sm:$0xf]
  %v149 = vld [vmem:[%s1 + $0x208] sm:$0xf]
  %v150 = vld [vmem:[%s1 + $0x20c] sm:$0xf]
  %v151 = vld [vmem:[%s1 + $0x210] sm:$0xf]
  %v152 = vld [vmem:[%s1 + $0x214] sm:$0xf]
  %v153 = vld [vmem:[%s1 + $0x218] sm:$0xf]
  %v154 = vld [vmem:[%s1 + $0x21c] sm:$0xf]
  %v155 = vld [vmem:[%s1 + $0x220] sm:$0xf]
  %v156 = vld [vmem:[%s1 + $0x224] sm:$0xf]
  %v157 = vld [vmem:[%s1 + $0x228] sm:$0xf]
  %v158 = vld [vmem:[%s1 + $0x22c] sm:$0xf]
  %v159 = vld [vmem:[%s1 + $0x230] sm:$0xf]
  %v160 = vld [vmem:[%s1 + $0x234] sm:$0xf]
  %v161 = vld [vmem:[%s1 + $0x238] sm:$0xf]
  %v162 = vld [vmem:[%s1 + $0x23c] sm:$0xf]
  %v163 = vld [vmem:[%s2] sm:$0x1]
  %v165 = vperm.slane %v163, 0
  %v172 = vunpack.c.l.b16 %v14
  %v173 = vunpack.c.h.b16 %v14
  %v174 = vunpack.c.l.b16 %v15
  %v175 = vunpack.c.h.b16 %v15
  %v176 = vunpack.c.l.b16 %v16
  %v177 = vunpack.c.h.b16 %v16
  %v178 = vunpack.c.l.b16 %v17
  %v179 = vunpack.c.h.b16 %v17
  %v180 = vunpack.c.l.b16 %v18
  %v181 = vpack.c.b16 %v172, %v172
  %v182 = vpack.c.b16 %v173, %v173
  %v183 = vpack.c.b16 %v174, %v174
  %v184 = vpack.c.b16 %v175, %v175
  %v185 = vpack.c.b16 %v176, %v176
  %v186 = vpack.c.b16 %v177, %v177
  %v187 = vpack.c.b16 %v178, %v178
  %v188 = vpack.c.b16 %v179, %v179
  %v189 = vpack.c.b16 %v180, %v180
  %v343 = vunpack.c.l.b16 %v19
  %v344 = vunpack.c.l.b16 %v20
  %v345 = vunpack.c.l.b16 %v21
  %v346 = vunpack.c.l.b16 %v22
  %v347 = vunpack.c.l.b16 %v23
  %v348 = vunpack.c.l.b16 %v24
  %v349 = vunpack.c.l.b16 %v25
  %v350 = vunpack.c.l.b16 %v26
  %v351 = vunpack.c.l.b16 %v27
  %v352 = vunpack.c.l.b16 %v28
  %v353 = vunpack.c.l.b16 %v29
  %v354 = vunpack.c.l.b16 %v30
  %v355 = vunpack.c.l.b16 %v31
  %v356 = vunpack.c.l.b16 %v32
  %v357 = vunpack.c.l.b16 %v33
  %v358 = vunpack.c.l.b16 %v34
  %v359 = vunpack.c.l.b16 %v35
  %v360 = vunpack.c.l.b16 %v36
  %v361 = vunpack.c.l.b16 %v37
  %v362 = vunpack.c.l.b16 %v38
  %v363 = vunpack.c.l.b16 %v39
  %v364 = vunpack.c.l.b16 %v40
  %v365 = vunpack.c.l.b16 %v41
  %v366 = vunpack.c.l.b16 %v42
  %v367 = vunpack.c.l.b16 %v43
  %v368 = vunpack.c.l.b16 %v44
  %v369 = vunpack.c.l.b16 %v45
  %v370 = vunpack.c.l.b16 %v46
  %v371 = vunpack.c.l.b16 %v47
  %v372 = vunpack.c.l.b16 %v48
  %v373 = vunpack.c.l.b16 %v49
  %v374 = vunpack.c.l.b16 %v50
  %v375 = vunpack.c.l.b16 %v51
  %v376 = vunpack.c.l.b16 %v52
  %v377 = vunpack.c.l.b16 %v53
  %v378 = vunpack.c.l.b16 %v54
  %v379 = vunpack.c.l.b16 %v55
  %v380 = vunpack.c.l.b16 %v56
  %v381 = vunpack.c.l.b16 %v57
  %v382 = vunpack.c.l.b16 %v58
  %v383 = vunpack.c.l.b16 %v59
  %v384 = vunpack.c.l.b16 %v60
  %v385 = vunpack.c.l.b16 %v61
  %v386 = vunpack.c.l.b16 %v62
  %v387 = vunpack.c.l.b16 %v63
  %v388 = vunpack.c.l.b16 %v64
  %v389 = vunpack.c.l.b16 %v65
  %v390 = vunpack.c.l.b16 %v66
  %v391 = vunpack.c.l.b16 %v67
  %v392 = vunpack.c.l.b16 %v68
  %v393 = vunpack.c.l.b16 %v69
  %v394 = vunpack.c.l.b16 %v70
  %v395 = vunpack.c.l.b16 %v71
  %v396 = vunpack.c.l.b16 %v72
  %v397 = vunpack.c.l.b16 %v73
  %v398 = vunpack.c.l.b16 %v74
  %v399 = vunpack.c.l.b16 %v75
  %v400 = vunpack.c.l.b16 %v76
  %v401 = vunpack.c.l.b16 %v77
  %v402 = vunpack.c.l.b16 %v78
  %v403 = vunpack.c.l.b16 %v79
  %v404 = vunpack.c.l.b16 %v80
  %v405 = vunpack.c.l.b16 %v81
  %v406 = vunpack.c.l.b16 %v82
  %v407 = vunpack.c.l.b16 %v83
  %v408 = vunpack.c.l.b16 %v84
  %v409 = vunpack.c.l.b16 %v85
  %v410 = vunpack.c.l.b16 %v86
  %v411 = vunpack.c.l.b16 %v87
  %v412 = vunpack.c.l.b16 %v88
  %v413 = vunpack.c.l.b16 %v89
  %v414 = vunpack.c.l.b16 %v90
  %v415 = vunpack.c.l.b16 %v91
  %v416 = vunpack.c.l.b16 %v92
  %v417 = vunpack.c.l.b16 %v93
  %v418 = vunpack.c.l.b16 %v94
  %v419 = vunpack.c.l.b16 %v95
  %v420 = vunpack.c.l.b16 %v96
  %v421 = vunpack.c.l.b16 %v97
  %v422 = vunpack.c.l.b16 %v98
  %v423 = vunpack.c.l.b16 %v99
  %v424 = vunpack.c.l.b16 %v100
  %v425 = vunpack.c.l.b16 %v101
  %v426 = vunpack.c.l.b16 %v102
  %v427 = vunpack.c.l.b16 %v103
  %v428 = vunpack.c.l.b16 %v104
  %v429 = vunpack.c.l.b16 %v105
  %v430 = vunpack.c.l.b16 %v106
  %v431 = vunpack.c.l.b16 %v107
  %v432 = vunpack.c.l.b16 %v108
  %v433 = vunpack.c.l.b16 %v109
  %v434 = vunpack.c.l.b16 %v110
  %v435 = vunpack.c.l.b16 %v111
  %v436 = vunpack.c.l.b16 %v112
  %v437 = vunpack.c.l.b16 %v113
  %v438 = vunpack.c.l.b16 %v114
  %v439 = vunpack.c.l.b16 %v115
  %v440 = vunpack.c.l.b16 %v116
  %v441 = vunpack.c.l.b16 %v117
  %v442 = vunpack.c.l.b16 %v118
  %v443 = vunpack.c.l.b16 %v119
  %v444 = vunpack.c.l.b16 %v120
  %v445 = vunpack.c.l.b16 %v121
  %v446 = vunpack.c.l.b16 %v122
  %v447 = vunpack.c.l.b16 %v123
  %v448 = vunpack.c.l.b16 %v124
  %v449 = vunpack.c.l.b16 %v125
  %v450 = vunpack.c.l.b16 %v126
  %v451 = vunpack.c.l.b16 %v127
  %v452 = vunpack.c.l.b16 %v128
  %v453 = vunpack.c.l.b16 %v129
  %v454 = vunpack.c.l.b16 %v130
  %v455 = vunpack.c.l.b16 %v131
  %v456 = vunpack.c.l.b16 %v132
  %v457 = vunpack.c.l.b16 %v133
  %v458 = vunpack.c.l.b16 %v134
  %v459 = vunpack.c.l.b16 %v135
  %v460 = vunpack.c.l.b16 %v136
  %v461 = vunpack.c.l.b16 %v137
  %v462 = vunpack.c.l.b16 %v138
  %v463 = vunpack.c.l.b16 %v139
  %v464 = vunpack.c.l.b16 %v140
  %v465 = vunpack.c.l.b16 %v141
  %v466 = vunpack.c.l.b16 %v142
  %v467 = vunpack.c.l.b16 %v143
  %v468 = vunpack.c.l.b16 %v144
  %v469 = vunpack.c.l.b16 %v145
  %v470 = vunpack.c.l.b16 %v146
  %v471 = vunpack.c.l.b16 %v147
  %v472 = vunpack.c.l.b16 %v148
  %v473 = vunpack.c.l.b16 %v149
  %v474 = vunpack.c.l.b16 %v150
  %v475 = vunpack.c.l.b16 %v151
  %v476 = vunpack.c.l.b16 %v152
  %v477 = vunpack.c.l.b16 %v153
  %v478 = vunpack.c.l.b16 %v154
  %v479 = vunpack.c.l.b16 %v155
  %v480 = vunpack.c.l.b16 %v156
  %v481 = vunpack.c.l.b16 %v157
  %v482 = vunpack.c.l.b16 %v158
  %v483 = vunpack.c.l.b16 %v159
  %v484 = vunpack.c.l.b16 %v160
  %v485 = vunpack.c.l.b16 %v161
  %v486 = vunpack.c.l.b16 %v162
  %v487 = vpack.c.b16 %v344, %v343
  %v488 = vpack.c.b16 %v346, %v345
  %v489 = vpack.c.b16 %v348, %v347
  %v490 = vpack.c.b16 %v350, %v349
  %v491 = vpack.c.b16 %v352, %v351
  %v492 = vpack.c.b16 %v354, %v353
  %v493 = vpack.c.b16 %v356, %v355
  %v494 = vpack.c.b16 %v358, %v357
  %v495 = vpack.c.b16 %v360, %v359
  %v496 = vpack.c.b16 %v362, %v361
  %v497 = vpack.c.b16 %v364, %v363
  %v498 = vpack.c.b16 %v366, %v365
  %v499 = vpack.c.b16 %v368, %v367
  %v500 = vpack.c.b16 %v370, %v369
  %v501 = vpack.c.b16 %v372, %v371
  %v502 = vpack.c.b16 %v374, %v373
  %v503 = vpack.c.b16 %v376, %v375
  %v504 = vpack.c.b16 %v378, %v377
  %v505 = vpack.c.b16 %v380, %v379
  %v506 = vpack.c.b16 %v382, %v381
  %v507 = vpack.c.b16 %v384, %v383
  %v508 = vpack.c.b16 %v386, %v385
  %v509 = vpack.c.b16 %v388, %v387
  %v510 = vpack.c.b16 %v390, %v389
  %v511 = vpack.c.b16 %v392, %v391
  %v512 = vpack.c.b16 %v394, %v393
  %v513 = vpack.c.b16 %v396, %v395
  %v514 = vpack.c.b16 %v398, %v397
  %v515 = vpack.c.b16 %v400, %v399
  %v516 = vpack.c.b16 %v402, %v401
  %v517 = vpack.c.b16 %v404, %v403
  %v518 = vpack.c.b16 %v406, %v405
  %v519 = vpack.c.b16 %v408, %v407
  %v520 = vpack.c.b16 %v410, %v409
  %v521 = vpack.c.b16 %v412, %v411
  %v522 = vpack.c.b16 %v414, %v413
  %v523 = vpack.c.b16 %v416, %v415
  %v524 = vpack.c.b16 %v418, %v417
  %v525 = vpack.c.b16 %v420, %v419
  %v526 = vpack.c.b16 %v422, %v421
  %v527 = vpack.c.b16 %v424, %v423
  %v528 = vpack.c.b16 %v426, %v425
  %v529 = vpack.c.b16 %v428, %v427
  %v530 = vpack.c.b16 %v430, %v429
  %v531 = vpack.c.b16 %v432, %v431
  %v532 = vpack.c.b16 %v434, %v433
  %v533 = vpack.c.b16 %v436, %v435
  %v534 = vpack.c.b16 %v438, %v437
  %v535 = vpack.c.b16 %v440, %v439
  %v536 = vpack.c.b16 %v442, %v441
  %v537 = vpack.c.b16 %v444, %v443
  %v538 = vpack.c.b16 %v446, %v445
  %v539 = vpack.c.b16 %v448, %v447
  %v540 = vpack.c.b16 %v450, %v449
  %v541 = vpack.c.b16 %v452, %v451
  %v542 = vpack.c.b16 %v454, %v453
  %v543 = vpack.c.b16 %v456, %v455
  %v544 = vpack.c.b16 %v458, %v457
  %v545 = vpack.c.b16 %v460, %v459
  %v546 = vpack.c.b16 %v462, %v461
  %v547 = vpack.c.b16 %v464, %v463
  %v548 = vpack.c.b16 %v466, %v465
  %v549 = vpack.c.b16 %v468, %v467
  %v550 = vpack.c.b16 %v470, %v469
  %v551 = vpack.c.b16 %v472, %v471
  %v552 = vpack.c.b16 %v474, %v473
  %v553 = vpack.c.b16 %v476, %v475
  %v554 = vpack.c.b16 %v478, %v477
  %v555 = vpack.c.b16 %v480, %v479
  %v556 = vpack.c.b16 %v482, %v481
  %v557 = vpack.c.b16 %v484, %v483
  %v558 = vpack.c.b16 %v486, %v485
  %631 = vmatpush.bf16.msra.mxu0 %v494
  %632 = vmatpush.bf16.msra.mxu0 %v493
  %633 = vmatpush.bf16.msra.mxu0 %v492
  %634 = vmatpush.bf16.msra.mxu0 %v491
  %635 = vmatpush.bf16.msra.mxu0 %v490
  %636 = vmatpush.bf16.msra.mxu0 %v489
  %637 = vmatpush.bf16.msra.mxu0 %v488
  %638 = vmatpush.bf16.msra.mxu0 %v487
  %639 = vmatmul.bf16.gmra.mxu0 %v181
  %v640 = vpop.f32.mrf.mxu0
  %v641 = vadd.f32 %v165, %v640
  %v642 = vpop.f32.mrf.mxu0
  %643 = vdwg.mxu0
  %644 = vmatpush.bf16.msra.mxu0 %v502
  %645 = vmatpush.bf16.msra.mxu0 %v501
  %646 = vmatpush.bf16.msra.mxu0 %v500
  %647 = vmatpush.bf16.msra.mxu0 %v499
  %648 = vmatpush.bf16.msra.mxu0 %v498
  %649 = vmatpush.bf16.msra.mxu0 %v497
  %650 = vmatpush.bf16.msra.mxu0 %v496
  %651 = vmatpush.bf16.msra.mxu0 %v495
  %652 = vmatmul.bf16.gmra.mxu0 %v182
  %v653 = vpop.f32.mrf.mxu0
  %v654 = vadd.f32 %v641, %v653
  %v655 = vpop.f32.mrf.mxu0
  %656 = vdwg.mxu0
  %657 = vmatpush.bf16.msra.mxu0 %v510
  %658 = vmatpush.bf16.msra.mxu0 %v509
  %659 = vmatpush.bf16.msra.mxu0 %v508
  %660 = vmatpush.bf16.msra.mxu0 %v507
  %661 = vmatpush.bf16.msra.mxu0 %v506
  %662 = vmatpush.bf16.msra.mxu0 %v505
  %663 = vmatpush.bf16.msra.mxu0 %v504
  %664 = vmatpush.bf16.msra.mxu0 %v503
  %665 = vmatmul.bf16.gmra.mxu0 %v183
  %v666 = vpop.f32.mrf.mxu0
  %v667 = vadd.f32 %v654, %v666
  %v668 = vpop.f32.mrf.mxu0
  %669 = vdwg.mxu0
  %670 = vmatpush.bf16.msra.mxu0 %v518
  %671 = vmatpush.bf16.msra.mxu0 %v517
  %672 = vmatpush.bf16.msra.mxu0 %v516
  %673 = vmatpush.bf16.msra.mxu0 %v515
  %674 = vmatpush.bf16.msra.mxu0 %v514
  %675 = vmatpush.bf16.msra.mxu0 %v513
  %676 = vmatpush.bf16.msra.mxu0 %v512
  %677 = vmatpush.bf16.msra.mxu0 %v511
  %678 = vmatmul.bf16.gmra.mxu0 %v184
  %v679 = vpop.f32.mrf.mxu0
  %v680 = vadd.f32 %v667, %v679
  %v681 = vpop.f32.mrf.mxu0
  %682 = vdwg.mxu0
  %683 = vmatpush.bf16.msra.mxu0 %v526
  %684 = vmatpush.bf16.msra.mxu0 %v525
  %685 = vmatpush.bf16.msra.mxu0 %v524
  %686 = vmatpush.bf16.msra.mxu0 %v523
  %687 = vmatpush.bf16.msra.mxu0 %v522
  %688 = vmatpush.bf16.msra.mxu0 %v521
  %689 = vmatpush.bf16.msra.mxu0 %v520
  %690 = vmatpush.bf16.msra.mxu0 %v519
  %691 = vmatmul.bf16.gmra.mxu0 %v185
  %v692 = vpop.f32.mrf.mxu0
  %v693 = vadd.f32 %v680, %v692
  %v694 = vpop.f32.mrf.mxu0
  %695 = vdwg.mxu0
  %696 = vmatpush.bf16.msra.mxu0 %v534
  %697 = vmatpush.bf16.msra.mxu0 %v533
  %698 = vmatpush.bf16.msra.mxu0 %v532
  %699 = vmatpush.bf16.msra.mxu0 %v531
  %700 = vmatpush.bf16.msra.mxu0 %v530
  %701 = vmatpush.bf16.msra.mxu0 %v529
  %702 = vmatpush.bf16.msra.mxu0 %v528
  %703 = vmatpush.bf16.msra.mxu0 %v527
  %704 = vmatmul.bf16.gmra.mxu0 %v186
  %v705 = vpop.f32.mrf.mxu0
  %v706 = vadd.f32 %v693, %v705
  %v707 = vpop.f32.mrf.mxu0
  %708 = vdwg.mxu0
  %709 = vmatpush.bf16.msra.mxu0 %v542
  %710 = vmatpush.bf16.msra.mxu0 %v541
  %711 = vmatpush.bf16.msra.mxu0 %v540
  %712 = vmatpush.bf16.msra.mxu0 %v539
  %713 = vmatpush.bf16.msra.mxu0 %v538
  %714 = vmatpush.bf16.msra.mxu0 %v537
  %715 = vmatpush.bf16.msra.mxu0 %v536
  %716 = vmatpush.bf16.msra.mxu0 %v535
  %717 = vmatmul.bf16.gmra.mxu0 %v187
  %v718 = vpop.f32.mrf.mxu0
  %v719 = vadd.f32 %v706, %v718
  %v720 = vpop.f32.mrf.mxu0
  %721 = vdwg.mxu0
  %722 = vmatpush.bf16.msra.mxu0 %v550
  %723 = vmatpush.bf16.msra.mxu0 %v549
  %724 = vmatpush.bf16.msra.mxu0 %v548
  %725 = vmatpush.bf16.msra.mxu0 %v547
  %726 = vmatpush.bf16.msra.mxu0 %v546
  %727 = vmatpush.bf16.msra.mxu0 %v545
  %728 = vmatpush.bf16.msra.mxu0 %v544
  %729 = vmatpush.bf16.msra.mxu0 %v543
  %730 = vmatmul.bf16.gmra.mxu0 %v188
  %v731 = vpop.f32.mrf.mxu0
  %v732 = vadd.f32 %v719, %v731
  %v733 = vpop.f32.mrf.mxu0
  %734 = vdwg.mxu0
  %735 = vmatpush.bf16.msra.mxu0 %v558
  %736 = vmatpush.bf16.msra.mxu0 %v557
  %737 = vmatpush.bf16.msra.mxu0 %v556
  %738 = vmatpush.bf16.msra.mxu0 %v555
  %739 = vmatpush.bf16.msra.mxu0 %v554
  %740 = vmatpush.bf16.msra.mxu0 %v553
  %741 = vmatpush.bf16.msra.mxu0 %v552
  %742 = vmatpush.bf16.msra.mxu0 %v551
  %743 = vmatmul.bf16.gmra.mxu0 %v189
  %v744 = vpop.f32.mrf.mxu0
  %v745 = vadd.f32 %v732, %v744
  %v746 = vpop.f32.mrf.mxu0
  %747 = vdwg.mxu0
  %v748 = vmax.f32 %v745, 0.0
  %v749 = vpack.c.bf16 %v748, %v748
  %vm750 = vcmask 519168
  %751 = vst.msk [vmem:[%s3] sm:$0xf] %vm750, %v749
  // Predicated region
  $region14: #{autoencoder_forward.10} parent=0 // pred_check
    _
  $region15: #{autoencoder_forward.10} parent=0 // pred_check_branch
    %753 = sbr.rel (0) target = $region17
  $region16: #{autoencoder_forward.10} parent=0 // pred_region
    _
  $region17: #{autoencoder_forward.10} parent=0 // pred_fallthru
    _
  // Predicated region
  $region18: #{autoencoder_forward.10} parent=0 // pred_check
    _
  $region19: #{autoencoder_forward.10} parent=0 // pred_check_branch
    %755 = sbr.rel (0) target = $region21
  $region20: #{autoencoder_forward.10} parent=0 // pred_region
    _
  $region21: #{autoencoder_forward.10} parent=0 // pred_fallthru
    _

// kernel: autoencoder_forward.9
$region0: #{autoencoder_forward.9}
  #allocation0 [shape = 'u32[]', space=smem, size = 0x4, offset = 0x4, fixed_abs, tag = 'smem constant byte address 0x4 - core index']
  #allocation1 [shape = 'u32[72,128]{1,0:T(1,128)}', space=vmem, size = 0x9000, scoped, tag = 'internal scratch']
  %s0 = inlined_call_operand.vmem [shape: bf16[32,2304], index: 0, kind: input, shape index: {}]
  %s1 = inlined_call_operand.vmem [shape: bf16[2304,128], index: 1, kind: input, shape index: {}]
  %s2 = inlined_call_operand.vmem [shape: f32[1,128], index: 2, kind: input, shape index: {}]
  %s3 = inlined_call_operand.vmem [shape: bf16[32,128], index: 3, kind: output, shape index: {}]
  %s4 = sld [smem:[#allocation0]]
  $region22: #{autoencoder_forward.9} parent=0
    _
  %s6 = ssub.s32 1, %s4
  %s7 = scalar_select 0, %s6, %s4
  // Predicated region
  $region2: #{autoencoder_forward.9} parent=0 // pred_check
    _
  $region3: #{autoencoder_forward.9} parent=0 // pred_check_branch
    %9 = sbr.rel (0) target = $region5
  $region4: #{autoencoder_forward.9} parent=0 // pred_region
    _
  $region5: #{autoencoder_forward.9} parent=0 // pred_fallthru
    _
  // Predicated region
  $region6: #{autoencoder_forward.9} parent=0 // pred_check
    _
  $region7: #{autoencoder_forward.9} parent=0 // pred_check_branch
    %11 = sbr.rel (0) target = $region9
  $region8: #{autoencoder_forward.9} parent=0 // pred_region
    _
  $region9: #{autoencoder_forward.9} parent=0 // pred_fallthru
    _
  // Predicated region
  $region10: #{autoencoder_forward.9} parent=0 // pred_check
    _
  $region11: #{autoencoder_forward.9} parent=0 // pred_check_branch
    %13 = sbr.rel (0) target = $region13
  $region12: #{autoencoder_forward.9} parent=0 // pred_region
    _
  $region13: #{autoencoder_forward.9} parent=0 // pred_fallthru
    _
  %v14 = vld [vmem:[%s0] sm:$0xff]
  %v15 = vld [vmem:[%s0 + $0x8] sm:$0xff]
  %v16 = vld [vmem:[%s0 + $0x10] sm:$0xff]
  %v17 = vld [vmem:[%s0 + $0x18] sm:$0xff]
  %v18 = vld [vmem:[%s0 + $0x20] sm:$0xff]
  %v19 = vld [vmem:[%s0 + $0x28] sm:$0xff]
  %v20 = vld [vmem:[%s0 + $0x30] sm:$0xff]
  %v21 = vld [vmem:[%s0 + $0x38] sm:$0xff]
  %v22 = vld [vmem:[%s0 + $0x40] sm:$0xff]
  %v23 = vld [vmem:[%s0 + $0x48] sm:$0xff]
  %v24 = vld [vmem:[%s0 + $0x50] sm:$0xff]
  %v25 = vld [vmem:[%s0 + $0x58] sm:$0xff]
  %v26 = vld [vmem:[%s0 + $0x60] sm:$0xff]
  %v27 = vld [vmem:[%s0 + $0x68] sm:$0xff]
  %v28 = vld [vmem:[%s0 + $0x70] sm:$0xff]
  %v29 = vld [vmem:[%s0 + $0x78] sm:$0xff]
  %v30 = vld [vmem:[%s0 + $0x80] sm:$0xff]
  %v31 = vld [vmem:[%s0 + $0x88] sm:$0xff]
  %v32 = vld [vmem:[%s0 + $0x90] sm:$0xff]
  %v33 = vld [vmem:[%s0 + $0x98] sm:$0xff]
  %v34 = vld [vmem:[%s0 + $0xa0] sm:$0xff]
  %v35 = vld [vmem:[%s0 + $0xa8] sm:$0xff]
  %v36 = vld [vmem:[%s0 + $0xb0] sm:$0xff]
  %v37 = vld [vmem:[%s0 + $0xb8] sm:$0xff]
  %v38 = vld [vmem:[%s0 + $0xc0] sm:$0xff]
  %v39 = vld [vmem:[%s0 + $0xc8] sm:$0xff]
  %v40 = vld [vmem:[%s0 + $0xd0] sm:$0xff]
  %v41 = vld [vmem:[%s0 + $0xd8] sm:$0xff]
  %v42 = vld [vmem:[%s0 + $0xe0] sm:$0xff]
  %v43 = vld [vmem:[%s0 + $0xe8] sm:$0xff]
  %v44 = vld [vmem:[%s0 + $0xf0] sm:$0xff]
  %v45 = vld [vmem:[%s0 + $0xf8] sm:$0xff]
  %v46 = vld [vmem:[%s0 + $0x100] sm:$0xff]
  %v47 = vld [vmem:[%s0 + $0x108] sm:$0xff]
  %v48 = vld [vmem:[%s0 + $0x110] sm:$0xff]
  %v49 = vld [vmem:[%s0 + $0x118] sm:$0xff]
  %v50 = vld [vmem:[%s1] sm:$0xf]
  %v51 = vld [vmem:[%s1 + $0x4] sm:$0xf]
  %v52 = vld [vmem:[%s1 + $0x8] sm:$0xf]
  %v53 = vld [vmem:[%s1 + $0xc] sm:$0xf]
  %v54 = vld [vmem:[%s1 + $0x10] sm:$0xf]
  %v55 = vld [vmem:[%s1 + $0x14] sm:$0xf]
  %v56 = vld [vmem:[%s1 + $0x18] sm:$0xf]
  %v57 = vld [vmem:[%s1 + $0x1c] sm:$0xf]
  %v58 = vld [vmem:[%s1 + $0x20] sm:$0xf]
  %v59 = vld [vmem:[%s1 + $0x24] sm:$0xf]
  %v60 = vld [vmem:[%s1 + $0x28] sm:$0xf]
  %v61 = vld [vmem:[%s1 + $0x2c] sm:$0xf]
  %v62 = vld [vmem:[%s1 + $0x30] sm:$0xf]
  %v63 = vld [vmem:[%s1 + $0x34] sm:$0xf]
  %v64 = vld [vmem:[%s1 + $0x38] sm:$0xf]
  %v65 = vld [vmem:[%s1 + $0x3c] sm:$0xf]
  %v66 = vld [vmem:[%s1 + $0x40] sm:$0xf]
  %v67 = vld [vmem:[%s1 + $0x44] sm:$0xf]
  %v68 = vld [vmem:[%s1 + $0x48] sm:$0xf]
  %v69 = vld [vmem:[%s1 + $0x4c] sm:$0xf]
  %v70 = vld [vmem:[%s1 + $0x50] sm:$0xf]
  %v71 = vld [vmem:[%s1 + $0x54] sm:$0xf]
  %v72 = vld [vmem:[%s1 + $0x58] sm:$0xf]
  %v73 = vld [vmem:[%s1 + $0x5c] sm:$0xf]
  %v74 = vld [vmem:[%s1 + $0x60] sm:$0xf]
  %v75 = vld [vmem:[%s1 + $0x64] sm:$0xf]
  %v76 = vld [vmem:[%s1 + $0x68] sm:$0xf]
  %v77 = vld [vmem:[%s1 + $0x6c] sm:$0xf]
  %v78 = vld [vmem:[%s1 + $0x70] sm:$0xf]
  %v79 = vld [vmem:[%s1 + $0x74] sm:$0xf]
  %v80 = vld [vmem:[%s1 + $0x78] sm:$0xf]
  %v81 = vld [vmem:[%s1 + $0x7c] sm:$0xf]
  %v82 = vld [vmem:[%s1 + $0x80] sm:$0xf]
  %v83 = vld [vmem:[%s1 + $0x84] sm:$0xf]
  %v84 = vld [vmem:[%s1 + $0x88] sm:$0xf]
  %v85 = vld [vmem:[%s1 + $0x8c] sm:$0xf]
  %v86 = vld [vmem:[%s1 + $0x90] sm:$0xf]
  %v87 = vld [vmem:[%s1 + $0x94] sm:$0xf]
  %v88 = vld [vmem:[%s1 + $0x98] sm:$0xf]
  %v89 = vld [vmem:[%s1 + $0x9c] sm:$0xf]
  %v90 = vld [vmem:[%s1 + $0xa0] sm:$0xf]
  %v91 = vld [vmem:[%s1 + $0xa4] sm:$0xf]
  %v92 = vld [vmem:[%s1 + $0xa8] sm:$0xf]
  %v93 = vld [vmem:[%s1 + $0xac] sm:$0xf]
  %v94 = vld [vmem:[%s1 + $0xb0] sm:$0xf]
  %v95 = vld [vmem:[%s1 + $0xb4] sm:$0xf]
  %v96 = vld [vmem:[%s1 + $0xb8] sm:$0xf]
  %v97 = vld [vmem:[%s1 + $0xbc] sm:$0xf]
  %v98 = vld [vmem:[%s1 + $0xc0] sm:$0xf]
  %v99 = vld [vmem:[%s1 + $0xc4] sm:$0xf]
  %v100 = vld [vmem:[%s1 + $0xc8] sm:$0xf]
  %v101 = vld [vmem:[%s1 + $0xcc] sm:$0xf]
  %v102 = vld [vmem:[%s1 + $0xd0] sm:$0xf]
  %v103 = vld [vmem:[%s1 + $0xd4] sm:$0xf]
  %v104 = vld [vmem:[%s1 + $0xd8] sm:$0xf]
  %v105 = vld [vmem:[%s1 + $0xdc] sm:$0xf]
  %v106 = vld [vmem:[%s1 + $0xe0] sm:$0xf]
  %v107 = vld [vmem:[%s1 + $0xe4] sm:$0xf]
  %v108 = vld [vmem:[%s1 + $0xe8] sm:$0xf]
  %v109 = vld [vmem:[%s1 + $0xec] sm:$0xf]
  %v110 = vld [vmem:[%s1 + $0xf0] sm:$0xf]
  %v111 = vld [vmem:[%s1 + $0xf4] sm:$0xf]
  %v112 = vld [vmem:[%s1 + $0xf8] sm:$0xf]
  %v113 = vld [vmem:[%s1 + $0xfc] sm:$0xf]
  %v114 = vld [vmem:[%s1 + $0x100] sm:$0xf]
  %v115 = vld [vmem:[%s1 + $0x104] sm:$0xf]
  %v116 = vld [vmem:[%s1 + $0x108] sm:$0xf]
  %v117 = vld [vmem:[%s1 + $0x10c] sm:$0xf]
  %v118 = vld [vmem:[%s1 + $0x110] sm:$0xf]
  %v119 = vld [vmem:[%s1 + $0x114] sm:$0xf]
  %v120 = vld [vmem:[%s1 + $0x118] sm:$0xf]
  %v121 = vld [vmem:[%s1 + $0x11c] sm:$0xf]
  %v122 = vld [vmem:[%s1 + $0x120] sm:$0xf]
  %v123 = vld [vmem:[%s1 + $0x124] sm:$0xf]
  %v124 = vld [vmem:[%s1 + $0x128] sm:$0xf]
  %v125 = vld [vmem:[%s1 + $0x12c] sm:$0xf]
  %v126 = vld [vmem:[%s1 + $0x130] sm:$0xf]
  %v127 = vld [vmem:[%s1 + $0x134] sm:$0xf]
  %v128 = vld [vmem:[%s1 + $0x138] sm:$0xf]
  %v129 = vld [vmem:[%s1 + $0x13c] sm:$0xf]
  %v130 = vld [vmem:[%s1 + $0x140] sm:$0xf]
  %v131 = vld [vmem:[%s1 + $0x144] sm:$0xf]
  %v132 = vld [vmem:[%s1 + $0x148] sm:$0xf]
  %v133 = vld [vmem:[%s1 + $0x14c] sm:$0xf]
  %v134 = vld [vmem:[%s1 + $0x150] sm:$0xf]
  %v135 = vld [vmem:[%s1 + $0x154] sm:$0xf]
  %v136 = vld [vmem:[%s1 + $0x158] sm:$0xf]
  %v137 = vld [vmem:[%s1 + $0x15c] sm:$0xf]
  %v138 = vld [vmem:[%s1 + $0x160] sm:$0xf]
  %v139 = vld [vmem:[%s1 + $0x164] sm:$0xf]
  %v140 = vld [vmem:[%s1 + $0x168] sm:$0xf]
  %v141 = vld [vmem:[%s1 + $0x16c] sm:$0xf]
  %v142 = vld [vmem:[%s1 + $0x170] sm:$0xf]
  %v143 = vld [vmem:[%s1 + $0x174] sm:$0xf]
  %v144 = vld [vmem:[%s1 + $0x178] sm:$0xf]
  %v145 = vld [vmem:[%s1 + $0x17c] sm:$0xf]
  %v146 = vld [vmem:[%s1 + $0x180] sm:$0xf]
  %v147 = vld [vmem:[%s1 + $0x184] sm:$0xf]
  %v148 = vld [vmem:[%s1 + $0x188] sm:$0xf]
  %v149 = vld [vmem:[%s1 + $0x18c] sm:$0xf]
  %v150 = vld [vmem:[%s1 + $0x190] sm:$0xf]
  %v151 = vld [vmem:[%s1 + $0x194] sm:$0xf]
  %v152 = vld [vmem:[%s1 + $0x198] sm:$0xf]
  %v153 = vld [vmem:[%s1 + $0x19c] sm:$0xf]
  %v154 = vld [vmem:[%s1 + $0x1a0] sm:$0xf]
  %v155 = vld [vmem:[%s1 + $0x1a4] sm:$0xf]
  %v156 = vld [vmem:[%s1 + $0x1a8] sm:$0xf]
  %v157 = vld [vmem:[%s1 + $0x1ac] sm:$0xf]
  %v158 = vld [vmem:[%s1 + $0x1b0] sm:$0xf]
  %v159 = vld [vmem:[%s1 + $0x1b4] sm:$0xf]
  %v160 = vld [vmem:[%s1 + $0x1b8] sm:$0xf]
  %v161 = vld [vmem:[%s1 + $0x1bc] sm:$0xf]
  %v162 = vld [vmem:[%s1 + $0x1c0] sm:$0xf]
  %v163 = vld [vmem:[%s1 + $0x1c4] sm:$0xf]
  %v164 = vld [vmem:[%s1 + $0x1c8] sm:$0xf]
  %v165 = vld [vmem:[%s1 + $0x1cc] sm:$0xf]
  %v166 = vld [vmem:[%s1 + $0x1d0] sm:$0xf]
  %v167 = vld [vmem:[%s1 + $0x1d4] sm:$0xf]
  %v168 = vld [vmem:[%s1 + $0x1d8] sm:$0xf]
  %v169 = vld [vmem:[%s1 + $0x1dc] sm:$0xf]
  %v170 = vld [vmem:[%s1 + $0x1e0] sm:$0xf]
  %v171 = vld [vmem:[%s1 + $0x1e4] sm:$0xf]
  %v172 = vld [vmem:[%s1 + $0x1e8] sm:$0xf]
  %v173 = vld [vmem:[%s1 + $0x1ec] sm:$0xf]
  %v174 = vld [vmem:[%s1 + $0x1f0] sm:$0xf]
  %v175 = vld [vmem:[%s1 + $0x1f4] sm:$0xf]
  %v176 = vld [vmem:[%s1 + $0x1f8] sm:$0xf]
  %v177 = vld [vmem:[%s1 + $0x1fc] sm:$0xf]
  %v178 = vld [vmem:[%s1 + $0x200] sm:$0xf]
  %v179 = vld [vmem:[%s1 + $0x204] sm:$0xf]
  %v180 = vld [vmem:[%s1 + $0x208] sm:$0xf]
  %v181 = vld [vmem:[%s1 + $0x20c] sm:$0xf]
  %v182 = vld [vmem:[%s1 + $0x210] sm:$0xf]
  %v183 = vld [vmem:[%s1 + $0x214] sm:$0xf]
  %v184 = vld [vmem:[%s1 + $0x218] sm:$0xf]
  %v185 = vld [vmem:[%s1 + $0x21c] sm:$0xf]
  %v186 = vld [vmem:[%s1 + $0x220] sm:$0xf]
  %v187 = vld [vmem:[%s1 + $0x224] sm:$0xf]
  %v188 = vld [vmem:[%s1 + $0x228] sm:$0xf]
  %v189 = vld [vmem:[%s1 + $0x22c] sm:$0xf]
  %v190 = vld [vmem:[%s1 + $0x230] sm:$0xf]
  %v191 = vld [vmem:[%s1 + $0x234] sm:$0xf]
  %v192 = vld [vmem:[%s1 + $0x238] sm:$0xf]
  %v193 = vld [vmem:[%s1 + $0x23c] sm:$0xf]
  %v194 = vld [vmem:[%s1 + $0x240] sm:$0xf]
  %v195 = vld [vmem:[%s1 + $0x244] sm:$0xf]
  %v196 = vld [vmem:[%s1 + $0x248] sm:$0xf]
  %v197 = vld [vmem:[%s1 + $0x24c] sm:$0xf]
  %v198 = vld [vmem:[%s1 + $0x250] sm:$0xf]
  %v199 = vld [vmem:[%s1 + $0x254] sm:$0xf]
  %v200 = vld [vmem:[%s1 + $0x258] sm:$0xf]
  %v201 = vld [vmem:[%s1 + $0x25c] sm:$0xf]
  %v202 = vld [vmem:[%s1 + $0x260] sm:$0xf]
  %v203 = vld [vmem:[%s1 + $0x264] sm:$0xf]
  %v204 = vld [vmem:[%s1 + $0x268] sm:$0xf]
  %v205 = vld [vmem:[%s1 + $0x26c] sm:$0xf]
  %v206 = vld [vmem:[%s1 + $0x270] sm:$0xf]
  %v207 = vld [vmem:[%s1 + $0x274] sm:$0xf]
  %v208 = vld [vmem:[%s1 + $0x278] sm:$0xf]
  %v209 = vld [vmem:[%s1 + $0x27c] sm:$0xf]
  %v210 = vld [vmem:[%s1 + $0x280] sm:$0xf]
  %v211 = vld [vmem:[%s1 + $0x284] sm:$0xf]
  %v212 = vld [vmem:[%s1 + $0x288] sm:$0xf]
  %v213 = vld [vmem:[%s1 + $0x28c] sm:$0xf]
  %v214 = vld [vmem:[%s1 + $0x290] sm:$0xf]
  %v215 = vld [vmem:[%s1 + $0x294] sm:$0xf]
  %v216 = vld [vmem:[%s1 + $0x298] sm:$0xf]
  %v217 = vld [vmem:[%s1 + $0x29c] sm:$0xf]
  %v218 = vld [vmem:[%s1 + $0x2a0] sm:$0xf]
  %v219 = vld [vmem:[%s1 + $0x2a4] sm:$0xf]
  %v220 = vld [vmem:[%s1 + $0x2a8] sm:$0xf]
  %v221 = vld [vmem:[%s1 + $0x2ac] sm:$0xf]
  %v222 = vld [vmem:[%s1 + $0x2b0] sm:$0xf]
  %v223 = vld [vmem:[%s1 + $0x2b4] sm:$0xf]
  %v224 = vld [vmem:[%s1 + $0x2b8] sm:$0xf]
  %v225 = vld [vmem:[%s1 + $0x2bc] sm:$0xf]
  %v226 = vld [vmem:[%s1 + $0x2c0] sm:$0xf]
  %v227 = vld [vmem:[%s1 + $0x2c4] sm:$0xf]
  %v228 = vld [vmem:[%s1 + $0x2c8] sm:$0xf]
  %v229 = vld [vmem:[%s1 + $0x2cc] sm:$0xf]
  %v230 = vld [vmem:[%s1 + $0x2d0] sm:$0xf]
  %v231 = vld [vmem:[%s1 + $0x2d4] sm:$0xf]
  %v232 = vld [vmem:[%s1 + $0x2d8] sm:$0xf]
  %v233 = vld [vmem:[%s1 + $0x2dc] sm:$0xf]
  %v234 = vld [vmem:[%s1 + $0x2e0] sm:$0xf]
  %v235 = vld [vmem:[%s1 + $0x2e4] sm:$0xf]
  %v236 = vld [vmem:[%s1 + $0x2e8] sm:$0xf]
  %v237 = vld [vmem:[%s1 + $0x2ec] sm:$0xf]
  %v238 = vld [vmem:[%s1 + $0x2f0] sm:$0xf]
  %v239 = vld [vmem:[%s1 + $0x2f4] sm:$0xf]
  %v240 = vld [vmem:[%s1 + $0x2f8] sm:$0xf]
  %v241 = vld [vmem:[%s1 + $0x2fc] sm:$0xf]
  %v242 = vld [vmem:[%s1 + $0x300] sm:$0xf]
  %v243 = vld [vmem:[%s1 + $0x304] sm:$0xf]
  %v244 = vld [vmem:[%s1 + $0x308] sm:$0xf]
  %v245 = vld [vmem:[%s1 + $0x30c] sm:$0xf]
  %v246 = vld [vmem:[%s1 + $0x310] sm:$0xf]
  %v247 = vld [vmem:[%s1 + $0x314] sm:$0xf]
  %v248 = vld [vmem:[%s1 + $0x318] sm:$0xf]
  %v249 = vld [vmem:[%s1 + $0x31c] sm:$0xf]
  %v250 = vld [vmem:[%s1 + $0x320] sm:$0xf]
  %v251 = vld [vmem:[%s1 + $0x324] sm:$0xf]
  %v252 = vld [vmem:[%s1 + $0x328] sm:$0xf]
  %v253 = vld [vmem:[%s1 + $0x32c] sm:$0xf]
  %v254 = vld [vmem:[%s1 + $0x330] sm:$0xf]
  %v255 = vld [vmem:[%s1 + $0x334] sm:$0xf]
  %v256 = vld [vmem:[%s1 + $0x338] sm:$0xf]
  %v257 = vld [vmem:[%s1 + $0x33c] sm:$0xf]
  %v258 = vld [vmem:[%s1 + $0x340] sm:$0xf]
  %v259 = vld [vmem:[%s1 + $0x344] sm:$0xf]
  %v260 = vld [vmem:[%s1 + $0x348] sm:$0xf]
  %v261 = vld [vmem:[%s1 + $0x34c] sm:$0xf]
  %v262 = vld [vmem:[%s1 + $0x350] sm:$0xf]
  %v263 = vld [vmem:[%s1 + $0x354] sm:$0xf]
  %v264 = vld [vmem:[%s1 + $0x358] sm:$0xf]
  %v265 = vld [vmem:[%s1 + $0x35c] sm:$0xf]
  %v266 = vld [vmem:[%s1 + $0x360] sm:$0xf]
  %v267 = vld [vmem:[%s1 + $0x364] sm:$0xf]
  %v268 = vld [vmem:[%s1 + $0x368] sm:$0xf]
  %v269 = vld [vmem:[%s1 + $0x36c] sm:$0xf]
  %v270 = vld [vmem:[%s1 + $0x370] sm:$0xf]
  %v271 = vld [vmem:[%s1 + $0x374] sm:$0xf]
  %v272 = vld [vmem:[%s1 + $0x378] sm:$0xf]
  %v273 = vld [vmem:[%s1 + $0x37c] sm:$0xf]
  %v274 = vld [vmem:[%s1 + $0x380] sm:$0xf]
  %v275 = vld [vmem:[%s1 + $0x384] sm:$0xf]
  %v276 = vld [vmem:[%s1 + $0x388] sm:$0xf]
  %v277 = vld [vmem:[%s1 + $0x38c] sm:$0xf]
  %v278 = vld [vmem:[%s1 + $0x390] sm:$0xf]
  %v279 = vld [vmem:[%s1 + $0x394] sm:$0xf]
  %v280 = vld [vmem:[%s1 + $0x398] sm:$0xf]
  %v281 = vld [vmem:[%s1 + $0x39c] sm:$0xf]
  %v282 = vld [vmem:[%s1 + $0x3a0] sm:$0xf]
  %v283 = vld [vmem:[%s1 + $0x3a4] sm:$0xf]
  %v284 = vld [vmem:[%s1 + $0x3a8] sm:$0xf]
  %v285 = vld [vmem:[%s1 + $0x3ac] sm:$0xf]
  %v286 = vld [vmem:[%s1 + $0x3b0] sm:$0xf]
  %v287 = vld [vmem:[%s1 + $0x3b4] sm:$0xf]
  %v288 = vld [vmem:[%s1 + $0x3b8] sm:$0xf]
  %v289 = vld [vmem:[%s1 + $0x3bc] sm:$0xf]
  %v290 = vld [vmem:[%s1 + $0x3c0] sm:$0xf]
  %v291 = vld [vmem:[%s1 + $0x3c4] sm:$0xf]
  %v292 = vld [vmem:[%s1 + $0x3c8] sm:$0xf]
  %v293 = vld [vmem:[%s1 + $0x3cc] sm:$0xf]
  %v294 = vld [vmem:[%s1 + $0x3d0] sm:$0xf]
  %v295 = vld [vmem:[%s1 + $0x3d4] sm:$0xf]
  %v296 = vld [vmem:[%s1 + $0x3d8] sm:$0xf]
  %v297 = vld [vmem:[%s1 + $0x3dc] sm:$0xf]
  %v298 = vld [vmem:[%s1 + $0x3e0] sm:$0xf]
  %v299 = vld [vmem:[%s1 + $0x3e4] sm:$0xf]
  %v300 = vld [vmem:[%s1 + $0x3e8] sm:$0xf]
  %v301 = vld [vmem:[%s1 + $0x3ec] sm:$0xf]
  %v302 = vld [vmem:[%s1 + $0x3f0] sm:$0xf]
  %v303 = vld [vmem:[%s1 + $0x3f4] sm:$0xf]
  %v304 = vld [vmem:[%s1 + $0x3f8] sm:$0xf]
  %v305 = vld [vmem:[%s1 + $0x3fc] sm:$0xf]
  %v306 = vld [vmem:[%s1 + $0x400] sm:$0xf]
  %v307 = vld [vmem:[%s1 + $0x404] sm:$0xf]
  %v308 = vld [vmem:[%s1 + $0x408] sm:$0xf]
  %v309 = vld [vmem:[%s1 + $0x40c] sm:$0xf]
  %v310 = vld [vmem:[%s1 + $0x410] sm:$0xf]
  %v311 = vld [vmem:[%s1 + $0x414] sm:$0xf]
  %v312 = vld [vmem:[%s1 + $0x418] sm:$0xf]
  %v313 = vld [vmem:[%s1 + $0x41c] sm:$0xf]
  %v314 = vld [vmem:[%s1 + $0x420] sm:$0xf]
  %v315 = vld [vmem:[%s1 + $0x424] sm:$0xf]
  %v316 = vld [vmem:[%s1 + $0x428] sm:$0xf]
  %v317 = vld [vmem:[%s1 + $0x42c] sm:$0xf]
  %v318 = vld [vmem:[%s1 + $0x430] sm:$0xf]
  %v319 = vld [vmem:[%s1 + $0x434] sm:$0xf]
  %v320 = vld [vmem:[%s1 + $0x438] sm:$0xf]
  %v321 = vld [vmem:[%s1 + $0x43c] sm:$0xf]
  %v322 = vld [vmem:[%s1 + $0x440] sm:$0xf]
  %v323 = vld [vmem:[%s1 + $0x444] sm:$0xf]
  %v324 = vld [vmem:[%s1 + $0x448] sm:$0xf]
  %v325 = vld [vmem:[%s1 + $0x44c] sm:$0xf]
  %v326 = vld [vmem:[%s1 + $0x450] sm:$0xf]
  %v327 = vld [vmem:[%s1 + $0x454] sm:$0xf]
  %v328 = vld [vmem:[%s1 + $0x458] sm:$0xf]
  %v329 = vld [vmem:[%s1 + $0x45c] sm:$0xf]
  %v330 = vld [vmem:[%s1 + $0x460] sm:$0xf]
  %v331 = vld [vmem:[%s1 + $0x464] sm:$0xf]
  %v332 = vld [vmem:[%s1 + $0x468] sm:$0xf]
  %v333 = vld [vmem:[%s1 + $0x46c] sm:$0xf]
  %v334 = vld [vmem:[%s1 + $0x470] sm:$0xf]
  %v335 = vld [vmem:[%s1 + $0x474] sm:$0xf]
  %v336 = vld [vmem:[%s1 + $0x478] sm:$0xf]
  %v337 = vld [vmem:[%s1 + $0x47c] sm:$0xf]
  %v338 = vld [vmem:[%s2] sm:$0x1]
  %v340 = vperm.slane %v338, 0
  %v378 = vunpack.c.l.b16 %v14
  %v379 = vunpack.c.h.b16 %v14
  %v380 = vunpack.c.l.b16 %v15
  %v381 = vunpack.c.h.b16 %v15
  %v382 = vunpack.c.l.b16 %v16
  %v383 = vunpack.c.h.b16 %v16
  %v384 = vunpack.c.l.b16 %v17
  %v385 = vunpack.c.h.b16 %v17
  %v386 = vunpack.c.l.b16 %v18
  %v387 = vunpack.c.h.b16 %v18
  %v388 = vunpack.c.l.b16 %v19
  %v389 = vunpack.c.h.b16 %v19
  %v390 = vunpack.c.l.b16 %v20
  %v391 = vunpack.c.h.b16 %v20
  %v392 = vunpack.c.l.b16 %v21
  %v393 = vunpack.c.h.b16 %v21
  %v394 = vunpack.c.l.b16 %v22
  %v395 = vunpack.c.h.b16 %v22
  %v396 = vunpack.c.l.b16 %v23
  %v397 = vunpack.c.h.b16 %v23
  %v398 = vunpack.c.l.b16 %v24
  %v399 = vunpack.c.h.b16 %v24
  %v400 = vunpack.c.l.b16 %v25
  %v401 = vunpack.c.h.b16 %v25
  %v402 = vunpack.c.l.b16 %v26
  %v403 = vunpack.c.h.b16 %v26
  %v404 = vunpack.c.l.b16 %v27
  %v405 = vunpack.c.h.b16 %v27
  %v406 = vunpack.c.l.b16 %v28
  %v407 = vunpack.c.h.b16 %v28
  %v408 = vunpack.c.l.b16 %v29
  %v409 = vunpack.c.h.b16 %v29
  %v410 = vunpack.c.l.b16 %v30
  %v411 = vunpack.c.h.b16 %v30
  %v412 = vunpack.c.l.b16 %v31
  %v413 = vunpack.c.h.b16 %v31
  %v414 = vunpack.c.l.b16 %v32
  %v415 = vunpack.c.h.b16 %v32
  %v416 = vunpack.c.l.b16 %v33
  %v417 = vunpack.c.h.b16 %v33
  %v418 = vunpack.c.l.b16 %v34
  %v419 = vunpack.c.h.b16 %v34
  %v420 = vunpack.c.l.b16 %v35
  %v421 = vunpack.c.h.b16 %v35
  %v422 = vunpack.c.l.b16 %v36
  %v423 = vunpack.c.h.b16 %v36
  %v424 = vunpack.c.l.b16 %v37
  %v425 = vunpack.c.h.b16 %v37
  %v426 = vunpack.c.l.b16 %v38
  %v427 = vunpack.c.h.b16 %v38
  %v428 = vunpack.c.l.b16 %v39
  %v429 = vunpack.c.h.b16 %v39
  %v430 = vunpack.c.l.b16 %v40
  %v431 = vunpack.c.h.b16 %v40
  %v432 = vunpack.c.l.b16 %v41
  %v433 = vunpack.c.h.b16 %v41
  %v434 = vunpack.c.l.b16 %v42
  %v435 = vunpack.c.h.b16 %v42
  %v436 = vunpack.c.l.b16 %v43
  %v437 = vunpack.c.h.b16 %v43
  %v438 = vunpack.c.l.b16 %v44
  %v439 = vunpack.c.h.b16 %v44
  %v440 = vunpack.c.l.b16 %v45
  %v441 = vunpack.c.h.b16 %v45
  %v442 = vunpack.c.l.b16 %v46
  %v443 = vunpack.c.h.b16 %v46
  %v444 = vunpack.c.l.b16 %v47
  %v445 = vunpack.c.h.b16 %v47
  %v446 = vunpack.c.l.b16 %v48
  %v447 = vunpack.c.h.b16 %v48
  %v448 = vunpack.c.l.b16 %v49
  %v449 = vunpack.c.h.b16 %v49
  %v450 = vpack.c.b16 %v396, %v378
  %v451 = vpack.c.b16 %v397, %v379
  %v452 = vpack.c.b16 %v398, %v380
  %v453 = vpack.c.b16 %v399, %v381
  %v454 = vpack.c.b16 %v400, %v382
  %v455 = vpack.c.b16 %v401, %v383
  %v456 = vpack.c.b16 %v402, %v384
  %v457 = vpack.c.b16 %v403, %v385
  %v458 = vpack.c.b16 %v404, %v386
  %v459 = vpack.c.b16 %v405, %v387
  %v460 = vpack.c.b16 %v406, %v388
  %v461 = vpack.c.b16 %v407, %v389
  %v462 = vpack.c.b16 %v408, %v390
  %v463 = vpack.c.b16 %v409, %v391
  %v464 = vpack.c.b16 %v410, %v392
  %v465 = vpack.c.b16 %v411, %v393
  %v466 = vpack.c.b16 %v412, %v394
  %v467 = vpack.c.b16 %v413, %v395
  %v468 = vpack.c.b16 %v432, %v414
  %v469 = vpack.c.b16 %v433, %v415
  %v470 = vpack.c.b16 %v434, %v416
  %v471 = vpack.c.b16 %v435, %v417
  %v472 = vpack.c.b16 %v436, %v418
  %v473 = vpack.c.b16 %v437, %v419
  %v474 = vpack.c.b16 %v438, %v420
  %v475 = vpack.c.b16 %v439, %v421
  %v476 = vpack.c.b16 %v440, %v422
  %v477 = vpack.c.b16 %v441, %v423
  %v478 = vpack.c.b16 %v442, %v424
  %v479 = vpack.c.b16 %v443, %v425
  %v480 = vpack.c.b16 %v444, %v426
  %v481 = vpack.c.b16 %v445, %v427
  %v482 = vpack.c.b16 %v446, %v428
  %v483 = vpack.c.b16 %v447, %v429
  %v484 = vpack.c.b16 %v448, %v430
  %v485 = vpack.c.b16 %v449, %v431
  %v810 = vunpack.c.l.b16 %v50
  %v811 = vunpack.c.l.b16 %v51
  %v812 = vunpack.c.l.b16 %v52
  %v813 = vunpack.c.l.b16 %v53
  %v814 = vunpack.c.l.b16 %v54
  %v815 = vunpack.c.l.b16 %v55
  %v816 = vunpack.c.l.b16 %v56
  %v817 = vunpack.c.l.b16 %v57
  %v818 = vunpack.c.l.b16 %v58
  %v819 = vunpack.c.l.b16 %v59
  %v820 = vunpack.c.l.b16 %v60
  %v821 = vunpack.c.l.b16 %v61
  %v822 = vunpack.c.l.b16 %v62
  %v823 = vunpack.c.l.b16 %v63
  %v824 = vunpack.c.l.b16 %v64
  %v825 = vunpack.c.l.b16 %v65
  %v826 = vunpack.c.l.b16 %v66
  %v827 = vunpack.c.l.b16 %v67
  %v828 = vunpack.c.l.b16 %v68
  %v829 = vunpack.c.l.b16 %v69
  %v830 = vunpack.c.l.b16 %v70
  %v831 = vunpack.c.l.b16 %v71
  %v832 = vunpack.c.l.b16 %v72
  %v833 = vunpack.c.l.b16 %v73
  %v834 = vunpack.c.l.b16 %v74
  %v835 = vunpack.c.l.b16 %v75
  %v836 = vunpack.c.l.b16 %v76
  %v837 = vunpack.c.l.b16 %v77
  %v838 = vunpack.c.l.b16 %v78
  %v839 = vunpack.c.l.b16 %v79
  %v840 = vunpack.c.l.b16 %v80
  %v841 = vunpack.c.l.b16 %v81
  %v842 = vunpack.c.l.b16 %v82
  %v843 = vunpack.c.l.b16 %v83
  %v844 = vunpack.c.l.b16 %v84
  %v845 = vunpack.c.l.b16 %v85
  %v846 = vunpack.c.l.b16 %v86
  %v847 = vunpack.c.l.b16 %v87
  %v848 = vunpack.c.l.b16 %v88
  %v849 = vunpack.c.l.b16 %v89
  %v850 = vunpack.c.l.b16 %v90
  %v851 = vunpack.c.l.b16 %v91
  %v852 = vunpack.c.l.b16 %v92
  %v853 = vunpack.c.l.b16 %v93
  %v854 = vunpack.c.l.b16 %v94
  %v855 = vunpack.c.l.b16 %v95
  %v856 = vunpack.c.l.b16 %v96
  %v857 = vunpack.c.l.b16 %v97
  %v858 = vunpack.c.l.b16 %v98
  %v859 = vunpack.c.l.b16 %v99
  %v860 = vunpack.c.l.b16 %v100
  %v861 = vunpack.c.l.b16 %v101
  %v862 = vunpack.c.l.b16 %v102
  %v863 = vunpack.c.l.b16 %v103
  %v864 = vunpack.c.l.b16 %v104
  %v865 = vunpack.c.l.b16 %v105
  %v866 = vunpack.c.l.b16 %v106
  %v867 = vunpack.c.l.b16 %v107
  %v868 = vunpack.c.l.b16 %v108
  %v869 = vunpack.c.l.b16 %v109
  %v870 = vunpack.c.l.b16 %v110
  %v871 = vunpack.c.l.b16 %v111
  %v872 = vunpack.c.l.b16 %v112
  %v873 = vunpack.c.l.b16 %v113
  %v874 = vunpack.c.l.b16 %v114
  %v875 = vunpack.c.l.b16 %v115
  %v876 = vunpack.c.l.b16 %v116
  %v877 = vunpack.c.l.b16 %v117
  %v878 = vunpack.c.l.b16 %v118
  %v879 = vunpack.c.l.b16 %v119
  %v880 = vunpack.c.l.b16 %v120
  %v881 = vunpack.c.l.b16 %v121
  %v882 = vunpack.c.l.b16 %v122
  %v883 = vunpack.c.l.b16 %v123
  %v884 = vunpack.c.l.b16 %v124
  %v885 = vunpack.c.l.b16 %v125
  %v886 = vunpack.c.l.b16 %v126
  %v887 = vunpack.c.l.b16 %v127
  %v888 = vunpack.c.l.b16 %v128
  %v889 = vunpack.c.l.b16 %v129
  %v890 = vunpack.c.l.b16 %v130
  %v891 = vunpack.c.l.b16 %v131
  %v892 = vunpack.c.l.b16 %v132
  %v893 = vunpack.c.l.b16 %v133
  %v894 = vunpack.c.l.b16 %v134
  %v895 = vunpack.c.l.b16 %v135
  %v896 = vunpack.c.l.b16 %v136
  %v897 = vunpack.c.l.b16 %v137
  %v898 = vunpack.c.l.b16 %v138
  %v899 = vunpack.c.l.b16 %v139
  %v900 = vunpack.c.l.b16 %v140
  %v901 = vunpack.c.l.b16 %v141
  %v902 = vunpack.c.l.b16 %v142
  %v903 = vunpack.c.l.b16 %v143
  %v904 = vunpack.c.l.b16 %v144
  %v905 = vunpack.c.l.b16 %v145
  %v906 = vunpack.c.l.b16 %v146
  %v907 = vunpack.c.l.b16 %v147
  %v908 = vunpack.c.l.b16 %v148
  %v909 = vunpack.c.l.b16 %v149
  %v910 = vunpack.c.l.b16 %v150
  %v911 = vunpack.c.l.b16 %v151
  %v912 = vunpack.c.l.b16 %v152
  %v913 = vunpack.c.l.b16 %v153
  %v914 = vunpack.c.l.b16 %v154
  %v915 = vunpack.c.l.b16 %v155
  %v916 = vunpack.c.l.b16 %v156
  %v917 = vunpack.c.l.b16 %v157
  %v918 = vunpack.c.l.b16 %v158
  %v919 = vunpack.c.l.b16 %v159
  %v920 = vunpack.c.l.b16 %v160
  %v921 = vunpack.c.l.b16 %v161
  %v922 = vunpack.c.l.b16 %v162
  %v923 = vunpack.c.l.b16 %v163
  %v924 = vunpack.c.l.b16 %v164
  %v925 = vunpack.c.l.b16 %v165
  %v926 = vunpack.c.l.b16 %v166
  %v927 = vunpack.c.l.b16 %v167
  %v928 = vunpack.c.l.b16 %v168
  %v929 = vunpack.c.l.b16 %v169
  %v930 = vunpack.c.l.b16 %v170
  %v931 = vunpack.c.l.b16 %v171
  %v932 = vunpack.c.l.b16 %v172
  %v933 = vunpack.c.l.b16 %v173
  %v934 = vunpack.c.l.b16 %v174
  %v935 = vunpack.c.l.b16 %v175
  %v936 = vunpack.c.l.b16 %v176
  %v937 = vunpack.c.l.b16 %v177
  %v938 = vunpack.c.l.b16 %v178
  %v939 = vunpack.c.l.b16 %v179
  %v940 = vunpack.c.l.b16 %v180
  %v941 = vunpack.c.l.b16 %v181
  %v942 = vunpack.c.l.b16 %v182
  %v943 = vunpack.c.l.b16 %v183
  %v944 = vunpack.c.l.b16 %v184
  %v945 = vunpack.c.l.b16 %v185
  %v946 = vunpack.c.l.b16 %v186
  %v947 = vunpack.c.l.b16 %v187
  %v948 = vunpack.c.l.b16 %v188
  %v949 = vunpack.c.l.b16 %v189
  %v950 = vunpack.c.l.b16 %v190
  %v951 = vunpack.c.l.b16 %v191
  %v952 = vunpack.c.l.b16 %v192
  %v953 = vunpack.c.l.b16 %v193
  %v954 = vunpack.c.l.b16 %v194
  %v955 = vunpack.c.l.b16 %v195
  %v956 = vunpack.c.l.b16 %v196
  %v957 = vunpack.c.l.b16 %v197
  %v958 = vunpack.c.l.b16 %v198
  %v959 = vunpack.c.l.b16 %v199
  %v960 = vunpack.c.l.b16 %v200
  %v961 = vunpack.c.l.b16 %v201
  %v962 = vunpack.c.l.b16 %v202
  %v963 = vunpack.c.l.b16 %v203
  %v964 = vunpack.c.l.b16 %v204
  %v965 = vunpack.c.l.b16 %v205
  %v966 = vunpack.c.l.b16 %v206
  %v967 = vunpack.c.l.b16 %v207
  %v968 = vunpack.c.l.b16 %v208
  %v969 = vunpack.c.l.b16 %v209
  %v970 = vunpack.c.l.b16 %v210
  %v971 = vunpack.c.l.b16 %v211
  %v972 = vunpack.c.l.b16 %v212
  %v973 = vunpack.c.l.b16 %v213
  %v974 = vunpack.c.l.b16 %v214
  %v975 = vunpack.c.l.b16 %v215
  %v976 = vunpack.c.l.b16 %v216
  %v977 = vunpack.c.l.b16 %v217
  %v978 = vunpack.c.l.b16 %v218
  %v979 = vunpack.c.l.b16 %v219
  %v980 = vunpack.c.l.b16 %v220
  %v981 = vunpack.c.l.b16 %v221
  %v982 = vunpack.c.l.b16 %v222
  %v983 = vunpack.c.l.b16 %v223
  %v984 = vunpack.c.l.b16 %v224
  %v985 = vunpack.c.l.b16 %v225
  %v986 = vunpack.c.l.b16 %v226
  %v987 = vunpack.c.l.b16 %v227
  %v988 = vunpack.c.l.b16 %v228
  %v989 = vunpack.c.l.b16 %v229
  %v990 = vunpack.c.l.b16 %v230
  %v991 = vunpack.c.l.b16 %v231
  %v992 = vunpack.c.l.b16 %v232
  %v993 = vunpack.c.l.b16 %v233
  %v994 = vunpack.c.l.b16 %v234
  %v995 = vunpack.c.l.b16 %v235
  %v996 = vunpack.c.l.b16 %v236
  %v997 = vunpack.c.l.b16 %v237
  %v998 = vunpack.c.l.b16 %v238
  %v999 = vunpack.c.l.b16 %v239
  %v1000 = vunpack.c.l.b16 %v240
  %v1001 = vunpack.c.l.b16 %v241
  %v1002 = vunpack.c.l.b16 %v242
  %v1003 = vunpack.c.l.b16 %v243
  %v1004 = vunpack.c.l.b16 %v244
  %v1005 = vunpack.c.l.b16 %v245
  %v1006 = vunpack.c.l.b16 %v246
  %v1007 = vunpack.c.l.b16 %v247
  %v1008 = vunpack.c.l.b16 %v248
  %v1009 = vunpack.c.l.b16 %v249
  %v1010 = vunpack.c.l.b16 %v250
  %v1011 = vunpack.c.l.b16 %v251
  %v1012 = vunpack.c.l.b16 %v252
  %v1013 = vunpack.c.l.b16 %v253
  %v1014 = vunpack.c.l.b16 %v254
  %v1015 = vunpack.c.l.b16 %v255
  %v1016 = vunpack.c.l.b16 %v256
  %v1017 = vunpack.c.l.b16 %v257
  %v1018 = vunpack.c.l.b16 %v258
  %v1019 = vunpack.c.l.b16 %v259
  %v1020 = vunpack.c.l.b16 %v260
  %v1021 = vunpack.c.l.b16 %v261
  %v1022 = vunpack.c.l.b16 %v262
  %v1023 = vunpack.c.l.b16 %v263
  %v1024 = vunpack.c.l.b16 %v264
  %v1025 = vunpack.c.l.b16 %v265
  %v1026 = vunpack.c.l.b16 %v266
  %v1027 = vunpack.c.l.b16 %v267
  %v1028 = vunpack.c.l.b16 %v268
  %v1029 = vunpack.c.l.b16 %v269
  %v1030 = vunpack.c.l.b16 %v270
  %v1031 = vunpack.c.l.b16 %v271
  %v1032 = vunpack.c.l.b16 %v272
  %v1033 = vunpack.c.l.b16 %v273
  %v1034 = vunpack.c.l.b16 %v274
  %v1035 = vunpack.c.l.b16 %v275
  %v1036 = vunpack.c.l.b16 %v276
  %v1037 = vunpack.c.l.b16 %v277
  %v1038 = vunpack.c.l.b16 %v278
  %v1039 = vunpack.c.l.b16 %v279
  %v1040 = vunpack.c.l.b16 %v280
  %v1041 = vunpack.c.l.b16 %v281
  %v1042 = vunpack.c.l.b16 %v282
  %v1043 = vunpack.c.l.b16 %v283
  %v1044 = vunpack.c.l.b16 %v284
  %v1045 = vunpack.c.l.b16 %v285
  %v1046 = vunpack.c.l.b16 %v286
  %v1047 = vunpack.c.l.b16 %v287
  %v1048 = vunpack.c.l.b16 %v288
  %v1049 = vunpack.c.l.b16 %v289
  %v1050 = vunpack.c.l.b16 %v290
  %v1051 = vunpack.c.l.b16 %v291
  %v1052 = vunpack.c.l.b16 %v292
  %v1053 = vunpack.c.l.b16 %v293
  %v1054 = vunpack.c.l.b16 %v294
  %v1055 = vunpack.c.l.b16 %v295
  %v1056 = vunpack.c.l.b16 %v296
  %v1057 = vunpack.c.l.b16 %v297
  %v1058 = vunpack.c.l.b16 %v298
  %v1059 = vunpack.c.l.b16 %v299
  %v1060 = vunpack.c.l.b16 %v300
  %v1061 = vunpack.c.l.b16 %v301
  %v1062 = vunpack.c.l.b16 %v302
  %v1063 = vunpack.c.l.b16 %v303
  %v1064 = vunpack.c.l.b16 %v304
  %v1065 = vunpack.c.l.b16 %v305
  %v1066 = vunpack.c.l.b16 %v306
  %v1067 = vunpack.c.l.b16 %v307
  %v1068 = vunpack.c.l.b16 %v308
  %v1069 = vunpack.c.l.b16 %v309
  %v1070 = vunpack.c.l.b16 %v310
  %v1071 = vunpack.c.l.b16 %v311
  %v1072 = vunpack.c.l.b16 %v312
  %v1073 = vunpack.c.l.b16 %v313
  %v1074 = vunpack.c.l.b16 %v314
  %v1075 = vunpack.c.l.b16 %v315
  %v1076 = vunpack.c.l.b16 %v316
  %v1077 = vunpack.c.l.b16 %v317
  %v1078 = vunpack.c.l.b16 %v318
  %v1079 = vunpack.c.l.b16 %v319
  %v1080 = vunpack.c.l.b16 %v320
  %v1081 = vunpack.c.l.b16 %v321
  %v1082 = vunpack.c.l.b16 %v322
  %v1083 = vunpack.c.l.b16 %v323
  %v1084 = vunpack.c.l.b16 %v324
  %v1085 = vunpack.c.l.b16 %v325
  %v1086 = vunpack.c.l.b16 %v326
  %v1087 = vunpack.c.l.b16 %v327
  %v1088 = vunpack.c.l.b16 %v328
  %v1089 = vunpack.c.l.b16 %v329
  %v1090 = vunpack.c.l.b16 %v330
  %v1091 = vunpack.c.l.b16 %v331
  %v1092 = vunpack.c.l.b16 %v332
  %v1093 = vunpack.c.l.b16 %v333
  %v1094 = vunpack.c.l.b16 %v334
  %v1095 = vunpack.c.l.b16 %v335
  %v1096 = vunpack.c.l.b16 %v336
  %v1097 = vunpack.c.l.b16 %v337
  %v1098 = vpack.c.b16 %v811, %v810
  %v1099 = vpack.c.b16 %v813, %v812
  %v1100 = vpack.c.b16 %v815, %v814
  %v1101 = vpack.c.b16 %v817, %v816
  %v1102 = vpack.c.b16 %v819, %v818
  %v1103 = vpack.c.b16 %v821, %v820
  %v1104 = vpack.c.b16 %v823, %v822
  %v1105 = vpack.c.b16 %v825, %v824
  %v1106 = vpack.c.b16 %v827, %v826
  %v1107 = vpack.c.b16 %v829, %v828
  %v1108 = vpack.c.b16 %v831, %v830
  %v1109 = vpack.c.b16 %v833, %v832
  %v1110 = vpack.c.b16 %v835, %v834
  %v1111 = vpack.c.b16 %v837, %v836
  %v1112 = vpack.c.b16 %v839, %v838
  %v1113 = vpack.c.b16 %v841, %v840
  %v1114 = vpack.c.b16 %v843, %v842
  %v1115 = vpack.c.b16 %v845, %v844
  %v1116 = vpack.c.b16 %v847, %v846
  %v1117 = vpack.c.b16 %v849, %v848
  %v1118 = vpack.c.b16 %v851, %v850
  %v1119 = vpack.c.b16 %v853, %v852
  %v1120 = vpack.c.b16 %v855, %v854
  %v1121 = vpack.c.b16 %v857, %v856
  %v1122 = vpack.c.b16 %v859, %v858
  %v1123 = vpack.c.b16 %v861, %v860
  %v1124 = vpack.c.b16 %v863, %v862
  %v1125 = vpack.c.b16 %v865, %v864
  %v1126 = vpack.c.b16 %v867, %v866
  %v1127 = vpack.c.b16 %v869, %v868
  %v1128 = vpack.c.b16 %v871, %v870
  %v1129 = vpack.c.b16 %v873, %v872
  %v1130 = vpack.c.b16 %v875, %v874
  %v1131 = vpack.c.b16 %v877, %v876
  %v1132 = vpack.c.b16 %v879, %v878
  %v1133 = vpack.c.b16 %v881, %v880
  %v1134 = vpack.c.b16 %v883, %v882
  %v1135 = vpack.c.b16 %v885, %v884
  %v1136 = vpack.c.b16 %v887, %v886
  %v1137 = vpack.c.b16 %v889, %v888
  %v1138 = vpack.c.b16 %v891, %v890
  %v1139 = vpack.c.b16 %v893, %v892
  %v1140 = vpack.c.b16 %v895, %v894
  %v1141 = vpack.c.b16 %v897, %v896
  %v1142 = vpack.c.b16 %v899, %v898
  %v1143 = vpack.c.b16 %v901, %v900
  %v1144 = vpack.c.b16 %v903, %v902
  %v1145 = vpack.c.b16 %v905, %v904
  %v1146 = vpack.c.b16 %v907, %v906
  %v1147 = vpack.c.b16 %v909, %v908
  %v1148 = vpack.c.b16 %v911, %v910
  %v1149 = vpack.c.b16 %v913, %v912
  %v1150 = vpack.c.b16 %v915, %v914
  %v1151 = vpack.c.b16 %v917, %v916
  %v1152 = vpack.c.b16 %v919, %v918
  %v1153 = vpack.c.b16 %v921, %v920
  %v1154 = vpack.c.b16 %v923, %v922
  %v1155 = vpack.c.b16 %v925, %v924
  %v1156 = vpack.c.b16 %v927, %v926
  %v1157 = vpack.c.b16 %v929, %v928
  %v1158 = vpack.c.b16 %v931, %v930
  %v1159 = vpack.c.b16 %v933, %v932
  %v1160 = vpack.c.b16 %v935, %v934
  %v1161 = vpack.c.b16 %v937, %v936
  %v1162 = vpack.c.b16 %v939, %v938
  %v1163 = vpack.c.b16 %v941, %v940
  %v1164 = vpack.c.b16 %v943, %v942
  %v1165 = vpack.c.b16 %v945, %v944
  %v1166 = vpack.c.b16 %v947, %v946
  %v1167 = vpack.c.b16 %v949, %v948
  %v1168 = vpack.c.b16 %v951, %v950
  %v1169 = vpack.c.b16 %v953, %v952
  %v1170 = vpack.c.b16 %v955, %v954
  %v1171 = vpack.c.b16 %v957, %v956
  %v1172 = vpack.c.b16 %v959, %v958
  %v1173 = vpack.c.b16 %v961, %v960
  %v1174 = vpack.c.b16 %v963, %v962
  %v1175 = vpack.c.b16 %v965, %v964
  %v1176 = vpack.c.b16 %v967, %v966
  %v1177 = vpack.c.b16 %v969, %v968
  %v1178 = vpack.c.b16 %v971, %v970
  %v1179 = vpack.c.b16 %v973, %v972
  %v1180 = vpack.c.b16 %v975, %v974
  %v1181 = vpack.c.b16 %v977, %v976
  %v1182 = vpack.c.b16 %v979, %v978
  %v1183 = vpack.c.b16 %v981, %v980
  %v1184 = vpack.c.b16 %v983, %v982
  %v1185 = vpack.c.b16 %v985, %v984
  %v1186 = vpack.c.b16 %v987, %v986
  %v1187 = vpack.c.b16 %v989, %v988
  %v1188 = vpack.c.b16 %v991, %v990
  %v1189 = vpack.c.b16 %v993, %v992
  %v1190 = vpack.c.b16 %v995, %v994
  %v1191 = vpack.c.b16 %v997, %v996
  %v1192 = vpack.c.b16 %v999, %v998
  %v1193 = vpack.c.b16 %v1001, %v1000
  %v1194 = vpack.c.b16 %v1003, %v1002
  %v1195 = vpack.c.b16 %v1005, %v1004
  %v1196 = vpack.c.b16 %v1007, %v1006
  %v1197 = vpack.c.b16 %v1009, %v1008
  %v1198 = vpack.c.b16 %v1011, %v1010
  %v1199 = vpack.c.b16 %v1013, %v1012
  %v1200 = vpack.c.b16 %v1015, %v1014
  %v1201 = vpack.c.b16 %v1017, %v1016
  %v1202 = vpack.c.b16 %v1019, %v1018
  %v1203 = vpack.c.b16 %v1021, %v1020
  %v1204 = vpack.c.b16 %v1023, %v1022
  %v1205 = vpack.c.b16 %v1025, %v1024
  %v1206 = vpack.c.b16 %v1027, %v1026
  %v1207 = vpack.c.b16 %v1029, %v1028
  %v1208 = vpack.c.b16 %v1031, %v1030
  %v1209 = vpack.c.b16 %v1033, %v1032
  %v1210 = vpack.c.b16 %v1035, %v1034
  %v1211 = vpack.c.b16 %v1037, %v1036
  %v1212 = vpack.c.b16 %v1039, %v1038
  %v1213 = vpack.c.b16 %v1041, %v1040
  %v1214 = vpack.c.b16 %v1043, %v1042
  %v1215 = vpack.c.b16 %v1045, %v1044
  %v1216 = vpack.c.b16 %v1047, %v1046
  %v1217 = vpack.c.b16 %v1049, %v1048
  %v1218 = vpack.c.b16 %v1051, %v1050
  %v1219 = vpack.c.b16 %v1053, %v1052
  %v1220 = vpack.c.b16 %v1055, %v1054
  %v1221 = vpack.c.b16 %v1057, %v1056
  %v1222 = vpack.c.b16 %v1059, %v1058
  %v1223 = vpack.c.b16 %v1061, %v1060
  %v1224 = vpack.c.b16 %v1063, %v1062
  %v1225 = vpack.c.b16 %v1065, %v1064
  %v1226 = vpack.c.b16 %v1067, %v1066
  %v1227 = vpack.c.b16 %v1069, %v1068
  %v1228 = vpack.c.b16 %v1071, %v1070
  %v1229 = vpack.c.b16 %v1073, %v1072
  %v1230 = vpack.c.b16 %v1075, %v1074
  %v1231 = vpack.c.b16 %v1077, %v1076
  %v1232 = vpack.c.b16 %v1079, %v1078
  %v1233 = vpack.c.b16 %v1081, %v1080
  %v1234 = vpack.c.b16 %v1083, %v1082
  %v1235 = vpack.c.b16 %v1085, %v1084
  %v1236 = vpack.c.b16 %v1087, %v1086
  %v1237 = vpack.c.b16 %v1089, %v1088
  %v1238 = vpack.c.b16 %v1091, %v1090
  %v1239 = vpack.c.b16 %v1093, %v1092
  %v1240 = vpack.c.b16 %v1095, %v1094
  %v1241 = vpack.c.b16 %v1097, %v1096
  %1386 = vmatpush.bf16.msra.mxu0 %v1105
  %1387 = vmatpush.bf16.msra.mxu0 %v1104
  %1388 = vmatpush.bf16.msra.mxu0 %v1103
  %1389 = vmatpush.bf16.msra.mxu0 %v1102
  %1390 = vmatpush.bf16.msra.mxu0 %v1101
  %1391 = vmatpush.bf16.msra.mxu0 %v1100
  %1392 = vmatpush.bf16.msra.mxu0 %v1099
  %1393 = vmatpush.bf16.msra.mxu0 %v1098
  %1394 = vmatmul.bf16.gmra.mxu0 %v450
  %v1395 = vpop.f32.mrf.mxu0
  %v1396 = vadd.f32 %v340, %v1395
  %v1397 = vpop.f32.mrf.mxu0
  %v1398 = vadd.f32 %v340, %v1397
  %1399 = vmatmul.bf16.gmra.mxu0 %v468
  %v1400 = vpop.f32.mrf.mxu0
  %v1401 = vadd.f32 %v340, %v1400
  %v1402 = vpop.f32.mrf.mxu0
  %v1403 = vadd.f32 %v340, %v1402
  %1404 = vdwg.mxu0
  %1405 = vmatpush.bf16.msra.mxu0 %v1113
  %1406 = vmatpush.bf16.msra.mxu0 %v1112
  %1407 = vmatpush.bf16.msra.mxu0 %v1111
  %1408 = vmatpush.bf16.msra.mxu0 %v1110
  %1409 = vmatpush.bf16.msra.mxu0 %v1109
  %1410 = vmatpush.bf16.msra.mxu0 %v1108
  %1411 = vmatpush.bf16.msra.mxu0 %v1107
  %1412 = vmatpush.bf16.msra.mxu0 %v1106
  %1413 = vmatmul.bf16.gmra.mxu0 %v451
  %v1414 = vpop.f32.mrf.mxu0
  %v1415 = vadd.f32 %v1396, %v1414
  %v1416 = vpop.f32.mrf.mxu0
  %v1417 = vadd.f32 %v1398, %v1416
  %1418 = vmatmul.bf16.gmra.mxu0 %v469
  %v1419 = vpop.f32.mrf.mxu0
  %v1420 = vadd.f32 %v1401, %v1419
  %v1421 = vpop.f32.mrf.mxu0
  %v1422 = vadd.f32 %v1403, %v1421
  %1423 = vdwg.mxu0
  %1424 = vmatpush.bf16.msra.mxu0 %v1121
  %1425 = vmatpush.bf16.msra.mxu0 %v1120
  %1426 = vmatpush.bf16.msra.mxu0 %v1119
  %1427 = vmatpush.bf16.msra.mxu0 %v1118
  %1428 = vmatpush.bf16.msra.mxu0 %v1117
  %1429 = vmatpush.bf16.msra.mxu0 %v1116
  %1430 = vmatpush.bf16.msra.mxu0 %v1115
  %1431 = vmatpush.bf16.msra.mxu0 %v1114
  %1432 = vmatmul.bf16.gmra.mxu0 %v452
  %v1433 = vpop.f32.mrf.mxu0
  %v1434 = vadd.f32 %v1415, %v1433
  %v1435 = vpop.f32.mrf.mxu0
  %v1436 = vadd.f32 %v1417, %v1435
  %1437 = vmatmul.bf16.gmra.mxu0 %v470
  %v1438 = vpop.f32.mrf.mxu0
  %v1439 = vadd.f32 %v1420, %v1438
  %v1440 = vpop.f32.mrf.mxu0
  %v1441 = vadd.f32 %v1422, %v1440
  %1442 = vdwg.mxu0
  %1443 = vmatpush.bf16.msra.mxu0 %v1129
  %1444 = vmatpush.bf16.msra.mxu0 %v1128
  %1445 = vmatpush.bf16.msra.mxu0 %v1127
  %1446 = vmatpush.bf16.msra.mxu0 %v1126
  %1447 = vmatpush.bf16.msra.mxu0 %v1125
  %1448 = vmatpush.bf16.msra.mxu0 %v1124
  %1449 = vmatpush.bf16.msra.mxu0 %v1123
  %1450 = vmatpush.bf16.msra.mxu0 %v1122
  %1451 = vmatmul.bf16.gmra.mxu0 %v453
  %v1452 = vpop.f32.mrf.mxu0
  %v1453 = vadd.f32 %v1434, %v1452
  %v1454 = vpop.f32.mrf.mxu0
  %v1455 = vadd.f32 %v1436, %v1454
  %1456 = vmatmul.bf16.gmra.mxu0 %v471
  %v1457 = vpop.f32.mrf.mxu0
  %v1458 = vadd.f32 %v1439, %v1457
  %v1459 = vpop.f32.mrf.mxu0
  %v1460 = vadd.f32 %v1441, %v1459
  %1461 = vdwg.mxu0
  %1462 = vmatpush.bf16.msra.mxu0 %v1137
  %1463 = vmatpush.bf16.msra.mxu0 %v1136
  %1464 = vmatpush.bf16.msra.mxu0 %v1135
  %1465 = vmatpush.bf16.msra.mxu0 %v1134
  %1466 = vmatpush.bf16.msra.mxu0 %v1133
  %1467 = vmatpush.bf16.msra.mxu0 %v1132
  %1468 = vmatpush.bf16.msra.mxu0 %v1131
  %1469 = vmatpush.bf16.msra.mxu0 %v1130
  %1470 = vmatmul.bf16.gmra.mxu0 %v454
  %v1471 = vpop.f32.mrf.mxu0
  %v1472 = vadd.f32 %v1453, %v1471
  %v1473 = vpop.f32.mrf.mxu0
  %v1474 = vadd.f32 %v1455, %v1473
  %1475 = vmatmul.bf16.gmra.mxu0 %v472
  %v1476 = vpop.f32.mrf.mxu0
  %v1477 = vadd.f32 %v1458, %v1476
  %v1478 = vpop.f32.mrf.mxu0
  %v1479 = vadd.f32 %v1460, %v1478
  %1480 = vdwg.mxu0
  %1481 = vmatpush.bf16.msra.mxu0 %v1145
  %1482 = vmatpush.bf16.msra.mxu0 %v1144
  %1483 = vmatpush.bf16.msra.mxu0 %v1143
  %1484 = vmatpush.bf16.msra.mxu0 %v1142
  %1485 = vmatpush.bf16.msra.mxu0 %v1141
  %1486 = vmatpush.bf16.msra.mxu0 %v1140
  %1487 = vmatpush.bf16.msra.mxu0 %v1139
  %1488 = vmatpush.bf16.msra.mxu0 %v1138
  %1489 = vmatmul.bf16.gmra.mxu0 %v455
  %v1490 = vpop.f32.mrf.mxu0
  %v1491 = vadd.f32 %v1472, %v1490
  %v1492 = vpop.f32.mrf.mxu0
  %v1493 = vadd.f32 %v1474, %v1492
  %1494 = vmatmul.bf16.gmra.mxu0 %v473
  %v1495 = vpop.f32.mrf.mxu0
  %v1496 = vadd.f32 %v1477, %v1495
  %v1497 = vpop.f32.mrf.mxu0
  %v1498 = vadd.f32 %v1479, %v1497
  %1499 = vdwg.mxu0
  %1500 = vmatpush.bf16.msra.mxu0 %v1153
  %1501 = vmatpush.bf16.msra.mxu0 %v1152
  %1502 = vmatpush.bf16.msra.mxu0 %v1151
  %1503 = vmatpush.bf16.msra.mxu0 %v1150
  %1504 = vmatpush.bf16.msra.mxu0 %v1149
  %1505 = vmatpush.bf16.msra.mxu0 %v1148
  %1506 = vmatpush.bf16.msra.mxu0 %v1147
  %1507 = vmatpush.bf16.msra.mxu0 %v1146
  %1508 = vmatmul.bf16.gmra.mxu0 %v456
  %v1509 = vpop.f32.mrf.mxu0
  %v1510 = vadd.f32 %v1491, %v1509
  %v1511 = vpop.f32.mrf.mxu0
  %v1512 = vadd.f32 %v1493, %v1511
  %1513 = vmatmul.bf16.gmra.mxu0 %v474
  %v1514 = vpop.f32.mrf.mxu0
  %v1515 = vadd.f32 %v1496, %v1514
  %v1516 = vpop.f32.mrf.mxu0
  %v1517 = vadd.f32 %v1498, %v1516
  %1518 = vdwg.mxu0
  %1519 = vmatpush.bf16.msra.mxu0 %v1161
  %1520 = vmatpush.bf16.msra.mxu0 %v1160
  %1521 = vmatpush.bf16.msra.mxu0 %v1159
  %1522 = vmatpush.bf16.msra.mxu0 %v1158
  %1523 = vmatpush.bf16.msra.mxu0 %v1157
  %1524 = vmatpush.bf16.msra.mxu0 %v1156
  %1525 = vmatpush.bf16.msra.mxu0 %v1155
  %1526 = vmatpush.bf16.msra.mxu0 %v1154
  %1527 = vmatmul.bf16.gmra.mxu0 %v457
  %v1528 = vpop.f32.mrf.mxu0
  %v1529 = vadd.f32 %v1510, %v1528
  %v1530 = vpop.f32.mrf.mxu0
  %v1531 = vadd.f32 %v1512, %v1530
  %1532 = vmatmul.bf16.gmra.mxu0 %v475
  %v1533 = vpop.f32.mrf.mxu0
  %v1534 = vadd.f32 %v1515, %v1533
  %v1535 = vpop.f32.mrf.mxu0
  %v1536 = vadd.f32 %v1517, %v1535
  %1537 = vdwg.mxu0
  %1538 = vmatpush.bf16.msra.mxu0 %v1169
  %1539 = vmatpush.bf16.msra.mxu0 %v1168
  %1540 = vmatpush.bf16.msra.mxu0 %v1167
  %1541 = vmatpush.bf16.msra.mxu0 %v1166
  %1542 = vmatpush.bf16.msra.mxu0 %v1165
  %1543 = vmatpush.bf16.msra.mxu0 %v1164
  %1544 = vmatpush.bf16.msra.mxu0 %v1163
  %1545 = vmatpush.bf16.msra.mxu0 %v1162
  %1546 = vmatmul.bf16.gmra.mxu0 %v458
  %v1547 = vpop.f32.mrf.mxu0
  %v1548 = vadd.f32 %v1529, %v1547
  %v1549 = vpop.f32.mrf.mxu0
  %v1550 = vadd.f32 %v1531, %v1549
  %1551 = vmatmul.bf16.gmra.mxu0 %v476
  %v1552 = vpop.f32.mrf.mxu0
  %v1553 = vadd.f32 %v1534, %v1552
  %v1554 = vpop.f32.mrf.mxu0
  %v1555 = vadd.f32 %v1536, %v1554
  %1556 = vdwg.mxu0
  %1557 = vmatpush.bf16.msra.mxu0 %v1177
  %1558 = vmatpush.bf16.msra.mxu0 %v1176
  %1559 = vmatpush.bf16.msra.mxu0 %v1175
  %1560 = vmatpush.bf16.msra.mxu0 %v1174
  %1561 = vmatpush.bf16.msra.mxu0 %v1173
  %1562 = vmatpush.bf16.msra.mxu0 %v1172
  %1563 = vmatpush.bf16.msra.mxu0 %v1171
  %1564 = vmatpush.bf16.msra.mxu0 %v1170
  %1565 = vmatmul.bf16.gmra.mxu0 %v459
  %v1566 = vpop.f32.mrf.mxu0
  %v1567 = vadd.f32 %v1548, %v1566
  %v1568 = vpop.f32.mrf.mxu0
  %v1569 = vadd.f32 %v1550, %v1568
  %1570 = vmatmul.bf16.gmra.mxu0 %v477
  %v1571 = vpop.f32.mrf.mxu0
  %v1572 = vadd.f32 %v1553, %v1571
  %v1573 = vpop.f32.mrf.mxu0
  %v1574 = vadd.f32 %v1555, %v1573
  %1575 = vdwg.mxu0
  %1576 = vmatpush.bf16.msra.mxu0 %v1185
  %1577 = vmatpush.bf16.msra.mxu0 %v1184
  %1578 = vmatpush.bf16.msra.mxu0 %v1183
  %1579 = vmatpush.bf16.msra.mxu0 %v1182
  %1580 = vmatpush.bf16.msra.mxu0 %v1181
  %1581 = vmatpush.bf16.msra.mxu0 %v1180
  %1582 = vmatpush.bf16.msra.mxu0 %v1179
  %1583 = vmatpush.bf16.msra.mxu0 %v1178
  %1584 = vmatmul.bf16.gmra.mxu0 %v460
  %v1585 = vpop.f32.mrf.mxu0
  %v1586 = vadd.f32 %v1567, %v1585
  %v1587 = vpop.f32.mrf.mxu0
  %v1588 = vadd.f32 %v1569, %v1587
  %1589 = vmatmul.bf16.gmra.mxu0 %v478
  %v1590 = vpop.f32.mrf.mxu0
  %v1591 = vadd.f32 %v1572, %v1590
  %v1592 = vpop.f32.mrf.mxu0
  %v1593 = vadd.f32 %v1574, %v1592
  %1594 = vdwg.mxu0
  %1595 = vmatpush.bf16.msra.mxu0 %v1193
  %1596 = vmatpush.bf16.msra.mxu0 %v1192
  %1597 = vmatpush.bf16.msra.mxu0 %v1191
  %1598 = vmatpush.bf16.msra.mxu0 %v1190
  %1599 = vmatpush.bf16.msra.mxu0 %v1189
  %1600 = vmatpush.bf16.msra.mxu0 %v1188
  %1601 = vmatpush.bf16.msra.mxu0 %v1187
  %1602 = vmatpush.bf16.msra.mxu0 %v1186
  %1603 = vmatmul.bf16.gmra.mxu0 %v461
  %v1604 = vpop.f32.mrf.mxu0
  %v1605 = vadd.f32 %v1586, %v1604
  %v1606 = vpop.f32.mrf.mxu0
  %v1607 = vadd.f32 %v1588, %v1606
  %1608 = vmatmul.bf16.gmra.mxu0 %v479
  %v1609 = vpop.f32.mrf.mxu0
  %v1610 = vadd.f32 %v1591, %v1609
  %v1611 = vpop.f32.mrf.mxu0
  %v1612 = vadd.f32 %v1593, %v1611
  %1613 = vdwg.mxu0
  %1614 = vmatpush.bf16.msra.mxu0 %v1201
  %1615 = vmatpush.bf16.msra.mxu0 %v1200
  %1616 = vmatpush.bf16.msra.mxu0 %v1199
  %1617 = vmatpush.bf16.msra.mxu0 %v1198
  %1618 = vmatpush.bf16.msra.mxu0 %v1197
  %1619 = vmatpush.bf16.msra.mxu0 %v1196
  %1620 = vmatpush.bf16.msra.mxu0 %v1195
  %1621 = vmatpush.bf16.msra.mxu0 %v1194
  %1622 = vmatmul.bf16.gmra.mxu0 %v462
  %v1623 = vpop.f32.mrf.mxu0
  %v1624 = vadd.f32 %v1605, %v1623
  %v1625 = vpop.f32.mrf.mxu0
  %v1626 = vadd.f32 %v1607, %v1625
  %1627 = vmatmul.bf16.gmra.mxu0 %v480
  %v1628 = vpop.f32.mrf.mxu0
  %v1629 = vadd.f32 %v1610, %v1628
  %v1630 = vpop.f32.mrf.mxu0
  %v1631 = vadd.f32 %v1612, %v1630
  %1632 = vdwg.mxu0
  %1633 = vmatpush.bf16.msra.mxu0 %v1209
  %1634 = vmatpush.bf16.msra.mxu0 %v1208
  %1635 = vmatpush.bf16.msra.mxu0 %v1207
  %1636 = vmatpush.bf16.msra.mxu0 %v1206
  %1637 = vmatpush.bf16.msra.mxu0 %v1205
  %1638 = vmatpush.bf16.msra.mxu0 %v1204
  %1639 = vmatpush.bf16.msra.mxu0 %v1203
  %1640 = vmatpush.bf16.msra.mxu0 %v1202
  %1641 = vmatmul.bf16.gmra.mxu0 %v463
  %v1642 = vpop.f32.mrf.mxu0
  %v1643 = vadd.f32 %v1624, %v1642
  %v1644 = vpop.f32.mrf.mxu0
  %v1645 = vadd.f32 %v1626, %v1644
  %1646 = vmatmul.bf16.gmra.mxu0 %v481
  %v1647 = vpop.f32.mrf.mxu0
  %v1648 = vadd.f32 %v1629, %v1647
  %v1649 = vpop.f32.mrf.mxu0
  %v1650 = vadd.f32 %v1631, %v1649
  %1651 = vdwg.mxu0
  %1652 = vmatpush.bf16.msra.mxu0 %v1217
  %1653 = vmatpush.bf16.msra.mxu0 %v1216
  %1654 = vmatpush.bf16.msra.mxu0 %v1215
  %1655 = vmatpush.bf16.msra.mxu0 %v1214
  %1656 = vmatpush.bf16.msra.mxu0 %v1213
  %1657 = vmatpush.bf16.msra.mxu0 %v1212
  %1658 = vmatpush.bf16.msra.mxu0 %v1211
  %1659 = vmatpush.bf16.msra.mxu0 %v1210
  %1660 = vmatmul.bf16.gmra.mxu0 %v464
  %v1661 = vpop.f32.mrf.mxu0
  %v1662 = vadd.f32 %v1643, %v1661
  %v1663 = vpop.f32.mrf.mxu0
  %v1664 = vadd.f32 %v1645, %v1663
  %1665 = vmatmul.bf16.gmra.mxu0 %v482
  %v1666 = vpop.f32.mrf.mxu0
  %v1667 = vadd.f32 %v1648, %v1666
  %v1668 = vpop.f32.mrf.mxu0
  %v1669 = vadd.f32 %v1650, %v1668
  %1670 = vdwg.mxu0
  %1671 = vmatpush.bf16.msra.mxu0 %v1225
  %1672 = vmatpush.bf16.msra.mxu0 %v1224
  %1673 = vmatpush.bf16.msra.mxu0 %v1223
  %1674 = vmatpush.bf16.msra.mxu0 %v1222
  %1675 = vmatpush.bf16.msra.mxu0 %v1221
  %1676 = vmatpush.bf16.msra.mxu0 %v1220
  %1677 = vmatpush.bf16.msra.mxu0 %v1219
  %1678 = vmatpush.bf16.msra.mxu0 %v1218
  %1679 = vmatmul.bf16.gmra.mxu0 %v465
  %v1680 = vpop.f32.mrf.mxu0
  %v1681 = vadd.f32 %v1662, %v1680
  %v1682 = vpop.f32.mrf.mxu0
  %v1683 = vadd.f32 %v1664, %v1682
  %1684 = vmatmul.bf16.gmra.mxu0 %v483
  %v1685 = vpop.f32.mrf.mxu0
  %v1686 = vadd.f32 %v1667, %v1685
  %v1687 = vpop.f32.mrf.mxu0
  %v1688 = vadd.f32 %v1669, %v1687
  %1689 = vdwg.mxu0
  %1690 = vmatpush.bf16.msra.mxu0 %v1233
  %1691 = vmatpush.bf16.msra.mxu0 %v1232
  %1692 = vmatpush.bf16.msra.mxu0 %v1231
  %1693 = vmatpush.bf16.msra.mxu0 %v1230
  %1694 = vmatpush.bf16.msra.mxu0 %v1229
  %1695 = vmatpush.bf16.msra.mxu0 %v1228
  %1696 = vmatpush.bf16.msra.mxu0 %v1227
  %1697 = vmatpush.bf16.msra.mxu0 %v1226
  %1698 = vmatmul.bf16.gmra.mxu0 %v466
  %v1699 = vpop.f32.mrf.mxu0
  %v1700 = vadd.f32 %v1681, %v1699
  %v1701 = vpop.f32.mrf.mxu0
  %v1702 = vadd.f32 %v1683, %v1701
  %1703 = vmatmul.bf16.gmra.mxu0 %v484
  %v1704 = vpop.f32.mrf.mxu0
  %v1705 = vadd.f32 %v1686, %v1704
  %v1706 = vpop.f32.mrf.mxu0
  %v1707 = vadd.f32 %v1688, %v1706
  %1708 = vdwg.mxu0
  %1709 = vmatpush.bf16.msra.mxu0 %v1241
  %1710 = vmatpush.bf16.msra.mxu0 %v1240
  %1711 = vmatpush.bf16.msra.mxu0 %v1239
  %1712 = vmatpush.bf16.msra.mxu0 %v1238
  %1713 = vmatpush.bf16.msra.mxu0 %v1237
  %1714 = vmatpush.bf16.msra.mxu0 %v1236
  %1715 = vmatpush.bf16.msra.mxu0 %v1235
  %1716 = vmatpush.bf16.msra.mxu0 %v1234
  %1717 = vmatmul.bf16.gmra.mxu0 %v467
  %v1718 = vpop.f32.mrf.mxu0
  %v1719 = vadd.f32 %v1700, %v1718
  %v1720 = vpop.f32.mrf.mxu0
  %v1721 = vadd.f32 %v1702, %v1720
  %1722 = vmatmul.bf16.gmra.mxu0 %v485
  %v1723 = vpop.f32.mrf.mxu0
  %v1724 = vadd.f32 %v1705, %v1723
  %v1725 = vpop.f32.mrf.mxu0
  %v1726 = vadd.f32 %v1707, %v1725
  %1727 = vdwg.mxu0
  %v1728 = vmax.f32 %v1719, 0.0
  %v1729 = vmax.f32 %v1721, 0.0
  %v1730 = vmax.f32 %v1724, 0.0
  %v1731 = vmax.f32 %v1726, 0.0
  %v1732 = vpack.c.bf16 %v1728, %v1728
  %v1733 = vpack.c.bf16 %v1729, %v1729
  %v1734 = vpack.c.bf16 %v1730, %v1730
  %v1735 = vpack.c.bf16 %v1731, %v1731
  %1736 = vst [vmem:[%s3] sm:$0xf] %v1732
  %1737 = vst [vmem:[%s3 + $0x4] sm:$0xf] %v1733
  %1738 = vst [vmem:[%s3 + $0x8] sm:$0xf] %v1734
  %1739 = vst [vmem:[%s3 + $0xc] sm:$0xf] %v1735
  // Predicated region
  $region14: #{autoencoder_forward.9} parent=0 // pred_check
    _
  $region15: #{autoencoder_forward.9} parent=0 // pred_check_branch
    %1741 = sbr.rel (0) target = $region17
  $region16: #{autoencoder_forward.9} parent=0 // pred_region
    _
  $region17: #{autoencoder_forward.9} parent=0 // pred_fallthru
    _
  // Predicated region
  $region18: #{autoencoder_forward.9} parent=0 // pred_check
    _
  $region19: #{autoencoder_forward.9} parent=0 // pred_check_branch
    %1743 = sbr.rel (0) target = $region21
  $region20: #{autoencoder_forward.9} parent=0 // pred_region
    _
  $region21: #{autoencoder_forward.9} parent=0 // pred_fallthru
    _

// kernel: autoencoder_forward.11
$region0: #{autoencoder_forward.11}
  #allocation0 [shape = 'u32[]', space=smem, size = 0x4, offset = 0x4, fixed_abs, tag = 'smem constant byte address 0x4 - core index']
  #allocation1 [shape = 'u32[72,128]{1,0:T(1,128)}', space=vmem, size = 0x9000, scoped, tag = 'internal scratch']
  %s0 = inlined_call_operand.vmem [shape: bf16[2,576], index: 0, kind: input, shape index: {}]
  %s1 = inlined_call_operand.vmem [shape: bf16[576,8], index: 1, kind: input, shape index: {}]
  %s2 = inlined_call_operand.vmem [shape: f32[1,8], index: 2, kind: input, shape index: {}]
  %s3 = inlined_call_operand.vmem [shape: f32[2,8], index: 3, kind: output, shape index: {}]
  %s4 = sld [smem:[#allocation0]]
  $region22: #{autoencoder_forward.11} parent=0
    _
  %s6 = ssub.s32 1, %s4
  %s7 = scalar_select 0, %s6, %s4
  // Predicated region
  $region2: #{autoencoder_forward.11} parent=0 // pred_check
    _
  $region3: #{autoencoder_forward.11} parent=0 // pred_check_branch
    %9 = sbr.rel (0) target = $region5
  $region4: #{autoencoder_forward.11} parent=0 // pred_region
    _
  $region5: #{autoencoder_forward.11} parent=0 // pred_fallthru
    _
  // Predicated region
  $region6: #{autoencoder_forward.11} parent=0 // pred_check
    _
  $region7: #{autoencoder_forward.11} parent=0 // pred_check_branch
    %11 = sbr.rel (0) target = $region9
  $region8: #{autoencoder_forward.11} parent=0 // pred_region
    _
  $region9: #{autoencoder_forward.11} parent=0 // pred_fallthru
    _
  // Predicated region
  $region10: #{autoencoder_forward.11} parent=0 // pred_check
    _
  $region11: #{autoencoder_forward.11} parent=0 // pred_check_branch
    %13 = sbr.rel (0) target = $region13
  $region12: #{autoencoder_forward.11} parent=0 // pred_region
    _
  $region13: #{autoencoder_forward.11} parent=0 // pred_fallthru
    _
  %v15 = vld [vmem:[%s0] sm:$0x1f]
  %v16 = vld [vmem:[%s1] sm:$0xf]
  %v17 = vld [vmem:[%s1 + $0x4] sm:$0xf]
  %v18 = vld [vmem:[%s1 + $0x8] sm:$0xf]
  %v19 = vld [vmem:[%s1 + $0xc] sm:$0xf]
  %v20 = vld [vmem:[%s1 + $0x10] sm:$0xf]
  %v21 = vld [vmem:[%s1 + $0x14] sm:$0xf]
  %v22 = vld [vmem:[%s1 + $0x18] sm:$0xf]
  %v23 = vld [vmem:[%s1 + $0x1c] sm:$0xf]
  %v24 = vld [vmem:[%s1 + $0x20] sm:$0xf]
  %v25 = vld [vmem:[%s1 + $0x24] sm:$0xf]
  %v26 = vld [vmem:[%s1 + $0x28] sm:$0xf]
  %v27 = vld [vmem:[%s1 + $0x2c] sm:$0xf]
  %v28 = vld [vmem:[%s1 + $0x30] sm:$0xf]
  %v29 = vld [vmem:[%s1 + $0x34] sm:$0xf]
  %v30 = vld [vmem:[%s1 + $0x38] sm:$0xf]
  %v31 = vld [vmem:[%s1 + $0x3c] sm:$0xf]
  %v32 = vld [vmem:[%s1 + $0x40] sm:$0xf]
  %v33 = vld [vmem:[%s1 + $0x44] sm:$0xf]
  %v34 = vld [vmem:[%s1 + $0x48] sm:$0xf]
  %v35 = vld [vmem:[%s1 + $0x4c] sm:$0xf]
  %v36 = vld [vmem:[%s1 + $0x50] sm:$0xf]
  %v37 = vld [vmem:[%s1 + $0x54] sm:$0xf]
  %v38 = vld [vmem:[%s1 + $0x58] sm:$0xf]
  %v39 = vld [vmem:[%s1 + $0x5c] sm:$0xf]
  %v40 = vld [vmem:[%s1 + $0x60] sm:$0xf]
  %v41 = vld [vmem:[%s1 + $0x64] sm:$0xf]
  %v42 = vld [vmem:[%s1 + $0x68] sm:$0xf]
  %v43 = vld [vmem:[%s1 + $0x6c] sm:$0xf]
  %v44 = vld [vmem:[%s1 + $0x70] sm:$0xf]
  %v45 = vld [vmem:[%s1 + $0x74] sm:$0xf]
  %v46 = vld [vmem:[%s1 + $0x78] sm:$0xf]
  %v47 = vld [vmem:[%s1 + $0x7c] sm:$0xf]
  %v48 = vld [vmem:[%s1 + $0x80] sm:$0xf]
  %v49 = vld [vmem:[%s1 + $0x84] sm:$0xf]
  %v50 = vld [vmem:[%s1 + $0x88] sm:$0xf]
  %v51 = vld [vmem:[%s1 + $0x8c] sm:$0xf]
  %v52 = vld [vmem:[%s1 + $0x90] sm:$0xf]
  %v53 = vld [vmem:[%s1 + $0x94] sm:$0xf]
  %v54 = vld [vmem:[%s1 + $0x98] sm:$0xf]
  %v55 = vld [vmem:[%s1 + $0x9c] sm:$0xf]
  %v56 = vld [vmem:[%s1 + $0xa0] sm:$0xf]
  %v57 = vld [vmem:[%s1 + $0xa4] sm:$0xf]
  %v58 = vld [vmem:[%s1 + $0xa8] sm:$0xf]
  %v59 = vld [vmem:[%s1 + $0xac] sm:$0xf]
  %v60 = vld [vmem:[%s1 + $0xb0] sm:$0xf]
  %v61 = vld [vmem:[%s1 + $0xb4] sm:$0xf]
  %v62 = vld [vmem:[%s1 + $0xb8] sm:$0xf]
  %v63 = vld [vmem:[%s1 + $0xbc] sm:$0xf]
  %v64 = vld [vmem:[%s1 + $0xc0] sm:$0xf]
  %v65 = vld [vmem:[%s1 + $0xc4] sm:$0xf]
  %v66 = vld [vmem:[%s1 + $0xc8] sm:$0xf]
  %v67 = vld [vmem:[%s1 + $0xcc] sm:$0xf]
  %v68 = vld [vmem:[%s1 + $0xd0] sm:$0xf]
  %v69 = vld [vmem:[%s1 + $0xd4] sm:$0xf]
  %v70 = vld [vmem:[%s1 + $0xd8] sm:$0xf]
  %v71 = vld [vmem:[%s1 + $0xdc] sm:$0xf]
  %v72 = vld [vmem:[%s1 + $0xe0] sm:$0xf]
  %v73 = vld [vmem:[%s1 + $0xe4] sm:$0xf]
  %v74 = vld [vmem:[%s1 + $0xe8] sm:$0xf]
  %v75 = vld [vmem:[%s1 + $0xec] sm:$0xf]
  %v76 = vld [vmem:[%s1 + $0xf0] sm:$0xf]
  %v77 = vld [vmem:[%s1 + $0xf4] sm:$0xf]
  %v78 = vld [vmem:[%s1 + $0xf8] sm:$0xf]
  %v79 = vld [vmem:[%s1 + $0xfc] sm:$0xf]
  %v80 = vld [vmem:[%s1 + $0x100] sm:$0xf]
  %v81 = vld [vmem:[%s1 + $0x104] sm:$0xf]
  %v82 = vld [vmem:[%s1 + $0x108] sm:$0xf]
  %v83 = vld [vmem:[%s1 + $0x10c] sm:$0xf]
  %v84 = vld [vmem:[%s1 + $0x110] sm:$0xf]
  %v85 = vld [vmem:[%s1 + $0x114] sm:$0xf]
  %v86 = vld [vmem:[%s1 + $0x118] sm:$0xf]
  %v87 = vld [vmem:[%s1 + $0x11c] sm:$0xf]
  %v88 = vld [vmem:[%s2] sm:$0x1]
  %v90 = vperm.slane %v88, 0
  %93 = vst [vmem:[#allocation1] ss:$9 sm:$0xff] %v15
  %v94 = vld [vmem:[#allocation1] sm:$0xff]
  %v95 = vld [vmem:[#allocation1 + $0x9] sm:$0xff]
  %v96 = vld [vmem:[#allocation1 + $0x12] sm:$0xff]
  %v97 = vld [vmem:[#allocation1 + $0x1b] sm:$0xff]
  %v98 = vld [vmem:[#allocation1 + $0x24] sm:$0xff]
  %v175 = vunpack.c.l.b16 %v16
  %v176 = vunpack.c.l.b16 %v17
  %v177 = vunpack.c.l.b16 %v18
  %v178 = vunpack.c.l.b16 %v19
  %v179 = vunpack.c.l.b16 %v20
  %v180 = vunpack.c.l.b16 %v21
  %v181 = vunpack.c.l.b16 %v22
  %v182 = vunpack.c.l.b16 %v23
  %v183 = vunpack.c.l.b16 %v24
  %v184 = vunpack.c.l.b16 %v25
  %v185 = vunpack.c.l.b16 %v26
  %v186 = vunpack.c.l.b16 %v27
  %v187 = vunpack.c.l.b16 %v28
  %v188 = vunpack.c.l.b16 %v29
  %v189 = vunpack.c.l.b16 %v30
  %v190 = vunpack.c.l.b16 %v31
  %v191 = vunpack.c.l.b16 %v32
  %v192 = vunpack.c.l.b16 %v33
  %v193 = vunpack.c.l.b16 %v34
  %v194 = vunpack.c.l.b16 %v35
  %v195 = vunpack.c.l.b16 %v36
  %v196 = vunpack.c.l.b16 %v37
  %v197 = vunpack.c.l.b16 %v38
  %v198 = vunpack.c.l.b16 %v39
  %v199 = vunpack.c.l.b16 %v40
  %v200 = vunpack.c.l.b16 %v41
  %v201 = vunpack.c.l.b16 %v42
  %v202 = vunpack.c.l.b16 %v43
  %v203 = vunpack.c.l.b16 %v44
  %v204 = vunpack.c.l.b16 %v45
  %v205 = vunpack.c.l.b16 %v46
  %v206 = vunpack.c.l.b16 %v47
  %v207 = vunpack.c.l.b16 %v48
  %v208 = vunpack.c.l.b16 %v49
  %v209 = vunpack.c.l.b16 %v50
  %v210 = vunpack.c.l.b16 %v51
  %v211 = vunpack.c.l.b16 %v52
  %v212 = vunpack.c.l.b16 %v53
  %v213 = vunpack.c.l.b16 %v54
  %v214 = vunpack.c.l.b16 %v55
  %v215 = vunpack.c.l.b16 %v56
  %v216 = vunpack.c.l.b16 %v57
  %v217 = vunpack.c.l.b16 %v58
  %v218 = vunpack.c.l.b16 %v59
  %v219 = vunpack.c.l.b16 %v60
  %v220 = vunpack.c.l.b16 %v61
  %v221 = vunpack.c.l.b16 %v62
  %v222 = vunpack.c.l.b16 %v63
  %v223 = vunpack.c.l.b16 %v64
  %v224 = vunpack.c.l.b16 %v65
  %v225 = vunpack.c.l.b16 %v66
  %v226 = vunpack.c.l.b16 %v67
  %v227 = vunpack.c.l.b16 %v68
  %v228 = vunpack.c.l.b16 %v69
  %v229 = vunpack.c.l.b16 %v70
  %v230 = vunpack.c.l.b16 %v71
  %v231 = vunpack.c.l.b16 %v72
  %v232 = vunpack.c.l.b16 %v73
  %v233 = vunpack.c.l.b16 %v74
  %v234 = vunpack.c.l.b16 %v75
  %v235 = vunpack.c.l.b16 %v76
  %v236 = vunpack.c.l.b16 %v77
  %v237 = vunpack.c.l.b16 %v78
  %v238 = vunpack.c.l.b16 %v79
  %v239 = vunpack.c.l.b16 %v80
  %v240 = vunpack.c.l.b16 %v81
  %v241 = vunpack.c.l.b16 %v82
  %v242 = vunpack.c.l.b16 %v83
  %v243 = vunpack.c.l.b16 %v84
  %v244 = vunpack.c.l.b16 %v85
  %v245 = vunpack.c.l.b16 %v86
  %v246 = vunpack.c.l.b16 %v87
  %v247 = vpack.c.b16 %v176, %v175
  %v248 = vpack.c.b16 %v178, %v177
  %v249 = vpack.c.b16 %v180, %v179
  %v250 = vpack.c.b16 %v182, %v181
  %v251 = vpack.c.b16 %v184, %v183
  %v252 = vpack.c.b16 %v186, %v185
  %v253 = vpack.c.b16 %v188, %v187
  %v254 = vpack.c.b16 %v190, %v189
  %v255 = vpack.c.b16 %v192, %v191
  %v256 = vpack.c.b16 %v194, %v193
  %v257 = vpack.c.b16 %v196, %v195
  %v258 = vpack.c.b16 %v198, %v197
  %v259 = vpack.c.b16 %v200, %v199
  %v260 = vpack.c.b16 %v202, %v201
  %v261 = vpack.c.b16 %v204, %v203
  %v262 = vpack.c.b16 %v206, %v205
  %v263 = vpack.c.b16 %v208, %v207
  %v264 = vpack.c.b16 %v210, %v209
  %v265 = vpack.c.b16 %v212, %v211
  %v266 = vpack.c.b16 %v214, %v213
  %v267 = vpack.c.b16 %v216, %v215
  %v268 = vpack.c.b16 %v218, %v217
  %v269 = vpack.c.b16 %v220, %v219
  %v270 = vpack.c.b16 %v222, %v221
  %v271 = vpack.c.b16 %v224, %v223
  %v272 = vpack.c.b16 %v226, %v225
  %v273 = vpack.c.b16 %v228, %v227
  %v274 = vpack.c.b16 %v230, %v229
  %v275 = vpack.c.b16 %v232, %v231
  %v276 = vpack.c.b16 %v234, %v233
  %v277 = vpack.c.b16 %v236, %v235
  %v278 = vpack.c.b16 %v238, %v237
  %v279 = vpack.c.b16 %v240, %v239
  %v280 = vpack.c.b16 %v242, %v241
  %v281 = vpack.c.b16 %v244, %v243
  %v282 = vpack.c.b16 %v246, %v245
  %vm319 = vcmask 523264
  %v320 = vsel %vm319, %v98, 0
  %322 = vmatpush.bf16.msra.mxu0 %v254
  %323 = vmatpush.bf16.msra.mxu0 %v253
  %324 = vmatpush.bf16.msra.mxu0 %v252
  %325 = vmatpush.bf16.msra.mxu0 %v251
  %326 = vmatpush.bf16.msra.mxu0 %v250
  %327 = vmatpush.bf16.msra.mxu0 %v249
  %328 = vmatpush.bf16.msra.mxu0 %v248
  %329 = vmatpush.bf16.msra.mxu0 %v247
  %330 = vmatmul.bf16.gmra.mxu0 %v94
  %v331 = vpop.f32.mrf.mxu0
  %v332 = vadd.f32 %v90, %v331
  %v333 = vpop.f32.mrf.mxu0
  %334 = vdwg.mxu0
  %335 = vmatpush.bf16.msra.mxu0 %v262
  %336 = vmatpush.bf16.msra.mxu0 %v261
  %337 = vmatpush.bf16.msra.mxu0 %v260
  %338 = vmatpush.bf16.msra.mxu0 %v259
  %339 = vmatpush.bf16.msra.mxu0 %v258
  %340 = vmatpush.bf16.msra.mxu0 %v257
  %341 = vmatpush.bf16.msra.mxu0 %v256
  %342 = vmatpush.bf16.msra.mxu0 %v255
  %343 = vmatmul.bf16.gmra.mxu0 %v95
  %v344 = vpop.f32.mrf.mxu0
  %v345 = vadd.f32 %v332, %v344
  %v346 = vpop.f32.mrf.mxu0
  %347 = vdwg.mxu0
  %348 = vmatpush.bf16.msra.mxu0 %v270
  %349 = vmatpush.bf16.msra.mxu0 %v269
  %350 = vmatpush.bf16.msra.mxu0 %v268
  %351 = vmatpush.bf16.msra.mxu0 %v267
  %352 = vmatpush.bf16.msra.mxu0 %v266
  %353 = vmatpush.bf16.msra.mxu0 %v265
  %354 = vmatpush.bf16.msra.mxu0 %v264
  %355 = vmatpush.bf16.msra.mxu0 %v263
  %356 = vmatmul.bf16.gmra.mxu0 %v96
  %v357 = vpop.f32.mrf.mxu0
  %v358 = vadd.f32 %v345, %v357
  %v359 = vpop.f32.mrf.mxu0
  %360 = vdwg.mxu0
  %361 = vmatpush.bf16.msra.mxu0 %v278
  %362 = vmatpush.bf16.msra.mxu0 %v277
  %363 = vmatpush.bf16.msra.mxu0 %v276
  %364 = vmatpush.bf16.msra.mxu0 %v275
  %365 = vmatpush.bf16.msra.mxu0 %v274
  %366 = vmatpush.bf16.msra.mxu0 %v273
  %367 = vmatpush.bf16.msra.mxu0 %v272
  %368 = vmatpush.bf16.msra.mxu0 %v271
  %369 = vmatmul.bf16.gmra.mxu0 %v97
  %v370 = vpop.f32.mrf.mxu0
  %v371 = vadd.f32 %v358, %v370
  %v372 = vpop.f32.mrf.mxu0
  %373 = vdwg.mxu0
  %374 = vmatpush.bf16.msra.mxu0 0
  %375 = vmatpush.bf16.msra.mxu0 0
  %376 = vmatpush.bf16.msra.mxu0 0
  %377 = vmatpush.bf16.msra.mxu0 0
  %378 = vmatpush.bf16.msra.mxu0 %v282
  %379 = vmatpush.bf16.msra.mxu0 %v281
  %380 = vmatpush.bf16.msra.mxu0 %v280
  %381 = vmatpush.bf16.msra.mxu0 %v279
  %382 = vmatmul.bf16.gmra.mxu0 %v320
  %v383 = vpop.f32.mrf.mxu0
  %v384 = vadd.f32 %v371, %v383
  %v385 = vpop.f32.mrf.mxu0
  %386 = vdwg.mxu0
  %vm387 = vcmask 58368
  %388 = vst.msk [vmem:[%s3] sm:$0x3] %vm387, %v384
  // Predicated region
  $region14: #{autoencoder_forward.11} parent=0 // pred_check
    _
  $region15: #{autoencoder_forward.11} parent=0 // pred_check_branch
    %390 = sbr.rel (0) target = $region17
  $region16: #{autoencoder_forward.11} parent=0 // pred_region
    _
  $region17: #{autoencoder_forward.11} parent=0 // pred_fallthru
    _
  // Predicated region
  $region18: #{autoencoder_forward.11} parent=0 // pred_check
    _
  $region19: #{autoencoder_forward.11} parent=0 // pred_check_branch
    %392 = sbr.rel (0) target = $region21
  $region20: #{autoencoder_forward.11} parent=0 // pred_region
    _
  $region21: #{autoencoder_forward.11} parent=0 // pred_fallthru
    _

// kernel: autoencoder_forward.12
$region0: #{autoencoder_forward.12}
  #allocation0 [shape = 'u32[]', space=smem, size = 0x4, offset = 0x4, fixed_abs, tag = 'smem constant byte address 0x4 - core index']
  #allocation1 [shape = 'u32[72,128]{1,0:T(1,128)}', space=vmem, size = 0x9000, scoped, tag = 'internal scratch']
  %s0 = inlined_call_operand.vmem [shape: bf16[2,32], index: 0, kind: input, shape index: {}]
  %s1 = inlined_call_operand.vmem [shape: bf16[32,256], index: 1, kind: input, shape index: {}]
  %s2 = inlined_call_operand.vmem [shape: f32[1,256], index: 2, kind: input, shape index: {}]
  %s3 = inlined_call_operand.vmem [shape: bf16[2,256], index: 3, kind: output, shape index: {}]
  %s4 = sld [smem:[#allocation0]]
  $region22: #{autoencoder_forward.12} parent=0
    _
  %s6 = ssub.s32 1, %s4
  %s7 = scalar_select 0, %s6, %s4
  // Predicated region
  $region2: #{autoencoder_forward.12} parent=0 // pred_check
    _
  $region3: #{autoencoder_forward.12} parent=0 // pred_check_branch
    %9 = sbr.rel (0) target = $region5
  $region4: #{autoencoder_forward.12} parent=0 // pred_region
    _
  $region5: #{autoencoder_forward.12} parent=0 // pred_fallthru
    _
  // Predicated region
  $region6: #{autoencoder_forward.12} parent=0 // pred_check
    _
  $region7: #{autoencoder_forward.12} parent=0 // pred_check_branch
    %11 = sbr.rel (0) target = $region9
  $region8: #{autoencoder_forward.12} parent=0 // pred_region
    _
  $region9: #{autoencoder_forward.12} parent=0 // pred_fallthru
    _
  // Predicated region
  $region10: #{autoencoder_forward.12} parent=0 // pred_check
    _
  $region11: #{autoencoder_forward.12} parent=0 // pred_check_branch
    %13 = sbr.rel (0) target = $region13
  $region12: #{autoencoder_forward.12} parent=0 // pred_region
    _
  $region13: #{autoencoder_forward.12} parent=0 // pred_fallthru
    _
  %v15 = vld [vmem:[%s0] sm:$0x1]
  %v16 = vld [vmem:[%s1] sm:$0xff]
  %v17 = vld [vmem:[%s1 + $0x8] sm:$0xff]
  %v18 = vld [vmem:[%s1 + $0x10] sm:$0xff]
  %v19 = vld [vmem:[%s1 + $0x18] sm:$0xff]
  %v20 = vld [vmem:[%s2] sm:$0x3]
  %v22 = vperm.slane %v20, 0
  %v23 = vperm.slane %v20, 1
  %v30 = vunpack.c.l.b16 %v16
  %v31 = vunpack.c.h.b16 %v16
  %v32 = vunpack.c.l.b16 %v17
  %v33 = vunpack.c.h.b16 %v17
  %v34 = vunpack.c.l.b16 %v18
  %v35 = vunpack.c.h.b16 %v18
  %v36 = vunpack.c.l.b16 %v19
  %v37 = vunpack.c.h.b16 %v19
  %v38 = vpack.c.b16 %v32, %v30
  %v39 = vpack.c.b16 %v33, %v31
  %v40 = vpack.c.b16 %v36, %v34
  %v41 = vpack.c.b16 %v37, %v35
  %vm46 = vcmask 261120
  %v48 = vsel %vm46, %v15, 0
  %50 = vmatpush.bf16.msra.mxu0 0
  %51 = vmatpush.bf16.msra.mxu0 0
  %52 = vmatpush.bf16.msra.mxu0 0
  %53 = vmatpush.bf16.msra.mxu0 0
  %54 = vmatpush.bf16.msra.mxu0 0
  %55 = vmatpush.bf16.msra.mxu0 0
  %56 = vmatpush.bf16.msra.mxu0 %v40
  %57 = vmatpush.bf16.msra.mxu0 %v38
  %58 = vmatmul.bf16.gmra.mxu0 %v48
  %v59 = vpop.f32.mrf.mxu0
  %v60 = vadd.f32 %v22, %v59
  %v61 = vpop.f32.mrf.mxu0
  %62 = vdwg.mxu0
  %63 = vmatpush.bf16.msra.mxu0 0
  %64 = vmatpush.bf16.msra.mxu0 0
  %65 = vmatpush.bf16.msra.mxu0 0
  %66 = vmatpush.bf16.msra.mxu0 0
  %67 = vmatpush.bf16.msra.mxu0 0
  %68 = vmatpush.bf16.msra.mxu0 0
  %69 = vmatpush.bf16.msra.mxu0 %v41
  %70 = vmatpush.bf16.msra.mxu0 %v39
  %71 = vmatmul.bf16.gmra.mxu0 %v48
  %v72 = vpop.f32.mrf.mxu0
  %v73 = vadd.f32 %v23, %v72
  %v74 = vpop.f32.mrf.mxu0
  %75 = vdwg.mxu0
  %v76 = vmax.f32 %v60, 0.0
  %v77 = vmax.f32 %v73, 0.0
  %v78 = vpack.c.bf16 %v77, %v76
  %v80 = vrot.slane %v78, 3
  %vm81 = vcmask 1040384
  %v84 = vsel %vm81, %v78, %v80
  %86 = vst [vmem:[%s3] sm:$0x3] %v84
  // Predicated region
  $region14: #{autoencoder_forward.12} parent=0 // pred_check
    _
  $region15: #{autoencoder_forward.12} parent=0 // pred_check_branch
    %88 = sbr.rel (0) target = $region17
  $region16: #{autoencoder_forward.12} parent=0 // pred_region
    _
  $region17: #{autoencoder_forward.12} parent=0 // pred_fallthru
    _
  // Predicated region
  $region18: #{autoencoder_forward.12} parent=0 // pred_check
    _
  $region19: #{autoencoder_forward.12} parent=0 // pred_check_branch
    %90 = sbr.rel (0) target = $region21
  $region20: #{autoencoder_forward.12} parent=0 // pred_region
    _
  $region21: #{autoencoder_forward.12} parent=0 // pred_fallthru
    _

// kernel: autoencoder_forward.13
$region0: #{autoencoder_forward.13}
  #allocation0 [shape = 'u32[]', space=smem, size = 0x4, offset = 0x4, fixed_abs, tag = 'smem constant byte address 0x4 - core index']
  #allocation1 [shape = 'u32[72,128]{1,0:T(1,128)}', space=vmem, size = 0x9000, scoped, tag = 'internal scratch']
  %s0 = inlined_call_operand.vmem [shape: bf16[8,256], index: 0, kind: input, shape index: {}]
  %s1 = inlined_call_operand.vmem [shape: bf16[256,512], index: 1, kind: input, shape index: {}]
  %s2 = inlined_call_operand.vmem [shape: f32[1,512], index: 2, kind: input, shape index: {}]
  %s3 = inlined_call_operand.vmem [shape: bf16[8,512], index: 3, kind: output, shape index: {}]
  %s4 = sld [smem:[#allocation0]]
  $region22: #{autoencoder_forward.13} parent=0
    _
  %s6 = ssub.s32 1, %s4
  %s7 = scalar_select 0, %s6, %s4
  // Predicated region
  $region2: #{autoencoder_forward.13} parent=0 // pred_check
    _
  $region3: #{autoencoder_forward.13} parent=0 // pred_check_branch
    %9 = sbr.rel (0) target = $region5
  $region4: #{autoencoder_forward.13} parent=0 // pred_region
    _
  $region5: #{autoencoder_forward.13} parent=0 // pred_fallthru
    _
  // Predicated region
  $region6: #{autoencoder_forward.13} parent=0 // pred_check
    _
  $region7: #{autoencoder_forward.13} parent=0 // pred_check_branch
    %11 = sbr.rel (0) target = $region9
  $region8: #{autoencoder_forward.13} parent=0 // pred_region
    _
  $region9: #{autoencoder_forward.13} parent=0 // pred_fallthru
    _
  // Predicated region
  $region10: #{autoencoder_forward.13} parent=0 // pred_check
    _
  $region11: #{autoencoder_forward.13} parent=0 // pred_check_branch
    %13 = sbr.rel (0) target = $region13
  $region12: #{autoencoder_forward.13} parent=0 // pred_region
    _
  $region13: #{autoencoder_forward.13} parent=0 // pred_fallthru
    _
  %v14 = vld [vmem:[%s0] sm:$0xff]
  %v15 = vld [vmem:[%s1] sm:$0xff]
  %v16 = vld [vmem:[%s1 + $0x8] sm:$0xff]
  %v17 = vld [vmem:[%s1 + $0x10] sm:$0xff]
  %v18 = vld [vmem:[%s1 + $0x18] sm:$0xff]
  %v19 = vld [vmem:[%s1 + $0x20] sm:$0xff]
  %v20 = vld [vmem:[%s1 + $0x28] sm:$0xff]
  %v21 = vld [vmem:[%s1 + $0x30] sm:$0xff]
  %v22 = vld [vmem:[%s1 + $0x38] sm:$0xff]
  %v23 = vld [vmem:[%s1 + $0x40] sm:$0xff]
  %v24 = vld [vmem:[%s1 + $0x48] sm:$0xff]
  %v25 = vld [vmem:[%s1 + $0x50] sm:$0xff]
  %v26 = vld [vmem:[%s1 + $0x58] sm:$0xff]
  %v27 = vld [vmem:[%s1 + $0x60] sm:$0xff]
  %v28 = vld [vmem:[%s1 + $0x68] sm:$0xff]
  %v29 = vld [vmem:[%s1 + $0x70] sm:$0xff]
  %v30 = vld [vmem:[%s1 + $0x78] sm:$0xff]
  %v31 = vld [vmem:[%s1 + $0x80] sm:$0xff]
  %v32 = vld [vmem:[%s1 + $0x88] sm:$0xff]
  %v33 = vld [vmem:[%s1 + $0x90] sm:$0xff]
  %v34 = vld [vmem:[%s1 + $0x98] sm:$0xff]
  %v35 = vld [vmem:[%s1 + $0xa0] sm:$0xff]
  %v36 = vld [vmem:[%s1 + $0xa8] sm:$0xff]
  %v37 = vld [vmem:[%s1 + $0xb0] sm:$0xff]
  %v38 = vld [vmem:[%s1 + $0xb8] sm:$0xff]
  %v39 = vld [vmem:[%s1 + $0xc0] sm:$0xff]
  %v40 = vld [vmem:[%s1 + $0xc8] sm:$0xff]
  %v41 = vld [vmem:[%s1 + $0xd0] sm:$0xff]
  %v42 = vld [vmem:[%s1 + $0xd8] sm:$0xff]
  %v43 = vld [vmem:[%s1 + $0xe0] sm:$0xff]
  %v44 = vld [vmem:[%s1 + $0xe8] sm:$0xff]
  %v45 = vld [vmem:[%s1 + $0xf0] sm:$0xff]
  %v46 = vld [vmem:[%s1 + $0xf8] sm:$0xff]
  %v47 = vld [vmem:[%s1 + $0x100] sm:$0xff]
  %v48 = vld [vmem:[%s1 + $0x108] sm:$0xff]
  %v49 = vld [vmem:[%s1 + $0x110] sm:$0xff]
  %v50 = vld [vmem:[%s1 + $0x118] sm:$0xff]
  %v51 = vld [vmem:[%s1 + $0x120] sm:$0xff]
  %v52 = vld [vmem:[%s1 + $0x128] sm:$0xff]
  %v53 = vld [vmem:[%s1 + $0x130] sm:$0xff]
  %v54 = vld [vmem:[%s1 + $0x138] sm:$0xff]
  %v55 = vld [vmem:[%s1 + $0x140] sm:$0xff]
  %v56 = vld [vmem:[%s1 + $0x148] sm:$0xff]
  %v57 = vld [vmem:[%s1 + $0x150] sm:$0xff]
  %v58 = vld [vmem:[%s1 + $0x158] sm:$0xff]
  %v59 = vld [vmem:[%s1 + $0x160] sm:$0xff]
  %v60 = vld [vmem:[%s1 + $0x168] sm:$0xff]
  %v61 = vld [vmem:[%s1 + $0x170] sm:$0xff]
  %v62 = vld [vmem:[%s1 + $0x178] sm:$0xff]
  %v63 = vld [vmem:[%s1 + $0x180] sm:$0xff]
  %v64 = vld [vmem:[%s1 + $0x188] sm:$0xff]
  %v65 = vld [vmem:[%s1 + $0x190] sm:$0xff]
  %v66 = vld [vmem:[%s1 + $0x198] sm:$0xff]
  %v67 = vld [vmem:[%s1 + $0x1a0] sm:$0xff]
  %v68 = vld [vmem:[%s1 + $0x1a8] sm:$0xff]
  %v69 = vld [vmem:[%s1 + $0x1b0] sm:$0xff]
  %v70 = vld [vmem:[%s1 + $0x1b8] sm:$0xff]
  %v71 = vld [vmem:[%s1 + $0x1c0] sm:$0xff]
  %v72 = vld [vmem:[%s1 + $0x1c8] sm:$0xff]
  %v73 = vld [vmem:[%s1 + $0x1d0] sm:$0xff]
  %v74 = vld [vmem:[%s1 + $0x1d8] sm:$0xff]
  %v75 = vld [vmem:[%s1 + $0x1e0] sm:$0xff]
  %v76 = vld [vmem:[%s1 + $0x1e8] sm:$0xff]
  %v77 = vld [vmem:[%s1 + $0x1f0] sm:$0xff]
  %v78 = vld [vmem:[%s1 + $0x1f8] sm:$0xff]
  %v79 = vld [vmem:[%s2] sm:$0xf]
  %v81 = vperm.slane %v79, 0
  %v82 = vperm.slane %v79, 1
  %v83 = vperm.slane %v79, 2
  %v84 = vperm.slane %v79, 3
  %v90 = vunpack.c.l.b16 %v14
  %v91 = vunpack.c.h.b16 %v14
  %v92 = vpack.c.b16 %v90, %v90
  %v93 = vpack.c.b16 %v91, %v91
  %v160 = vunpack.c.l.b16 %v15
  %v161 = vunpack.c.h.b16 %v15
  %v162 = vunpack.c.l.b16 %v16
  %v163 = vunpack.c.h.b16 %v16
  %v164 = vunpack.c.l.b16 %v17
  %v165 = vunpack.c.h.b16 %v17
  %v166 = vunpack.c.l.b16 %v18
  %v167 = vunpack.c.h.b16 %v18
  %v168 = vunpack.c.l.b16 %v19
  %v169 = vunpack.c.h.b16 %v19
  %v170 = vunpack.c.l.b16 %v20
  %v171 = vunpack.c.h.b16 %v20
  %v172 = vunpack.c.l.b16 %v21
  %v173 = vunpack.c.h.b16 %v21
  %v174 = vunpack.c.l.b16 %v22
  %v175 = vunpack.c.h.b16 %v22
  %v176 = vunpack.c.l.b16 %v23
  %v177 = vunpack.c.h.b16 %v23
  %v178 = vunpack.c.l.b16 %v24
  %v179 = vunpack.c.h.b16 %v24
  %v180 = vunpack.c.l.b16 %v25
  %v181 = vunpack.c.h.b16 %v25
  %v182 = vunpack.c.l.b16 %v26
  %v183 = vunpack.c.h.b16 %v26
  %v184 = vunpack.c.l.b16 %v27
  %v185 = vunpack.c.h.b16 %v27
  %v186 = vunpack.c.l.b16 %v28
  %v187 = vunpack.c.h.b16 %v28
  %v188 = vunpack.c.l.b16 %v29
  %v189 = vunpack.c.h.b16 %v29
  %v190 = vunpack.c.l.b16 %v30
  %v191 = vunpack.c.h.b16 %v30
  %v192 = vunpack.c.l.b16 %v31
  %v193 = vunpack.c.h.b16 %v31
  %v194 = vunpack.c.l.b16 %v32
  %v195 = vunpack.c.h.b16 %v32
  %v196 = vunpack.c.l.b16 %v33
  %v197 = vunpack.c.h.b16 %v33
  %v198 = vunpack.c.l.b16 %v34
  %v199 = vunpack.c.h.b16 %v34
  %v200 = vunpack.c.l.b16 %v35
  %v201 = vunpack.c.h.b16 %v35
  %v202 = vunpack.c.l.b16 %v36
  %v203 = vunpack.c.h.b16 %v36
  %v204 = vunpack.c.l.b16 %v37
  %v205 = vunpack.c.h.b16 %v37
  %v206 = vunpack.c.l.b16 %v38
  %v207 = vunpack.c.h.b16 %v38
  %v208 = vunpack.c.l.b16 %v39
  %v209 = vunpack.c.h.b16 %v39
  %v210 = vunpack.c.l.b16 %v40
  %v211 = vunpack.c.h.b16 %v40
  %v212 = vunpack.c.l.b16 %v41
  %v213 = vunpack.c.h.b16 %v41
  %v214 = vunpack.c.l.b16 %v42
  %v215 = vunpack.c.h.b16 %v42
  %v216 = vunpack.c.l.b16 %v43
  %v217 = vunpack.c.h.b16 %v43
  %v218 = vunpack.c.l.b16 %v44
  %v219 = vunpack.c.h.b16 %v44
  %v220 = vunpack.c.l.b16 %v45
  %v221 = vunpack.c.h.b16 %v45
  %v222 = vunpack.c.l.b16 %v46
  %v223 = vunpack.c.h.b16 %v46
  %v224 = vunpack.c.l.b16 %v47
  %v225 = vunpack.c.h.b16 %v47
  %v226 = vunpack.c.l.b16 %v48
  %v227 = vunpack.c.h.b16 %v48
  %v228 = vunpack.c.l.b16 %v49
  %v229 = vunpack.c.h.b16 %v49
  %v230 = vunpack.c.l.b16 %v50
  %v231 = vunpack.c.h.b16 %v50
  %v232 = vunpack.c.l.b16 %v51
  %v233 = vunpack.c.h.b16 %v51
  %v234 = vunpack.c.l.b16 %v52
  %v235 = vunpack.c.h.b16 %v52
  %v236 = vunpack.c.l.b16 %v53
  %v237 = vunpack.c.h.b16 %v53
  %v238 = vunpack.c.l.b16 %v54
  %v239 = vunpack.c.h.b16 %v54
  %v240 = vunpack.c.l.b16 %v55
  %v241 = vunpack.c.h.b16 %v55
  %v242 = vunpack.c.l.b16 %v56
  %v243 = vunpack.c.h.b16 %v56
  %v244 = vunpack.c.l.b16 %v57
  %v245 = vunpack.c.h.b16 %v57
  %v246 = vunpack.c.l.b16 %v58
  %v247 = vunpack.c.h.b16 %v58
  %v248 = vunpack.c.l.b16 %v59
  %v249 = vunpack.c.h.b16 %v59
  %v250 = vunpack.c.l.b16 %v60
  %v251 = vunpack.c.h.b16 %v60
  %v252 = vunpack.c.l.b16 %v61
  %v253 = vunpack.c.h.b16 %v61
  %v254 = vunpack.c.l.b16 %v62
  %v255 = vunpack.c.h.b16 %v62
  %v256 = vunpack.c.l.b16 %v63
  %v257 = vunpack.c.h.b16 %v63
  %v258 = vunpack.c.l.b16 %v64
  %v259 = vunpack.c.h.b16 %v64
  %v260 = vunpack.c.l.b16 %v65
  %v261 = vunpack.c.h.b16 %v65
  %v262 = vunpack.c.l.b16 %v66
  %v263 = vunpack.c.h.b16 %v66
  %v264 = vunpack.c.l.b16 %v67
  %v265 = vunpack.c.h.b16 %v67
  %v266 = vunpack.c.l.b16 %v68
  %v267 = vunpack.c.h.b16 %v68
  %v268 = vunpack.c.l.b16 %v69
  %v269 = vunpack.c.h.b16 %v69
  %v270 = vunpack.c.l.b16 %v70
  %v271 = vunpack.c.h.b16 %v70
  %v272 = vunpack.c.l.b16 %v71
  %v273 = vunpack.c.h.b16 %v71
  %v274 = vunpack.c.l.b16 %v72
  %v275 = vunpack.c.h.b16 %v72
  %v276 = vunpack.c.l.b16 %v73
  %v277 = vunpack.c.h.b16 %v73
  %v278 = vunpack.c.l.b16 %v74
  %v279 = vunpack.c.h.b16 %v74
  %v280 = vunpack.c.l.b16 %v75
  %v281 = vunpack.c.h.b16 %v75
  %v282 = vunpack.c.l.b16 %v76
  %v283 = vunpack.c.h.b16 %v76
  %v284 = vunpack.c.l.b16 %v77
  %v285 = vunpack.c.h.b16 %v77
  %v286 = vunpack.c.l.b16 %v78
  %v287 = vunpack.c.h.b16 %v78
  %v288 = vpack.c.b16 %v164, %v160
  %v289 = vpack.c.b16 %v165, %v161
  %v290 = vpack.c.b16 %v166, %v162
  %v291 = vpack.c.b16 %v167, %v163
  %v292 = vpack.c.b16 %v172, %v168
  %v293 = vpack.c.b16 %v173, %v169
  %v294 = vpack.c.b16 %v174, %v170
  %v295 = vpack.c.b16 %v175, %v171
  %v296 = vpack.c.b16 %v180, %v176
  %v297 = vpack.c.b16 %v181, %v177
  %v298 = vpack.c.b16 %v182, %v178
  %v299 = vpack.c.b16 %v183, %v179
  %v300 = vpack.c.b16 %v188, %v184
  %v301 = vpack.c.b16 %v189, %v185
  %v302 = vpack.c.b16 %v190, %v186
  %v303 = vpack.c.b16 %v191, %v187
  %v304 = vpack.c.b16 %v196, %v192
  %v305 = vpack.c.b16 %v197, %v193
  %v306 = vpack.c.b16 %v198, %v194
  %v307 = vpack.c.b16 %v199, %v195
  %v308 = vpack.c.b16 %v204, %v200
  %v309 = vpack.c.b16 %v205, %v201
  %v310 = vpack.c.b16 %v206, %v202
  %v311 = vpack.c.b16 %v207, %v203
  %v312 = vpack.c.b16 %v212, %v208
  %v313 = vpack.c.b16 %v213, %v209
  %v314 = vpack.c.b16 %v214, %v210
  %v315 = vpack.c.b16 %v215, %v211
  %v316 = vpack.c.b16 %v220, %v216
  %v317 = vpack.c.b16 %v221, %v217
  %v318 = vpack.c.b16 %v222, %v218
  %v319 = vpack.c.b16 %v223, %v219
  %v320 = vpack.c.b16 %v228, %v224
  %v321 = vpack.c.b16 %v229, %v225
  %v322 = vpack.c.b16 %v230, %v226
  %v323 = vpack.c.b16 %v231, %v227
  %v324 = vpack.c.b16 %v236, %v232
  %v325 = vpack.c.b16 %v237, %v233
  %v326 = vpack.c.b16 %v238, %v234
  %v327 = vpack.c.b16 %v239, %v235
  %v328 = vpack.c.b16 %v244, %v240
  %v329 = vpack.c.b16 %v245, %v241
  %v330 = vpack.c.b16 %v246, %v242
  %v331 = vpack.c.b16 %v247, %v243
  %v332 = vpack.c.b16 %v252, %v248
  %v333 = vpack.c.b16 %v253, %v249
  %v334 = vpack.c.b16 %v254, %v250
  %v335 = vpack.c.b16 %v255, %v251
  %v336 = vpack.c.b16 %v260, %v256
  %v337 = vpack.c.b16 %v261, %v257
  %v338 = vpack.c.b16 %v262, %v258
  %v339 = vpack.c.b16 %v263, %v259
  %v340 = vpack.c.b16 %v268, %v264
  %v341 = vpack.c.b16 %v269, %v265
  %v342 = vpack.c.b16 %v270, %v266
  %v343 = vpack.c.b16 %v271, %v267
  %v344 = vpack.c.b16 %v276, %v272
  %v345 = vpack.c.b16 %v277, %v273
  %v346 = vpack.c.b16 %v278, %v274
  %v347 = vpack.c.b16 %v279, %v275
  %v348 = vpack.c.b16 %v284, %v280
  %v349 = vpack.c.b16 %v285, %v281
  %v350 = vpack.c.b16 %v286, %v282
  %v351 = vpack.c.b16 %v287, %v283
  %416 = vmatpush.bf16.msra.mxu0 %v316
  %417 = vmatpush.bf16.msra.mxu0 %v312
  %418 = vmatpush.bf16.msra.mxu0 %v308
  %419 = vmatpush.bf16.msra.mxu0 %v304
  %420 = vmatpush.bf16.msra.mxu0 %v300
  %421 = vmatpush.bf16.msra.mxu0 %v296
  %422 = vmatpush.bf16.msra.mxu0 %v292
  %423 = vmatpush.bf16.msra.mxu0 %v288
  %424 = vmatmul.bf16.gmra.mxu0 %v92
  %v425 = vpop.f32.mrf.mxu0
  %v426 = vadd.f32 %v81, %v425
  %v427 = vpop.f32.mrf.mxu0
  %428 = vdwg.mxu0
  %429 = vmatpush.bf16.msra.mxu0 %v348
  %430 = vmatpush.bf16.msra.mxu0 %v344
  %431 = vmatpush.bf16.msra.mxu0 %v340
  %432 = vmatpush.bf16.msra.mxu0 %v336
  %433 = vmatpush.bf16.msra.mxu0 %v332
  %434 = vmatpush.bf16.msra.mxu0 %v328
  %435 = vmatpush.bf16.msra.mxu0 %v324
  %436 = vmatpush.bf16.msra.mxu0 %v320
  %437 = vmatmul.bf16.gmra.mxu0 %v93
  %v438 = vpop.f32.mrf.mxu0
  %v439 = vadd.f32 %v426, %v438
  %v440 = vpop.f32.mrf.mxu0
  %441 = vdwg.mxu0
  %442 = vmatpush.bf16.msra.mxu0 %v317
  %443 = vmatpush.bf16.msra.mxu0 %v313
  %444 = vmatpush.bf16.msra.mxu0 %v309
  %445 = vmatpush.bf16.msra.mxu0 %v305
  %446 = vmatpush.bf16.msra.mxu0 %v301
  %447 = vmatpush.bf16.msra.mxu0 %v297
  %448 = vmatpush.bf16.msra.mxu0 %v293
  %449 = vmatpush.bf16.msra.mxu0 %v289
  %450 = vmatmul.bf16.gmra.mxu0 %v92
  %v451 = vpop.f32.mrf.mxu0
  %v452 = vadd.f32 %v82, %v451
  %v453 = vpop.f32.mrf.mxu0
  %454 = vdwg.mxu0
  %455 = vmatpush.bf16.msra.mxu0 %v349
  %456 = vmatpush.bf16.msra.mxu0 %v345
  %457 = vmatpush.bf16.msra.mxu0 %v341
  %458 = vmatpush.bf16.msra.mxu0 %v337
  %459 = vmatpush.bf16.msra.mxu0 %v333
  %460 = vmatpush.bf16.msra.mxu0 %v329
  %461 = vmatpush.bf16.msra.mxu0 %v325
  %462 = vmatpush.bf16.msra.mxu0 %v321
  %463 = vmatmul.bf16.gmra.mxu0 %v93
  %v464 = vpop.f32.mrf.mxu0
  %v465 = vadd.f32 %v452, %v464
  %v466 = vpop.f32.mrf.mxu0
  %467 = vdwg.mxu0
  %468 = vmatpush.bf16.msra.mxu0 %v318
  %469 = vmatpush.bf16.msra.mxu0 %v314
  %470 = vmatpush.bf16.msra.mxu0 %v310
  %471 = vmatpush.bf16.msra.mxu0 %v306
  %472 = vmatpush.bf16.msra.mxu0 %v302
  %473 = vmatpush.bf16.msra.mxu0 %v298
  %474 = vmatpush.bf16.msra.mxu0 %v294
  %475 = vmatpush.bf16.msra.mxu0 %v290
  %476 = vmatmul.bf16.gmra.mxu0 %v92
  %v477 = vpop.f32.mrf.mxu0
  %v478 = vadd.f32 %v83, %v477
  %v479 = vpop.f32.mrf.mxu0
  %480 = vdwg.mxu0
  %481 = vmatpush.bf16.msra.mxu0 %v350
  %482 = vmatpush.bf16.msra.mxu0 %v346
  %483 = vmatpush.bf16.msra.mxu0 %v342
  %484 = vmatpush.bf16.msra.mxu0 %v338
  %485 = vmatpush.bf16.msra.mxu0 %v334
  %486 = vmatpush.bf16.msra.mxu0 %v330
  %487 = vmatpush.bf16.msra.mxu0 %v326
  %488 = vmatpush.bf16.msra.mxu0 %v322
  %489 = vmatmul.bf16.gmra.mxu0 %v93
  %v490 = vpop.f32.mrf.mxu0
  %v491 = vadd.f32 %v478, %v490
  %v492 = vpop.f32.mrf.mxu0
  %493 = vdwg.mxu0
  %494 = vmatpush.bf16.msra.mxu0 %v319
  %495 = vmatpush.bf16.msra.mxu0 %v315
  %496 = vmatpush.bf16.msra.mxu0 %v311
  %497 = vmatpush.bf16.msra.mxu0 %v307
  %498 = vmatpush.bf16.msra.mxu0 %v303
  %499 = vmatpush.bf16.msra.mxu0 %v299
  %500 = vmatpush.bf16.msra.mxu0 %v295
  %501 = vmatpush.bf16.msra.mxu0 %v291
  %502 = vmatmul.bf16.gmra.mxu0 %v92
  %v503 = vpop.f32.mrf.mxu0
  %v504 = vadd.f32 %v84, %v503
  %v505 = vpop.f32.mrf.mxu0
  %506 = vdwg.mxu0
  %507 = vmatpush.bf16.msra.mxu0 %v351
  %508 = vmatpush.bf16.msra.mxu0 %v347
  %509 = vmatpush.bf16.msra.mxu0 %v343
  %510 = vmatpush.bf16.msra.mxu0 %v339
  %511 = vmatpush.bf16.msra.mxu0 %v335
  %512 = vmatpush.bf16.msra.mxu0 %v331
  %513 = vmatpush.bf16.msra.mxu0 %v327
  %514 = vmatpush.bf16.msra.mxu0 %v323
  %515 = vmatmul.bf16.gmra.mxu0 %v93
  %v516 = vpop.f32.mrf.mxu0
  %v517 = vadd.f32 %v504, %v516
  %v518 = vpop.f32.mrf.mxu0
  %519 = vdwg.mxu0
  %v520 = vmax.f32 %v439, 0.0
  %v521 = vmax.f32 %v465, 0.0
  %v522 = vmax.f32 %v491, 0.0
  %v523 = vmax.f32 %v517, 0.0
  %v524 = vpack.c.bf16 %v521, %v520
  %v525 = vpack.c.bf16 %v523, %v522
  %526 = vst [vmem:[%s3] sm:$0xff] %v524
  %527 = vst [vmem:[%s3 + $0x8] sm:$0xff] %v525
  // Predicated region
  $region14: #{autoencoder_forward.13} parent=0 // pred_check
    _
  $region15: #{autoencoder_forward.13} parent=0 // pred_check_branch
    %529 = sbr.rel (0) target = $region17
  $region16: #{autoencoder_forward.13} parent=0 // pred_region
    _
  $region17: #{autoencoder_forward.13} parent=0 // pred_fallthru
    _
  // Predicated region
  $region18: #{autoencoder_forward.13} parent=0 // pred_check
    _
  $region19: #{autoencoder_forward.13} parent=0 // pred_check_branch
    %531 = sbr.rel (0) target = $region21
  $region20: #{autoencoder_forward.13} parent=0 // pred_region
    _
  $region21: #{autoencoder_forward.13} parent=0 // pred_fallthru
    _

// kernel: autoencoder_forward.14
$region0: #{autoencoder_forward.14}
  #allocation0 [shape = 'u32[]', space=smem, size = 0x4, offset = 0x4, fixed_abs, tag = 'smem constant byte address 0x4 - core index']
  #allocation1 [shape = 'u32[72,128]{1,0:T(1,128)}', space=vmem, size = 0x9000, scoped, tag = 'internal scratch']
  %s0 = inlined_call_operand.vmem [shape: bf16[32,512], index: 0, kind: input, shape index: {}]
  %s1 = inlined_call_operand.vmem [shape: bf16[512,1024], index: 1, kind: input, shape index: {}]
  %s2 = inlined_call_operand.vmem [shape: f32[1,1024], index: 2, kind: input, shape index: {}]
  %s3 = inlined_call_operand.vmem [shape: bf16[32,1024], index: 3, kind: output, shape index: {}]
  %s4 = sld [smem:[#allocation0]]
  $region22: #{autoencoder_forward.14} parent=0
    _
  %s6 = ssub.s32 1, %s4
  %s7 = scalar_select 0, %s6, %s4
  // Predicated region
  $region2: #{autoencoder_forward.14} parent=0 // pred_check
    _
  $region3: #{autoencoder_forward.14} parent=0 // pred_check_branch
    %9 = sbr.rel (0) target = $region5
  $region4: #{autoencoder_forward.14} parent=0 // pred_region
    _
  $region5: #{autoencoder_forward.14} parent=0 // pred_fallthru
    _
  // Predicated region
  $region6: #{autoencoder_forward.14} parent=0 // pred_check
    _
  $region7: #{autoencoder_forward.14} parent=0 // pred_check_branch
    %11 = sbr.rel (0) target = $region9
  $region8: #{autoencoder_forward.14} parent=0 // pred_region
    _
  $region9: #{autoencoder_forward.14} parent=0 // pred_fallthru
    _
  // Predicated region
  $region10: #{autoencoder_forward.14} parent=0 // pred_check
    _
  $region11: #{autoencoder_forward.14} parent=0 // pred_check_branch
    %13 = sbr.rel (0) target = $region13
  $region12: #{autoencoder_forward.14} parent=0 // pred_region
    _
  $region13: #{autoencoder_forward.14} parent=0 // pred_fallthru
    _
  %v14 = vld [vmem:[%s0] sm:$0xff]
  %v15 = vld [vmem:[%s0 + $0x8] sm:$0xff]
  %v16 = vld [vmem:[%s0 + $0x10] sm:$0xff]
  %v17 = vld [vmem:[%s0 + $0x18] sm:$0xff]
  %v18 = vld [vmem:[%s0 + $0x20] sm:$0xff]
  %v19 = vld [vmem:[%s0 + $0x28] sm:$0xff]
  %v20 = vld [vmem:[%s0 + $0x30] sm:$0xff]
  %v21 = vld [vmem:[%s0 + $0x38] sm:$0xff]
  %v22 = vld [vmem:[%s1] sm:$0xff]
  %v23 = vld [vmem:[%s1 + $0x8] sm:$0xff]
  %v24 = vld [vmem:[%s1 + $0x10] sm:$0xff]
  %v25 = vld [vmem:[%s1 + $0x18] sm:$0xff]
  %v26 = vld [vmem:[%s1 + $0x20] sm:$0xff]
  %v27 = vld [vmem:[%s1 + $0x28] sm:$0xff]
  %v28 = vld [vmem:[%s1 + $0x30] sm:$0xff]
  %v29 = vld [vmem:[%s1 + $0x38] sm:$0xff]
  %v30 = vld [vmem:[%s1 + $0x40] sm:$0xff]
  %v31 = vld [vmem:[%s1 + $0x48] sm:$0xff]
  %v32 = vld [vmem:[%s1 + $0x50] sm:$0xff]
  %v33 = vld [vmem:[%s1 + $0x58] sm:$0xff]
  %v34 = vld [vmem:[%s1 + $0x60] sm:$0xff]
  %v35 = vld [vmem:[%s1 + $0x68] sm:$0xff]
  %v36 = vld [vmem:[%s1 + $0x70] sm:$0xff]
  %v37 = vld [vmem:[%s1 + $0x78] sm:$0xff]
  %v38 = vld [vmem:[%s1 + $0x80] sm:$0xff]
  %v39 = vld [vmem:[%s1 + $0x88] sm:$0xff]
  %v40 = vld [vmem:[%s1 + $0x90] sm:$0xff]
  %v41 = vld [vmem:[%s1 + $0x98] sm:$0xff]
  %v42 = vld [vmem:[%s1 + $0xa0] sm:$0xff]
  %v43 = vld [vmem:[%s1 + $0xa8] sm:$0xff]
  %v44 = vld [vmem:[%s1 + $0xb0] sm:$0xff]
  %v45 = vld [vmem:[%s1 + $0xb8] sm:$0xff]
  %v46 = vld [vmem:[%s1 + $0xc0] sm:$0xff]
  %v47 = vld [vmem:[%s1 + $0xc8] sm:$0xff]
  %v48 = vld [vmem:[%s1 + $0xd0] sm:$0xff]
  %v49 = vld [vmem:[%s1 + $0xd8] sm:$0xff]
  %v50 = vld [vmem:[%s1 + $0xe0] sm:$0xff]
  %v51 = vld [vmem:[%s1 + $0xe8] sm:$0xff]
  %v52 = vld [vmem:[%s1 + $0xf0] sm:$0xff]
  %v53 = vld [vmem:[%s1 + $0xf8] sm:$0xff]
  %v54 = vld [vmem:[%s1 + $0x100] sm:$0xff]
  %v55 = vld [vmem:[%s1 + $0x108] sm:$0xff]
  %v56 = vld [vmem:[%s1 + $0x110] sm:$0xff]
  %v57 = vld [vmem:[%s1 + $0x118] sm:$0xff]
  %v58 = vld [vmem:[%s1 + $0x120] sm:$0xff]
  %v59 = vld [vmem:[%s1 + $0x128] sm:$0xff]
  %v60 = vld [vmem:[%s1 + $0x130] sm:$0xff]
  %v61 = vld [vmem:[%s1 + $0x138] sm:$0xff]
  %v62 = vld [vmem:[%s1 + $0x140] sm:$0xff]
  %v63 = vld [vmem:[%s1 + $0x148] sm:$0xff]
  %v64 = vld [vmem:[%s1 + $0x150] sm:$0xff]
  %v65 = vld [vmem:[%s1 + $0x158] sm:$0xff]
  %v66 = vld [vmem:[%s1 + $0x160] sm:$0xff]
  %v67 = vld [vmem:[%s1 + $0x168] sm:$0xff]
  %v68 = vld [vmem:[%s1 + $0x170] sm:$0xff]
  %v69 = vld [vmem:[%s1 + $0x178] sm:$0xff]
  %v70 = vld [vmem:[%s1 + $0x180] sm:$0xff]
  %v71 = vld [vmem:[%s1 + $0x188] sm:$0xff]
  %v72 = vld [vmem:[%s1 + $0x190] sm:$0xff]
  %v73 = vld [vmem:[%s1 + $0x198] sm:$0xff]
  %v74 = vld [vmem:[%s1 + $0x1a0] sm:$0xff]
  %v75 = vld [vmem:[%s1 + $0x1a8] sm:$0xff]
  %v76 = vld [vmem:[%s1 + $0x1b0] sm:$0xff]
  %v77 = vld [vmem:[%s1 + $0x1b8] sm:$0xff]
  %v78 = vld [vmem:[%s1 + $0x1c0] sm:$0xff]
  %v79 = vld [vmem:[%s1 + $0x1c8] sm:$0xff]
  %v80 = vld [vmem:[%s1 + $0x1d0] sm:$0xff]
  %v81 = vld [vmem:[%s1 + $0x1d8] sm:$0xff]
  %v82 = vld [vmem:[%s1 + $0x1e0] sm:$0xff]
  %v83 = vld [vmem:[%s1 + $0x1e8] sm:$0xff]
  %v84 = vld [vmem:[%s1 + $0x1f0] sm:$0xff]
  %v85 = vld [vmem:[%s1 + $0x1f8] sm:$0xff]
  %v86 = vld [vmem:[%s1 + $0x200] sm:$0xff]
  %v87 = vld [vmem:[%s1 + $0x208] sm:$0xff]
  %v88 = vld [vmem:[%s1 + $0x210] sm:$0xff]
  %v89 = vld [vmem:[%s1 + $0x218] sm:$0xff]
  %v90 = vld [vmem:[%s1 + $0x220] sm:$0xff]
  %v91 = vld [vmem:[%s1 + $0x228] sm:$0xff]
  %v92 = vld [vmem:[%s1 + $0x230] sm:$0xff]
  %v93 = vld [vmem:[%s1 + $0x238] sm:$0xff]
  %v94 = vld [vmem:[%s1 + $0x240] sm:$0xff]
  %v95 = vld [vmem:[%s1 + $0x248] sm:$0xff]
  %v96 = vld [vmem:[%s1 + $0x250] sm:$0xff]
  %v97 = vld [vmem:[%s1 + $0x258] sm:$0xff]
  %v98 = vld [vmem:[%s1 + $0x260] sm:$0xff]
  %v99 = vld [vmem:[%s1 + $0x268] sm:$0xff]
  %v100 = vld [vmem:[%s1 + $0x270] sm:$0xff]
  %v101 = vld [vmem:[%s1 + $0x278] sm:$0xff]
  %v102 = vld [vmem:[%s1 + $0x280] sm:$0xff]
  %v103 = vld [vmem:[%s1 + $0x288] sm:$0xff]
  %v104 = vld [vmem:[%s1 + $0x290] sm:$0xff]
  %v105 = vld [vmem:[%s1 + $0x298] sm:$0xff]
  %v106 = vld [vmem:[%s1 + $0x2a0] sm:$0xff]
  %v107 = vld [vmem:[%s1 + $0x2a8] sm:$0xff]
  %v108 = vld [vmem:[%s1 + $0x2b0] sm:$0xff]
  %v109 = vld [vmem:[%s1 + $0x2b8] sm:$0xff]
  %v110 = vld [vmem:[%s1 + $0x2c0] sm:$0xff]
  %v111 = vld [vmem:[%s1 + $0x2c8] sm:$0xff]
  %v112 = vld [vmem:[%s1 + $0x2d0] sm:$0xff]
  %v113 = vld [vmem:[%s1 + $0x2d8] sm:$0xff]
  %v114 = vld [vmem:[%s1 + $0x2e0] sm:$0xff]
  %v115 = vld [vmem:[%s1 + $0x2e8] sm:$0xff]
  %v116 = vld [vmem:[%s1 + $0x2f0] sm:$0xff]
  %v117 = vld [vmem:[%s1 + $0x2f8] sm:$0xff]
  %v118 = vld [vmem:[%s1 + $0x300] sm:$0xff]
  %v119 = vld [vmem:[%s1 + $0x308] sm:$0xff]
  %v120 = vld [vmem:[%s1 + $0x310] sm:$0xff]
  %v121 = vld [vmem:[%s1 + $0x318] sm:$0xff]
  %v122 = vld [vmem:[%s1 + $0x320] sm:$0xff]
  %v123 = vld [vmem:[%s1 + $0x328] sm:$0xff]
  %v124 = vld [vmem:[%s1 + $0x330] sm:$0xff]
  %v125 = vld [vmem:[%s1 + $0x338] sm:$0xff]
  %v126 = vld [vmem:[%s1 + $0x340] sm:$0xff]
  %v127 = vld [vmem:[%s1 + $0x348] sm:$0xff]
  %v128 = vld [vmem:[%s1 + $0x350] sm:$0xff]
  %v129 = vld [vmem:[%s1 + $0x358] sm:$0xff]
  %v130 = vld [vmem:[%s1 + $0x360] sm:$0xff]
  %v131 = vld [vmem:[%s1 + $0x368] sm:$0xff]
  %v132 = vld [vmem:[%s1 + $0x370] sm:$0xff]
  %v133 = vld [vmem:[%s1 + $0x378] sm:$0xff]
  %v134 = vld [vmem:[%s1 + $0x380] sm:$0xff]
  %v135 = vld [vmem:[%s1 + $0x388] sm:$0xff]
  %v136 = vld [vmem:[%s1 + $0x390] sm:$0xff]
  %v137 = vld [vmem:[%s1 + $0x398] sm:$0xff]
  %v138 = vld [vmem:[%s1 + $0x3a0] sm:$0xff]
  %v139 = vld [vmem:[%s1 + $0x3a8] sm:$0xff]
  %v140 = vld [vmem:[%s1 + $0x3b0] sm:$0xff]
  %v141 = vld [vmem:[%s1 + $0x3b8] sm:$0xff]
  %v142 = vld [vmem:[%s1 + $0x3c0] sm:$0xff]
  %v143 = vld [vmem:[%s1 + $0x3c8] sm:$0xff]
  %v144 = vld [vmem:[%s1 + $0x3d0] sm:$0xff]
  %v145 = vld [vmem:[%s1 + $0x3d8] sm:$0xff]
  %v146 = vld [vmem:[%s1 + $0x3e0] sm:$0xff]
  %v147 = vld [vmem:[%s1 + $0x3e8] sm:$0xff]
  %v148 = vld [vmem:[%s1 + $0x3f0] sm:$0xff]
  %v149 = vld [vmem:[%s1 + $0x3f8] sm:$0xff]
  %v150 = vld [vmem:[%s1 + $0x400] sm:$0xff]
  %v151 = vld [vmem:[%s1 + $0x408] sm:$0xff]
  %v152 = vld [vmem:[%s1 + $0x410] sm:$0xff]
  %v153 = vld [vmem:[%s1 + $0x418] sm:$0xff]
  %v154 = vld [vmem:[%s1 + $0x420] sm:$0xff]
  %v155 = vld [vmem:[%s1 + $0x428] sm:$0xff]
  %v156 = vld [vmem:[%s1 + $0x430] sm:$0xff]
  %v157 = vld [vmem:[%s1 + $0x438] sm:$0xff]
  %v158 = vld [vmem:[%s1 + $0x440] sm:$0xff]
  %v159 = vld [vmem:[%s1 + $0x448] sm:$0xff]
  %v160 = vld [vmem:[%s1 + $0x450] sm:$0xff]
  %v161 = vld [vmem:[%s1 + $0x458] sm:$0xff]
  %v162 = vld [vmem:[%s1 + $0x460] sm:$0xff]
  %v163 = vld [vmem:[%s1 + $0x468] sm:$0xff]
  %v164 = vld [vmem:[%s1 + $0x470] sm:$0xff]
  %v165 = vld [vmem:[%s1 + $0x478] sm:$0xff]
  %v166 = vld [vmem:[%s1 + $0x480] sm:$0xff]
  %v167 = vld [vmem:[%s1 + $0x488] sm:$0xff]
  %v168 = vld [vmem:[%s1 + $0x490] sm:$0xff]
  %v169 = vld [vmem:[%s1 + $0x498] sm:$0xff]
  %v170 = vld [vmem:[%s1 + $0x4a0] sm:$0xff]
  %v171 = vld [vmem:[%s1 + $0x4a8] sm:$0xff]
  %v172 = vld [vmem:[%s1 + $0x4b0] sm:$0xff]
  %v173 = vld [vmem:[%s1 + $0x4b8] sm:$0xff]
  %v174 = vld [vmem:[%s1 + $0x4c0] sm:$0xff]
  %v175 = vld [vmem:[%s1 + $0x4c8] sm:$0xff]
  %v176 = vld [vmem:[%s1 + $0x4d0] sm:$0xff]
  %v177 = vld [vmem:[%s1 + $0x4d8] sm:$0xff]
  %v178 = vld [vmem:[%s1 + $0x4e0] sm:$0xff]
  %v179 = vld [vmem:[%s1 + $0x4e8] sm:$0xff]
  %v180 = vld [vmem:[%s1 + $0x4f0] sm:$0xff]
  %v181 = vld [vmem:[%s1 + $0x4f8] sm:$0xff]
  %v182 = vld [vmem:[%s1 + $0x500] sm:$0xff]
  %v183 = vld [vmem:[%s1 + $0x508] sm:$0xff]
  %v184 = vld [vmem:[%s1 + $0x510] sm:$0xff]
  %v185 = vld [vmem:[%s1 + $0x518] sm:$0xff]
  %v186 = vld [vmem:[%s1 + $0x520] sm:$0xff]
  %v187 = vld [vmem:[%s1 + $0x528] sm:$0xff]
  %v188 = vld [vmem:[%s1 + $0x530] sm:$0xff]
  %v189 = vld [vmem:[%s1 + $0x538] sm:$0xff]
  %v190 = vld [vmem:[%s1 + $0x540] sm:$0xff]
  %v191 = vld [vmem:[%s1 + $0x548] sm:$0xff]
  %v192 = vld [vmem:[%s1 + $0x550] sm:$0xff]
  %v193 = vld [vmem:[%s1 + $0x558] sm:$0xff]
  %v194 = vld [vmem:[%s1 + $0x560] sm:$0xff]
  %v195 = vld [vmem:[%s1 + $0x568] sm:$0xff]
  %v196 = vld [vmem:[%s1 + $0x570] sm:$0xff]
  %v197 = vld [vmem:[%s1 + $0x578] sm:$0xff]
  %v198 = vld [vmem:[%s1 + $0x580] sm:$0xff]
  %v199 = vld [vmem:[%s1 + $0x588] sm:$0xff]
  %v200 = vld [vmem:[%s1 + $0x590] sm:$0xff]
  %v201 = vld [vmem:[%s1 + $0x598] sm:$0xff]
  %v202 = vld [vmem:[%s1 + $0x5a0] sm:$0xff]
  %v203 = vld [vmem:[%s1 + $0x5a8] sm:$0xff]
  %v204 = vld [vmem:[%s1 + $0x5b0] sm:$0xff]
  %v205 = vld [vmem:[%s1 + $0x5b8] sm:$0xff]
  %v206 = vld [vmem:[%s1 + $0x5c0] sm:$0xff]
  %v207 = vld [vmem:[%s1 + $0x5c8] sm:$0xff]
  %v208 = vld [vmem:[%s1 + $0x5d0] sm:$0xff]
  %v209 = vld [vmem:[%s1 + $0x5d8] sm:$0xff]
  %v210 = vld [vmem:[%s1 + $0x5e0] sm:$0xff]
  %v211 = vld [vmem:[%s1 + $0x5e8] sm:$0xff]
  %v212 = vld [vmem:[%s1 + $0x5f0] sm:$0xff]
  %v213 = vld [vmem:[%s1 + $0x5f8] sm:$0xff]
  %v214 = vld [vmem:[%s1 + $0x600] sm:$0xff]
  %v215 = vld [vmem:[%s1 + $0x608] sm:$0xff]
  %v216 = vld [vmem:[%s1 + $0x610] sm:$0xff]
  %v217 = vld [vmem:[%s1 + $0x618] sm:$0xff]
  %v218 = vld [vmem:[%s1 + $0x620] sm:$0xff]
  %v219 = vld [vmem:[%s1 + $0x628] sm:$0xff]
  %v220 = vld [vmem:[%s1 + $0x630] sm:$0xff]
  %v221 = vld [vmem:[%s1 + $0x638] sm:$0xff]
  %v222 = vld [vmem:[%s1 + $0x640] sm:$0xff]
  %v223 = vld [vmem:[%s1 + $0x648] sm:$0xff]
  %v224 = vld [vmem:[%s1 + $0x650] sm:$0xff]
  %v225 = vld [vmem:[%s1 + $0x658] sm:$0xff]
  %v226 = vld [vmem:[%s1 + $0x660] sm:$0xff]
  %v227 = vld [vmem:[%s1 + $0x668] sm:$0xff]
  %v228 = vld [vmem:[%s1 + $0x670] sm:$0xff]
  %v229 = vld [vmem:[%s1 + $0x678] sm:$0xff]
  %v230 = vld [vmem:[%s1 + $0x680] sm:$0xff]
  %v231 = vld [vmem:[%s1 + $0x688] sm:$0xff]
  %v232 = vld [vmem:[%s1 + $0x690] sm:$0xff]
  %v233 = vld [vmem:[%s1 + $0x698] sm:$0xff]
  %v234 = vld [vmem:[%s1 + $0x6a0] sm:$0xff]
  %v235 = vld [vmem:[%s1 + $0x6a8] sm:$0xff]
  %v236 = vld [vmem:[%s1 + $0x6b0] sm:$0xff]
  %v237 = vld [vmem:[%s1 + $0x6b8] sm:$0xff]
  %v238 = vld [vmem:[%s1 + $0x6c0] sm:$0xff]
  %v239 = vld [vmem:[%s1 + $0x6c8] sm:$0xff]
  %v240 = vld [vmem:[%s1 + $0x6d0] sm:$0xff]
  %v241 = vld [vmem:[%s1 + $0x6d8] sm:$0xff]
  %v242 = vld [vmem:[%s1 + $0x6e0] sm:$0xff]
  %v243 = vld [vmem:[%s1 + $0x6e8] sm:$0xff]
  %v244 = vld [vmem:[%s1 + $0x6f0] sm:$0xff]
  %v245 = vld [vmem:[%s1 + $0x6f8] sm:$0xff]
  %v246 = vld [vmem:[%s1 + $0x700] sm:$0xff]
  %v247 = vld [vmem:[%s1 + $0x708] sm:$0xff]
  %v248 = vld [vmem:[%s1 + $0x710] sm:$0xff]
  %v249 = vld [vmem:[%s1 + $0x718] sm:$0xff]
  %v250 = vld [vmem:[%s1 + $0x720] sm:$0xff]
  %v251 = vld [vmem:[%s1 + $0x728] sm:$0xff]
  %v252 = vld [vmem:[%s1 + $0x730] sm:$0xff]
  %v253 = vld [vmem:[%s1 + $0x738] sm:$0xff]
  %v254 = vld [vmem:[%s1 + $0x740] sm:$0xff]
  %v255 = vld [vmem:[%s1 + $0x748] sm:$0xff]
  %v256 = vld [vmem:[%s1 + $0x750] sm:$0xff]
  %v257 = vld [vmem:[%s1 + $0x758] sm:$0xff]
  %v258 = vld [vmem:[%s1 + $0x760] sm:$0xff]
  %v259 = vld [vmem:[%s1 + $0x768] sm:$0xff]
  %v260 = vld [vmem:[%s1 + $0x770] sm:$0xff]
  %v261 = vld [vmem:[%s1 + $0x778] sm:$0xff]
  %v262 = vld [vmem:[%s1 + $0x780] sm:$0xff]
  %v263 = vld [vmem:[%s1 + $0x788] sm:$0xff]
  %v264 = vld [vmem:[%s1 + $0x790] sm:$0xff]
  %v265 = vld [vmem:[%s1 + $0x798] sm:$0xff]
  %v266 = vld [vmem:[%s1 + $0x7a0] sm:$0xff]
  %v267 = vld [vmem:[%s1 + $0x7a8] sm:$0xff]
  %v268 = vld [vmem:[%s1 + $0x7b0] sm:$0xff]
  %v269 = vld [vmem:[%s1 + $0x7b8] sm:$0xff]
  %v270 = vld [vmem:[%s1 + $0x7c0] sm:$0xff]
  %v271 = vld [vmem:[%s1 + $0x7c8] sm:$0xff]
  %v272 = vld [vmem:[%s1 + $0x7d0] sm:$0xff]
  %v273 = vld [vmem:[%s1 + $0x7d8] sm:$0xff]
  %v274 = vld [vmem:[%s1 + $0x7e0] sm:$0xff]
  %v275 = vld [vmem:[%s1 + $0x7e8] sm:$0xff]
  %v276 = vld [vmem:[%s1 + $0x7f0] sm:$0xff]
  %v277 = vld [vmem:[%s1 + $0x7f8] sm:$0xff]
  %v278 = vld [vmem:[%s2] sm:$0xff]
  %v280 = vperm.slane %v278, 0
  %v281 = vperm.slane %v278, 1
  %v282 = vperm.slane %v278, 2
  %v283 = vperm.slane %v278, 3
  %v284 = vperm.slane %v278, 4
  %v285 = vperm.slane %v278, 5
  %v286 = vperm.slane %v278, 6
  %v287 = vperm.slane %v278, 7
  %v304 = vunpack.c.l.b16 %v14
  %v305 = vunpack.c.h.b16 %v14
  %v306 = vunpack.c.l.b16 %v15
  %v307 = vunpack.c.h.b16 %v15
  %v308 = vunpack.c.l.b16 %v16
  %v309 = vunpack.c.h.b16 %v16
  %v310 = vunpack.c.l.b16 %v17
  %v311 = vunpack.c.h.b16 %v17
  %v312 = vunpack.c.l.b16 %v18
  %v313 = vunpack.c.h.b16 %v18
  %v314 = vunpack.c.l.b16 %v19
  %v315 = vunpack.c.h.b16 %v19
  %v316 = vunpack.c.l.b16 %v20
  %v317 = vunpack.c.h.b16 %v20
  %v318 = vunpack.c.l.b16 %v21
  %v319 = vunpack.c.h.b16 %v21
  %v320 = vpack.c.b16 %v308, %v304
  %v321 = vpack.c.b16 %v309, %v305
  %v322 = vpack.c.b16 %v310, %v306
  %v323 = vpack.c.b16 %v311, %v307
  %v324 = vpack.c.b16 %v316, %v312
  %v325 = vpack.c.b16 %v317, %v313
  %v326 = vpack.c.b16 %v318, %v314
  %v327 = vpack.c.b16 %v319, %v315
  %v592 = vunpack.c.l.b16 %v22
  %v593 = vunpack.c.h.b16 %v22
  %v594 = vunpack.c.l.b16 %v23
  %v595 = vunpack.c.h.b16 %v23
  %v596 = vunpack.c.l.b16 %v24
  %v597 = vunpack.c.h.b16 %v24
  %v598 = vunpack.c.l.b16 %v25
  %v599 = vunpack.c.h.b16 %v25
  %v600 = vunpack.c.l.b16 %v26
  %v601 = vunpack.c.h.b16 %v26
  %v602 = vunpack.c.l.b16 %v27
  %v603 = vunpack.c.h.b16 %v27
  %v604 = vunpack.c.l.b16 %v28
  %v605 = vunpack.c.h.b16 %v28
  %v606 = vunpack.c.l.b16 %v29
  %v607 = vunpack.c.h.b16 %v29
  %v608 = vunpack.c.l.b16 %v30
  %v609 = vunpack.c.h.b16 %v30
  %v610 = vunpack.c.l.b16 %v31
  %v611 = vunpack.c.h.b16 %v31
  %v612 = vunpack.c.l.b16 %v32
  %v613 = vunpack.c.h.b16 %v32
  %v614 = vunpack.c.l.b16 %v33
  %v615 = vunpack.c.h.b16 %v33
  %v616 = vunpack.c.l.b16 %v34
  %v617 = vunpack.c.h.b16 %v34
  %v618 = vunpack.c.l.b16 %v35
  %v619 = vunpack.c.h.b16 %v35
  %v620 = vunpack.c.l.b16 %v36
  %v621 = vunpack.c.h.b16 %v36
  %v622 = vunpack.c.l.b16 %v37
  %v623 = vunpack.c.h.b16 %v37
  %v624 = vunpack.c.l.b16 %v38
  %v625 = vunpack.c.h.b16 %v38
  %v626 = vunpack.c.l.b16 %v39
  %v627 = vunpack.c.h.b16 %v39
  %v628 = vunpack.c.l.b16 %v40
  %v629 = vunpack.c.h.b16 %v40
  %v630 = vunpack.c.l.b16 %v41
  %v631 = vunpack.c.h.b16 %v41
  %v632 = vunpack.c.l.b16 %v42
  %v633 = vunpack.c.h.b16 %v42
  %v634 = vunpack.c.l.b16 %v43
  %v635 = vunpack.c.h.b16 %v43
  %v636 = vunpack.c.l.b16 %v44
  %v637 = vunpack.c.h.b16 %v44
  %v638 = vunpack.c.l.b16 %v45
  %v639 = vunpack.c.h.b16 %v45
  %v640 = vunpack.c.l.b16 %v46
  %v641 = vunpack.c.h.b16 %v46
  %v642 = vunpack.c.l.b16 %v47
  %v643 = vunpack.c.h.b16 %v47
  %v644 = vunpack.c.l.b16 %v48
  %v645 = vunpack.c.h.b16 %v48
  %v646 = vunpack.c.l.b16 %v49
  %v647 = vunpack.c.h.b16 %v49
  %v648 = vunpack.c.l.b16 %v50
  %v649 = vunpack.c.h.b16 %v50
  %v650 = vunpack.c.l.b16 %v51
  %v651 = vunpack.c.h.b16 %v51
  %v652 = vunpack.c.l.b16 %v52
  %v653 = vunpack.c.h.b16 %v52
  %v654 = vunpack.c.l.b16 %v53
  %v655 = vunpack.c.h.b16 %v53
  %v656 = vunpack.c.l.b16 %v54
  %v657 = vunpack.c.h.b16 %v54
  %v658 = vunpack.c.l.b16 %v55
  %v659 = vunpack.c.h.b16 %v55
  %v660 = vunpack.c.l.b16 %v56
  %v661 = vunpack.c.h.b16 %v56
  %v662 = vunpack.c.l.b16 %v57
  %v663 = vunpack.c.h.b16 %v57
  %v664 = vunpack.c.l.b16 %v58
  %v665 = vunpack.c.h.b16 %v58
  %v666 = vunpack.c.l.b16 %v59
  %v667 = vunpack.c.h.b16 %v59
  %v668 = vunpack.c.l.b16 %v60
  %v669 = vunpack.c.h.b16 %v60
  %v670 = vunpack.c.l.b16 %v61
  %v671 = vunpack.c.h.b16 %v61
  %v672 = vunpack.c.l.b16 %v62
  %v673 = vunpack.c.h.b16 %v62
  %v674 = vunpack.c.l.b16 %v63
  %v675 = vunpack.c.h.b16 %v63
  %v676 = vunpack.c.l.b16 %v64
  %v677 = vunpack.c.h.b16 %v64
  %v678 = vunpack.c.l.b16 %v65
  %v679 = vunpack.c.h.b16 %v65
  %v680 = vunpack.c.l.b16 %v66
  %v681 = vunpack.c.h.b16 %v66
  %v682 = vunpack.c.l.b16 %v67
  %v683 = vunpack.c.h.b16 %v67
  %v684 = vunpack.c.l.b16 %v68
  %v685 = vunpack.c.h.b16 %v68
  %v686 = vunpack.c.l.b16 %v69
  %v687 = vunpack.c.h.b16 %v69
  %v688 = vunpack.c.l.b16 %v70
  %v689 = vunpack.c.h.b16 %v70
  %v690 = vunpack.c.l.b16 %v71
  %v691 = vunpack.c.h.b16 %v71
  %v692 = vunpack.c.l.b16 %v72
  %v693 = vunpack.c.h.b16 %v72
  %v694 = vunpack.c.l.b16 %v73
  %v695 = vunpack.c.h.b16 %v73
  %v696 = vunpack.c.l.b16 %v74
  %v697 = vunpack.c.h.b16 %v74
  %v698 = vunpack.c.l.b16 %v75
  %v699 = vunpack.c.h.b16 %v75
  %v700 = vunpack.c.l.b16 %v76
  %v701 = vunpack.c.h.b16 %v76
  %v702 = vunpack.c.l.b16 %v77
  %v703 = vunpack.c.h.b16 %v77
  %v704 = vunpack.c.l.b16 %v78
  %v705 = vunpack.c.h.b16 %v78
  %v706 = vunpack.c.l.b16 %v79
  %v707 = vunpack.c.h.b16 %v79
  %v708 = vunpack.c.l.b16 %v80
  %v709 = vunpack.c.h.b16 %v80
  %v710 = vunpack.c.l.b16 %v81
  %v711 = vunpack.c.h.b16 %v81
  %v712 = vunpack.c.l.b16 %v82
  %v713 = vunpack.c.h.b16 %v82
  %v714 = vunpack.c.l.b16 %v83
  %v715 = vunpack.c.h.b16 %v83
  %v716 = vunpack.c.l.b16 %v84
  %v717 = vunpack.c.h.b16 %v84
  %v718 = vunpack.c.l.b16 %v85
  %v719 = vunpack.c.h.b16 %v85
  %v720 = vunpack.c.l.b16 %v86
  %v721 = vunpack.c.h.b16 %v86
  %v722 = vunpack.c.l.b16 %v87
  %v723 = vunpack.c.h.b16 %v87
  %v724 = vunpack.c.l.b16 %v88
  %v725 = vunpack.c.h.b16 %v88
  %v726 = vunpack.c.l.b16 %v89
  %v727 = vunpack.c.h.b16 %v89
  %v728 = vunpack.c.l.b16 %v90
  %v729 = vunpack.c.h.b16 %v90
  %v730 = vunpack.c.l.b16 %v91
  %v731 = vunpack.c.h.b16 %v91
  %v732 = vunpack.c.l.b16 %v92
  %v733 = vunpack.c.h.b16 %v92
  %v734 = vunpack.c.l.b16 %v93
  %v735 = vunpack.c.h.b16 %v93
  %v736 = vunpack.c.l.b16 %v94
  %v737 = vunpack.c.h.b16 %v94
  %v738 = vunpack.c.l.b16 %v95
  %v739 = vunpack.c.h.b16 %v95
  %v740 = vunpack.c.l.b16 %v96
  %v741 = vunpack.c.h.b16 %v96
  %v742 = vunpack.c.l.b16 %v97
  %v743 = vunpack.c.h.b16 %v97
  %v744 = vunpack.c.l.b16 %v98
  %v745 = vunpack.c.h.b16 %v98
  %v746 = vunpack.c.l.b16 %v99
  %v747 = vunpack.c.h.b16 %v99
  %v748 = vunpack.c.l.b16 %v100
  %v749 = vunpack.c.h.b16 %v100
  %v750 = vunpack.c.l.b16 %v101
  %v751 = vunpack.c.h.b16 %v101
  %v752 = vunpack.c.l.b16 %v102
  %v753 = vunpack.c.h.b16 %v102
  %v754 = vunpack.c.l.b16 %v103
  %v755 = vunpack.c.h.b16 %v103
  %v756 = vunpack.c.l.b16 %v104
  %v757 = vunpack.c.h.b16 %v104
  %v758 = vunpack.c.l.b16 %v105
  %v759 = vunpack.c.h.b16 %v105
  %v760 = vunpack.c.l.b16 %v106
  %v761 = vunpack.c.h.b16 %v106
  %v762 = vunpack.c.l.b16 %v107
  %v763 = vunpack.c.h.b16 %v107
  %v764 = vunpack.c.l.b16 %v108
  %v765 = vunpack.c.h.b16 %v108
  %v766 = vunpack.c.l.b16 %v109
  %v767 = vunpack.c.h.b16 %v109
  %v768 = vunpack.c.l.b16 %v110
  %v769 = vunpack.c.h.b16 %v110
  %v770 = vunpack.c.l.b16 %v111
  %v771 = vunpack.c.h.b16 %v111
  %v772 = vunpack.c.l.b16 %v112
  %v773 = vunpack.c.h.b16 %v112
  %v774 = vunpack.c.l.b16 %v113
  %v775 = vunpack.c.h.b16 %v113
  %v776 = vunpack.c.l.b16 %v114
  %v777 = vunpack.c.h.b16 %v114
  %v778 = vunpack.c.l.b16 %v115
  %v779 = vunpack.c.h.b16 %v115
  %v780 = vunpack.c.l.b16 %v116
  %v781 = vunpack.c.h.b16 %v116
  %v782 = vunpack.c.l.b16 %v117
  %v783 = vunpack.c.h.b16 %v117
  %v784 = vunpack.c.l.b16 %v118
  %v785 = vunpack.c.h.b16 %v118
  %v786 = vunpack.c.l.b16 %v119
  %v787 = vunpack.c.h.b16 %v119
  %v788 = vunpack.c.l.b16 %v120
  %v789 = vunpack.c.h.b16 %v120
  %v790 = vunpack.c.l.b16 %v121
  %v791 = vunpack.c.h.b16 %v121
  %v792 = vunpack.c.l.b16 %v122
  %v793 = vunpack.c.h.b16 %v122
  %v794 = vunpack.c.l.b16 %v123
  %v795 = vunpack.c.h.b16 %v123
  %v796 = vunpack.c.l.b16 %v124
  %v797 = vunpack.c.h.b16 %v124
  %v798 = vunpack.c.l.b16 %v125
  %v799 = vunpack.c.h.b16 %v125
  %v800 = vunpack.c.l.b16 %v126
  %v801 = vunpack.c.h.b16 %v126
  %v802 = vunpack.c.l.b16 %v127
  %v803 = vunpack.c.h.b16 %v127
  %v804 = vunpack.c.l.b16 %v128
  %v805 = vunpack.c.h.b16 %v128
  %v806 = vunpack.c.l.b16 %v129
  %v807 = vunpack.c.h.b16 %v129
  %v808 = vunpack.c.l.b16 %v130
  %v809 = vunpack.c.h.b16 %v130
  %v810 = vunpack.c.l.b16 %v131
  %v811 = vunpack.c.h.b16 %v131
  %v812 = vunpack.c.l.b16 %v132
  %v813 = vunpack.c.h.b16 %v132
  %v814 = vunpack.c.l.b16 %v133
  %v815 = vunpack.c.h.b16 %v133
  %v816 = vunpack.c.l.b16 %v134
  %v817 = vunpack.c.h.b16 %v134
  %v818 = vunpack.c.l.b16 %v135
  %v819 = vunpack.c.h.b16 %v135
  %v820 = vunpack.c.l.b16 %v136
  %v821 = vunpack.c.h.b16 %v136
  %v822 = vunpack.c.l.b16 %v137
  %v823 = vunpack.c.h.b16 %v137
  %v824 = vunpack.c.l.b16 %v138
  %v825 = vunpack.c.h.b16 %v138
  %v826 = vunpack.c.l.b16 %v139
  %v827 = vunpack.c.h.b16 %v139
  %v828 = vunpack.c.l.b16 %v140
  %v829 = vunpack.c.h.b16 %v140
  %v830 = vunpack.c.l.b16 %v141
  %v831 = vunpack.c.h.b16 %v141
  %v832 = vunpack.c.l.b16 %v142
  %v833 = vunpack.c.h.b16 %v142
  %v834 = vunpack.c.l.b16 %v143
  %v835 = vunpack.c.h.b16 %v143
  %v836 = vunpack.c.l.b16 %v144
  %v837 = vunpack.c.h.b16 %v144
  %v838 = vunpack.c.l.b16 %v145
  %v839 = vunpack.c.h.b16 %v145
  %v840 = vunpack.c.l.b16 %v146
  %v841 = vunpack.c.h.b16 %v146
  %v842 = vunpack.c.l.b16 %v147
  %v843 = vunpack.c.h.b16 %v147
  %v844 = vunpack.c.l.b16 %v148
  %v845 = vunpack.c.h.b16 %v148
  %v846 = vunpack.c.l.b16 %v149
  %v847 = vunpack.c.h.b16 %v149
  %v848 = vunpack.c.l.b16 %v150
  %v849 = vunpack.c.h.b16 %v150
  %v850 = vunpack.c.l.b16 %v151
  %v851 = vunpack.c.h.b16 %v151
  %v852 = vunpack.c.l.b16 %v152
  %v853 = vunpack.c.h.b16 %v152
  %v854 = vunpack.c.l.b16 %v153
  %v855 = vunpack.c.h.b16 %v153
  %v856 = vunpack.c.l.b16 %v154
  %v857 = vunpack.c.h.b16 %v154
  %v858 = vunpack.c.l.b16 %v155
  %v859 = vunpack.c.h.b16 %v155
  %v860 = vunpack.c.l.b16 %v156
  %v861 = vunpack.c.h.b16 %v156
  %v862 = vunpack.c.l.b16 %v157
  %v863 = vunpack.c.h.b16 %v157
  %v864 = vunpack.c.l.b16 %v158
  %v865 = vunpack.c.h.b16 %v158
  %v866 = vunpack.c.l.b16 %v159
  %v867 = vunpack.c.h.b16 %v159
  %v868 = vunpack.c.l.b16 %v160
  %v869 = vunpack.c.h.b16 %v160
  %v870 = vunpack.c.l.b16 %v161
  %v871 = vunpack.c.h.b16 %v161
  %v872 = vunpack.c.l.b16 %v162
  %v873 = vunpack.c.h.b16 %v162
  %v874 = vunpack.c.l.b16 %v163
  %v875 = vunpack.c.h.b16 %v163
  %v876 = vunpack.c.l.b16 %v164
  %v877 = vunpack.c.h.b16 %v164
  %v878 = vunpack.c.l.b16 %v165
  %v879 = vunpack.c.h.b16 %v165
  %v880 = vunpack.c.l.b16 %v166
  %v881 = vunpack.c.h.b16 %v166
  %v882 = vunpack.c.l.b16 %v167
  %v883 = vunpack.c.h.b16 %v167
  %v884 = vunpack.c.l.b16 %v168
  %v885 = vunpack.c.h.b16 %v168
  %v886 = vunpack.c.l.b16 %v169
  %v887 = vunpack.c.h.b16 %v169
  %v888 = vunpack.c.l.b16 %v170
  %v889 = vunpack.c.h.b16 %v170
  %v890 = vunpack.c.l.b16 %v171
  %v891 = vunpack.c.h.b16 %v171
  %v892 = vunpack.c.l.b16 %v172
  %v893 = vunpack.c.h.b16 %v172
  %v894 = vunpack.c.l.b16 %v173
  %v895 = vunpack.c.h.b16 %v173
  %v896 = vunpack.c.l.b16 %v174
  %v897 = vunpack.c.h.b16 %v174
  %v898 = vunpack.c.l.b16 %v175
  %v899 = vunpack.c.h.b16 %v175
  %v900 = vunpack.c.l.b16 %v176
  %v901 = vunpack.c.h.b16 %v176
  %v902 = vunpack.c.l.b16 %v177
  %v903 = vunpack.c.h.b16 %v177
  %v904 = vunpack.c.l.b16 %v178
  %v905 = vunpack.c.h.b16 %v178
  %v906 = vunpack.c.l.b16 %v179
  %v907 = vunpack.c.h.b16 %v179
  %v908 = vunpack.c.l.b16 %v180
  %v909 = vunpack.c.h.b16 %v180
  %v910 = vunpack.c.l.b16 %v181
  %v911 = vunpack.c.h.b16 %v181
  %v912 = vunpack.c.l.b16 %v182
  %v913 = vunpack.c.h.b16 %v182
  %v914 = vunpack.c.l.b16 %v183
  %v915 = vunpack.c.h.b16 %v183
  %v916 = vunpack.c.l.b16 %v184
  %v917 = vunpack.c.h.b16 %v184
  %v918 = vunpack.c.l.b16 %v185
  %v919 = vunpack.c.h.b16 %v185
  %v920 = vunpack.c.l.b16 %v186
  %v921 = vunpack.c.h.b16 %v186
  %v922 = vunpack.c.l.b16 %v187
  %v923 = vunpack.c.h.b16 %v187
  %v924 = vunpack.c.l.b16 %v188
  %v925 = vunpack.c.h.b16 %v188
  %v926 = vunpack.c.l.b16 %v189
  %v927 = vunpack.c.h.b16 %v189
  %v928 = vunpack.c.l.b16 %v190
  %v929 = vunpack.c.h.b16 %v190
  %v930 = vunpack.c.l.b16 %v191
  %v931 = vunpack.c.h.b16 %v191
  %v932 = vunpack.c.l.b16 %v192
  %v933 = vunpack.c.h.b16 %v192
  %v934 = vunpack.c.l.b16 %v193
  %v935 = vunpack.c.h.b16 %v193
  %v936 = vunpack.c.l.b16 %v194
  %v937 = vunpack.c.h.b16 %v194
  %v938 = vunpack.c.l.b16 %v195
  %v939 = vunpack.c.h.b16 %v195
  %v940 = vunpack.c.l.b16 %v196
  %v941 = vunpack.c.h.b16 %v196
  %v942 = vunpack.c.l.b16 %v197
  %v943 = vunpack.c.h.b16 %v197
  %v944 = vunpack.c.l.b16 %v198
  %v945 = vunpack.c.h.b16 %v198
  %v946 = vunpack.c.l.b16 %v199
  %v947 = vunpack.c.h.b16 %v199
  %v948 = vunpack.c.l.b16 %v200
  %v949 = vunpack.c.h.b16 %v200
  %v950 = vunpack.c.l.b16 %v201
  %v951 = vunpack.c.h.b16 %v201
  %v952 = vunpack.c.l.b16 %v202
  %v953 = vunpack.c.h.b16 %v202
  %v954 = vunpack.c.l.b16 %v203
  %v955 = vunpack.c.h.b16 %v203
  %v956 = vunpack.c.l.b16 %v204
  %v957 = vunpack.c.h.b16 %v204
  %v958 = vunpack.c.l.b16 %v205
  %v959 = vunpack.c.h.b16 %v205
  %v960 = vunpack.c.l.b16 %v206
  %v961 = vunpack.c.h.b16 %v206
  %v962 = vunpack.c.l.b16 %v207
  %v963 = vunpack.c.h.b16 %v207
  %v964 = vunpack.c.l.b16 %v208
  %v965 = vunpack.c.h.b16 %v208
  %v966 = vunpack.c.l.b16 %v209
  %v967 = vunpack.c.h.b16 %v209
  %v968 = vunpack.c.l.b16 %v210
  %v969 = vunpack.c.h.b16 %v210
  %v970 = vunpack.c.l.b16 %v211
  %v971 = vunpack.c.h.b16 %v211
  %v972 = vunpack.c.l.b16 %v212
  %v973 = vunpack.c.h.b16 %v212
  %v974 = vunpack.c.l.b16 %v213
  %v975 = vunpack.c.h.b16 %v213
  %v976 = vunpack.c.l.b16 %v214
  %v977 = vunpack.c.h.b16 %v214
  %v978 = vunpack.c.l.b16 %v215
  %v979 = vunpack.c.h.b16 %v215
  %v980 = vunpack.c.l.b16 %v216
  %v981 = vunpack.c.h.b16 %v216
  %v982 = vunpack.c.l.b16 %v217
  %v983 = vunpack.c.h.b16 %v217
  %v984 = vunpack.c.l.b16 %v218
  %v985 = vunpack.c.h.b16 %v218
  %v986 = vunpack.c.l.b16 %v219
  %v987 = vunpack.c.h.b16 %v219
  %v988 = vunpack.c.l.b16 %v220
  %v989 = vunpack.c.h.b16 %v220
  %v990 = vunpack.c.l.b16 %v221
  %v991 = vunpack.c.h.b16 %v221
  %v992 = vunpack.c.l.b16 %v222
  %v993 = vunpack.c.h.b16 %v222
  %v994 = vunpack.c.l.b16 %v223
  %v995 = vunpack.c.h.b16 %v223
  %v996 = vunpack.c.l.b16 %v224
  %v997 = vunpack.c.h.b16 %v224
  %v998 = vunpack.c.l.b16 %v225
  %v999 = vunpack.c.h.b16 %v225
  %v1000 = vunpack.c.l.b16 %v226
  %v1001 = vunpack.c.h.b16 %v226
  %v1002 = vunpack.c.l.b16 %v227
  %v1003 = vunpack.c.h.b16 %v227
  %v1004 = vunpack.c.l.b16 %v228
  %v1005 = vunpack.c.h.b16 %v228
  %v1006 = vunpack.c.l.b16 %v229
  %v1007 = vunpack.c.h.b16 %v229
  %v1008 = vunpack.c.l.b16 %v230
  %v1009 = vunpack.c.h.b16 %v230
  %v1010 = vunpack.c.l.b16 %v231
  %v1011 = vunpack.c.h.b16 %v231
  %v1012 = vunpack.c.l.b16 %v232
  %v1013 = vunpack.c.h.b16 %v232
  %v1014 = vunpack.c.l.b16 %v233
  %v1015 = vunpack.c.h.b16 %v233
  %v1016 = vunpack.c.l.b16 %v234
  %v1017 = vunpack.c.h.b16 %v234
  %v1018 = vunpack.c.l.b16 %v235
  %v1019 = vunpack.c.h.b16 %v235
  %v1020 = vunpack.c.l.b16 %v236
  %v1021 = vunpack.c.h.b16 %v236
  %v1022 = vunpack.c.l.b16 %v237
  %v1023 = vunpack.c.h.b16 %v237
  %v1024 = vunpack.c.l.b16 %v238
  %v1025 = vunpack.c.h.b16 %v238
  %v1026 = vunpack.c.l.b16 %v239
  %v1027 = vunpack.c.h.b16 %v239
  %v1028 = vunpack.c.l.b16 %v240
  %v1029 = vunpack.c.h.b16 %v240
  %v1030 = vunpack.c.l.b16 %v241
  %v1031 = vunpack.c.h.b16 %v241
  %v1032 = vunpack.c.l.b16 %v242
  %v1033 = vunpack.c.h.b16 %v242
  %v1034 = vunpack.c.l.b16 %v243
  %v1035 = vunpack.c.h.b16 %v243
  %v1036 = vunpack.c.l.b16 %v244
  %v1037 = vunpack.c.h.b16 %v244
  %v1038 = vunpack.c.l.b16 %v245
  %v1039 = vunpack.c.h.b16 %v245
  %v1040 = vunpack.c.l.b16 %v246
  %v1041 = vunpack.c.h.b16 %v246
  %v1042 = vunpack.c.l.b16 %v247
  %v1043 = vunpack.c.h.b16 %v247
  %v1044 = vunpack.c.l.b16 %v248
  %v1045 = vunpack.c.h.b16 %v248
  %v1046 = vunpack.c.l.b16 %v249
  %v1047 = vunpack.c.h.b16 %v249
  %v1048 = vunpack.c.l.b16 %v250
  %v1049 = vunpack.c.h.b16 %v250
  %v1050 = vunpack.c.l.b16 %v251
  %v1051 = vunpack.c.h.b16 %v251
  %v1052 = vunpack.c.l.b16 %v252
  %v1053 = vunpack.c.h.b16 %v252
  %v1054 = vunpack.c.l.b16 %v253
  %v1055 = vunpack.c.h.b16 %v253
  %v1056 = vunpack.c.l.b16 %v254
  %v1057 = vunpack.c.h.b16 %v254
  %v1058 = vunpack.c.l.b16 %v255
  %v1059 = vunpack.c.h.b16 %v255
  %v1060 = vunpack.c.l.b16 %v256
  %v1061 = vunpack.c.h.b16 %v256
  %v1062 = vunpack.c.l.b16 %v257
  %v1063 = vunpack.c.h.b16 %v257
  %v1064 = vunpack.c.l.b16 %v258
  %v1065 = vunpack.c.h.b16 %v258
  %v1066 = vunpack.c.l.b16 %v259
  %v1067 = vunpack.c.h.b16 %v259
  %v1068 = vunpack.c.l.b16 %v260
  %v1069 = vunpack.c.h.b16 %v260
  %v1070 = vunpack.c.l.b16 %v261
  %v1071 = vunpack.c.h.b16 %v261
  %v1072 = vunpack.c.l.b16 %v262
  %v1073 = vunpack.c.h.b16 %v262
  %v1074 = vunpack.c.l.b16 %v263
  %v1075 = vunpack.c.h.b16 %v263
  %v1076 = vunpack.c.l.b16 %v264
  %v1077 = vunpack.c.h.b16 %v264
  %v1078 = vunpack.c.l.b16 %v265
  %v1079 = vunpack.c.h.b16 %v265
  %v1080 = vunpack.c.l.b16 %v266
  %v1081 = vunpack.c.h.b16 %v266
  %v1082 = vunpack.c.l.b16 %v267
  %v1083 = vunpack.c.h.b16 %v267
  %v1084 = vunpack.c.l.b16 %v268
  %v1085 = vunpack.c.h.b16 %v268
  %v1086 = vunpack.c.l.b16 %v269
  %v1087 = vunpack.c.h.b16 %v269
  %v1088 = vunpack.c.l.b16 %v270
  %v1089 = vunpack.c.h.b16 %v270
  %v1090 = vunpack.c.l.b16 %v271
  %v1091 = vunpack.c.h.b16 %v271
  %v1092 = vunpack.c.l.b16 %v272
  %v1093 = vunpack.c.h.b16 %v272
  %v1094 = vunpack.c.l.b16 %v273
  %v1095 = vunpack.c.h.b16 %v273
  %v1096 = vunpack.c.l.b16 %v274
  %v1097 = vunpack.c.h.b16 %v274
  %v1098 = vunpack.c.l.b16 %v275
  %v1099 = vunpack.c.h.b16 %v275
  %v1100 = vunpack.c.l.b16 %v276
  %v1101 = vunpack.c.h.b16 %v276
  %v1102 = vunpack.c.l.b16 %v277
  %v1103 = vunpack.c.h.b16 %v277
  %v1104 = vpack.c.b16 %v600, %v592
  %v1105 = vpack.c.b16 %v601, %v593
  %v1106 = vpack.c.b16 %v602, %v594
  %v1107 = vpack.c.b16 %v603, %v595
  %v1108 = vpack.c.b16 %v604, %v596
  %v1109 = vpack.c.b16 %v605, %v597
  %v1110 = vpack.c.b16 %v606, %v598
  %v1111 = vpack.c.b16 %v607, %v599
  %v1112 = vpack.c.b16 %v616, %v608
  %v1113 = vpack.c.b16 %v617, %v609
  %v1114 = vpack.c.b16 %v618, %v610
  %v1115 = vpack.c.b16 %v619, %v611
  %v1116 = vpack.c.b16 %v620, %v612
  %v1117 = vpack.c.b16 %v621, %v613
  %v1118 = vpack.c.b16 %v622, %v614
  %v1119 = vpack.c.b16 %v623, %v615
  %v1120 = vpack.c.b16 %v632, %v624
  %v1121 = vpack.c.b16 %v633, %v625
  %v1122 = vpack.c.b16 %v634, %v626
  %v1123 = vpack.c.b16 %v635, %v627
  %v1124 = vpack.c.b16 %v636, %v628
  %v1125 = vpack.c.b16 %v637, %v629
  %v1126 = vpack.c.b16 %v638, %v630
  %v1127 = vpack.c.b16 %v639, %v631
  %v1128 = vpack.c.b16 %v648, %v640
  %v1129 = vpack.c.b16 %v649, %v641
  %v1130 = vpack.c.b16 %v650, %v642
  %v1131 = vpack.c.b16 %v651, %v643
  %v1132 = vpack.c.b16 %v652, %v644
  %v1133 = vpack.c.b16 %v653, %v645
  %v1134 = vpack.c.b16 %v654, %v646
  %v1135 = vpack.c.b16 %v655, %v647
  %v1136 = vpack.c.b16 %v664, %v656
  %v1137 = vpack.c.b16 %v665, %v657
  %v1138 = vpack.c.b16 %v666, %v658
  %v1139 = vpack.c.b16 %v667, %v659
  %v1140 = vpack.c.b16 %v668, %v660
  %v1141 = vpack.c.b16 %v669, %v661
  %v1142 = vpack.c.b16 %v670, %v662
  %v1143 = vpack.c.b16 %v671, %v663
  %v1144 = vpack.c.b16 %v680, %v672
  %v1145 = vpack.c.b16 %v681, %v673
  %v1146 = vpack.c.b16 %v682, %v674
  %v1147 = vpack.c.b16 %v683, %v675
  %v1148 = vpack.c.b16 %v684, %v676
  %v1149 = vpack.c.b16 %v685, %v677
  %v1150 = vpack.c.b16 %v686, %v678
  %v1151 = vpack.c.b16 %v687, %v679
  %v1152 = vpack.c.b16 %v696, %v688
  %v1153 = vpack.c.b16 %v697, %v689
  %v1154 = vpack.c.b16 %v698, %v690
  %v1155 = vpack.c.b16 %v699, %v691
  %v1156 = vpack.c.b16 %v700, %v692
  %v1157 = vpack.c.b16 %v701, %v693
  %v1158 = vpack.c.b16 %v702, %v694
  %v1159 = vpack.c.b16 %v703, %v695
  %v1160 = vpack.c.b16 %v712, %v704
  %v1161 = vpack.c.b16 %v713, %v705
  %v1162 = vpack.c.b16 %v714, %v706
  %v1163 = vpack.c.b16 %v715, %v707
  %v1164 = vpack.c.b16 %v716, %v708
  %v1165 = vpack.c.b16 %v717, %v709
  %v1166 = vpack.c.b16 %v718, %v710
  %v1167 = vpack.c.b16 %v719, %v711
  %v1168 = vpack.c.b16 %v728, %v720
  %v1169 = vpack.c.b16 %v729, %v721
  %v1170 = vpack.c.b16 %v730, %v722
  %v1171 = vpack.c.b16 %v731, %v723
  %v1172 = vpack.c.b16 %v732, %v724
  %v1173 = vpack.c.b16 %v733, %v725
  %v1174 = vpack.c.b16 %v734, %v726
  %v1175 = vpack.c.b16 %v735, %v727
  %v1176 = vpack.c.b16 %v744, %v736
  %v1177 = vpack.c.b16 %v745, %v737
  %v1178 = vpack.c.b16 %v746, %v738
  %v1179 = vpack.c.b16 %v747, %v739
  %v1180 = vpack.c.b16 %v748, %v740
  %v1181 = vpack.c.b16 %v749, %v741
  %v1182 = vpack.c.b16 %v750, %v742
  %v1183 = vpack.c.b16 %v751, %v743
  %v1184 = vpack.c.b16 %v760, %v752
  %v1185 = vpack.c.b16 %v761, %v753
  %v1186 = vpack.c.b16 %v762, %v754
  %v1187 = vpack.c.b16 %v763, %v755
  %v1188 = vpack.c.b16 %v764, %v756
  %v1189 = vpack.c.b16 %v765, %v757
  %v1190 = vpack.c.b16 %v766, %v758
  %v1191 = vpack.c.b16 %v767, %v759
  %v1192 = vpack.c.b16 %v776, %v768
  %v1193 = vpack.c.b16 %v777, %v769
  %v1194 = vpack.c.b16 %v778, %v770
  %v1195 = vpack.c.b16 %v779, %v771
  %v1196 = vpack.c.b16 %v780, %v772
  %v1197 = vpack.c.b16 %v781, %v773
  %v1198 = vpack.c.b16 %v782, %v774
  %v1199 = vpack.c.b16 %v783, %v775
  %v1200 = vpack.c.b16 %v792, %v784
  %v1201 = vpack.c.b16 %v793, %v785
  %v1202 = vpack.c.b16 %v794, %v786
  %v1203 = vpack.c.b16 %v795, %v787
  %v1204 = vpack.c.b16 %v796, %v788
  %v1205 = vpack.c.b16 %v797, %v789
  %v1206 = vpack.c.b16 %v798, %v790
  %v1207 = vpack.c.b16 %v799, %v791
  %v1208 = vpack.c.b16 %v808, %v800
  %v1209 = vpack.c.b16 %v809, %v801
  %v1210 = vpack.c.b16 %v810, %v802
  %v1211 = vpack.c.b16 %v811, %v803
  %v1212 = vpack.c.b16 %v812, %v804
  %v1213 = vpack.c.b16 %v813, %v805
  %v1214 = vpack.c.b16 %v814, %v806
  %v1215 = vpack.c.b16 %v815, %v807
  %v1216 = vpack.c.b16 %v824, %v816
  %v1217 = vpack.c.b16 %v825, %v817
  %v1218 = vpack.c.b16 %v826, %v818
  %v1219 = vpack.c.b16 %v827, %v819
  %v1220 = vpack.c.b16 %v828, %v820
  %v1221 = vpack.c.b16 %v829, %v821
  %v1222 = vpack.c.b16 %v830, %v822
  %v1223 = vpack.c.b16 %v831, %v823
  %v1224 = vpack.c.b16 %v840, %v832
  %v1225 = vpack.c.b16 %v841, %v833
  %v1226 = vpack.c.b16 %v842, %v834
  %v1227 = vpack.c.b16 %v843, %v835
  %v1228 = vpack.c.b16 %v844, %v836
  %v1229 = vpack.c.b16 %v845, %v837
  %v1230 = vpack.c.b16 %v846, %v838
  %v1231 = vpack.c.b16 %v847, %v839
  %v1232 = vpack.c.b16 %v856, %v848
  %v1233 = vpack.c.b16 %v857, %v849
  %v1234 = vpack.c.b16 %v858, %v850
  %v1235 = vpack.c.b16 %v859, %v851
  %v1236 = vpack.c.b16 %v860, %v852
  %v1237 = vpack.c.b16 %v861, %v853
  %v1238 = vpack.c.b16 %v862, %v854
  %v1239 = vpack.c.b16 %v863, %v855
  %v1240 = vpack.c.b16 %v872, %v864
  %v1241 = vpack.c.b16 %v873, %v865
  %v1242 = vpack.c.b16 %v874, %v866
  %v1243 = vpack.c.b16 %v875, %v867
  %v1244 = vpack.c.b16 %v876, %v868
  %v1245 = vpack.c.b16 %v877, %v869
  %v1246 = vpack.c.b16 %v878, %v870
  %v1247 = vpack.c.b16 %v879, %v871
  %v1248 = vpack.c.b16 %v888, %v880
  %v1249 = vpack.c.b16 %v889, %v881
  %v1250 = vpack.c.b16 %v890, %v882
  %v1251 = vpack.c.b16 %v891, %v883
  %v1252 = vpack.c.b16 %v892, %v884
  %v1253 = vpack.c.b16 %v893, %v885
  %v1254 = vpack.c.b16 %v894, %v886
  %v1255 = vpack.c.b16 %v895, %v887
  %v1256 = vpack.c.b16 %v904, %v896
  %v1257 = vpack.c.b16 %v905, %v897
  %v1258 = vpack.c.b16 %v906, %v898
  %v1259 = vpack.c.b16 %v907, %v899
  %v1260 = vpack.c.b16 %v908, %v900
  %v1261 = vpack.c.b16 %v909, %v901
  %v1262 = vpack.c.b16 %v910, %v902
  %v1263 = vpack.c.b16 %v911, %v903
  %v1264 = vpack.c.b16 %v920, %v912
  %v1265 = vpack.c.b16 %v921, %v913
  %v1266 = vpack.c.b16 %v922, %v914
  %v1267 = vpack.c.b16 %v923, %v915
  %v1268 = vpack.c.b16 %v924, %v916
  %v1269 = vpack.c.b16 %v925, %v917
  %v1270 = vpack.c.b16 %v926, %v918
  %v1271 = vpack.c.b16 %v927, %v919
  %v1272 = vpack.c.b16 %v936, %v928
  %v1273 = vpack.c.b16 %v937, %v929
  %v1274 = vpack.c.b16 %v938, %v930
  %v1275 = vpack.c.b16 %v939, %v931
  %v1276 = vpack.c.b16 %v940, %v932
  %v1277 = vpack.c.b16 %v941, %v933
  %v1278 = vpack.c.b16 %v942, %v934
  %v1279 = vpack.c.b16 %v943, %v935
  %v1280 = vpack.c.b16 %v952, %v944
  %v1281 = vpack.c.b16 %v953, %v945
  %v1282 = vpack.c.b16 %v954, %v946
  %v1283 = vpack.c.b16 %v955, %v947
  %v1284 = vpack.c.b16 %v956, %v948
  %v1285 = vpack.c.b16 %v957, %v949
  %v1286 = vpack.c.b16 %v958, %v950
  %v1287 = vpack.c.b16 %v959, %v951
  %v1288 = vpack.c.b16 %v968, %v960
  %v1289 = vpack.c.b16 %v969, %v961
  %v1290 = vpack.c.b16 %v970, %v962
  %v1291 = vpack.c.b16 %v971, %v963
  %v1292 = vpack.c.b16 %v972, %v964
  %v1293 = vpack.c.b16 %v973, %v965
  %v1294 = vpack.c.b16 %v974, %v966
  %v1295 = vpack.c.b16 %v975, %v967
  %v1296 = vpack.c.b16 %v984, %v976
  %v1297 = vpack.c.b16 %v985, %v977
  %v1298 = vpack.c.b16 %v986, %v978
  %v1299 = vpack.c.b16 %v987, %v979
  %v1300 = vpack.c.b16 %v988, %v980
  %v1301 = vpack.c.b16 %v989, %v981
  %v1302 = vpack.c.b16 %v990, %v982
  %v1303 = vpack.c.b16 %v991, %v983
  %v1304 = vpack.c.b16 %v1000, %v992
  %v1305 = vpack.c.b16 %v1001, %v993
  %v1306 = vpack.c.b16 %v1002, %v994
  %v1307 = vpack.c.b16 %v1003, %v995
  %v1308 = vpack.c.b16 %v1004, %v996
  %v1309 = vpack.c.b16 %v1005, %v997
  %v1310 = vpack.c.b16 %v1006, %v998
  %v1311 = vpack.c.b16 %v1007, %v999
  %v1312 = vpack.c.b16 %v1016, %v1008
  %v1313 = vpack.c.b16 %v1017, %v1009
  %v1314 = vpack.c.b16 %v1018, %v1010
  %v1315 = vpack.c.b16 %v1019, %v1011
  %v1316 = vpack.c.b16 %v1020, %v1012
  %v1317 = vpack.c.b16 %v1021, %v1013
  %v1318 = vpack.c.b16 %v1022, %v1014
  %v1319 = vpack.c.b16 %v1023, %v1015
  %v1320 = vpack.c.b16 %v1032, %v1024
  %v1321 = vpack.c.b16 %v1033, %v1025
  %v1322 = vpack.c.b16 %v1034, %v1026
  %v1323 = vpack.c.b16 %v1035, %v1027
  %v1324 = vpack.c.b16 %v1036, %v1028
  %v1325 = vpack.c.b16 %v1037, %v1029
  %v1326 = vpack.c.b16 %v1038, %v1030
  %v1327 = vpack.c.b16 %v1039, %v1031
  %v1328 = vpack.c.b16 %v1048, %v1040
  %v1329 = vpack.c.b16 %v1049, %v1041
  %v1330 = vpack.c.b16 %v1050, %v1042
  %v1331 = vpack.c.b16 %v1051, %v1043
  %v1332 = vpack.c.b16 %v1052, %v1044
  %v1333 = vpack.c.b16 %v1053, %v1045
  %v1334 = vpack.c.b16 %v1054, %v1046
  %v1335 = vpack.c.b16 %v1055, %v1047
  %v1336 = vpack.c.b16 %v1064, %v1056
  %v1337 = vpack.c.b16 %v1065, %v1057
  %v1338 = vpack.c.b16 %v1066, %v1058
  %v1339 = vpack.c.b16 %v1067, %v1059
  %v1340 = vpack.c.b16 %v1068, %v1060
  %v1341 = vpack.c.b16 %v1069, %v1061
  %v1342 = vpack.c.b16 %v1070, %v1062
  %v1343 = vpack.c.b16 %v1071, %v1063
  %v1344 = vpack.c.b16 %v1080, %v1072
  %v1345 = vpack.c.b16 %v1081, %v1073
  %v1346 = vpack.c.b16 %v1082, %v1074
  %v1347 = vpack.c.b16 %v1083, %v1075
  %v1348 = vpack.c.b16 %v1084, %v1076
  %v1349 = vpack.c.b16 %v1085, %v1077
  %v1350 = vpack.c.b16 %v1086, %v1078
  %v1351 = vpack.c.b16 %v1087, %v1079
  %v1352 = vpack.c.b16 %v1096, %v1088
  %v1353 = vpack.c.b16 %v1097, %v1089
  %v1354 = vpack.c.b16 %v1098, %v1090
  %v1355 = vpack.c.b16 %v1099, %v1091
  %v1356 = vpack.c.b16 %v1100, %v1092
  %v1357 = vpack.c.b16 %v1101, %v1093
  %v1358 = vpack.c.b16 %v1102, %v1094
  %v1359 = vpack.c.b16 %v1103, %v1095
  %1616 = vmatpush.bf16.msra.mxu0 %v1160
  %1617 = vmatpush.bf16.msra.mxu0 %v1152
  %1618 = vmatpush.bf16.msra.mxu0 %v1144
  %1619 = vmatpush.bf16.msra.mxu0 %v1136
  %1620 = vmatpush.bf16.msra.mxu0 %v1128
  %1621 = vmatpush.bf16.msra.mxu0 %v1120
  %1622 = vmatpush.bf16.msra.mxu0 %v1112
  %1623 = vmatpush.bf16.msra.mxu0 %v1104
  %1624 = vmatmul.bf16.gmra.mxu0 %v320
  %v1625 = vpop.f32.mrf.mxu0
  %v1626 = vadd.f32 %v280, %v1625
  %v1627 = vpop.f32.mrf.mxu0
  %v1628 = vadd.f32 %v280, %v1627
  %1629 = vmatmul.bf16.gmra.mxu0 %v324
  %v1630 = vpop.f32.mrf.mxu0
  %v1631 = vadd.f32 %v280, %v1630
  %v1632 = vpop.f32.mrf.mxu0
  %v1633 = vadd.f32 %v280, %v1632
  %1634 = vdwg.mxu0
  %1635 = vmatpush.bf16.msra.mxu0 %v1224
  %1636 = vmatpush.bf16.msra.mxu0 %v1216
  %1637 = vmatpush.bf16.msra.mxu0 %v1208
  %1638 = vmatpush.bf16.msra.mxu0 %v1200
  %1639 = vmatpush.bf16.msra.mxu0 %v1192
  %1640 = vmatpush.bf16.msra.mxu0 %v1184
  %1641 = vmatpush.bf16.msra.mxu0 %v1176
  %1642 = vmatpush.bf16.msra.mxu0 %v1168
  %1643 = vmatmul.bf16.gmra.mxu0 %v321
  %v1644 = vpop.f32.mrf.mxu0
  %v1645 = vadd.f32 %v1626, %v1644
  %v1646 = vpop.f32.mrf.mxu0
  %v1647 = vadd.f32 %v1628, %v1646
  %1648 = vmatmul.bf16.gmra.mxu0 %v325
  %v1649 = vpop.f32.mrf.mxu0
  %v1650 = vadd.f32 %v1631, %v1649
  %v1651 = vpop.f32.mrf.mxu0
  %v1652 = vadd.f32 %v1633, %v1651
  %1653 = vdwg.mxu0
  %1654 = vmatpush.bf16.msra.mxu0 %v1288
  %1655 = vmatpush.bf16.msra.mxu0 %v1280
  %1656 = vmatpush.bf16.msra.mxu0 %v1272
  %1657 = vmatpush.bf16.msra.mxu0 %v1264
  %1658 = vmatpush.bf16.msra.mxu0 %v1256
  %1659 = vmatpush.bf16.msra.mxu0 %v1248
  %1660 = vmatpush.bf16.msra.mxu0 %v1240
  %1661 = vmatpush.bf16.msra.mxu0 %v1232
  %1662 = vmatmul.bf16.gmra.mxu0 %v322
  %v1663 = vpop.f32.mrf.mxu0
  %v1664 = vadd.f32 %v1645, %v1663
  %v1665 = vpop.f32.mrf.mxu0
  %v1666 = vadd.f32 %v1647, %v1665
  %1667 = vmatmul.bf16.gmra.mxu0 %v326
  %v1668 = vpop.f32.mrf.mxu0
  %v1669 = vadd.f32 %v1650, %v1668
  %v1670 = vpop.f32.mrf.mxu0
  %v1671 = vadd.f32 %v1652, %v1670
  %1672 = vdwg.mxu0
  %1673 = vmatpush.bf16.msra.mxu0 %v1352
  %1674 = vmatpush.bf16.msra.mxu0 %v1344
  %1675 = vmatpush.bf16.msra.mxu0 %v1336
  %1676 = vmatpush.bf16.msra.mxu0 %v1328
  %1677 = vmatpush.bf16.msra.mxu0 %v1320
  %1678 = vmatpush.bf16.msra.mxu0 %v1312
  %1679 = vmatpush.bf16.msra.mxu0 %v1304
  %1680 = vmatpush.bf16.msra.mxu0 %v1296
  %1681 = vmatmul.bf16.gmra.mxu0 %v323
  %v1682 = vpop.f32.mrf.mxu0
  %v1683 = vadd.f32 %v1664, %v1682
  %v1684 = vpop.f32.mrf.mxu0
  %v1685 = vadd.f32 %v1666, %v1684
  %1686 = vmatmul.bf16.gmra.mxu0 %v327
  %v1687 = vpop.f32.mrf.mxu0
  %v1688 = vadd.f32 %v1669, %v1687
  %v1689 = vpop.f32.mrf.mxu0
  %v1690 = vadd.f32 %v1671, %v1689
  %1691 = vdwg.mxu0
  %1692 = vmatpush.bf16.msra.mxu0 %v1161
  %1693 = vmatpush.bf16.msra.mxu0 %v1153
  %1694 = vmatpush.bf16.msra.mxu0 %v1145
  %1695 = vmatpush.bf16.msra.mxu0 %v1137
  %1696 = vmatpush.bf16.msra.mxu0 %v1129
  %1697 = vmatpush.bf16.msra.mxu0 %v1121
  %1698 = vmatpush.bf16.msra.mxu0 %v1113
  %1699 = vmatpush.bf16.msra.mxu0 %v1105
  %1700 = vmatmul.bf16.gmra.mxu0 %v320
  %v1701 = vpop.f32.mrf.mxu0
  %v1702 = vadd.f32 %v281, %v1701
  %v1703 = vpop.f32.mrf.mxu0
  %v1704 = vadd.f32 %v281, %v1703
  %1705 = vmatmul.bf16.gmra.mxu0 %v324
  %v1706 = vpop.f32.mrf.mxu0
  %v1707 = vadd.f32 %v281, %v1706
  %v1708 = vpop.f32.mrf.mxu0
  %v1709 = vadd.f32 %v281, %v1708
  %1710 = vdwg.mxu0
  %1711 = vmatpush.bf16.msra.mxu0 %v1225
  %1712 = vmatpush.bf16.msra.mxu0 %v1217
  %1713 = vmatpush.bf16.msra.mxu0 %v1209
  %1714 = vmatpush.bf16.msra.mxu0 %v1201
  %1715 = vmatpush.bf16.msra.mxu0 %v1193
  %1716 = vmatpush.bf16.msra.mxu0 %v1185
  %1717 = vmatpush.bf16.msra.mxu0 %v1177
  %1718 = vmatpush.bf16.msra.mxu0 %v1169
  %1719 = vmatmul.bf16.gmra.mxu0 %v321
  %v1720 = vpop.f32.mrf.mxu0
  %v1721 = vadd.f32 %v1702, %v1720
  %v1722 = vpop.f32.mrf.mxu0
  %v1723 = vadd.f32 %v1704, %v1722
  %1724 = vmatmul.bf16.gmra.mxu0 %v325
  %v1725 = vpop.f32.mrf.mxu0
  %v1726 = vadd.f32 %v1707, %v1725
  %v1727 = vpop.f32.mrf.mxu0
  %v1728 = vadd.f32 %v1709, %v1727
  %1729 = vdwg.mxu0
  %1730 = vmatpush.bf16.msra.mxu0 %v1289
  %1731 = vmatpush.bf16.msra.mxu0 %v1281
  %1732 = vmatpush.bf16.msra.mxu0 %v1273
  %1733 = vmatpush.bf16.msra.mxu0 %v1265
  %1734 = vmatpush.bf16.msra.mxu0 %v1257
  %1735 = vmatpush.bf16.msra.mxu0 %v1249
  %1736 = vmatpush.bf16.msra.mxu0 %v1241
  %1737 = vmatpush.bf16.msra.mxu0 %v1233
  %1738 = vmatmul.bf16.gmra.mxu0 %v322
  %v1739 = vpop.f32.mrf.mxu0
  %v1740 = vadd.f32 %v1721, %v1739
  %v1741 = vpop.f32.mrf.mxu0
  %v1742 = vadd.f32 %v1723, %v1741
  %1743 = vmatmul.bf16.gmra.mxu0 %v326
  %v1744 = vpop.f32.mrf.mxu0
  %v1745 = vadd.f32 %v1726, %v1744
  %v1746 = vpop.f32.mrf.mxu0
  %v1747 = vadd.f32 %v1728, %v1746
  %1748 = vdwg.mxu0
  %1749 = vmatpush.bf16.msra.mxu0 %v1353
  %1750 = vmatpush.bf16.msra.mxu0 %v1345
  %1751 = vmatpush.bf16.msra.mxu0 %v1337
  %1752 = vmatpush.bf16.msra.mxu0 %v1329
  %1753 = vmatpush.bf16.msra.mxu0 %v1321
  %1754 = vmatpush.bf16.msra.mxu0 %v1313
  %1755 = vmatpush.bf16.msra.mxu0 %v1305
  %1756 = vmatpush.bf16.msra.mxu0 %v1297
  %1757 = vmatmul.bf16.gmra.mxu0 %v323
  %v1758 = vpop.f32.mrf.mxu0
  %v1759 = vadd.f32 %v1740, %v1758
  %v1760 = vpop.f32.mrf.mxu0
  %v1761 = vadd.f32 %v1742, %v1760
  %1762 = vmatmul.bf16.gmra.mxu0 %v327
  %v1763 = vpop.f32.mrf.mxu0
  %v1764 = vadd.f32 %v1745, %v1763
  %v1765 = vpop.f32.mrf.mxu0
  %v1766 = vadd.f32 %v1747, %v1765
  %1767 = vdwg.mxu0
  %1768 = vmatpush.bf16.msra.mxu0 %v1162
  %1769 = vmatpush.bf16.msra.mxu0 %v1154
  %1770 = vmatpush.bf16.msra.mxu0 %v1146
  %1771 = vmatpush.bf16.msra.mxu0 %v1138
  %1772 = vmatpush.bf16.msra.mxu0 %v1130
  %1773 = vmatpush.bf16.msra.mxu0 %v1122
  %1774 = vmatpush.bf16.msra.mxu0 %v1114
  %1775 = vmatpush.bf16.msra.mxu0 %v1106
  %1776 = vmatmul.bf16.gmra.mxu0 %v320
  %v1777 = vpop.f32.mrf.mxu0
  %v1778 = vadd.f32 %v282, %v1777
  %v1779 = vpop.f32.mrf.mxu0
  %v1780 = vadd.f32 %v282, %v1779
  %1781 = vmatmul.bf16.gmra.mxu0 %v324
  %v1782 = vpop.f32.mrf.mxu0
  %v1783 = vadd.f32 %v282, %v1782
  %v1784 = vpop.f32.mrf.mxu0
  %v1785 = vadd.f32 %v282, %v1784
  %1786 = vdwg.mxu0
  %1787 = vmatpush.bf16.msra.mxu0 %v1226
  %1788 = vmatpush.bf16.msra.mxu0 %v1218
  %1789 = vmatpush.bf16.msra.mxu0 %v1210
  %1790 = vmatpush.bf16.msra.mxu0 %v1202
  %1791 = vmatpush.bf16.msra.mxu0 %v1194
  %1792 = vmatpush.bf16.msra.mxu0 %v1186
  %1793 = vmatpush.bf16.msra.mxu0 %v1178
  %1794 = vmatpush.bf16.msra.mxu0 %v1170
  %1795 = vmatmul.bf16.gmra.mxu0 %v321
  %v1796 = vpop.f32.mrf.mxu0
  %v1797 = vadd.f32 %v1778, %v1796
  %v1798 = vpop.f32.mrf.mxu0
  %v1799 = vadd.f32 %v1780, %v1798
  %1800 = vmatmul.bf16.gmra.mxu0 %v325
  %v1801 = vpop.f32.mrf.mxu0
  %v1802 = vadd.f32 %v1783, %v1801
  %v1803 = vpop.f32.mrf.mxu0
  %v1804 = vadd.f32 %v1785, %v1803
  %1805 = vdwg.mxu0
  %1806 = vmatpush.bf16.msra.mxu0 %v1290
  %1807 = vmatpush.bf16.msra.mxu0 %v1282
  %1808 = vmatpush.bf16.msra.mxu0 %v1274
  %1809 = vmatpush.bf16.msra.mxu0 %v1266
  %1810 = vmatpush.bf16.msra.mxu0 %v1258
  %1811 = vmatpush.bf16.msra.mxu0 %v1250
  %1812 = vmatpush.bf16.msra.mxu0 %v1242
  %1813 = vmatpush.bf16.msra.mxu0 %v1234
  %1814 = vmatmul.bf16.gmra.mxu0 %v322
  %v1815 = vpop.f32.mrf.mxu0
  %v1816 = vadd.f32 %v1797, %v1815
  %v1817 = vpop.f32.mrf.mxu0
  %v1818 = vadd.f32 %v1799, %v1817
  %1819 = vmatmul.bf16.gmra.mxu0 %v326
  %v1820 = vpop.f32.mrf.mxu0
  %v1821 = vadd.f32 %v1802, %v1820
  %v1822 = vpop.f32.mrf.mxu0
  %v1823 = vadd.f32 %v1804, %v1822
  %1824 = vdwg.mxu0
  %1825 = vmatpush.bf16.msra.mxu0 %v1354
  %1826 = vmatpush.bf16.msra.mxu0 %v1346
  %1827 = vmatpush.bf16.msra.mxu0 %v1338
  %1828 = vmatpush.bf16.msra.mxu0 %v1330
  %1829 = vmatpush.bf16.msra.mxu0 %v1322
  %1830 = vmatpush.bf16.msra.mxu0 %v1314
  %1831 = vmatpush.bf16.msra.mxu0 %v1306
  %1832 = vmatpush.bf16.msra.mxu0 %v1298
  %1833 = vmatmul.bf16.gmra.mxu0 %v323
  %v1834 = vpop.f32.mrf.mxu0
  %v1835 = vadd.f32 %v1816, %v1834
  %v1836 = vpop.f32.mrf.mxu0
  %v1837 = vadd.f32 %v1818, %v1836
  %1838 = vmatmul.bf16.gmra.mxu0 %v327
  %v1839 = vpop.f32.mrf.mxu0
  %v1840 = vadd.f32 %v1821, %v1839
  %v1841 = vpop.f32.mrf.mxu0
  %v1842 = vadd.f32 %v1823, %v1841
  %1843 = vdwg.mxu0
  %1844 = vmatpush.bf16.msra.mxu0 %v1163
  %1845 = vmatpush.bf16.msra.mxu0 %v1155
  %1846 = vmatpush.bf16.msra.mxu0 %v1147
  %1847 = vmatpush.bf16.msra.mxu0 %v1139
  %1848 = vmatpush.bf16.msra.mxu0 %v1131
  %1849 = vmatpush.bf16.msra.mxu0 %v1123
  %1850 = vmatpush.bf16.msra.mxu0 %v1115
  %1851 = vmatpush.bf16.msra.mxu0 %v1107
  %1852 = vmatmul.bf16.gmra.mxu0 %v320
  %v1853 = vpop.f32.mrf.mxu0
  %v1854 = vadd.f32 %v283, %v1853
  %v1855 = vpop.f32.mrf.mxu0
  %v1856 = vadd.f32 %v283, %v1855
  %1857 = vmatmul.bf16.gmra.mxu0 %v324
  %v1858 = vpop.f32.mrf.mxu0
  %v1859 = vadd.f32 %v283, %v1858
  %v1860 = vpop.f32.mrf.mxu0
  %v1861 = vadd.f32 %v283, %v1860
  %1862 = vdwg.mxu0
  %1863 = vmatpush.bf16.msra.mxu0 %v1227
  %1864 = vmatpush.bf16.msra.mxu0 %v1219
  %1865 = vmatpush.bf16.msra.mxu0 %v1211
  %1866 = vmatpush.bf16.msra.mxu0 %v1203
  %1867 = vmatpush.bf16.msra.mxu0 %v1195
  %1868 = vmatpush.bf16.msra.mxu0 %v1187
  %1869 = vmatpush.bf16.msra.mxu0 %v1179
  %1870 = vmatpush.bf16.msra.mxu0 %v1171
  %1871 = vmatmul.bf16.gmra.mxu0 %v321
  %v1872 = vpop.f32.mrf.mxu0
  %v1873 = vadd.f32 %v1854, %v1872
  %v1874 = vpop.f32.mrf.mxu0
  %v1875 = vadd.f32 %v1856, %v1874
  %1876 = vmatmul.bf16.gmra.mxu0 %v325
  %v1877 = vpop.f32.mrf.mxu0
  %v1878 = vadd.f32 %v1859, %v1877
  %v1879 = vpop.f32.mrf.mxu0
  %v1880 = vadd.f32 %v1861, %v1879
  %1881 = vdwg.mxu0
  %1882 = vmatpush.bf16.msra.mxu0 %v1291
  %1883 = vmatpush.bf16.msra.mxu0 %v1283
  %1884 = vmatpush.bf16.msra.mxu0 %v1275
  %1885 = vmatpush.bf16.msra.mxu0 %v1267
  %1886 = vmatpush.bf16.msra.mxu0 %v1259
  %1887 = vmatpush.bf16.msra.mxu0 %v1251
  %1888 = vmatpush.bf16.msra.mxu0 %v1243
  %1889 = vmatpush.bf16.msra.mxu0 %v1235
  %1890 = vmatmul.bf16.gmra.mxu0 %v322
  %v1891 = vpop.f32.mrf.mxu0
  %v1892 = vadd.f32 %v1873, %v1891
  %v1893 = vpop.f32.mrf.mxu0
  %v1894 = vadd.f32 %v1875, %v1893
  %1895 = vmatmul.bf16.gmra.mxu0 %v326
  %v1896 = vpop.f32.mrf.mxu0
  %v1897 = vadd.f32 %v1878, %v1896
  %v1898 = vpop.f32.mrf.mxu0
  %v1899 = vadd.f32 %v1880, %v1898
  %1900 = vdwg.mxu0
  %1901 = vmatpush.bf16.msra.mxu0 %v1355
  %1902 = vmatpush.bf16.msra.mxu0 %v1347
  %1903 = vmatpush.bf16.msra.mxu0 %v1339
  %1904 = vmatpush.bf16.msra.mxu0 %v1331
  %1905 = vmatpush.bf16.msra.mxu0 %v1323
  %1906 = vmatpush.bf16.msra.mxu0 %v1315
  %1907 = vmatpush.bf16.msra.mxu0 %v1307
  %1908 = vmatpush.bf16.msra.mxu0 %v1299
  %1909 = vmatmul.bf16.gmra.mxu0 %v323
  %v1910 = vpop.f32.mrf.mxu0
  %v1911 = vadd.f32 %v1892, %v1910
  %v1912 = vpop.f32.mrf.mxu0
  %v1913 = vadd.f32 %v1894, %v1912
  %1914 = vmatmul.bf16.gmra.mxu0 %v327
  %v1915 = vpop.f32.mrf.mxu0
  %v1916 = vadd.f32 %v1897, %v1915
  %v1917 = vpop.f32.mrf.mxu0
  %v1918 = vadd.f32 %v1899, %v1917
  %1919 = vdwg.mxu0
  %1920 = vmatpush.bf16.msra.mxu0 %v1164
  %1921 = vmatpush.bf16.msra.mxu0 %v1156
  %1922 = vmatpush.bf16.msra.mxu0 %v1148
  %1923 = vmatpush.bf16.msra.mxu0 %v1140
  %1924 = vmatpush.bf16.msra.mxu0 %v1132
  %1925 = vmatpush.bf16.msra.mxu0 %v1124
  %1926 = vmatpush.bf16.msra.mxu0 %v1116
  %1927 = vmatpush.bf16.msra.mxu0 %v1108
  %1928 = vmatmul.bf16.gmra.mxu0 %v320
  %v1929 = vpop.f32.mrf.mxu0
  %v1930 = vadd.f32 %v284, %v1929
  %v1931 = vpop.f32.mrf.mxu0
  %v1932 = vadd.f32 %v284, %v1931
  %1933 = vmatmul.bf16.gmra.mxu0 %v324
  %v1934 = vpop.f32.mrf.mxu0
  %v1935 = vadd.f32 %v284, %v1934
  %v1936 = vpop.f32.mrf.mxu0
  %v1937 = vadd.f32 %v284, %v1936
  %1938 = vdwg.mxu0
  %1939 = vmatpush.bf16.msra.mxu0 %v1228
  %1940 = vmatpush.bf16.msra.mxu0 %v1220
  %1941 = vmatpush.bf16.msra.mxu0 %v1212
  %1942 = vmatpush.bf16.msra.mxu0 %v1204
  %1943 = vmatpush.bf16.msra.mxu0 %v1196
  %1944 = vmatpush.bf16.msra.mxu0 %v1188
  %1945 = vmatpush.bf16.msra.mxu0 %v1180
  %1946 = vmatpush.bf16.msra.mxu0 %v1172
  %1947 = vmatmul.bf16.gmra.mxu0 %v321
  %v1948 = vpop.f32.mrf.mxu0
  %v1949 = vadd.f32 %v1930, %v1948
  %v1950 = vpop.f32.mrf.mxu0
  %v1951 = vadd.f32 %v1932, %v1950
  %1952 = vmatmul.bf16.gmra.mxu0 %v325
  %v1953 = vpop.f32.mrf.mxu0
  %v1954 = vadd.f32 %v1935, %v1953
  %v1955 = vpop.f32.mrf.mxu0
  %v1956 = vadd.f32 %v1937, %v1955
  %1957 = vdwg.mxu0
  %1958 = vmatpush.bf16.msra.mxu0 %v1292
  %1959 = vmatpush.bf16.msra.mxu0 %v1284
  %1960 = vmatpush.bf16.msra.mxu0 %v1276
  %1961 = vmatpush.bf16.msra.mxu0 %v1268
  %1962 = vmatpush.bf16.msra.mxu0 %v1260
  %1963 = vmatpush.bf16.msra.mxu0 %v1252
  %1964 = vmatpush.bf16.msra.mxu0 %v1244
  %1965 = vmatpush.bf16.msra.mxu0 %v1236
  %1966 = vmatmul.bf16.gmra.mxu0 %v322
  %v1967 = vpop.f32.mrf.mxu0
  %v1968 = vadd.f32 %v1949, %v1967
  %v1969 = vpop.f32.mrf.mxu0
  %v1970 = vadd.f32 %v1951, %v1969
  %1971 = vmatmul.bf16.gmra.mxu0 %v326
  %v1972 = vpop.f32.mrf.mxu0
  %v1973 = vadd.f32 %v1954, %v1972
  %v1974 = vpop.f32.mrf.mxu0
  %v1975 = vadd.f32 %v1956, %v1974
  %1976 = vdwg.mxu0
  %1977 = vmatpush.bf16.msra.mxu0 %v1356
  %1978 = vmatpush.bf16.msra.mxu0 %v1348
  %1979 = vmatpush.bf16.msra.mxu0 %v1340
  %1980 = vmatpush.bf16.msra.mxu0 %v1332
  %1981 = vmatpush.bf16.msra.mxu0 %v1324
  %1982 = vmatpush.bf16.msra.mxu0 %v1316
  %1983 = vmatpush.bf16.msra.mxu0 %v1308
  %1984 = vmatpush.bf16.msra.mxu0 %v1300
  %1985 = vmatmul.bf16.gmra.mxu0 %v323
  %v1986 = vpop.f32.mrf.mxu0
  %v1987 = vadd.f32 %v1968, %v1986
  %v1988 = vpop.f32.mrf.mxu0
  %v1989 = vadd.f32 %v1970, %v1988
  %1990 = vmatmul.bf16.gmra.mxu0 %v327
  %v1991 = vpop.f32.mrf.mxu0
  %v1992 = vadd.f32 %v1973, %v1991
  %v1993 = vpop.f32.mrf.mxu0
  %v1994 = vadd.f32 %v1975, %v1993
  %1995 = vdwg.mxu0
  %1996 = vmatpush.bf16.msra.mxu0 %v1165
  %1997 = vmatpush.bf16.msra.mxu0 %v1157
  %1998 = vmatpush.bf16.msra.mxu0 %v1149
  %1999 = vmatpush.bf16.msra.mxu0 %v1141
  %2000 = vmatpush.bf16.msra.mxu0 %v1133
  %2001 = vmatpush.bf16.msra.mxu0 %v1125
  %2002 = vmatpush.bf16.msra.mxu0 %v1117
  %2003 = vmatpush.bf16.msra.mxu0 %v1109
  %2004 = vmatmul.bf16.gmra.mxu0 %v320
  %v2005 = vpop.f32.mrf.mxu0
  %v2006 = vadd.f32 %v285, %v2005
  %v2007 = vpop.f32.mrf.mxu0
  %v2008 = vadd.f32 %v285, %v2007
  %2009 = vmatmul.bf16.gmra.mxu0 %v324
  %v2010 = vpop.f32.mrf.mxu0
  %v2011 = vadd.f32 %v285, %v2010
  %v2012 = vpop.f32.mrf.mxu0
  %v2013 = vadd.f32 %v285, %v2012
  %2014 = vdwg.mxu0
  %2015 = vmatpush.bf16.msra.mxu0 %v1229
  %2016 = vmatpush.bf16.msra.mxu0 %v1221
  %2017 = vmatpush.bf16.msra.mxu0 %v1213
  %2018 = vmatpush.bf16.msra.mxu0 %v1205
  %2019 = vmatpush.bf16.msra.mxu0 %v1197
  %2020 = vmatpush.bf16.msra.mxu0 %v1189
  %2021 = vmatpush.bf16.msra.mxu0 %v1181
  %2022 = vmatpush.bf16.msra.mxu0 %v1173
  %2023 = vmatmul.bf16.gmra.mxu0 %v321
  %v2024 = vpop.f32.mrf.mxu0
  %v2025 = vadd.f32 %v2006, %v2024
  %v2026 = vpop.f32.mrf.mxu0
  %v2027 = vadd.f32 %v2008, %v2026
  %2028 = vmatmul.bf16.gmra.mxu0 %v325
  %v2029 = vpop.f32.mrf.mxu0
  %v2030 = vadd.f32 %v2011, %v2029
  %v2031 = vpop.f32.mrf.mxu0
  %v2032 = vadd.f32 %v2013, %v2031
  %2033 = vdwg.mxu0
  %2034 = vmatpush.bf16.msra.mxu0 %v1293
  %2035 = vmatpush.bf16.msra.mxu0 %v1285
  %2036 = vmatpush.bf16.msra.mxu0 %v1277
  %2037 = vmatpush.bf16.msra.mxu0 %v1269
  %2038 = vmatpush.bf16.msra.mxu0 %v1261
  %2039 = vmatpush.bf16.msra.mxu0 %v1253
  %2040 = vmatpush.bf16.msra.mxu0 %v1245
  %2041 = vmatpush.bf16.msra.mxu0 %v1237
  %2042 = vmatmul.bf16.gmra.mxu0 %v322
  %v2043 = vpop.f32.mrf.mxu0
  %v2044 = vadd.f32 %v2025, %v2043
  %v2045 = vpop.f32.mrf.mxu0
  %v2046 = vadd.f32 %v2027, %v2045
  %2047 = vmatmul.bf16.gmra.mxu0 %v326
  %v2048 = vpop.f32.mrf.mxu0
  %v2049 = vadd.f32 %v2030, %v2048
  %v2050 = vpop.f32.mrf.mxu0
  %v2051 = vadd.f32 %v2032, %v2050
  %2052 = vdwg.mxu0
  %2053 = vmatpush.bf16.msra.mxu0 %v1357
  %2054 = vmatpush.bf16.msra.mxu0 %v1349
  %2055 = vmatpush.bf16.msra.mxu0 %v1341
  %2056 = vmatpush.bf16.msra.mxu0 %v1333
  %2057 = vmatpush.bf16.msra.mxu0 %v1325
  %2058 = vmatpush.bf16.msra.mxu0 %v1317
  %2059 = vmatpush.bf16.msra.mxu0 %v1309
  %2060 = vmatpush.bf16.msra.mxu0 %v1301
  %2061 = vmatmul.bf16.gmra.mxu0 %v323
  %v2062 = vpop.f32.mrf.mxu0
  %v2063 = vadd.f32 %v2044, %v2062
  %v2064 = vpop.f32.mrf.mxu0
  %v2065 = vadd.f32 %v2046, %v2064
  %2066 = vmatmul.bf16.gmra.mxu0 %v327
  %v2067 = vpop.f32.mrf.mxu0
  %v2068 = vadd.f32 %v2049, %v2067
  %v2069 = vpop.f32.mrf.mxu0
  %v2070 = vadd.f32 %v2051, %v2069
  %2071 = vdwg.mxu0
  %2072 = vmatpush.bf16.msra.mxu0 %v1166
  %2073 = vmatpush.bf16.msra.mxu0 %v1158
  %2074 = vmatpush.bf16.msra.mxu0 %v1150
  %2075 = vmatpush.bf16.msra.mxu0 %v1142
  %2076 = vmatpush.bf16.msra.mxu0 %v1134
  %2077 = vmatpush.bf16.msra.mxu0 %v1126
  %2078 = vmatpush.bf16.msra.mxu0 %v1118
  %2079 = vmatpush.bf16.msra.mxu0 %v1110
  %2080 = vmatmul.bf16.gmra.mxu0 %v320
  %v2081 = vpop.f32.mrf.mxu0
  %v2082 = vadd.f32 %v286, %v2081
  %v2083 = vpop.f32.mrf.mxu0
  %v2084 = vadd.f32 %v286, %v2083
  %2085 = vmatmul.bf16.gmra.mxu0 %v324
  %v2086 = vpop.f32.mrf.mxu0
  %v2087 = vadd.f32 %v286, %v2086
  %v2088 = vpop.f32.mrf.mxu0
  %v2089 = vadd.f32 %v286, %v2088
  %2090 = vdwg.mxu0
  %2091 = vmatpush.bf16.msra.mxu0 %v1230
  %2092 = vmatpush.bf16.msra.mxu0 %v1222
  %2093 = vmatpush.bf16.msra.mxu0 %v1214
  %2094 = vmatpush.bf16.msra.mxu0 %v1206
  %2095 = vmatpush.bf16.msra.mxu0 %v1198
  %2096 = vmatpush.bf16.msra.mxu0 %v1190
  %2097 = vmatpush.bf16.msra.mxu0 %v1182
  %2098 = vmatpush.bf16.msra.mxu0 %v1174
  %2099 = vmatmul.bf16.gmra.mxu0 %v321
  %v2100 = vpop.f32.mrf.mxu0
  %v2101 = vadd.f32 %v2082, %v2100
  %v2102 = vpop.f32.mrf.mxu0
  %v2103 = vadd.f32 %v2084, %v2102
  %2104 = vmatmul.bf16.gmra.mxu0 %v325
  %v2105 = vpop.f32.mrf.mxu0
  %v2106 = vadd.f32 %v2087, %v2105
  %v2107 = vpop.f32.mrf.mxu0
  %v2108 = vadd.f32 %v2089, %v2107
  %2109 = vdwg.mxu0
  %2110 = vmatpush.bf16.msra.mxu0 %v1294
  %2111 = vmatpush.bf16.msra.mxu0 %v1286
  %2112 = vmatpush.bf16.msra.mxu0 %v1278
  %2113 = vmatpush.bf16.msra.mxu0 %v1270
  %2114 = vmatpush.bf16.msra.mxu0 %v1262
  %2115 = vmatpush.bf16.msra.mxu0 %v1254
  %2116 = vmatpush.bf16.msra.mxu0 %v1246
  %2117 = vmatpush.bf16.msra.mxu0 %v1238
  %2118 = vmatmul.bf16.gmra.mxu0 %v322
  %v2119 = vpop.f32.mrf.mxu0
  %v2120 = vadd.f32 %v2101, %v2119
  %v2121 = vpop.f32.mrf.mxu0
  %v2122 = vadd.f32 %v2103, %v2121
  %2123 = vmatmul.bf16.gmra.mxu0 %v326
  %v2124 = vpop.f32.mrf.mxu0
  %v2125 = vadd.f32 %v2106, %v2124
  %v2126 = vpop.f32.mrf.mxu0
  %v2127 = vadd.f32 %v2108, %v2126
  %2128 = vdwg.mxu0
  %2129 = vmatpush.bf16.msra.mxu0 %v1358
  %2130 = vmatpush.bf16.msra.mxu0 %v1350
  %2131 = vmatpush.bf16.msra.mxu0 %v1342
  %2132 = vmatpush.bf16.msra.mxu0 %v1334
  %2133 = vmatpush.bf16.msra.mxu0 %v1326
  %2134 = vmatpush.bf16.msra.mxu0 %v1318
  %2135 = vmatpush.bf16.msra.mxu0 %v1310
  %2136 = vmatpush.bf16.msra.mxu0 %v1302
  %2137 = vmatmul.bf16.gmra.mxu0 %v323
  %v2138 = vpop.f32.mrf.mxu0
  %v2139 = vadd.f32 %v2120, %v2138
  %v2140 = vpop.f32.mrf.mxu0
  %v2141 = vadd.f32 %v2122, %v2140
  %2142 = vmatmul.bf16.gmra.mxu0 %v327
  %v2143 = vpop.f32.mrf.mxu0
  %v2144 = vadd.f32 %v2125, %v2143
  %v2145 = vpop.f32.mrf.mxu0
  %v2146 = vadd.f32 %v2127, %v2145
  %2147 = vdwg.mxu0
  %2148 = vmatpush.bf16.msra.mxu0 %v1167
  %2149 = vmatpush.bf16.msra.mxu0 %v1159
  %2150 = vmatpush.bf16.msra.mxu0 %v1151
  %2151 = vmatpush.bf16.msra.mxu0 %v1143
  %2152 = vmatpush.bf16.msra.mxu0 %v1135
  %2153 = vmatpush.bf16.msra.mxu0 %v1127
  %2154 = vmatpush.bf16.msra.mxu0 %v1119
  %2155 = vmatpush.bf16.msra.mxu0 %v1111
  %2156 = vmatmul.bf16.gmra.mxu0 %v320
  %v2157 = vpop.f32.mrf.mxu0
  %v2158 = vadd.f32 %v287, %v2157
  %v2159 = vpop.f32.mrf.mxu0
  %v2160 = vadd.f32 %v287, %v2159
  %2161 = vmatmul.bf16.gmra.mxu0 %v324
  %v2162 = vpop.f32.mrf.mxu0
  %v2163 = vadd.f32 %v287, %v2162
  %v2164 = vpop.f32.mrf.mxu0
  %v2165 = vadd.f32 %v287, %v2164
  %2166 = vdwg.mxu0
  %2167 = vmatpush.bf16.msra.mxu0 %v1231
  %2168 = vmatpush.bf16.msra.mxu0 %v1223
  %2169 = vmatpush.bf16.msra.mxu0 %v1215
  %2170 = vmatpush.bf16.msra.mxu0 %v1207
  %2171 = vmatpush.bf16.msra.mxu0 %v1199
  %2172 = vmatpush.bf16.msra.mxu0 %v1191
  %2173 = vmatpush.bf16.msra.mxu0 %v1183
  %2174 = vmatpush.bf16.msra.mxu0 %v1175
  %2175 = vmatmul.bf16.gmra.mxu0 %v321
  %v2176 = vpop.f32.mrf.mxu0
  %v2177 = vadd.f32 %v2158, %v2176
  %v2178 = vpop.f32.mrf.mxu0
  %v2179 = vadd.f32 %v2160, %v2178
  %2180 = vmatmul.bf16.gmra.mxu0 %v325
  %v2181 = vpop.f32.mrf.mxu0
  %v2182 = vadd.f32 %v2163, %v2181
  %v2183 = vpop.f32.mrf.mxu0
  %v2184 = vadd.f32 %v2165, %v2183
  %2185 = vdwg.mxu0
  %2186 = vmatpush.bf16.msra.mxu0 %v1295
  %2187 = vmatpush.bf16.msra.mxu0 %v1287
  %2188 = vmatpush.bf16.msra.mxu0 %v1279
  %2189 = vmatpush.bf16.msra.mxu0 %v1271
  %2190 = vmatpush.bf16.msra.mxu0 %v1263
  %2191 = vmatpush.bf16.msra.mxu0 %v1255
  %2192 = vmatpush.bf16.msra.mxu0 %v1247
  %2193 = vmatpush.bf16.msra.mxu0 %v1239
  %2194 = vmatmul.bf16.gmra.mxu0 %v322
  %v2195 = vpop.f32.mrf.mxu0
  %v2196 = vadd.f32 %v2177, %v2195
  %v2197 = vpop.f32.mrf.mxu0
  %v2198 = vadd.f32 %v2179, %v2197
  %2199 = vmatmul.bf16.gmra.mxu0 %v326
  %v2200 = vpop.f32.mrf.mxu0
  %v2201 = vadd.f32 %v2182, %v2200
  %v2202 = vpop.f32.mrf.mxu0
  %v2203 = vadd.f32 %v2184, %v2202
  %2204 = vdwg.mxu0
  %2205 = vmatpush.bf16.msra.mxu0 %v1359
  %2206 = vmatpush.bf16.msra.mxu0 %v1351
  %2207 = vmatpush.bf16.msra.mxu0 %v1343
  %2208 = vmatpush.bf16.msra.mxu0 %v1335
  %2209 = vmatpush.bf16.msra.mxu0 %v1327
  %2210 = vmatpush.bf16.msra.mxu0 %v1319
  %2211 = vmatpush.bf16.msra.mxu0 %v1311
  %2212 = vmatpush.bf16.msra.mxu0 %v1303
  %2213 = vmatmul.bf16.gmra.mxu0 %v323
  %v2214 = vpop.f32.mrf.mxu0
  %v2215 = vadd.f32 %v2196, %v2214
  %v2216 = vpop.f32.mrf.mxu0
  %v2217 = vadd.f32 %v2198, %v2216
  %2218 = vmatmul.bf16.gmra.mxu0 %v327
  %v2219 = vpop.f32.mrf.mxu0
  %v2220 = vadd.f32 %v2201, %v2219
  %v2221 = vpop.f32.mrf.mxu0
  %v2222 = vadd.f32 %v2203, %v2221
  %2223 = vdwg.mxu0
  %v2224 = vmax.f32 %v1683, 0.0
  %v2225 = vmax.f32 %v1759, 0.0
  %v2226 = vmax.f32 %v1835, 0.0
  %v2227 = vmax.f32 %v1911, 0.0
  %v2228 = vmax.f32 %v1987, 0.0
  %v2229 = vmax.f32 %v2063, 0.0
  %v2230 = vmax.f32 %v2139, 0.0
  %v2231 = vmax.f32 %v2215, 0.0
  %v2232 = vmax.f32 %v1685, 0.0
  %v2233 = vmax.f32 %v1761, 0.0
  %v2234 = vmax.f32 %v1837, 0.0
  %v2235 = vmax.f32 %v1913, 0.0
  %v2236 = vmax.f32 %v1989, 0.0
  %v2237 = vmax.f32 %v2065, 0.0
  %v2238 = vmax.f32 %v2141, 0.0
  %v2239 = vmax.f32 %v2217, 0.0
  %v2240 = vmax.f32 %v1688, 0.0
  %v2241 = vmax.f32 %v1764, 0.0
  %v2242 = vmax.f32 %v1840, 0.0
  %v2243 = vmax.f32 %v1916, 0.0
  %v2244 = vmax.f32 %v1992, 0.0
  %v2245 = vmax.f32 %v2068, 0.0
  %v2246 = vmax.f32 %v2144, 0.0
  %v2247 = vmax.f32 %v2220, 0.0
  %v2248 = vmax.f32 %v1690, 0.0
  %v2249 = vmax.f32 %v1766, 0.0
  %v2250 = vmax.f32 %v1842, 0.0
  %v2251 = vmax.f32 %v1918, 0.0
  %v2252 = vmax.f32 %v1994, 0.0
  %v2253 = vmax.f32 %v2070, 0.0
  %v2254 = vmax.f32 %v2146, 0.0
  %v2255 = vmax.f32 %v2222, 0.0
  %v2256 = vpack.c.bf16 %v2225, %v2224
  %v2257 = vpack.c.bf16 %v2227, %v2226
  %v2258 = vpack.c.bf16 %v2229, %v2228
  %v2259 = vpack.c.bf16 %v2231, %v2230
  %v2260 = vpack.c.bf16 %v2233, %v2232
  %v2261 = vpack.c.bf16 %v2235, %v2234
  %v2262 = vpack.c.bf16 %v2237, %v2236
  %v2263 = vpack.c.bf16 %v2239, %v2238
  %v2264 = vpack.c.bf16 %v2241, %v2240
  %v2265 = vpack.c.bf16 %v2243, %v2242
  %v2266 = vpack.c.bf16 %v2245, %v2244
  %v2267 = vpack.c.bf16 %v2247, %v2246
  %v2268 = vpack.c.bf16 %v2249, %v2248
  %v2269 = vpack.c.bf16 %v2251, %v2250
  %v2270 = vpack.c.bf16 %v2253, %v2252
  %v2271 = vpack.c.bf16 %v2255, %v2254
  %2272 = vst [vmem:[%s3] sm:$0xff] %v2256
  %2273 = vst [vmem:[%s3 + $0x8] sm:$0xff] %v2257
  %2274 = vst [vmem:[%s3 + $0x10] sm:$0xff] %v2258
  %2275 = vst [vmem:[%s3 + $0x18] sm:$0xff] %v2259
  %2276 = vst [vmem:[%s3 + $0x20] sm:$0xff] %v2260
  %2277 = vst [vmem:[%s3 + $0x28] sm:$0xff] %v2261
  %2278 = vst [vmem:[%s3 + $0x30] sm:$0xff] %v2262
  %2279 = vst [vmem:[%s3 + $0x38] sm:$0xff] %v2263
  %2280 = vst [vmem:[%s3 + $0x40] sm:$0xff] %v2264
  %2281 = vst [vmem:[%s3 + $0x48] sm:$0xff] %v2265
  %2282 = vst [vmem:[%s3 + $0x50] sm:$0xff] %v2266
  %2283 = vst [vmem:[%s3 + $0x58] sm:$0xff] %v2267
  %2284 = vst [vmem:[%s3 + $0x60] sm:$0xff] %v2268
  %2285 = vst [vmem:[%s3 + $0x68] sm:$0xff] %v2269
  %2286 = vst [vmem:[%s3 + $0x70] sm:$0xff] %v2270
  %2287 = vst [vmem:[%s3 + $0x78] sm:$0xff] %v2271
  // Predicated region
  $region14: #{autoencoder_forward.14} parent=0 // pred_check
    _
  $region15: #{autoencoder_forward.14} parent=0 // pred_check_branch
    %2289 = sbr.rel (0) target = $region17
  $region16: #{autoencoder_forward.14} parent=0 // pred_region
    _
  $region17: #{autoencoder_forward.14} parent=0 // pred_fallthru
    _
  // Predicated region
  $region18: #{autoencoder_forward.14} parent=0 // pred_check
    _
  $region19: #{autoencoder_forward.14} parent=0 // pred_check_branch
    %2291 = sbr.rel (0) target = $region21
  $region20: #{autoencoder_forward.14} parent=0 // pred_region
    _
  $region21: #{autoencoder_forward.14} parent=0 // pred_fallthru
    _

// kernel: autoencoder_forward.15
$region0: #{autoencoder_forward.15}
  #allocation0 [shape = 'u32[]', space=smem, size = 0x4, offset = 0x4, fixed_abs, tag = 'smem constant byte address 0x4 - core index']
  #allocation1 [shape = 'u32[72,128]{1,0:T(1,128)}', space=vmem, size = 0x9000, scoped, tag = 'internal scratch']
  %s0 = inlined_call_operand.vmem [shape: bf16[128,1024], index: 0, kind: input, shape index: {}]
  %s1 = inlined_call_operand.vmem [shape: bf16[1024,16], index: 1, kind: input, shape index: {}]
  %s2 = inlined_call_operand.vmem [shape: f32[1,16], index: 2, kind: input, shape index: {}]
  %s3 = inlined_call_operand.vmem [shape: f32[128,16], index: 3, kind: output, shape index: {}]
  %s4 = sld [smem:[#allocation0]]
  $region22: #{autoencoder_forward.15} parent=0
    _
  %s6 = ssub.s32 1, %s4
  %s7 = scalar_select 0, %s6, %s4
  // Predicated region
  $region2: #{autoencoder_forward.15} parent=0 // pred_check
    _
  $region3: #{autoencoder_forward.15} parent=0 // pred_check_branch
    %9 = sbr.rel (0) target = $region5
  $region4: #{autoencoder_forward.15} parent=0 // pred_region
    _
  $region5: #{autoencoder_forward.15} parent=0 // pred_fallthru
    _
  // Predicated region
  $region6: #{autoencoder_forward.15} parent=0 // pred_check
    _
  $region7: #{autoencoder_forward.15} parent=0 // pred_check_branch
    %11 = sbr.rel (0) target = $region9
  $region8: #{autoencoder_forward.15} parent=0 // pred_region
    _
  $region9: #{autoencoder_forward.15} parent=0 // pred_fallthru
    _
  // Predicated region
  $region10: #{autoencoder_forward.15} parent=0 // pred_check
    _
  $region11: #{autoencoder_forward.15} parent=0 // pred_check_branch
    %13 = sbr.rel (0) target = $region13
  $region12: #{autoencoder_forward.15} parent=0 // pred_region
    _
  $region13: #{autoencoder_forward.15} parent=0 // pred_fallthru
    _
  %v14 = vld [vmem:[%s0] sm:$0xff]
  %v15 = vld [vmem:[%s0 + $0x8] sm:$0xff]
  %v16 = vld [vmem:[%s0 + $0x10] sm:$0xff]
  %v17 = vld [vmem:[%s0 + $0x18] sm:$0xff]
  %v18 = vld [vmem:[%s0 + $0x20] sm:$0xff]
  %v19 = vld [vmem:[%s0 + $0x28] sm:$0xff]
  %v20 = vld [vmem:[%s0 + $0x30] sm:$0xff]
  %v21 = vld [vmem:[%s0 + $0x38] sm:$0xff]
  %v22 = vld [vmem:[%s0 + $0x40] sm:$0xff]
  %v23 = vld [vmem:[%s0 + $0x48] sm:$0xff]
  %v24 = vld [vmem:[%s0 + $0x50] sm:$0xff]
  %v25 = vld [vmem:[%s0 + $0x58] sm:$0xff]
  %v26 = vld [vmem:[%s0 + $0x60] sm:$0xff]
  %v27 = vld [vmem:[%s0 + $0x68] sm:$0xff]
  %v28 = vld [vmem:[%s0 + $0x70] sm:$0xff]
  %v29 = vld [vmem:[%s0 + $0x78] sm:$0xff]
  %v30 = vld [vmem:[%s0 + $0x80] sm:$0xff]
  %v31 = vld [vmem:[%s0 + $0x88] sm:$0xff]
  %v32 = vld [vmem:[%s0 + $0x90] sm:$0xff]
  %v33 = vld [vmem:[%s0 + $0x98] sm:$0xff]
  %v34 = vld [vmem:[%s0 + $0xa0] sm:$0xff]
  %v35 = vld [vmem:[%s0 + $0xa8] sm:$0xff]
  %v36 = vld [vmem:[%s0 + $0xb0] sm:$0xff]
  %v37 = vld [vmem:[%s0 + $0xb8] sm:$0xff]
  %v38 = vld [vmem:[%s0 + $0xc0] sm:$0xff]
  %v39 = vld [vmem:[%s0 + $0xc8] sm:$0xff]
  %v40 = vld [vmem:[%s0 + $0xd0] sm:$0xff]
  %v41 = vld [vmem:[%s0 + $0xd8] sm:$0xff]
  %v42 = vld [vmem:[%s0 + $0xe0] sm:$0xff]
  %v43 = vld [vmem:[%s0 + $0xe8] sm:$0xff]
  %v44 = vld [vmem:[%s0 + $0xf0] sm:$0xff]
  %v45 = vld [vmem:[%s0 + $0xf8] sm:$0xff]
  %v46 = vld [vmem:[%s0 + $0x100] sm:$0xff]
  %v47 = vld [vmem:[%s0 + $0x108] sm:$0xff]
  %v48 = vld [vmem:[%s0 + $0x110] sm:$0xff]
  %v49 = vld [vmem:[%s0 + $0x118] sm:$0xff]
  %v50 = vld [vmem:[%s0 + $0x120] sm:$0xff]
  %v51 = vld [vmem:[%s0 + $0x128] sm:$0xff]
  %v52 = vld [vmem:[%s0 + $0x130] sm:$0xff]
  %v53 = vld [vmem:[%s0 + $0x138] sm:$0xff]
  %v54 = vld [vmem:[%s0 + $0x140] sm:$0xff]
  %v55 = vld [vmem:[%s0 + $0x148] sm:$0xff]
  %v56 = vld [vmem:[%s0 + $0x150] sm:$0xff]
  %v57 = vld [vmem:[%s0 + $0x158] sm:$0xff]
  %v58 = vld [vmem:[%s0 + $0x160] sm:$0xff]
  %v59 = vld [vmem:[%s0 + $0x168] sm:$0xff]
  %v60 = vld [vmem:[%s0 + $0x170] sm:$0xff]
  %v61 = vld [vmem:[%s0 + $0x178] sm:$0xff]
  %v62 = vld [vmem:[%s0 + $0x180] sm:$0xff]
  %v63 = vld [vmem:[%s0 + $0x188] sm:$0xff]
  %v64 = vld [vmem:[%s0 + $0x190] sm:$0xff]
  %v65 = vld [vmem:[%s0 + $0x198] sm:$0xff]
  %v66 = vld [vmem:[%s0 + $0x1a0] sm:$0xff]
  %v67 = vld [vmem:[%s0 + $0x1a8] sm:$0xff]
  %v68 = vld [vmem:[%s0 + $0x1b0] sm:$0xff]
  %v69 = vld [vmem:[%s0 + $0x1b8] sm:$0xff]
  %v70 = vld [vmem:[%s0 + $0x1c0] sm:$0xff]
  %v71 = vld [vmem:[%s0 + $0x1c8] sm:$0xff]
  %v72 = vld [vmem:[%s0 + $0x1d0] sm:$0xff]
  %v73 = vld [vmem:[%s0 + $0x1d8] sm:$0xff]
  %v74 = vld [vmem:[%s0 + $0x1e0] sm:$0xff]
  %v75 = vld [vmem:[%s0 + $0x1e8] sm:$0xff]
  %v76 = vld [vmem:[%s0 + $0x1f0] sm:$0xff]
  %v77 = vld [vmem:[%s0 + $0x1f8] sm:$0xff]
  %v78 = vld [vmem:[%s1] sm:$0xf]
  %v79 = vld [vmem:[%s1 + $0x4] sm:$0xf]
  %v80 = vld [vmem:[%s1 + $0x8] sm:$0xf]
  %v81 = vld [vmem:[%s1 + $0xc] sm:$0xf]
  %v82 = vld [vmem:[%s1 + $0x10] sm:$0xf]
  %v83 = vld [vmem:[%s1 + $0x14] sm:$0xf]
  %v84 = vld [vmem:[%s1 + $0x18] sm:$0xf]
  %v85 = vld [vmem:[%s1 + $0x1c] sm:$0xf]
  %v86 = vld [vmem:[%s1 + $0x20] sm:$0xf]
  %v87 = vld [vmem:[%s1 + $0x24] sm:$0xf]
  %v88 = vld [vmem:[%s1 + $0x28] sm:$0xf]
  %v89 = vld [vmem:[%s1 + $0x2c] sm:$0xf]
  %v90 = vld [vmem:[%s1 + $0x30] sm:$0xf]
  %v91 = vld [vmem:[%s1 + $0x34] sm:$0xf]
  %v92 = vld [vmem:[%s1 + $0x38] sm:$0xf]
  %v93 = vld [vmem:[%s1 + $0x3c] sm:$0xf]
  %v94 = vld [vmem:[%s1 + $0x40] sm:$0xf]
  %v95 = vld [vmem:[%s1 + $0x44] sm:$0xf]
  %v96 = vld [vmem:[%s1 + $0x48] sm:$0xf]
  %v97 = vld [vmem:[%s1 + $0x4c] sm:$0xf]
  %v98 = vld [vmem:[%s1 + $0x50] sm:$0xf]
  %v99 = vld [vmem:[%s1 + $0x54] sm:$0xf]
  %v100 = vld [vmem:[%s1 + $0x58] sm:$0xf]
  %v101 = vld [vmem:[%s1 + $0x5c] sm:$0xf]
  %v102 = vld [vmem:[%s1 + $0x60] sm:$0xf]
  %v103 = vld [vmem:[%s1 + $0x64] sm:$0xf]
  %v104 = vld [vmem:[%s1 + $0x68] sm:$0xf]
  %v105 = vld [vmem:[%s1 + $0x6c] sm:$0xf]
  %v106 = vld [vmem:[%s1 + $0x70] sm:$0xf]
  %v107 = vld [vmem:[%s1 + $0x74] sm:$0xf]
  %v108 = vld [vmem:[%s1 + $0x78] sm:$0xf]
  %v109 = vld [vmem:[%s1 + $0x7c] sm:$0xf]
  %v110 = vld [vmem:[%s1 + $0x80] sm:$0xf]
  %v111 = vld [vmem:[%s1 + $0x84] sm:$0xf]
  %v112 = vld [vmem:[%s1 + $0x88] sm:$0xf]
  %v113 = vld [vmem:[%s1 + $0x8c] sm:$0xf]
  %v114 = vld [vmem:[%s1 + $0x90] sm:$0xf]
  %v115 = vld [vmem:[%s1 + $0x94] sm:$0xf]
  %v116 = vld [vmem:[%s1 + $0x98] sm:$0xf]
  %v117 = vld [vmem:[%s1 + $0x9c] sm:$0xf]
  %v118 = vld [vmem:[%s1 + $0xa0] sm:$0xf]
  %v119 = vld [vmem:[%s1 + $0xa4] sm:$0xf]
  %v120 = vld [vmem:[%s1 + $0xa8] sm:$0xf]
  %v121 = vld [vmem:[%s1 + $0xac] sm:$0xf]
  %v122 = vld [vmem:[%s1 + $0xb0] sm:$0xf]
  %v123 = vld [vmem:[%s1 + $0xb4] sm:$0xf]
  %v124 = vld [vmem:[%s1 + $0xb8] sm:$0xf]
  %v125 = vld [vmem:[%s1 + $0xbc] sm:$0xf]
  %v126 = vld [vmem:[%s1 + $0xc0] sm:$0xf]
  %v127 = vld [vmem:[%s1 + $0xc4] sm:$0xf]
  %v128 = vld [vmem:[%s1 + $0xc8] sm:$0xf]
  %v129 = vld [vmem:[%s1 + $0xcc] sm:$0xf]
  %v130 = vld [vmem:[%s1 + $0xd0] sm:$0xf]
  %v131 = vld [vmem:[%s1 + $0xd4] sm:$0xf]
  %v132 = vld [vmem:[%s1 + $0xd8] sm:$0xf]
  %v133 = vld [vmem:[%s1 + $0xdc] sm:$0xf]
  %v134 = vld [vmem:[%s1 + $0xe0] sm:$0xf]
  %v135 = vld [vmem:[%s1 + $0xe4] sm:$0xf]
  %v136 = vld [vmem:[%s1 + $0xe8] sm:$0xf]
  %v137 = vld [vmem:[%s1 + $0xec] sm:$0xf]
  %v138 = vld [vmem:[%s1 + $0xf0] sm:$0xf]
  %v139 = vld [vmem:[%s1 + $0xf4] sm:$0xf]
  %v140 = vld [vmem:[%s1 + $0xf8] sm:$0xf]
  %v141 = vld [vmem:[%s1 + $0xfc] sm:$0xf]
  %v142 = vld [vmem:[%s1 + $0x100] sm:$0xf]
  %v143 = vld [vmem:[%s1 + $0x104] sm:$0xf]
  %v144 = vld [vmem:[%s1 + $0x108] sm:$0xf]
  %v145 = vld [vmem:[%s1 + $0x10c] sm:$0xf]
  %v146 = vld [vmem:[%s1 + $0x110] sm:$0xf]
  %v147 = vld [vmem:[%s1 + $0x114] sm:$0xf]
  %v148 = vld [vmem:[%s1 + $0x118] sm:$0xf]
  %v149 = vld [vmem:[%s1 + $0x11c] sm:$0xf]
  %v150 = vld [vmem:[%s1 + $0x120] sm:$0xf]
  %v151 = vld [vmem:[%s1 + $0x124] sm:$0xf]
  %v152 = vld [vmem:[%s1 + $0x128] sm:$0xf]
  %v153 = vld [vmem:[%s1 + $0x12c] sm:$0xf]
  %v154 = vld [vmem:[%s1 + $0x130] sm:$0xf]
  %v155 = vld [vmem:[%s1 + $0x134] sm:$0xf]
  %v156 = vld [vmem:[%s1 + $0x138] sm:$0xf]
  %v157 = vld [vmem:[%s1 + $0x13c] sm:$0xf]
  %v158 = vld [vmem:[%s1 + $0x140] sm:$0xf]
  %v159 = vld [vmem:[%s1 + $0x144] sm:$0xf]
  %v160 = vld [vmem:[%s1 + $0x148] sm:$0xf]
  %v161 = vld [vmem:[%s1 + $0x14c] sm:$0xf]
  %v162 = vld [vmem:[%s1 + $0x150] sm:$0xf]
  %v163 = vld [vmem:[%s1 + $0x154] sm:$0xf]
  %v164 = vld [vmem:[%s1 + $0x158] sm:$0xf]
  %v165 = vld [vmem:[%s1 + $0x15c] sm:$0xf]
  %v166 = vld [vmem:[%s1 + $0x160] sm:$0xf]
  %v167 = vld [vmem:[%s1 + $0x164] sm:$0xf]
  %v168 = vld [vmem:[%s1 + $0x168] sm:$0xf]
  %v169 = vld [vmem:[%s1 + $0x16c] sm:$0xf]
  %v170 = vld [vmem:[%s1 + $0x170] sm:$0xf]
  %v171 = vld [vmem:[%s1 + $0x174] sm:$0xf]
  %v172 = vld [vmem:[%s1 + $0x178] sm:$0xf]
  %v173 = vld [vmem:[%s1 + $0x17c] sm:$0xf]
  %v174 = vld [vmem:[%s1 + $0x180] sm:$0xf]
  %v175 = vld [vmem:[%s1 + $0x184] sm:$0xf]
  %v176 = vld [vmem:[%s1 + $0x188] sm:$0xf]
  %v177 = vld [vmem:[%s1 + $0x18c] sm:$0xf]
  %v178 = vld [vmem:[%s1 + $0x190] sm:$0xf]
  %v179 = vld [vmem:[%s1 + $0x194] sm:$0xf]
  %v180 = vld [vmem:[%s1 + $0x198] sm:$0xf]
  %v181 = vld [vmem:[%s1 + $0x19c] sm:$0xf]
  %v182 = vld [vmem:[%s1 + $0x1a0] sm:$0xf]
  %v183 = vld [vmem:[%s1 + $0x1a4] sm:$0xf]
  %v184 = vld [vmem:[%s1 + $0x1a8] sm:$0xf]
  %v185 = vld [vmem:[%s1 + $0x1ac] sm:$0xf]
  %v186 = vld [vmem:[%s1 + $0x1b0] sm:$0xf]
  %v187 = vld [vmem:[%s1 + $0x1b4] sm:$0xf]
  %v188 = vld [vmem:[%s1 + $0x1b8] sm:$0xf]
  %v189 = vld [vmem:[%s1 + $0x1bc] sm:$0xf]
  %v190 = vld [vmem:[%s1 + $0x1c0] sm:$0xf]
  %v191 = vld [vmem:[%s1 + $0x1c4] sm:$0xf]
  %v192 = vld [vmem:[%s1 + $0x1c8] sm:$0xf]
  %v193 = vld [vmem:[%s1 + $0x1cc] sm:$0xf]
  %v194 = vld [vmem:[%s1 + $0x1d0] sm:$0xf]
  %v195 = vld [vmem:[%s1 + $0x1d4] sm:$0xf]
  %v196 = vld [vmem:[%s1 + $0x1d8] sm:$0xf]
  %v197 = vld [vmem:[%s1 + $0x1dc] sm:$0xf]
  %v198 = vld [vmem:[%s1 + $0x1e0] sm:$0xf]
  %v199 = vld [vmem:[%s1 + $0x1e4] sm:$0xf]
  %v200 = vld [vmem:[%s1 + $0x1e8] sm:$0xf]
  %v201 = vld [vmem:[%s1 + $0x1ec] sm:$0xf]
  %v202 = vld [vmem:[%s1 + $0x1f0] sm:$0xf]
  %v203 = vld [vmem:[%s1 + $0x1f4] sm:$0xf]
  %v204 = vld [vmem:[%s1 + $0x1f8] sm:$0xf]
  %v205 = vld [vmem:[%s1 + $0x1fc] sm:$0xf]
  %v206 = vld [vmem:[%s2] sm:$0x1]
  %v208 = vperm.slane %v206, 0
  %v274 = vunpack.c.l.b16 %v14
  %v275 = vunpack.c.h.b16 %v14
  %v276 = vunpack.c.l.b16 %v15
  %v277 = vunpack.c.h.b16 %v15
  %v278 = vunpack.c.l.b16 %v16
  %v279 = vunpack.c.h.b16 %v16
  %v280 = vunpack.c.l.b16 %v17
  %v281 = vunpack.c.h.b16 %v17
  %v282 = vunpack.c.l.b16 %v18
  %v283 = vunpack.c.h.b16 %v18
  %v284 = vunpack.c.l.b16 %v19
  %v285 = vunpack.c.h.b16 %v19
  %v286 = vunpack.c.l.b16 %v20
  %v287 = vunpack.c.h.b16 %v20
  %v288 = vunpack.c.l.b16 %v21
  %v289 = vunpack.c.h.b16 %v21
  %v290 = vunpack.c.l.b16 %v22
  %v291 = vunpack.c.h.b16 %v22
  %v292 = vunpack.c.l.b16 %v23
  %v293 = vunpack.c.h.b16 %v23
  %v294 = vunpack.c.l.b16 %v24
  %v295 = vunpack.c.h.b16 %v24
  %v296 = vunpack.c.l.b16 %v25
  %v297 = vunpack.c.h.b16 %v25
  %v298 = vunpack.c.l.b16 %v26
  %v299 = vunpack.c.h.b16 %v26
  %v300 = vunpack.c.l.b16 %v27
  %v301 = vunpack.c.h.b16 %v27
  %v302 = vunpack.c.l.b16 %v28
  %v303 = vunpack.c.h.b16 %v28
  %v304 = vunpack.c.l.b16 %v29
  %v305 = vunpack.c.h.b16 %v29
  %v306 = vunpack.c.l.b16 %v30
  %v307 = vunpack.c.h.b16 %v30
  %v308 = vunpack.c.l.b16 %v31
  %v309 = vunpack.c.h.b16 %v31
  %v310 = vunpack.c.l.b16 %v32
  %v311 = vunpack.c.h.b16 %v32
  %v312 = vunpack.c.l.b16 %v33
  %v313 = vunpack.c.h.b16 %v33
  %v314 = vunpack.c.l.b16 %v34
  %v315 = vunpack.c.h.b16 %v34
  %v316 = vunpack.c.l.b16 %v35
  %v317 = vunpack.c.h.b16 %v35
  %v318 = vunpack.c.l.b16 %v36
  %v319 = vunpack.c.h.b16 %v36
  %v320 = vunpack.c.l.b16 %v37
  %v321 = vunpack.c.h.b16 %v37
  %v322 = vunpack.c.l.b16 %v38
  %v323 = vunpack.c.h.b16 %v38
  %v324 = vunpack.c.l.b16 %v39
  %v325 = vunpack.c.h.b16 %v39
  %v326 = vunpack.c.l.b16 %v40
  %v327 = vunpack.c.h.b16 %v40
  %v328 = vunpack.c.l.b16 %v41
  %v329 = vunpack.c.h.b16 %v41
  %v330 = vunpack.c.l.b16 %v42
  %v331 = vunpack.c.h.b16 %v42
  %v332 = vunpack.c.l.b16 %v43
  %v333 = vunpack.c.h.b16 %v43
  %v334 = vunpack.c.l.b16 %v44
  %v335 = vunpack.c.h.b16 %v44
  %v336 = vunpack.c.l.b16 %v45
  %v337 = vunpack.c.h.b16 %v45
  %v338 = vunpack.c.l.b16 %v46
  %v339 = vunpack.c.h.b16 %v46
  %v340 = vunpack.c.l.b16 %v47
  %v341 = vunpack.c.h.b16 %v47
  %v342 = vunpack.c.l.b16 %v48
  %v343 = vunpack.c.h.b16 %v48
  %v344 = vunpack.c.l.b16 %v49
  %v345 = vunpack.c.h.b16 %v49
  %v346 = vunpack.c.l.b16 %v50
  %v347 = vunpack.c.h.b16 %v50
  %v348 = vunpack.c.l.b16 %v51
  %v349 = vunpack.c.h.b16 %v51
  %v350 = vunpack.c.l.b16 %v52
  %v351 = vunpack.c.h.b16 %v52
  %v352 = vunpack.c.l.b16 %v53
  %v353 = vunpack.c.h.b16 %v53
  %v354 = vunpack.c.l.b16 %v54
  %v355 = vunpack.c.h.b16 %v54
  %v356 = vunpack.c.l.b16 %v55
  %v357 = vunpack.c.h.b16 %v55
  %v358 = vunpack.c.l.b16 %v56
  %v359 = vunpack.c.h.b16 %v56
  %v360 = vunpack.c.l.b16 %v57
  %v361 = vunpack.c.h.b16 %v57
  %v362 = vunpack.c.l.b16 %v58
  %v363 = vunpack.c.h.b16 %v58
  %v364 = vunpack.c.l.b16 %v59
  %v365 = vunpack.c.h.b16 %v59
  %v366 = vunpack.c.l.b16 %v60
  %v367 = vunpack.c.h.b16 %v60
  %v368 = vunpack.c.l.b16 %v61
  %v369 = vunpack.c.h.b16 %v61
  %v370 = vunpack.c.l.b16 %v62
  %v371 = vunpack.c.h.b16 %v62
  %v372 = vunpack.c.l.b16 %v63
  %v373 = vunpack.c.h.b16 %v63
  %v374 = vunpack.c.l.b16 %v64
  %v375 = vunpack.c.h.b16 %v64
  %v376 = vunpack.c.l.b16 %v65
  %v377 = vunpack.c.h.b16 %v65
  %v378 = vunpack.c.l.b16 %v66
  %v379 = vunpack.c.h.b16 %v66
  %v380 = vunpack.c.l.b16 %v67
  %v381 = vunpack.c.h.b16 %v67
  %v382 = vunpack.c.l.b16 %v68
  %v383 = vunpack.c.h.b16 %v68
  %v384 = vunpack.c.l.b16 %v69
  %v385 = vunpack.c.h.b16 %v69
  %v386 = vunpack.c.l.b16 %v70
  %v387 = vunpack.c.h.b16 %v70
  %v388 = vunpack.c.l.b16 %v71
  %v389 = vunpack.c.h.b16 %v71
  %v390 = vunpack.c.l.b16 %v72
  %v391 = vunpack.c.h.b16 %v72
  %v392 = vunpack.c.l.b16 %v73
  %v393 = vunpack.c.h.b16 %v73
  %v394 = vunpack.c.l.b16 %v74
  %v395 = vunpack.c.h.b16 %v74
  %v396 = vunpack.c.l.b16 %v75
  %v397 = vunpack.c.h.b16 %v75
  %v398 = vunpack.c.l.b16 %v76
  %v399 = vunpack.c.h.b16 %v76
  %v400 = vunpack.c.l.b16 %v77
  %v401 = vunpack.c.h.b16 %v77
  %v402 = vpack.c.b16 %v282, %v274
  %v403 = vpack.c.b16 %v283, %v275
  %v404 = vpack.c.b16 %v284, %v276
  %v405 = vpack.c.b16 %v285, %v277
  %v406 = vpack.c.b16 %v286, %v278
  %v407 = vpack.c.b16 %v287, %v279
  %v408 = vpack.c.b16 %v288, %v280
  %v409 = vpack.c.b16 %v289, %v281
  %v410 = vpack.c.b16 %v298, %v290
  %v411 = vpack.c.b16 %v299, %v291
  %v412 = vpack.c.b16 %v300, %v292
  %v413 = vpack.c.b16 %v301, %v293
  %v414 = vpack.c.b16 %v302, %v294
  %v415 = vpack.c.b16 %v303, %v295
  %v416 = vpack.c.b16 %v304, %v296
  %v417 = vpack.c.b16 %v305, %v297
  %v418 = vpack.c.b16 %v314, %v306
  %v419 = vpack.c.b16 %v315, %v307
  %v420 = vpack.c.b16 %v316, %v308
  %v421 = vpack.c.b16 %v317, %v309
  %v422 = vpack.c.b16 %v318, %v310
  %v423 = vpack.c.b16 %v319, %v311
  %v424 = vpack.c.b16 %v320, %v312
  %v425 = vpack.c.b16 %v321, %v313
  %v426 = vpack.c.b16 %v330, %v322
  %v427 = vpack.c.b16 %v331, %v323
  %v428 = vpack.c.b16 %v332, %v324
  %v429 = vpack.c.b16 %v333, %v325
  %v430 = vpack.c.b16 %v334, %v326
  %v431 = vpack.c.b16 %v335, %v327
  %v432 = vpack.c.b16 %v336, %v328
  %v433 = vpack.c.b16 %v337, %v329
  %v434 = vpack.c.b16 %v346, %v338
  %v435 = vpack.c.b16 %v347, %v339
  %v436 = vpack.c.b16 %v348, %v340
  %v437 = vpack.c.b16 %v349, %v341
  %v438 = vpack.c.b16 %v350, %v342
  %v439 = vpack.c.b16 %v351, %v343
  %v440 = vpack.c.b16 %v352, %v344
  %v441 = vpack.c.b16 %v353, %v345
  %v442 = vpack.c.b16 %v362, %v354
  %v443 = vpack.c.b16 %v363, %v355
  %v444 = vpack.c.b16 %v364, %v356
  %v445 = vpack.c.b16 %v365, %v357
  %v446 = vpack.c.b16 %v366, %v358
  %v447 = vpack.c.b16 %v367, %v359
  %v448 = vpack.c.b16 %v368, %v360
  %v449 = vpack.c.b16 %v369, %v361
  %v450 = vpack.c.b16 %v378, %v370
  %v451 = vpack.c.b16 %v379, %v371
  %v452 = vpack.c.b16 %v380, %v372
  %v453 = vpack.c.b16 %v381, %v373
  %v454 = vpack.c.b16 %v382, %v374
  %v455 = vpack.c.b16 %v383, %v375
  %v456 = vpack.c.b16 %v384, %v376
  %v457 = vpack.c.b16 %v385, %v377
  %v458 = vpack.c.b16 %v394, %v386
  %v459 = vpack.c.b16 %v395, %v387
  %v460 = vpack.c.b16 %v396, %v388
  %v461 = vpack.c.b16 %v397, %v389
  %v462 = vpack.c.b16 %v398, %v390
  %v463 = vpack.c.b16 %v399, %v391
  %v464 = vpack.c.b16 %v400, %v392
  %v465 = vpack.c.b16 %v401, %v393
  %v658 = vunpack.c.l.b16 %v78
  %v659 = vunpack.c.l.b16 %v79
  %v660 = vunpack.c.l.b16 %v80
  %v661 = vunpack.c.l.b16 %v81
  %v662 = vunpack.c.l.b16 %v82
  %v663 = vunpack.c.l.b16 %v83
  %v664 = vunpack.c.l.b16 %v84
  %v665 = vunpack.c.l.b16 %v85
  %v666 = vunpack.c.l.b16 %v86
  %v667 = vunpack.c.l.b16 %v87
  %v668 = vunpack.c.l.b16 %v88
  %v669 = vunpack.c.l.b16 %v89
  %v670 = vunpack.c.l.b16 %v90
  %v671 = vunpack.c.l.b16 %v91
  %v672 = vunpack.c.l.b16 %v92
  %v673 = vunpack.c.l.b16 %v93
  %v674 = vunpack.c.l.b16 %v94
  %v675 = vunpack.c.l.b16 %v95
  %v676 = vunpack.c.l.b16 %v96
  %v677 = vunpack.c.l.b16 %v97
  %v678 = vunpack.c.l.b16 %v98
  %v679 = vunpack.c.l.b16 %v99
  %v680 = vunpack.c.l.b16 %v100
  %v681 = vunpack.c.l.b16 %v101
  %v682 = vunpack.c.l.b16 %v102
  %v683 = vunpack.c.l.b16 %v103
  %v684 = vunpack.c.l.b16 %v104
  %v685 = vunpack.c.l.b16 %v105
  %v686 = vunpack.c.l.b16 %v106
  %v687 = vunpack.c.l.b16 %v107
  %v688 = vunpack.c.l.b16 %v108
  %v689 = vunpack.c.l.b16 %v109
  %v690 = vunpack.c.l.b16 %v110
  %v691 = vunpack.c.l.b16 %v111
  %v692 = vunpack.c.l.b16 %v112
  %v693 = vunpack.c.l.b16 %v113
  %v694 = vunpack.c.l.b16 %v114
  %v695 = vunpack.c.l.b16 %v115
  %v696 = vunpack.c.l.b16 %v116
  %v697 = vunpack.c.l.b16 %v117
  %v698 = vunpack.c.l.b16 %v118
  %v699 = vunpack.c.l.b16 %v119
  %v700 = vunpack.c.l.b16 %v120
  %v701 = vunpack.c.l.b16 %v121
  %v702 = vunpack.c.l.b16 %v122
  %v703 = vunpack.c.l.b16 %v123
  %v704 = vunpack.c.l.b16 %v124
  %v705 = vunpack.c.l.b16 %v125
  %v706 = vunpack.c.l.b16 %v126
  %v707 = vunpack.c.l.b16 %v127
  %v708 = vunpack.c.l.b16 %v128
  %v709 = vunpack.c.l.b16 %v129
  %v710 = vunpack.c.l.b16 %v130
  %v711 = vunpack.c.l.b16 %v131
  %v712 = vunpack.c.l.b16 %v132
  %v713 = vunpack.c.l.b16 %v133
  %v714 = vunpack.c.l.b16 %v134
  %v715 = vunpack.c.l.b16 %v135
  %v716 = vunpack.c.l.b16 %v136
  %v717 = vunpack.c.l.b16 %v137
  %v718 = vunpack.c.l.b16 %v138
  %v719 = vunpack.c.l.b16 %v139
  %v720 = vunpack.c.l.b16 %v140
  %v721 = vunpack.c.l.b16 %v141
  %v722 = vunpack.c.l.b16 %v142
  %v723 = vunpack.c.l.b16 %v143
  %v724 = vunpack.c.l.b16 %v144
  %v725 = vunpack.c.l.b16 %v145
  %v726 = vunpack.c.l.b16 %v146
  %v727 = vunpack.c.l.b16 %v147
  %v728 = vunpack.c.l.b16 %v148
  %v729 = vunpack.c.l.b16 %v149
  %v730 = vunpack.c.l.b16 %v150
  %v731 = vunpack.c.l.b16 %v151
  %v732 = vunpack.c.l.b16 %v152
  %v733 = vunpack.c.l.b16 %v153
  %v734 = vunpack.c.l.b16 %v154
  %v735 = vunpack.c.l.b16 %v155
  %v736 = vunpack.c.l.b16 %v156
  %v737 = vunpack.c.l.b16 %v157
  %v738 = vunpack.c.l.b16 %v158
  %v739 = vunpack.c.l.b16 %v159
  %v740 = vunpack.c.l.b16 %v160
  %v741 = vunpack.c.l.b16 %v161
  %v742 = vunpack.c.l.b16 %v162
  %v743 = vunpack.c.l.b16 %v163
  %v744 = vunpack.c.l.b16 %v164
  %v745 = vunpack.c.l.b16 %v165
  %v746 = vunpack.c.l.b16 %v166
  %v747 = vunpack.c.l.b16 %v167
  %v748 = vunpack.c.l.b16 %v168
  %v749 = vunpack.c.l.b16 %v169
  %v750 = vunpack.c.l.b16 %v170
  %v751 = vunpack.c.l.b16 %v171
  %v752 = vunpack.c.l.b16 %v172
  %v753 = vunpack.c.l.b16 %v173
  %v754 = vunpack.c.l.b16 %v174
  %v755 = vunpack.c.l.b16 %v175
  %v756 = vunpack.c.l.b16 %v176
  %v757 = vunpack.c.l.b16 %v177
  %v758 = vunpack.c.l.b16 %v178
  %v759 = vunpack.c.l.b16 %v179
  %v760 = vunpack.c.l.b16 %v180
  %v761 = vunpack.c.l.b16 %v181
  %v762 = vunpack.c.l.b16 %v182
  %v763 = vunpack.c.l.b16 %v183
  %v764 = vunpack.c.l.b16 %v184
  %v765 = vunpack.c.l.b16 %v185
  %v766 = vunpack.c.l.b16 %v186
  %v767 = vunpack.c.l.b16 %v187
  %v768 = vunpack.c.l.b16 %v188
  %v769 = vunpack.c.l.b16 %v189
  %v770 = vunpack.c.l.b16 %v190
  %v771 = vunpack.c.l.b16 %v191
  %v772 = vunpack.c.l.b16 %v192
  %v773 = vunpack.c.l.b16 %v193
  %v774 = vunpack.c.l.b16 %v194
  %v775 = vunpack.c.l.b16 %v195
  %v776 = vunpack.c.l.b16 %v196
  %v777 = vunpack.c.l.b16 %v197
  %v778 = vunpack.c.l.b16 %v198
  %v779 = vunpack.c.l.b16 %v199
  %v780 = vunpack.c.l.b16 %v200
  %v781 = vunpack.c.l.b16 %v201
  %v782 = vunpack.c.l.b16 %v202
  %v783 = vunpack.c.l.b16 %v203
  %v784 = vunpack.c.l.b16 %v204
  %v785 = vunpack.c.l.b16 %v205
  %v786 = vpack.c.b16 %v659, %v658
  %v787 = vpack.c.b16 %v661, %v660
  %v788 = vpack.c.b16 %v663, %v662
  %v789 = vpack.c.b16 %v665, %v664
  %v790 = vpack.c.b16 %v667, %v666
  %v791 = vpack.c.b16 %v669, %v668
  %v792 = vpack.c.b16 %v671, %v670
  %v793 = vpack.c.b16 %v673, %v672
  %v794 = vpack.c.b16 %v675, %v674
  %v795 = vpack.c.b16 %v677, %v676
  %v796 = vpack.c.b16 %v679, %v678
  %v797 = vpack.c.b16 %v681, %v680
  %v798 = vpack.c.b16 %v683, %v682
  %v799 = vpack.c.b16 %v685, %v684
  %v800 = vpack.c.b16 %v687, %v686
  %v801 = vpack.c.b16 %v689, %v688
  %v802 = vpack.c.b16 %v691, %v690
  %v803 = vpack.c.b16 %v693, %v692
  %v804 = vpack.c.b16 %v695, %v694
  %v805 = vpack.c.b16 %v697, %v696
  %v806 = vpack.c.b16 %v699, %v698
  %v807 = vpack.c.b16 %v701, %v700
  %v808 = vpack.c.b16 %v703, %v702
  %v809 = vpack.c.b16 %v705, %v704
  %v810 = vpack.c.b16 %v707, %v706
  %v811 = vpack.c.b16 %v709, %v708
  %v812 = vpack.c.b16 %v711, %v710
  %v813 = vpack.c.b16 %v713, %v712
  %v814 = vpack.c.b16 %v715, %v714
  %v815 = vpack.c.b16 %v717, %v716
  %v816 = vpack.c.b16 %v719, %v718
  %v817 = vpack.c.b16 %v721, %v720
  %v818 = vpack.c.b16 %v723, %v722
  %v819 = vpack.c.b16 %v725, %v724
  %v820 = vpack.c.b16 %v727, %v726
  %v821 = vpack.c.b16 %v729, %v728
  %v822 = vpack.c.b16 %v731, %v730
  %v823 = vpack.c.b16 %v733, %v732
  %v824 = vpack.c.b16 %v735, %v734
  %v825 = vpack.c.b16 %v737, %v736
  %v826 = vpack.c.b16 %v739, %v738
  %v827 = vpack.c.b16 %v741, %v740
  %v828 = vpack.c.b16 %v743, %v742
  %v829 = vpack.c.b16 %v745, %v744
  %v830 = vpack.c.b16 %v747, %v746
  %v831 = vpack.c.b16 %v749, %v748
  %v832 = vpack.c.b16 %v751, %v750
  %v833 = vpack.c.b16 %v753, %v752
  %v834 = vpack.c.b16 %v755, %v754
  %v835 = vpack.c.b16 %v757, %v756
  %v836 = vpack.c.b16 %v759, %v758
  %v837 = vpack.c.b16 %v761, %v760
  %v838 = vpack.c.b16 %v763, %v762
  %v839 = vpack.c.b16 %v765, %v764
  %v840 = vpack.c.b16 %v767, %v766
  %v841 = vpack.c.b16 %v769, %v768
  %v842 = vpack.c.b16 %v771, %v770
  %v843 = vpack.c.b16 %v773, %v772
  %v844 = vpack.c.b16 %v775, %v774
  %v845 = vpack.c.b16 %v777, %v776
  %v846 = vpack.c.b16 %v779, %v778
  %v847 = vpack.c.b16 %v781, %v780
  %v848 = vpack.c.b16 %v783, %v782
  %v849 = vpack.c.b16 %v785, %v784
  %914 = vmatpush.bf16.msra.mxu0 %v793
  %915 = vmatpush.bf16.msra.mxu0 %v792
  %916 = vmatpush.bf16.msra.mxu0 %v791
  %917 = vmatpush.bf16.msra.mxu0 %v790
  %918 = vmatpush.bf16.msra.mxu0 %v789
  %919 = vmatpush.bf16.msra.mxu0 %v788
  %920 = vmatpush.bf16.msra.mxu0 %v787
  %921 = vmatpush.bf16.msra.mxu0 %v786
  %922 = vmatmul.bf16.gmra.mxu0 %v402
  %v923 = vpop.f32.mrf.mxu0
  %v924 = vadd.f32 %v208, %v923
  %v925 = vpop.f32.mrf.mxu0
  %v926 = vadd.f32 %v208, %v925
  %927 = vmatmul.bf16.gmra.mxu0 %v410
  %v928 = vpop.f32.mrf.mxu0
  %v929 = vadd.f32 %v208, %v928
  %v930 = vpop.f32.mrf.mxu0
  %v931 = vadd.f32 %v208, %v930
  %932 = vmatmul.bf16.gmra.mxu0 %v418
  %v933 = vpop.f32.mrf.mxu0
  %v934 = vadd.f32 %v208, %v933
  %v935 = vpop.f32.mrf.mxu0
  %v936 = vadd.f32 %v208, %v935
  %937 = vmatmul.bf16.gmra.mxu0 %v426
  %v938 = vpop.f32.mrf.mxu0
  %v939 = vadd.f32 %v208, %v938
  %v940 = vpop.f32.mrf.mxu0
  %v941 = vadd.f32 %v208, %v940
  %942 = vmatmul.bf16.gmra.mxu0 %v434
  %v943 = vpop.f32.mrf.mxu0
  %v944 = vadd.f32 %v208, %v943
  %v945 = vpop.f32.mrf.mxu0
  %v946 = vadd.f32 %v208, %v945
  %947 = vmatmul.bf16.gmra.mxu0 %v442
  %v948 = vpop.f32.mrf.mxu0
  %v949 = vadd.f32 %v208, %v948
  %v950 = vpop.f32.mrf.mxu0
  %v951 = vadd.f32 %v208, %v950
  %952 = vmatmul.bf16.gmra.mxu0 %v450
  %v953 = vpop.f32.mrf.mxu0
  %v954 = vadd.f32 %v208, %v953
  %v955 = vpop.f32.mrf.mxu0
  %v956 = vadd.f32 %v208, %v955
  %957 = vmatmul.bf16.gmra.mxu0 %v458
  %v958 = vpop.f32.mrf.mxu0
  %v959 = vadd.f32 %v208, %v958
  %v960 = vpop.f32.mrf.mxu0
  %v961 = vadd.f32 %v208, %v960
  %962 = vdwg.mxu0
  %963 = vmatpush.bf16.msra.mxu0 %v801
  %964 = vmatpush.bf16.msra.mxu0 %v800
  %965 = vmatpush.bf16.msra.mxu0 %v799
  %966 = vmatpush.bf16.msra.mxu0 %v798
  %967 = vmatpush.bf16.msra.mxu0 %v797
  %968 = vmatpush.bf16.msra.mxu0 %v796
  %969 = vmatpush.bf16.msra.mxu0 %v795
  %970 = vmatpush.bf16.msra.mxu0 %v794
  %971 = vmatmul.bf16.gmra.mxu0 %v403
  %v972 = vpop.f32.mrf.mxu0
  %v973 = vadd.f32 %v924, %v972
  %v974 = vpop.f32.mrf.mxu0
  %v975 = vadd.f32 %v926, %v974
  %976 = vmatmul.bf16.gmra.mxu0 %v411
  %v977 = vpop.f32.mrf.mxu0
  %v978 = vadd.f32 %v929, %v977
  %v979 = vpop.f32.mrf.mxu0
  %v980 = vadd.f32 %v931, %v979
  %981 = vmatmul.bf16.gmra.mxu0 %v419
  %v982 = vpop.f32.mrf.mxu0
  %v983 = vadd.f32 %v934, %v982
  %v984 = vpop.f32.mrf.mxu0
  %v985 = vadd.f32 %v936, %v984
  %986 = vmatmul.bf16.gmra.mxu0 %v427
  %v987 = vpop.f32.mrf.mxu0
  %v988 = vadd.f32 %v939, %v987
  %v989 = vpop.f32.mrf.mxu0
  %v990 = vadd.f32 %v941, %v989
  %991 = vmatmul.bf16.gmra.mxu0 %v435
  %v992 = vpop.f32.mrf.mxu0
  %v993 = vadd.f32 %v944, %v992
  %v994 = vpop.f32.mrf.mxu0
  %v995 = vadd.f32 %v946, %v994
  %996 = vmatmul.bf16.gmra.mxu0 %v443
  %v997 = vpop.f32.mrf.mxu0
  %v998 = vadd.f32 %v949, %v997
  %v999 = vpop.f32.mrf.mxu0
  %v1000 = vadd.f32 %v951, %v999
  %1001 = vmatmul.bf16.gmra.mxu0 %v451
  %v1002 = vpop.f32.mrf.mxu0
  %v1003 = vadd.f32 %v954, %v1002
  %v1004 = vpop.f32.mrf.mxu0
  %v1005 = vadd.f32 %v956, %v1004
  %1006 = vmatmul.bf16.gmra.mxu0 %v459
  %v1007 = vpop.f32.mrf.mxu0
  %v1008 = vadd.f32 %v959, %v1007
  %v1009 = vpop.f32.mrf.mxu0
  %v1010 = vadd.f32 %v961, %v1009
  %1011 = vdwg.mxu0
  %1012 = vmatpush.bf16.msra.mxu0 %v809
  %1013 = vmatpush.bf16.msra.mxu0 %v808
  %1014 = vmatpush.bf16.msra.mxu0 %v807
  %1015 = vmatpush.bf16.msra.mxu0 %v806
  %1016 = vmatpush.bf16.msra.mxu0 %v805
  %1017 = vmatpush.bf16.msra.mxu0 %v804
  %1018 = vmatpush.bf16.msra.mxu0 %v803
  %1019 = vmatpush.bf16.msra.mxu0 %v802
  %1020 = vmatmul.bf16.gmra.mxu0 %v404
  %v1021 = vpop.f32.mrf.mxu0
  %v1022 = vadd.f32 %v973, %v1021
  %v1023 = vpop.f32.mrf.mxu0
  %v1024 = vadd.f32 %v975, %v1023
  %1025 = vmatmul.bf16.gmra.mxu0 %v412
  %v1026 = vpop.f32.mrf.mxu0
  %v1027 = vadd.f32 %v978, %v1026
  %v1028 = vpop.f32.mrf.mxu0
  %v1029 = vadd.f32 %v980, %v1028
  %1030 = vmatmul.bf16.gmra.mxu0 %v420
  %v1031 = vpop.f32.mrf.mxu0
  %v1032 = vadd.f32 %v983, %v1031
  %v1033 = vpop.f32.mrf.mxu0
  %v1034 = vadd.f32 %v985, %v1033
  %1035 = vmatmul.bf16.gmra.mxu0 %v428
  %v1036 = vpop.f32.mrf.mxu0
  %v1037 = vadd.f32 %v988, %v1036
  %v1038 = vpop.f32.mrf.mxu0
  %v1039 = vadd.f32 %v990, %v1038
  %1040 = vmatmul.bf16.gmra.mxu0 %v436
  %v1041 = vpop.f32.mrf.mxu0
  %v1042 = vadd.f32 %v993, %v1041
  %v1043 = vpop.f32.mrf.mxu0
  %v1044 = vadd.f32 %v995, %v1043
  %1045 = vmatmul.bf16.gmra.mxu0 %v444
  %v1046 = vpop.f32.mrf.mxu0
  %v1047 = vadd.f32 %v998, %v1046
  %v1048 = vpop.f32.mrf.mxu0
  %v1049 = vadd.f32 %v1000, %v1048
  %1050 = vmatmul.bf16.gmra.mxu0 %v452
  %v1051 = vpop.f32.mrf.mxu0
  %v1052 = vadd.f32 %v1003, %v1051
  %v1053 = vpop.f32.mrf.mxu0
  %v1054 = vadd.f32 %v1005, %v1053
  %1055 = vmatmul.bf16.gmra.mxu0 %v460
  %v1056 = vpop.f32.mrf.mxu0
  %v1057 = vadd.f32 %v1008, %v1056
  %v1058 = vpop.f32.mrf.mxu0
  %v1059 = vadd.f32 %v1010, %v1058
  %1060 = vdwg.mxu0
  %1061 = vmatpush.bf16.msra.mxu0 %v817
  %1062 = vmatpush.bf16.msra.mxu0 %v816
  %1063 = vmatpush.bf16.msra.mxu0 %v815
  %1064 = vmatpush.bf16.msra.mxu0 %v814
  %1065 = vmatpush.bf16.msra.mxu0 %v813
  %1066 = vmatpush.bf16.msra.mxu0 %v812
  %1067 = vmatpush.bf16.msra.mxu0 %v811
  %1068 = vmatpush.bf16.msra.mxu0 %v810
  %1069 = vmatmul.bf16.gmra.mxu0 %v405
  %v1070 = vpop.f32.mrf.mxu0
  %v1071 = vadd.f32 %v1022, %v1070
  %v1072 = vpop.f32.mrf.mxu0
  %v1073 = vadd.f32 %v1024, %v1072
  %1074 = vmatmul.bf16.gmra.mxu0 %v413
  %v1075 = vpop.f32.mrf.mxu0
  %v1076 = vadd.f32 %v1027, %v1075
  %v1077 = vpop.f32.mrf.mxu0
  %v1078 = vadd.f32 %v1029, %v1077
  %1079 = vmatmul.bf16.gmra.mxu0 %v421
  %v1080 = vpop.f32.mrf.mxu0
  %v1081 = vadd.f32 %v1032, %v1080
  %v1082 = vpop.f32.mrf.mxu0
  %v1083 = vadd.f32 %v1034, %v1082
  %1084 = vmatmul.bf16.gmra.mxu0 %v429
  %v1085 = vpop.f32.mrf.mxu0
  %v1086 = vadd.f32 %v1037, %v1085
  %v1087 = vpop.f32.mrf.mxu0
  %v1088 = vadd.f32 %v1039, %v1087
  %1089 = vmatmul.bf16.gmra.mxu0 %v437
  %v1090 = vpop.f32.mrf.mxu0
  %v1091 = vadd.f32 %v1042, %v1090
  %v1092 = vpop.f32.mrf.mxu0
  %v1093 = vadd.f32 %v1044, %v1092
  %1094 = vmatmul.bf16.gmra.mxu0 %v445
  %v1095 = vpop.f32.mrf.mxu0
  %v1096 = vadd.f32 %v1047, %v1095
  %v1097 = vpop.f32.mrf.mxu0
  %v1098 = vadd.f32 %v1049, %v1097
  %1099 = vmatmul.bf16.gmra.mxu0 %v453
  %v1100 = vpop.f32.mrf.mxu0
  %v1101 = vadd.f32 %v1052, %v1100
  %v1102 = vpop.f32.mrf.mxu0
  %v1103 = vadd.f32 %v1054, %v1102
  %1104 = vmatmul.bf16.gmra.mxu0 %v461
  %v1105 = vpop.f32.mrf.mxu0
  %v1106 = vadd.f32 %v1057, %v1105
  %v1107 = vpop.f32.mrf.mxu0
  %v1108 = vadd.f32 %v1059, %v1107
  %1109 = vdwg.mxu0
  %1110 = vmatpush.bf16.msra.mxu0 %v825
  %1111 = vmatpush.bf16.msra.mxu0 %v824
  %1112 = vmatpush.bf16.msra.mxu0 %v823
  %1113 = vmatpush.bf16.msra.mxu0 %v822
  %1114 = vmatpush.bf16.msra.mxu0 %v821
  %1115 = vmatpush.bf16.msra.mxu0 %v820
  %1116 = vmatpush.bf16.msra.mxu0 %v819
  %1117 = vmatpush.bf16.msra.mxu0 %v818
  %1118 = vmatmul.bf16.gmra.mxu0 %v406
  %v1119 = vpop.f32.mrf.mxu0
  %v1120 = vadd.f32 %v1071, %v1119
  %v1121 = vpop.f32.mrf.mxu0
  %v1122 = vadd.f32 %v1073, %v1121
  %1123 = vmatmul.bf16.gmra.mxu0 %v414
  %v1124 = vpop.f32.mrf.mxu0
  %v1125 = vadd.f32 %v1076, %v1124
  %v1126 = vpop.f32.mrf.mxu0
  %v1127 = vadd.f32 %v1078, %v1126
  %1128 = vmatmul.bf16.gmra.mxu0 %v422
  %v1129 = vpop.f32.mrf.mxu0
  %v1130 = vadd.f32 %v1081, %v1129
  %v1131 = vpop.f32.mrf.mxu0
  %v1132 = vadd.f32 %v1083, %v1131
  %1133 = vmatmul.bf16.gmra.mxu0 %v430
  %v1134 = vpop.f32.mrf.mxu0
  %v1135 = vadd.f32 %v1086, %v1134
  %v1136 = vpop.f32.mrf.mxu0
  %v1137 = vadd.f32 %v1088, %v1136
  %1138 = vmatmul.bf16.gmra.mxu0 %v438
  %v1139 = vpop.f32.mrf.mxu0
  %v1140 = vadd.f32 %v1091, %v1139
  %v1141 = vpop.f32.mrf.mxu0
  %v1142 = vadd.f32 %v1093, %v1141
  %1143 = vmatmul.bf16.gmra.mxu0 %v446
  %v1144 = vpop.f32.mrf.mxu0
  %v1145 = vadd.f32 %v1096, %v1144
  %v1146 = vpop.f32.mrf.mxu0
  %v1147 = vadd.f32 %v1098, %v1146
  %1148 = vmatmul.bf16.gmra.mxu0 %v454
  %v1149 = vpop.f32.mrf.mxu0
  %v1150 = vadd.f32 %v1101, %v1149
  %v1151 = vpop.f32.mrf.mxu0
  %v1152 = vadd.f32 %v1103, %v1151
  %1153 = vmatmul.bf16.gmra.mxu0 %v462
  %v1154 = vpop.f32.mrf.mxu0
  %v1155 = vadd.f32 %v1106, %v1154
  %v1156 = vpop.f32.mrf.mxu0
  %v1157 = vadd.f32 %v1108, %v1156
  %1158 = vdwg.mxu0
  %1159 = vmatpush.bf16.msra.mxu0 %v833
  %1160 = vmatpush.bf16.msra.mxu0 %v832
  %1161 = vmatpush.bf16.msra.mxu0 %v831
  %1162 = vmatpush.bf16.msra.mxu0 %v830
  %1163 = vmatpush.bf16.msra.mxu0 %v829
  %1164 = vmatpush.bf16.msra.mxu0 %v828
  %1165 = vmatpush.bf16.msra.mxu0 %v827
  %1166 = vmatpush.bf16.msra.mxu0 %v826
  %1167 = vmatmul.bf16.gmra.mxu0 %v407
  %v1168 = vpop.f32.mrf.mxu0
  %v1169 = vadd.f32 %v1120, %v1168
  %v1170 = vpop.f32.mrf.mxu0
  %v1171 = vadd.f32 %v1122, %v1170
  %1172 = vmatmul.bf16.gmra.mxu0 %v415
  %v1173 = vpop.f32.mrf.mxu0
  %v1174 = vadd.f32 %v1125, %v1173
  %v1175 = vpop.f32.mrf.mxu0
  %v1176 = vadd.f32 %v1127, %v1175
  %1177 = vmatmul.bf16.gmra.mxu0 %v423
  %v1178 = vpop.f32.mrf.mxu0
  %v1179 = vadd.f32 %v1130, %v1178
  %v1180 = vpop.f32.mrf.mxu0
  %v1181 = vadd.f32 %v1132, %v1180
  %1182 = vmatmul.bf16.gmra.mxu0 %v431
  %v1183 = vpop.f32.mrf.mxu0
  %v1184 = vadd.f32 %v1135, %v1183
  %v1185 = vpop.f32.mrf.mxu0
  %v1186 = vadd.f32 %v1137, %v1185
  %1187 = vmatmul.bf16.gmra.mxu0 %v439
  %v1188 = vpop.f32.mrf.mxu0
  %v1189 = vadd.f32 %v1140, %v1188
  %v1190 = vpop.f32.mrf.mxu0
  %v1191 = vadd.f32 %v1142, %v1190
  %1192 = vmatmul.bf16.gmra.mxu0 %v447
  %v1193 = vpop.f32.mrf.mxu0
  %v1194 = vadd.f32 %v1145, %v1193
  %v1195 = vpop.f32.mrf.mxu0
  %v1196 = vadd.f32 %v1147, %v1195
  %1197 = vmatmul.bf16.gmra.mxu0 %v455
  %v1198 = vpop.f32.mrf.mxu0
  %v1199 = vadd.f32 %v1150, %v1198
  %v1200 = vpop.f32.mrf.mxu0
  %v1201 = vadd.f32 %v1152, %v1200
  %1202 = vmatmul.bf16.gmra.mxu0 %v463
  %v1203 = vpop.f32.mrf.mxu0
  %v1204 = vadd.f32 %v1155, %v1203
  %v1205 = vpop.f32.mrf.mxu0
  %v1206 = vadd.f32 %v1157, %v1205
  %1207 = vdwg.mxu0
  %1208 = vmatpush.bf16.msra.mxu0 %v841
  %1209 = vmatpush.bf16.msra.mxu0 %v840
  %1210 = vmatpush.bf16.msra.mxu0 %v839
  %1211 = vmatpush.bf16.msra.mxu0 %v838
  %1212 = vmatpush.bf16.msra.mxu0 %v837
  %1213 = vmatpush.bf16.msra.mxu0 %v836
  %1214 = vmatpush.bf16.msra.mxu0 %v835
  %1215 = vmatpush.bf16.msra.mxu0 %v834
  %1216 = vmatmul.bf16.gmra.mxu0 %v408
  %v1217 = vpop.f32.mrf.mxu0
  %v1218 = vadd.f32 %v1169, %v1217
  %v1219 = vpop.f32.mrf.mxu0
  %v1220 = vadd.f32 %v1171, %v1219
  %1221 = vmatmul.bf16.gmra.mxu0 %v416
  %v1222 = vpop.f32.mrf.mxu0
  %v1223 = vadd.f32 %v1174, %v1222
  %v1224 = vpop.f32.mrf.mxu0
  %v1225 = vadd.f32 %v1176, %v1224
  %1226 = vmatmul.bf16.gmra.mxu0 %v424
  %v1227 = vpop.f32.mrf.mxu0
  %v1228 = vadd.f32 %v1179, %v1227
  %v1229 = vpop.f32.mrf.mxu0
  %v1230 = vadd.f32 %v1181, %v1229
  %1231 = vmatmul.bf16.gmra.mxu0 %v432
  %v1232 = vpop.f32.mrf.mxu0
  %v1233 = vadd.f32 %v1184, %v1232
  %v1234 = vpop.f32.mrf.mxu0
  %v1235 = vadd.f32 %v1186, %v1234
  %1236 = vmatmul.bf16.gmra.mxu0 %v440
  %v1237 = vpop.f32.mrf.mxu0
  %v1238 = vadd.f32 %v1189, %v1237
  %v1239 = vpop.f32.mrf.mxu0
  %v1240 = vadd.f32 %v1191, %v1239
  %1241 = vmatmul.bf16.gmra.mxu0 %v448
  %v1242 = vpop.f32.mrf.mxu0
  %v1243 = vadd.f32 %v1194, %v1242
  %v1244 = vpop.f32.mrf.mxu0
  %v1245 = vadd.f32 %v1196, %v1244
  %1246 = vmatmul.bf16.gmra.mxu0 %v456
  %v1247 = vpop.f32.mrf.mxu0
  %v1248 = vadd.f32 %v1199, %v1247
  %v1249 = vpop.f32.mrf.mxu0
  %v1250 = vadd.f32 %v1201, %v1249
  %1251 = vmatmul.bf16.gmra.mxu0 %v464
  %v1252 = vpop.f32.mrf.mxu0
  %v1253 = vadd.f32 %v1204, %v1252
  %v1254 = vpop.f32.mrf.mxu0
  %v1255 = vadd.f32 %v1206, %v1254
  %1256 = vdwg.mxu0
  %1257 = vmatpush.bf16.msra.mxu0 %v849
  %1258 = vmatpush.bf16.msra.mxu0 %v848
  %1259 = vmatpush.bf16.msra.mxu0 %v847
  %1260 = vmatpush.bf16.msra.mxu0 %v846
  %1261 = vmatpush.bf16.msra.mxu0 %v845
  %1262 = vmatpush.bf16.msra.mxu0 %v844
  %1263 = vmatpush.bf16.msra.mxu0 %v843
  %1264 = vmatpush.bf16.msra.mxu0 %v842
  %1265 = vmatmul.bf16.gmra.mxu0 %v409
  %v1266 = vpop.f32.mrf.mxu0
  %v1267 = vadd.f32 %v1218, %v1266
  %v1268 = vpop.f32.mrf.mxu0
  %v1269 = vadd.f32 %v1220, %v1268
  %1270 = vmatmul.bf16.gmra.mxu0 %v417
  %v1271 = vpop.f32.mrf.mxu0
  %v1272 = vadd.f32 %v1223, %v1271
  %v1273 = vpop.f32.mrf.mxu0
  %v1274 = vadd.f32 %v1225, %v1273
  %1275 = vmatmul.bf16.gmra.mxu0 %v425
  %v1276 = vpop.f32.mrf.mxu0
  %v1277 = vadd.f32 %v1228, %v1276
  %v1278 = vpop.f32.mrf.mxu0
  %v1279 = vadd.f32 %v1230, %v1278
  %1280 = vmatmul.bf16.gmra.mxu0 %v433
  %v1281 = vpop.f32.mrf.mxu0
  %v1282 = vadd.f32 %v1233, %v1281
  %v1283 = vpop.f32.mrf.mxu0
  %v1284 = vadd.f32 %v1235, %v1283
  %1285 = vmatmul.bf16.gmra.mxu0 %v441
  %v1286 = vpop.f32.mrf.mxu0
  %v1287 = vadd.f32 %v1238, %v1286
  %v1288 = vpop.f32.mrf.mxu0
  %v1289 = vadd.f32 %v1240, %v1288
  %1290 = vmatmul.bf16.gmra.mxu0 %v449
  %v1291 = vpop.f32.mrf.mxu0
  %v1292 = vadd.f32 %v1243, %v1291
  %v1293 = vpop.f32.mrf.mxu0
  %v1294 = vadd.f32 %v1245, %v1293
  %1295 = vmatmul.bf16.gmra.mxu0 %v457
  %v1296 = vpop.f32.mrf.mxu0
  %v1297 = vadd.f32 %v1248, %v1296
  %v1298 = vpop.f32.mrf.mxu0
  %v1299 = vadd.f32 %v1250, %v1298
  %1300 = vmatmul.bf16.gmra.mxu0 %v465
  %v1301 = vpop.f32.mrf.mxu0
  %v1302 = vadd.f32 %v1253, %v1301
  %v1303 = vpop.f32.mrf.mxu0
  %v1304 = vadd.f32 %v1255, %v1303
  %1305 = vdwg.mxu0
  %vm1306 = vcmask 130048
  %1307 = vst.msk [vmem:[%s3] sm:$0xff] %vm1306, %v1267
  %1308 = vst.msk [vmem:[%s3 + $0x8] sm:$0xff] %vm1306, %v1269
  %1309 = vst.msk [vmem:[%s3 + $0x10] sm:$0xff] %vm1306, %v1272
  %1310 = vst.msk [vmem:[%s3 + $0x18] sm:$0xff] %vm1306, %v1274
  %1311 = vst.msk [vmem:[%s3 + $0x20] sm:$0xff] %vm1306, %v1277
  %1312 = vst.msk [vmem:[%s3 + $0x28] sm:$0xff] %vm1306, %v1279
  %1313 = vst.msk [vmem:[%s3 + $0x30] sm:$0xff] %vm1306, %v1282
  %1314 = vst.msk [vmem:[%s3 + $0x38] sm:$0xff] %vm1306, %v1284
  %1315 = vst.msk [vmem:[%s3 + $0x40] sm:$0xff] %vm1306, %v1287
  %1316 = vst.msk [vmem:[%s3 + $0x48] sm:$0xff] %vm1306, %v1289
  %1317 = vst.msk [vmem:[%s3 + $0x50] sm:$0xff] %vm1306, %v1292
  %1318 = vst.msk [vmem:[%s3 + $0x58] sm:$0xff] %vm1306, %v1294
  %1319 = vst.msk [vmem:[%s3 + $0x60] sm:$0xff] %vm1306, %v1297
  %1320 = vst.msk [vmem:[%s3 + $0x68] sm:$0xff] %vm1306, %v1299
  %1321 = vst.msk [vmem:[%s3 + $0x70] sm:$0xff] %vm1306, %v1302
  %1322 = vst.msk [vmem:[%s3 + $0x78] sm:$0xff] %vm1306, %v1304
  // Predicated region
  $region14: #{autoencoder_forward.15} parent=0 // pred_check
    _
  $region15: #{autoencoder_forward.15} parent=0 // pred_check_branch
    %1324 = sbr.rel (0) target = $region17
  $region16: #{autoencoder_forward.15} parent=0 // pred_region
    _
  $region17: #{autoencoder_forward.15} parent=0 // pred_fallthru
    _
  // Predicated region
  $region18: #{autoencoder_forward.15} parent=0 // pred_check
    _
  $region19: #{autoencoder_forward.15} parent=0 // pred_check_branch
    %1326 = sbr.rel (0) target = $region21
  $region20: #{autoencoder_forward.15} parent=0 // pred_region
    _
  $region21: #{autoencoder_forward.15} parent=0 // pred_fallthru
    _

</llo_original>
